<compile_context>
chip_gen: v5e
topology: v5e:2x2
jax: 0.10.0
libtpu: 0.0.40
codegen_flags: <defaults>
</compile_context>

<pallas_src>
import jax
import jax.numpy as jnp
from jax import lax
from jax.experimental import pallas as pl
from jax.experimental.pallas import tpu as pltpu

EPS = 1e-5  # PyTorch BatchNorm2d default eps


# ----------------------------- Pallas kernels ------------------------------ #

def conv1_bn_pool_kernel(p_ref, w_ref, b_ref, g_ref, beta_ref, o_ref):
    """Fused Conv1 + ReLU + BatchNorm (training) + MaxPool2d((1,3),(1,3)).

    p_ref:  (3, K1, M)  transposed im2col patches, split into the 3 pool
                        width-phases; M = B*OH1*PW rows ordered (b, h, wp).
    w_ref:  (C1, K1)    conv1 weight (out-channel major).
    b/g/beta: (C1, 1)   bias / BN gamma / BN beta.
    o_ref:  (C1, M)     pooled, normalized output (lane-dense in M).
    """
    w = w_ref[...]
    bias = b_ref[...]
    n_ph = p_ref.shape[0]
    ys = []
    for ph in range(n_ph):
        y = jnp.dot(w, p_ref[ph], preferred_element_type=jnp.float32) + bias
        ys.append(jnp.maximum(y, 0.0))
    # BatchNorm statistics over ALL conv1 output positions (= all 3 phases),
    # reduced along the lane axis.
    n = float(n_ph * ys[0].shape[-1])
    mean = sum(y.sum(axis=-1, keepdims=True) for y in ys) / n
    var = sum(((y - mean) ** 2).sum(axis=-1, keepdims=True) for y in ys) / n
    scale = g_ref[...] * lax.rsqrt(var + EPS)
    shift = beta_ref[...] - mean * scale
    # Normalize each phase, then elementwise max across phases == MaxPool.
    out = ys[0] * scale + shift
    for y in ys[1:]:
        out = jnp.maximum(out, y * scale + shift)
    o_ref[...] = out


def conv2_bn_kernel(p_ref, w_ref, b_ref, g_ref, beta_ref, o_ref):
    """Fused Conv2 + ReLU + BatchNorm (training), transposed per batch.

    p_ref:  (B, K2, M2) transposed im2col patches per batch (M2 = OH2*OW2).
    w_ref:  (C2, K2); b/g/beta: (C2, 1).
    o_ref:  (B, C2, M2)  -> raw reshape of o_ref equals PyTorch (C,H,W) flatten.
    """
    w = w_ref[...]
    bias = b_ref[...]
    B = p_ref.shape[0]
    ys = []
    for b in range(B):
        y = jnp.dot(w, p_ref[b], preferred_element_type=jnp.float32) + bias
        ys.append(jnp.maximum(y, 0.0))
    n = float(B * ys[0].shape[-1])
    mean = sum(y.sum(axis=-1, keepdims=True) for y in ys) / n
    var = sum(((y - mean) ** 2).sum(axis=-1, keepdims=True) for y in ys) / n
    scale = g_ref[...] * lax.rsqrt(var + EPS)
    shift = beta_ref[...] - mean * scale
    for b in range(B):
        o_ref[b] = ys[b] * scale + shift


def fc_concat_kernel(x_ref, wf1_ref, bf1_ref, st_ref, wf2_ref, bf2_ref, o_ref):
    """Fused fc1+ReLU (bf16 weight, f32 accum), fc2+ReLU, and concat.

    x_ref: (B, 4608) f32, wf1_ref: (4608, 600) bf16, bf1_ref: (1, 600) f32,
    st_ref: (B, 6) f32,  wf2_ref: (6, 600) f32,    bf2_ref: (1, 600) f32,
    o_ref: (B, 1200) f32  -> [obs_emb | state_emb].
    """
    x16 = x_ref[...].astype(jnp.bfloat16)
    obs = jnp.dot(x16, wf1_ref[...], preferred_element_type=jnp.float32)
    obs = jnp.maximum(obs + bf1_ref[...], 0.0)
    st = jnp.dot(st_ref[...], wf2_ref[...], preferred_element_type=jnp.float32)
    st = jnp.maximum(st + bf2_ref[...], 0.0)
    H = obs.shape[-1]
    o_ref[:, 0:H] = obs
    o_ref[:, H:2 * H] = st


def _vmem_call(kernel, n_in, out_shape):
    # Single grid step, all operands resident in VMEM (everything is small;
    # the largest input is the 5.5 MB bf16 fc1 weight).
    return pl.pallas_call(
        kernel,
        out_shape=out_shape,
        in_specs=[pl.BlockSpec(memory_space=pltpu.MemorySpace.VMEM)] * n_in,
        out_specs=pl.BlockSpec(memory_space=pltpu.MemorySpace.VMEM),
        compiler_params=pltpu.CompilerParams(vmem_limit_bytes=32 * 1024 * 1024),
    )


# ------------------------------- glue (JAX) -------------------------------- #

def embedding_network_forward(kp, obs_nchw, state):
    """Pallas forward. kp = kernel-layout params from prepare_kernel_params."""
    B = obs_nchw.shape[0]
    x = obs_nchw[:, 0, :, :]                               # Cin = 1 -> (B, H, W)
    H, W = x.shape[1], x.shape[2]
    KH, KW, SH, SW = 3, 40, 2, 4
    OH1 = (H - KH) // SH + 1                               # 17
    OW1 = (W - KW) // SW + 1                               # 81
    assert OW1 % 3 == 0, "phase-split pool fusion assumes OW1 % 3 == 0"
    PW = OW1 // 3                                          # 27

    # --- conv1 im2col, transposed and split into the 3 pool width-phases ---
    taps = []
    for i in range(KH):
        for j in range(KW):
            taps.append(x[:, i:i + SH * (OH1 - 1) + 1:SH,
                          j:j + SW * (OW1 - 1) + 1:SW])    # (B, OH1, OW1)
    patches = jnp.stack(taps, axis=-1)                     # (B, OH1, OW1, 120)
    patches = patches[:, :, :3 * PW, :].reshape(B, OH1, PW, 3, KH * KW)
    p1t = patches.transpose(3, 4, 0, 1, 2).reshape(3, KH * KW, B * OH1 * PW)

    M1 = B * OH1 * PW                                      # 918
    y1t = _vmem_call(
        conv1_bn_pool_kernel, 5,
        jax.ShapeDtypeStruct((32, M1), jnp.float32),
    )(p1t, kp["w1t"], kp["b1"], kp["g1"], kp["beta1"])     # (32, 918)

    # --- conv2 im2col (kh=3, kw=3, stride (2,3)), transposed per batch ------
    OH2 = (OH1 - 3) // 2 + 1                               # 8
    OW2 = (PW - 3) // 3 + 1                                # 9
    yp = y1t.reshape(32, B, OH1, PW)                       # (c, b, h, wp)
    slabs = []
    for i in range(3):
        for j in range(3):
            slabs.append(yp[:, :, i:i + 2 * (OH2 - 1) + 1:2,
                          j:j + 3 * (OW2 - 1) + 1:3])      # (32, B, 8, 9)
    p2 = jnp.stack(slabs, axis=1)                          # (32, 9, B, 8, 9)
    p2t = p2.transpose(2, 0, 1, 3, 4).reshape(B, 32 * 9, OH2 * OW2)

    y2 = _vmem_call(
        conv2_bn_kernel, 5,
        jax.ShapeDtypeStruct((B, 64, OH2 * OW2), jnp.float32),
    )(p2t, kp["w2t"], kp["b2"], kp["g2"], kp["beta2"])     # (B, 64, 72)

    # PyTorch Flatten over (C, H, W) is a free contiguous reshape here.
    flat = y2.reshape(B, 64 * OH2 * OW2)                   # (B, 4608)

    out = _vmem_call(
        fc_concat_kernel, 6,
        jax.ShapeDtypeStruct((B, 1200), jnp.float32),
    )(flat, kp["wf1"], kp["bf1"], state, kp["wf2"], kp["bf2"])
    return out


# ------------------- reference (pure JAX, PyTorch-faithful) ----------------- #

def _bn2d_train(x, gamma, beta):
    mean = x.mean(axis=(0, 2, 3), keepdims=True)
    var = ((x - mean) ** 2).mean(axis=(0, 2, 3), keepdims=True)
    return (gamma[None, :, None, None] * (x - mean) * lax.rsqrt(var + EPS)
            + beta[None, :, None, None])


def reference_forward(p, obs, state):
    x = lax.conv_general_dilated(
        obs, p["conv1_w"], window_strides=(2, 4), padding="VALID",
        dimension_numbers=("NCHW", "OIHW", "NCHW"),
        precision=lax.Precision.HIGHEST)
    x = jnp.maximum(x + p["conv1_b"][None, :, None, None], 0.0)
    x = _bn2d_train(x, p["bn1_g"], p["bn1_b"])
    B, C, H, W = x.shape
    x = x[:, :, :, :(W // 3) * 3].reshape(B, C, H, W // 3, 3).max(axis=-1)
    x = lax.conv_general_dilated(
        x, p["conv2_w"], window_strides=(2, 3), padding="VALID",
        dimension_numbers=("NCHW", "OIHW", "NCHW"),
        precision=lax.Precision.HIGHEST)
    x = jnp.maximum(x + p["conv2_b"][None, :, None, None], 0.0)
    x = _bn2d_train(x, p["bn2_g"], p["bn2_b"])
    flat = x.reshape(B, -1)
    obs_emb = jnp.maximum(
        jnp.dot(flat, p["fc1_w"].T, precision=lax.Precision.HIGHEST)
        + p["fc1_b"], 0.0)
    st_emb = jnp.maximum(
        jnp.dot(state, p["fc2_w"].T, precision=lax.Precision.HIGHEST)
        + p["fc2_b"], 0.0)
    return jnp.concatenate([obs_emb, st_emb], axis=1)


# ------------------------------ param handling ------------------------------ #

def init_params(key):
    """Parameters in PyTorch layout (Conv: OIHW, Linear: (out, in))."""
    ks = jax.random.split(key, 12)

    def normal(k, shape, scale):
        return (scale * jax.random.normal(k, shape, jnp.float32)).astype(jnp.float32)

    return {
        "conv1_w": normal(ks[0], (32, 1, 3, 40), 1.0 / jnp.sqrt(120.0)),
        "conv1_b": normal(ks[1], (32,), 0.1),
        "bn1_g": 1.0 + normal(ks[2], (32,), 0.1),
        "bn1_b": normal(ks[3], (32,), 0.1),
        "conv2_w": normal(ks[4], (64, 32, 3, 3), 1.0 / jnp.sqrt(288.0)),
        "conv2_b": normal(ks[5], (64,), 0.1),
        "bn2_g": 1.0 + normal(ks[6], (64,), 0.1),
        "bn2_b": normal(ks[7], (64,), 0.1),
        "fc1_w": normal(ks[8], (600, 4608), 1.0 / jnp.sqrt(4608.0)),
        "fc1_b": normal(ks[9], (600,), 0.1),
        "fc2_w": normal(ks[10], (600, 6), 1.0 / jnp.sqrt(6.0)),
        "fc2_b": normal(ks[11], (600,), 0.1),
    }


def prepare_kernel_params(p):
    """PyTorch layout -> kernel layout (transposed conv weights, bf16 fc1)."""
    return {
        "w1t": p["conv1_w"].reshape(32, 3 * 40),           # cols ordered (kh, kw)
        "b1": p["conv1_b"].reshape(32, 1),
        "g1": p["bn1_g"].reshape(32, 1),
        "beta1": p["bn1_b"].reshape(32, 1),
        "w2t": p["conv2_w"].reshape(64, 32 * 3 * 3),       # cols ordered (cin, kh, kw)
        "b2": p["conv2_b"].reshape(64, 1),
        "g2": p["bn2_g"].reshape(64, 1),
        "beta2": p["bn2_b"].reshape(64, 1),
        "wf1": p["fc1_w"].T.astype(jnp.bfloat16),          # (4608, 600) bf16: halves DMA bytes
        "bf1": p["fc1_b"].reshape(1, 600),
        "wf2": p["fc2_w"].T,                               # (6, 600)
        "bf2": p["fc2_b"].reshape(1, 600),
    }


# --------------------------------- main ------------------------------------ #

if __name__ == "__main__":
    key = jax.random.PRNGKey(0)
    k_par, k_obs, k_st = jax.random.split(key, 3)

    params = init_params(k_par)
    kparams = prepare_kernel_params(params)

    # Smallest batch consistent with the module; spatial size chosen so the
    # flatten yields exactly 4608 features (as fc1 requires):
    #   (35, 360) --conv1(3,40)/(2,4)--> (17, 81) --pool(1,3)/(1,3)--> (17, 27)
    #   --conv2(3,3)/(2,3)--> (8, 9);  64 * 8 * 9 = 4608.
    B = 2
    obs = jax.random.normal(k_obs, (B, 1, 35, 360), jnp.float32)   # NCHW
    state = jax.random.normal(k_st, (B, 6), jnp.float32)

    fwd = jax.jit(embedding_network_forward)
    out = jax.block_until_ready(fwd(kparams, obs, state))

    ref = jax.block_until_ready(jax.jit(reference_forward)(params, obs, state))

    assert out.shape == (B, 1200), out.shape
    max_err = float(jnp.max(jnp.abs(out - ref)))
    assert max_err < 1e-2, f"max abs error vs reference: {max_err}"
    print("KERNEL_OK")
</pallas_src>

<mosaic_0001>
module attributes {stable_mosaic.version = 11 : i64} {
  func.func @conv1_bn_pool_kernel(%arg0: memref<3x120x918xf32, #tpu.memory_space<vmem>>, %arg1: memref<32x120xf32, #tpu.memory_space<vmem>>, %arg2: memref<32x1xf32, #tpu.memory_space<vmem>>, %arg3: memref<32x1xf32, #tpu.memory_space<vmem>>, %arg4: memref<32x1xf32, #tpu.memory_space<vmem>>, %arg5: memref<32x918xf32, #tpu.memory_space<vmem>>) attributes {dimension_semantics = [], scalar_prefetch = 0 : i64, scratch_operands = 0 : i64, tpu.core_type = #tpu.core_type<tc>} {
    %c0 = arith.constant 0 : index
    %c0_0 = arith.constant 0 : index
    %0 = vector.load %arg1[%c0, %c0_0] : memref<32x120xf32, #tpu.memory_space<vmem>>, vector<32x120xf32>
    %c0_1 = arith.constant 0 : index
    %c0_2 = arith.constant 0 : index
    %1 = vector.load %arg2[%c0_1, %c0_2] : memref<32x1xf32, #tpu.memory_space<vmem>>, vector<32x1xf32>
    %c0_3 = arith.constant 0 : index
    %c0_4 = arith.constant 0 : index
    %c0_5 = arith.constant 0 : index
    %2 = vector.load %arg0[%c0_3, %c0_4, %c0_5] : memref<3x120x918xf32, #tpu.memory_space<vmem>>, vector<1x120x918xf32>
    %3 = vector.shape_cast %2 : vector<1x120x918xf32> to vector<120x918xf32>
    %cst = arith.constant dense<0.000000e+00> : vector<32x918xf32>
    %4 = tpu.matmul %0, %3, %cst {dimension_numbers = #tpu.dot_dimension_numbers<[1], [0], [0], [1], [0, 0, 1, 1], [], []>} : vector<32x120xf32>, vector<120x918xf32>, vector<32x918xf32> -> vector<32x918xf32>
    %5 = vector.broadcast %1 : vector<32x1xf32> to vector<32x918xf32>
    %6 = arith.addf %4, %5 : vector<32x918xf32>
    %cst_6 = arith.constant 0.000000e+00 : f32
    %7 = vector.broadcast %cst_6 : f32 to vector<32x918xf32>
    %8 = arith.maximumf %6, %7 : vector<32x918xf32>
    %c1 = arith.constant 1 : index
    %c0_7 = arith.constant 0 : index
    %c0_8 = arith.constant 0 : index
    %9 = vector.load %arg0[%c1, %c0_7, %c0_8] : memref<3x120x918xf32, #tpu.memory_space<vmem>>, vector<1x120x918xf32>
    %10 = vector.shape_cast %9 : vector<1x120x918xf32> to vector<120x918xf32>
    %cst_9 = arith.constant dense<0.000000e+00> : vector<32x918xf32>
    %11 = tpu.matmul %0, %10, %cst_9 {dimension_numbers = #tpu.dot_dimension_numbers<[1], [0], [0], [1], [0, 0, 1, 1], [], []>} : vector<32x120xf32>, vector<120x918xf32>, vector<32x918xf32> -> vector<32x918xf32>
    %12 = vector.broadcast %1 : vector<32x1xf32> to vector<32x918xf32>
    %13 = arith.addf %11, %12 : vector<32x918xf32>
    %cst_10 = arith.constant 0.000000e+00 : f32
    %14 = vector.broadcast %cst_10 : f32 to vector<32x918xf32>
    %15 = arith.maximumf %13, %14 : vector<32x918xf32>
    %c2 = arith.constant 2 : index
    %c0_11 = arith.constant 0 : index
    %c0_12 = arith.constant 0 : index
    %16 = vector.load %arg0[%c2, %c0_11, %c0_12] : memref<3x120x918xf32, #tpu.memory_space<vmem>>, vector<1x120x918xf32>
    %17 = vector.shape_cast %16 : vector<1x120x918xf32> to vector<120x918xf32>
    %cst_13 = arith.constant dense<0.000000e+00> : vector<32x918xf32>
    %18 = tpu.matmul %0, %17, %cst_13 {dimension_numbers = #tpu.dot_dimension_numbers<[1], [0], [0], [1], [0, 0, 1, 1], [], []>} : vector<32x120xf32>, vector<120x918xf32>, vector<32x918xf32> -> vector<32x918xf32>
    %19 = vector.broadcast %1 : vector<32x1xf32> to vector<32x918xf32>
    %20 = arith.addf %18, %19 : vector<32x918xf32>
    %cst_14 = arith.constant 0.000000e+00 : f32
    %21 = vector.broadcast %cst_14 : f32 to vector<32x918xf32>
    %22 = arith.maximumf %20, %21 : vector<32x918xf32>
    %cst_15 = arith.constant dense<0.000000e+00> : vector<32xf32>
    %23 = vector.multi_reduction <add>, %8, %cst_15 [1] : vector<32x918xf32> to vector<32xf32>
    %24 = vector.shape_cast %23 : vector<32xf32> to vector<32x1xf32>
    %cst_16 = arith.constant 0.000000e+00 : f32
    %25 = vector.broadcast %cst_16 : f32 to vector<32x1xf32>
    %26 = arith.addf %25, %24 : vector<32x1xf32>
    %cst_17 = arith.constant dense<0.000000e+00> : vector<32xf32>
    %27 = vector.multi_reduction <add>, %15, %cst_17 [1] : vector<32x918xf32> to vector<32xf32>
    %28 = vector.shape_cast %27 : vector<32xf32> to vector<32x1xf32>
    %29 = arith.addf %26, %28 : vector<32x1xf32>
    %cst_18 = arith.constant dense<0.000000e+00> : vector<32xf32>
    %30 = vector.multi_reduction <add>, %22, %cst_18 [1] : vector<32x918xf32> to vector<32xf32>
    %31 = vector.shape_cast %30 : vector<32xf32> to vector<32x1xf32>
    %32 = arith.addf %29, %31 : vector<32x1xf32>
    %cst_19 = arith.constant 2.754000e+03 : f32
    %33 = vector.broadcast %cst_19 : f32 to vector<32x1xf32>
    %34 = arith.divf %32, %33 : vector<32x1xf32>
    %35 = vector.broadcast %34 : vector<32x1xf32> to vector<32x918xf32>
    %36 = arith.subf %8, %35 : vector<32x918xf32>
    %37 = arith.mulf %36, %36 : vector<32x918xf32>
    %cst_20 = arith.constant dense<0.000000e+00> : vector<32xf32>
    %38 = vector.multi_reduction <add>, %37, %cst_20 [1] : vector<32x918xf32> to vector<32xf32>
    %39 = vector.shape_cast %38 : vector<32xf32> to vector<32x1xf32>
    %cst_21 = arith.constant 0.000000e+00 : f32
    %40 = vector.broadcast %cst_21 : f32 to vector<32x1xf32>
    %41 = arith.addf %40, %39 : vector<32x1xf32>
    %42 = vector.broadcast %34 : vector<32x1xf32> to vector<32x918xf32>
    %43 = arith.subf %15, %42 : vector<32x918xf32>
    %44 = arith.mulf %43, %43 : vector<32x918xf32>
    %cst_22 = arith.constant dense<0.000000e+00> : vector<32xf32>
    %45 = vector.multi_reduction <add>, %44, %cst_22 [1] : vector<32x918xf32> to vector<32xf32>
    %46 = vector.shape_cast %45 : vector<32xf32> to vector<32x1xf32>
    %47 = arith.addf %41, %46 : vector<32x1xf32>
    %48 = vector.broadcast %34 : vector<32x1xf32> to vector<32x918xf32>
    %49 = arith.subf %22, %48 : vector<32x918xf32>
    %50 = arith.mulf %49, %49 : vector<32x918xf32>
    %cst_23 = arith.constant dense<0.000000e+00> : vector<32xf32>
    %51 = vector.multi_reduction <add>, %50, %cst_23 [1] : vector<32x918xf32> to vector<32xf32>
    %52 = vector.shape_cast %51 : vector<32xf32> to vector<32x1xf32>
    %53 = arith.addf %47, %52 : vector<32x1xf32>
    %cst_24 = arith.constant 2.754000e+03 : f32
    %54 = vector.broadcast %cst_24 : f32 to vector<32x1xf32>
    %55 = arith.divf %53, %54 : vector<32x1xf32>
    %c0_25 = arith.constant 0 : index
    %c0_26 = arith.constant 0 : index
    %56 = vector.load %arg3[%c0_25, %c0_26] : memref<32x1xf32, #tpu.memory_space<vmem>>, vector<32x1xf32>
    %cst_27 = arith.constant 9.99999974E-6 : f32
    %57 = vector.broadcast %cst_27 : f32 to vector<32x1xf32>
    %58 = arith.addf %55, %57 : vector<32x1xf32>
    %59 = math.rsqrt %58 : vector<32x1xf32>
    %60 = arith.mulf %56, %59 : vector<32x1xf32>
    %c0_28 = arith.constant 0 : index
    %c0_29 = arith.constant 0 : index
    %61 = vector.load %arg4[%c0_28, %c0_29] : memref<32x1xf32, #tpu.memory_space<vmem>>, vector<32x1xf32>
    %62 = arith.mulf %34, %60 : vector<32x1xf32>
    %63 = arith.subf %61, %62 : vector<32x1xf32>
    %64 = vector.broadcast %60 : vector<32x1xf32> to vector<32x918xf32>
    %65 = arith.mulf %8, %64 : vector<32x918xf32>
    %66 = vector.broadcast %63 : vector<32x1xf32> to vector<32x918xf32>
    %67 = arith.addf %65, %66 : vector<32x918xf32>
    %68 = vector.broadcast %60 : vector<32x1xf32> to vector<32x918xf32>
    %69 = arith.mulf %15, %68 : vector<32x918xf32>
    %70 = vector.broadcast %63 : vector<32x1xf32> to vector<32x918xf32>
    %71 = arith.addf %69, %70 : vector<32x918xf32>
    %72 = arith.maximumf %67, %71 : vector<32x918xf32>
    %73 = vector.broadcast %60 : vector<32x1xf32> to vector<32x918xf32>
    %74 = arith.mulf %22, %73 : vector<32x918xf32>
    %75 = vector.broadcast %63 : vector<32x1xf32> to vector<32x918xf32>
    %76 = arith.addf %74, %75 : vector<32x918xf32>
    %77 = arith.maximumf %72, %76 : vector<32x918xf32>
    %c0_30 = arith.constant 0 : index
    %c0_31 = arith.constant 0 : index
    %78 = vector.load %arg5[%c0_30, %c0_31] : memref<32x918xf32, #tpu.memory_space<vmem>>, vector<32x918xf32>
    tpu.vector_store %arg5[%c0_30, %c0_31], %77 {strides = array<i32>} : memref<32x918xf32, #tpu.memory_space<vmem>>, vector<32x918xf32>,
    return
  }
}

module attributes {stable_mosaic.version = 11 : i64} {
  func.func @conv2_bn_kernel(%arg0: memref<2x288x72xf32, #tpu.memory_space<vmem>>, %arg1: memref<64x288xf32, #tpu.memory_space<vmem>>, %arg2: memref<64x1xf32, #tpu.memory_space<vmem>>, %arg3: memref<64x1xf32, #tpu.memory_space<vmem>>, %arg4: memref<64x1xf32, #tpu.memory_space<vmem>>, %arg5: memref<2x64x72xf32, #tpu.memory_space<vmem>>) attributes {dimension_semantics = [], scalar_prefetch = 0 : i64, scratch_operands = 0 : i64, tpu.core_type = #tpu.core_type<tc>} {
    %c0 = arith.constant 0 : index
    %c0_0 = arith.constant 0 : index
    %0 = vector.load %arg1[%c0, %c0_0] : memref<64x288xf32, #tpu.memory_space<vmem>>, vector<64x288xf32>
    %c0_1 = arith.constant 0 : index
    %c0_2 = arith.constant 0 : index
    %1 = vector.load %arg2[%c0_1, %c0_2] : memref<64x1xf32, #tpu.memory_space<vmem>>, vector<64x1xf32>
    %c0_3 = arith.constant 0 : index
    %c0_4 = arith.constant 0 : index
    %c0_5 = arith.constant 0 : index
    %2 = vector.load %arg0[%c0_3, %c0_4, %c0_5] : memref<2x288x72xf32, #tpu.memory_space<vmem>>, vector<1x288x72xf32>
    %3 = vector.shape_cast %2 : vector<1x288x72xf32> to vector<288x72xf32>
    %cst = arith.constant dense<0.000000e+00> : vector<64x72xf32>
    %4 = tpu.matmul %0, %3, %cst {dimension_numbers = #tpu.dot_dimension_numbers<[1], [0], [0], [1], [0, 0, 1, 1], [], []>} : vector<64x288xf32>, vector<288x72xf32>, vector<64x72xf32> -> vector<64x72xf32>
    %5 = vector.broadcast %1 : vector<64x1xf32> to vector<64x72xf32>
    %6 = arith.addf %4, %5 : vector<64x72xf32>
    %cst_6 = arith.constant 0.000000e+00 : f32
    %7 = vector.broadcast %cst_6 : f32 to vector<64x72xf32>
    %8 = arith.maximumf %6, %7 : vector<64x72xf32>
    %c1 = arith.constant 1 : index
    %c0_7 = arith.constant 0 : index
    %c0_8 = arith.constant 0 : index
    %9 = vector.load %arg0[%c1, %c0_7, %c0_8] : memref<2x288x72xf32, #tpu.memory_space<vmem>>, vector<1x288x72xf32>
    %10 = vector.shape_cast %9 : vector<1x288x72xf32> to vector<288x72xf32>
    %cst_9 = arith.constant dense<0.000000e+00> : vector<64x72xf32>
    %11 = tpu.matmul %0, %10, %cst_9 {dimension_numbers = #tpu.dot_dimension_numbers<[1], [0], [0], [1], [0, 0, 1, 1], [], []>} : vector<64x288xf32>, vector<288x72xf32>, vector<64x72xf32> -> vector<64x72xf32>
    %12 = vector.broadcast %1 : vector<64x1xf32> to vector<64x72xf32>
    %13 = arith.addf %11, %12 : vector<64x72xf32>
    %cst_10 = arith.constant 0.000000e+00 : f32
    %14 = vector.broadcast %cst_10 : f32 to vector<64x72xf32>
    %15 = arith.maximumf %13, %14 : vector<64x72xf32>
    %cst_11 = arith.constant dense<0.000000e+00> : vector<64xf32>
    %16 = vector.multi_reduction <add>, %8, %cst_11 [1] : vector<64x72xf32> to vector<64xf32>
    %17 = vector.shape_cast %16 : vector<64xf32> to vector<64x1xf32>
    %cst_12 = arith.constant 0.000000e+00 : f32
    %18 = vector.broadcast %cst_12 : f32 to vector<64x1xf32>
    %19 = arith.addf %18, %17 : vector<64x1xf32>
    %cst_13 = arith.constant dense<0.000000e+00> : vector<64xf32>
    %20 = vector.multi_reduction <add>, %15, %cst_13 [1] : vector<64x72xf32> to vector<64xf32>
    %21 = vector.shape_cast %20 : vector<64xf32> to vector<64x1xf32>
    %22 = arith.addf %19, %21 : vector<64x1xf32>
    %cst_14 = arith.constant 1.440000e+02 : f32
    %23 = vector.broadcast %cst_14 : f32 to vector<64x1xf32>
    %24 = arith.divf %22, %23 : vector<64x1xf32>
    %25 = vector.broadcast %24 : vector<64x1xf32> to vector<64x72xf32>
    %26 = arith.subf %8, %25 : vector<64x72xf32>
    %27 = arith.mulf %26, %26 : vector<64x72xf32>
    %cst_15 = arith.constant dense<0.000000e+00> : vector<64xf32>
    %28 = vector.multi_reduction <add>, %27, %cst_15 [1] : vector<64x72xf32> to vector<64xf32>
    %29 = vector.shape_cast %28 : vector<64xf32> to vector<64x1xf32>
    %cst_16 = arith.constant 0.000000e+00 : f32
    %30 = vector.broadcast %cst_16 : f32 to vector<64x1xf32>
    %31 = arith.addf %30, %29 : vector<64x1xf32>
    %32 = vector.broadcast %24 : vector<64x1xf32> to vector<64x72xf32>
    %33 = arith.subf %15, %32 : vector<64x72xf32>
    %34 = arith.mulf %33, %33 : vector<64x72xf32>
    %cst_17 = arith.constant dense<0.000000e+00> : vector<64xf32>
    %35 = vector.multi_reduction <add>, %34, %cst_17 [1] : vector<64x72xf32> to vector<64xf32>
    %36 = vector.shape_cast %35 : vector<64xf32> to vector<64x1xf32>
    %37 = arith.addf %31, %36 : vector<64x1xf32>
    %cst_18 = arith.constant 1.440000e+02 : f32
    %38 = vector.broadcast %cst_18 : f32 to vector<64x1xf32>
    %39 = arith.divf %37, %38 : vector<64x1xf32>
    %c0_19 = arith.constant 0 : index
    %c0_20 = arith.constant 0 : index
    %40 = vector.load %arg3[%c0_19, %c0_20] : memref<64x1xf32, #tpu.memory_space<vmem>>, vector<64x1xf32>
    %cst_21 = arith.constant 9.99999974E-6 : f32
    %41 = vector.broadcast %cst_21 : f32 to vector<64x1xf32>
    %42 = arith.addf %39, %41 : vector<64x1xf32>
    %43 = math.rsqrt %42 : vector<64x1xf32>
    %44 = arith.mulf %40, %43 : vector<64x1xf32>
    %c0_22 = arith.constant 0 : index
    %c0_23 = arith.constant 0 : index
    %45 = vector.load %arg4[%c0_22, %c0_23] : memref<64x1xf32, #tpu.memory_space<vmem>>, vector<64x1xf32>
    %46 = arith.mulf %24, %44 : vector<64x1xf32>
    %47 = arith.subf %45, %46 : vector<64x1xf32>
    %48 = vector.broadcast %44 : vector<64x1xf32> to vector<64x72xf32>
    %49 = arith.mulf %8, %48 : vector<64x72xf32>
    %50 = vector.broadcast %47 : vector<64x1xf32> to vector<64x72xf32>
    %51 = arith.addf %49, %50 : vector<64x72xf32>
    %c0_24 = arith.constant 0 : index
    %c0_25 = arith.constant 0 : index
    %c0_26 = arith.constant 0 : index
    %52 = vector.load %arg5[%c0_24, %c0_25, %c0_26] : memref<2x64x72xf32, #tpu.memory_space<vmem>>, vector<1x64x72xf32>
    %53 = vector.shape_cast %52 : vector<1x64x72xf32> to vector<64x72xf32>
    %54 = vector.shape_cast %51 : vector<64x72xf32> to vector<1x64x72xf32>
    tpu.vector_store %arg5[%c0_24, %c0_25, %c0_26], %54 {strides = array<i32>} : memref<2x64x72xf32, #tpu.memory_space<vmem>>, vector<1x64x72xf32>,
    %55 = vector.broadcast %44 : vector<64x1xf32> to vector<64x72xf32>
    %56 = arith.mulf %15, %55 : vector<64x72xf32>
    %57 = vector.broadcast %47 : vector<64x1xf32> to vector<64x72xf32>
    %58 = arith.addf %56, %57 : vector<64x72xf32>
    %c1_27 = arith.constant 1 : index
    %c0_28 = arith.constant 0 : index
    %c0_29 = arith.constant 0 : index
    %59 = vector.load %arg5[%c1_27, %c0_28, %c0_29] : memref<2x64x72xf32, #tpu.memory_space<vmem>>, vector<1x64x72xf32>
    %60 = vector.shape_cast %59 : vector<1x64x72xf32> to vector<64x72xf32>
    %61 = vector.shape_cast %58 : vector<64x72xf32> to vector<1x64x72xf32>
    tpu.vector_store %arg5[%c1_27, %c0_28, %c0_29], %61 {strides = array<i32>} : memref<2x64x72xf32, #tpu.memory_space<vmem>>, vector<1x64x72xf32>,
    return
  }
}

module attributes {stable_mosaic.version = 11 : i64} {
  func.func @fc_concat_kernel(%arg0: memref<2x4608xf32, #tpu.memory_space<vmem>>, %arg1: memref<4608x600xbf16, #tpu.memory_space<vmem>>, %arg2: memref<1x600xf32, #tpu.memory_space<vmem>>, %arg3: memref<2x6xf32, #tpu.memory_space<vmem>>, %arg4: memref<6x600xf32, #tpu.memory_space<vmem>>, %arg5: memref<1x600xf32, #tpu.memory_space<vmem>>, %arg6: memref<2x1200xf32, #tpu.memory_space<vmem>>) attributes {dimension_semantics = [], scalar_prefetch = 0 : i64, scratch_operands = 0 : i64, tpu.core_type = #tpu.core_type<tc>} {
    %c0 = arith.constant 0 : index
    %c0_0 = arith.constant 0 : index
    %0 = vector.load %arg0[%c0, %c0_0] : memref<2x4608xf32, #tpu.memory_space<vmem>>, vector<2x4608xf32>
    %1 = arith.truncf %0 : vector<2x4608xf32> to vector<2x4608xbf16>
    %c0_1 = arith.constant 0 : index
    %c0_2 = arith.constant 0 : index
    %2 = vector.load %arg1[%c0_1, %c0_2] : memref<4608x600xbf16, #tpu.memory_space<vmem>>, vector<4608x600xbf16>
    %cst = arith.constant dense<0.000000e+00> : vector<2x600xf32>
    %3 = tpu.matmul %1, %2, %cst {dimension_numbers = #tpu.dot_dimension_numbers<[1], [0], [0], [1], [0, 0, 1, 1], [], []>} : vector<2x4608xbf16>, vector<4608x600xbf16>, vector<2x600xf32> -> vector<2x600xf32>
    %c0_3 = arith.constant 0 : index
    %c0_4 = arith.constant 0 : index
    %4 = vector.load %arg2[%c0_3, %c0_4] : memref<1x600xf32, #tpu.memory_space<vmem>>, vector<1x600xf32>
    %5 = vector.broadcast %4 : vector<1x600xf32> to vector<2x600xf32>
    %6 = arith.addf %3, %5 : vector<2x600xf32>
    %cst_5 = arith.constant 0.000000e+00 : f32
    %7 = vector.broadcast %cst_5 : f32 to vector<2x600xf32>
    %8 = arith.maximumf %6, %7 : vector<2x600xf32>
    %c0_6 = arith.constant 0 : index
    %c0_7 = arith.constant 0 : index
    %9 = vector.load %arg3[%c0_6, %c0_7] : memref<2x6xf32, #tpu.memory_space<vmem>>, vector<2x6xf32>
    %c0_8 = arith.constant 0 : index
    %c0_9 = arith.constant 0 : index
    %10 = vector.load %arg4[%c0_8, %c0_9] : memref<6x600xf32, #tpu.memory_space<vmem>>, vector<6x600xf32>
    %cst_10 = arith.constant dense<0.000000e+00> : vector<2x600xf32>
    %11 = tpu.matmul %9, %10, %cst_10 {dimension_numbers = #tpu.dot_dimension_numbers<[1], [0], [0], [1], [0, 0, 1, 1], [], []>} : vector<2x6xf32>, vector<6x600xf32>, vector<2x600xf32> -> vector<2x600xf32>
    %c0_11 = arith.constant 0 : index
    %c0_12 = arith.constant 0 : index
    %12 = vector.load %arg5[%c0_11, %c0_12] : memref<1x600xf32, #tpu.memory_space<vmem>>, vector<1x600xf32>
    %13 = vector.broadcast %12 : vector<1x600xf32> to vector<2x600xf32>
    %14 = arith.addf %11, %13 : vector<2x600xf32>
    %cst_13 = arith.constant 0.000000e+00 : f32
    %15 = vector.broadcast %cst_13 : f32 to vector<2x600xf32>
    %16 = arith.maximumf %14, %15 : vector<2x600xf32>
    %c0_14 = arith.constant 0 : index
    %c0_15 = arith.constant 0 : index
    %17 = vector.load %arg6[%c0_14, %c0_15] : memref<2x1200xf32, #tpu.memory_space<vmem>>, vector<2x600xf32>
    tpu.vector_store %arg6[%c0_14, %c0_15], %8 {strides = array<i32>} : memref<2x1200xf32, #tpu.memory_space<vmem>>, vector<2x600xf32>,
    %c0_16 = arith.constant 0 : index
    %c600 = arith.constant 600 : index
    %18 = vector.load %arg6[%c0_16, %c600] : memref<2x1200xf32, #tpu.memory_space<vmem>>, vector<2x600xf32>
    tpu.vector_store %arg6[%c0_16, %c600], %16 {strides = array<i32>} : memref<2x1200xf32, #tpu.memory_space<vmem>>, vector<2x600xf32>,
    return
  }
}

</mosaic_0001>

<llo_original>
// kernel: embedding_network_forward.3
$region0: #{embedding_network_forward.3}
  #allocation0 [shape = 'u32[]', space=smem, size = 0x4, offset = 0x4, fixed_abs, tag = 'smem constant byte address 0x4 - core index']
  #allocation1 [shape = 'u32[72,128]{1,0:T(1,128)}', space=vmem, size = 0x9000, scoped, tag = 'internal scratch']
  %s0 = inlined_call_operand.vmem [shape: f32[3,120,918], index: 0, kind: input, shape index: {}]
  %s1 = inlined_call_operand.vmem [shape: f32[32,120], index: 1, kind: input, shape index: {}]
  %s2 = inlined_call_operand.vmem [shape: f32[32,1], index: 2, kind: input, shape index: {}]
  %s3 = inlined_call_operand.vmem [shape: f32[32,1], index: 3, kind: input, shape index: {}]
  %s4 = inlined_call_operand.vmem [shape: f32[32,1], index: 4, kind: input, shape index: {}]
  %s5 = inlined_call_operand.vmem [shape: f32[32,918], index: 5, kind: output, shape index: {}]
  %s6 = sld [smem:[#allocation0]]
  $region30: #{embedding_network_forward.3} parent=0
    _
  %s8 = ssub.s32 1, %s6
  %s9 = scalar_select 0, %s8, %s6
  // Predicated region
  $region2: #{embedding_network_forward.3} parent=0 // pred_check
    _
  $region3: #{embedding_network_forward.3} parent=0 // pred_check_branch
    %11 = sbr.rel (0) target = $region5
  $region4: #{embedding_network_forward.3} parent=0 // pred_region
    _
  $region5: #{embedding_network_forward.3} parent=0 // pred_fallthru
    _
  // Predicated region
  $region6: #{embedding_network_forward.3} parent=0 // pred_check
    _
  $region7: #{embedding_network_forward.3} parent=0 // pred_check_branch
    %13 = sbr.rel (0) target = $region9
  $region8: #{embedding_network_forward.3} parent=0 // pred_region
    _
  $region9: #{embedding_network_forward.3} parent=0 // pred_fallthru
    _
  // Predicated region
  $region10: #{embedding_network_forward.3} parent=0 // pred_check
    _
  $region11: #{embedding_network_forward.3} parent=0 // pred_check_branch
    %15 = sbr.rel (0) target = $region13
  $region12: #{embedding_network_forward.3} parent=0 // pred_region
    _
  $region13: #{embedding_network_forward.3} parent=0 // pred_fallthru
    _
  // Predicated region
  $region14: #{embedding_network_forward.3} parent=0 // pred_check
    _
  $region15: #{embedding_network_forward.3} parent=0 // pred_check_branch
    %17 = sbr.rel (0) target = $region17
  $region16: #{embedding_network_forward.3} parent=0 // pred_region
    _
  $region17: #{embedding_network_forward.3} parent=0 // pred_fallthru
    _
  // Predicated region
  $region18: #{embedding_network_forward.3} parent=0 // pred_check
    _
  $region19: #{embedding_network_forward.3} parent=0 // pred_check_branch
    %19 = sbr.rel (0) target = $region21
  $region20: #{embedding_network_forward.3} parent=0 // pred_region
    _
  $region21: #{embedding_network_forward.3} parent=0 // pred_fallthru
    _
  %v20 = vld [vmem:[%s1] sm:$0xff]
  %v21 = vld [vmem:[%s1 + $0x8] sm:$0xff]
  %v22 = vld [vmem:[%s1 + $0x10] sm:$0xff]
  %v23 = vld [vmem:[%s1 + $0x18] sm:$0xff]
  %v24 = vld [vmem:[%s2] sm:$0xff]
  %v25 = vld [vmem:[%s2 + $0x8] sm:$0xff]
  %v26 = vld [vmem:[%s2 + $0x10] sm:$0xff]
  %v27 = vld [vmem:[%s2 + $0x18] sm:$0xff]
  %v28 = vld [vmem:[%s0] sm:$0xff]
  %v29 = vld [vmem:[%s0 + $0x8] sm:$0xff]
  %v30 = vld [vmem:[%s0 + $0x10] sm:$0xff]
  %v31 = vld [vmem:[%s0 + $0x18] sm:$0xff]
  %v32 = vld [vmem:[%s0 + $0x20] sm:$0xff]
  %v33 = vld [vmem:[%s0 + $0x28] sm:$0xff]
  %v34 = vld [vmem:[%s0 + $0x30] sm:$0xff]
  %v35 = vld [vmem:[%s0 + $0x38] sm:$0xff]
  %v36 = vld [vmem:[%s0 + $0x40] sm:$0xff]
  %v37 = vld [vmem:[%s0 + $0x48] sm:$0xff]
  %v38 = vld [vmem:[%s0 + $0x50] sm:$0xff]
  %v39 = vld [vmem:[%s0 + $0x58] sm:$0xff]
  %v40 = vld [vmem:[%s0 + $0x60] sm:$0xff]
  %v41 = vld [vmem:[%s0 + $0x68] sm:$0xff]
  %v42 = vld [vmem:[%s0 + $0x70] sm:$0xff]
  %v43 = vld [vmem:[%s0 + $0x78] sm:$0xff]
  %v44 = vld [vmem:[%s0 + $0x80] sm:$0xff]
  %v45 = vld [vmem:[%s0 + $0x88] sm:$0xff]
  %v46 = vld [vmem:[%s0 + $0x90] sm:$0xff]
  %v47 = vld [vmem:[%s0 + $0x98] sm:$0xff]
  %v48 = vld [vmem:[%s0 + $0xa0] sm:$0xff]
  %v49 = vld [vmem:[%s0 + $0xa8] sm:$0xff]
  %v50 = vld [vmem:[%s0 + $0xb0] sm:$0xff]
  %v51 = vld [vmem:[%s0 + $0xb8] sm:$0xff]
  %v52 = vld [vmem:[%s0 + $0xc0] sm:$0xff]
  %v53 = vld [vmem:[%s0 + $0xc8] sm:$0xff]
  %v54 = vld [vmem:[%s0 + $0xd0] sm:$0xff]
  %v55 = vld [vmem:[%s0 + $0xd8] sm:$0xff]
  %v56 = vld [vmem:[%s0 + $0xe0] sm:$0xff]
  %v57 = vld [vmem:[%s0 + $0xe8] sm:$0xff]
  %v58 = vld [vmem:[%s0 + $0xf0] sm:$0xff]
  %v59 = vld [vmem:[%s0 + $0xf8] sm:$0xff]
  %v60 = vld [vmem:[%s0 + $0x100] sm:$0xff]
  %v61 = vld [vmem:[%s0 + $0x108] sm:$0xff]
  %v62 = vld [vmem:[%s0 + $0x110] sm:$0xff]
  %v63 = vld [vmem:[%s0 + $0x118] sm:$0xff]
  %v64 = vld [vmem:[%s0 + $0x120] sm:$0xff]
  %v65 = vld [vmem:[%s0 + $0x128] sm:$0xff]
  %v66 = vld [vmem:[%s0 + $0x130] sm:$0xff]
  %v67 = vld [vmem:[%s0 + $0x138] sm:$0xff]
  %v68 = vld [vmem:[%s0 + $0x140] sm:$0xff]
  %v69 = vld [vmem:[%s0 + $0x148] sm:$0xff]
  %v70 = vld [vmem:[%s0 + $0x150] sm:$0xff]
  %v71 = vld [vmem:[%s0 + $0x158] sm:$0xff]
  %v72 = vld [vmem:[%s0 + $0x160] sm:$0xff]
  %v73 = vld [vmem:[%s0 + $0x168] sm:$0xff]
  %v74 = vld [vmem:[%s0 + $0x170] sm:$0xff]
  %v75 = vld [vmem:[%s0 + $0x178] sm:$0xff]
  %v76 = vld [vmem:[%s0 + $0x180] sm:$0xff]
  %v77 = vld [vmem:[%s0 + $0x188] sm:$0xff]
  %v78 = vld [vmem:[%s0 + $0x190] sm:$0xff]
  %v79 = vld [vmem:[%s0 + $0x198] sm:$0xff]
  %v80 = vld [vmem:[%s0 + $0x1a0] sm:$0xff]
  %v81 = vld [vmem:[%s0 + $0x1a8] sm:$0xff]
  %v82 = vld [vmem:[%s0 + $0x1b0] sm:$0xff]
  %v83 = vld [vmem:[%s0 + $0x1b8] sm:$0xff]
  %v84 = vld [vmem:[%s0 + $0x1c0] sm:$0xff]
  %v85 = vld [vmem:[%s0 + $0x1c8] sm:$0xff]
  %v86 = vld [vmem:[%s0 + $0x1d0] sm:$0xff]
  %v87 = vld [vmem:[%s0 + $0x1d8] sm:$0xff]
  %v88 = vld [vmem:[%s0 + $0x1e0] sm:$0xff]
  %v89 = vld [vmem:[%s0 + $0x1e8] sm:$0xff]
  %v90 = vld [vmem:[%s0 + $0x1f0] sm:$0xff]
  %v91 = vld [vmem:[%s0 + $0x1f8] sm:$0xff]
  %v92 = vld [vmem:[%s0 + $0x200] sm:$0xff]
  %v93 = vld [vmem:[%s0 + $0x208] sm:$0xff]
  %v94 = vld [vmem:[%s0 + $0x210] sm:$0xff]
  %v95 = vld [vmem:[%s0 + $0x218] sm:$0xff]
  %v96 = vld [vmem:[%s0 + $0x220] sm:$0xff]
  %v97 = vld [vmem:[%s0 + $0x228] sm:$0xff]
  %v98 = vld [vmem:[%s0 + $0x230] sm:$0xff]
  %v99 = vld [vmem:[%s0 + $0x238] sm:$0xff]
  %v100 = vld [vmem:[%s0 + $0x240] sm:$0xff]
  %v101 = vld [vmem:[%s0 + $0x248] sm:$0xff]
  %v102 = vld [vmem:[%s0 + $0x250] sm:$0xff]
  %v103 = vld [vmem:[%s0 + $0x258] sm:$0xff]
  %v104 = vld [vmem:[%s0 + $0x260] sm:$0xff]
  %v105 = vld [vmem:[%s0 + $0x268] sm:$0xff]
  %v106 = vld [vmem:[%s0 + $0x270] sm:$0xff]
  %v107 = vld [vmem:[%s0 + $0x278] sm:$0xff]
  %v108 = vld [vmem:[%s0 + $0x280] sm:$0xff]
  %v109 = vld [vmem:[%s0 + $0x288] sm:$0xff]
  %v110 = vld [vmem:[%s0 + $0x290] sm:$0xff]
  %v111 = vld [vmem:[%s0 + $0x298] sm:$0xff]
  %v112 = vld [vmem:[%s0 + $0x2a0] sm:$0xff]
  %v113 = vld [vmem:[%s0 + $0x2a8] sm:$0xff]
  %v114 = vld [vmem:[%s0 + $0x2b0] sm:$0xff]
  %v115 = vld [vmem:[%s0 + $0x2b8] sm:$0xff]
  %v116 = vld [vmem:[%s0 + $0x2c0] sm:$0xff]
  %v117 = vld [vmem:[%s0 + $0x2c8] sm:$0xff]
  %v118 = vld [vmem:[%s0 + $0x2d0] sm:$0xff]
  %v119 = vld [vmem:[%s0 + $0x2d8] sm:$0xff]
  %v120 = vld [vmem:[%s0 + $0x2e0] sm:$0xff]
  %v121 = vld [vmem:[%s0 + $0x2e8] sm:$0xff]
  %v122 = vld [vmem:[%s0 + $0x2f0] sm:$0xff]
  %v123 = vld [vmem:[%s0 + $0x2f8] sm:$0xff]
  %v124 = vld [vmem:[%s0 + $0x300] sm:$0xff]
  %v125 = vld [vmem:[%s0 + $0x308] sm:$0xff]
  %v126 = vld [vmem:[%s0 + $0x310] sm:$0xff]
  %v127 = vld [vmem:[%s0 + $0x318] sm:$0xff]
  %v128 = vld [vmem:[%s0 + $0x320] sm:$0xff]
  %v129 = vld [vmem:[%s0 + $0x328] sm:$0xff]
  %v130 = vld [vmem:[%s0 + $0x330] sm:$0xff]
  %v131 = vld [vmem:[%s0 + $0x338] sm:$0xff]
  %v132 = vld [vmem:[%s0 + $0x340] sm:$0xff]
  %v133 = vld [vmem:[%s0 + $0x348] sm:$0xff]
  %v134 = vld [vmem:[%s0 + $0x350] sm:$0xff]
  %v135 = vld [vmem:[%s0 + $0x358] sm:$0xff]
  %v136 = vld [vmem:[%s0 + $0x360] sm:$0xff]
  %v137 = vld [vmem:[%s0 + $0x368] sm:$0xff]
  %v138 = vld [vmem:[%s0 + $0x370] sm:$0xff]
  %v139 = vld [vmem:[%s0 + $0x378] sm:$0xff]
  %v140 = vld [vmem:[%s0 + $0x380] sm:$0xff]
  %v141 = vld [vmem:[%s0 + $0x388] sm:$0xff]
  %v142 = vld [vmem:[%s0 + $0x390] sm:$0xff]
  %v143 = vld [vmem:[%s0 + $0x398] sm:$0xff]
  %v144 = vld [vmem:[%s0 + $0x3a0] sm:$0xff]
  %v145 = vld [vmem:[%s0 + $0x3a8] sm:$0xff]
  %v146 = vld [vmem:[%s0 + $0x3b0] sm:$0xff]
  %v147 = vld [vmem:[%s0 + $0x3b8] sm:$0xff]
  %149 = vset.pattern.permute.xlu0 0
  %150 = vperm.xlu0 %149, %v24
  %v151 = vpop.permute.xlu0 %150
  %154 = vset.pattern.permute.xlu0 0
  %155 = vperm.xlu0 %154, %v25
  %v156 = vpop.permute.xlu0 %155
  %159 = vset.pattern.permute.xlu0 0
  %160 = vperm.xlu0 %159, %v26
  %v161 = vpop.permute.xlu0 %160
  %164 = vset.pattern.permute.xlu0 0
  %165 = vperm.xlu0 %164, %v27
  %v166 = vpop.permute.xlu0 %165
  %vm168 = vcmask 982016
  %v170 = vsel %vm168, %v20, 0
  %v173 = vsel %vm168, %v21, 0
  %v176 = vsel %vm168, %v22, 0
  %v179 = vsel %vm168, %v23, 0
  %181 = vmatpush.msra.mxu0 0.0
  %182 = vmatpush.msra.mxu0 %v140
  %183 = vmatpush.msra.mxu0 %v132
  %184 = vmatpush.msra.mxu0 %v124
  %185 = vmatpush.msra.mxu0 %v116
  %186 = vmatpush.msra.mxu0 %v108
  %187 = vmatpush.msra.mxu0 %v100
  %188 = vmatpush.msra.mxu0 %v92
  %189 = vmatpush.msra.mxu0 %v84
  %190 = vmatpush.msra.mxu0 %v76
  %191 = vmatpush.msra.mxu0 %v68
  %192 = vmatpush.msra.mxu0 %v60
  %193 = vmatpush.msra.mxu0 %v52
  %194 = vmatpush.msra.mxu0 %v44
  %195 = vmatpush.msra.mxu0 %v36
  %196 = vmatpush.msra.mxu0 %v28
  %197 = vmatmul.f32.gmra.mxu0 %v170
  %v198 = vpop.f32.mrf.mxu0
  %v199 = vadd.f32 %v151, %v198
  %200 = vmatmul.f32.gmra.mxu0 %v173
  %v201 = vpop.f32.mrf.mxu0
  %v202 = vadd.f32 %v156, %v201
  %203 = vmatmul.f32.gmra.mxu0 %v176
  %v204 = vpop.f32.mrf.mxu0
  %v205 = vadd.f32 %v161, %v204
  %206 = vmatmul.f32.gmra.mxu0 %v179
  %v207 = vpop.f32.mrf.mxu0
  %v208 = vadd.f32 %v166, %v207
  %209 = vdwg.mxu0
  %210 = vmatpush.msra.mxu0 0.0
  %211 = vmatpush.msra.mxu0 %v141
  %212 = vmatpush.msra.mxu0 %v133
  %213 = vmatpush.msra.mxu0 %v125
  %214 = vmatpush.msra.mxu0 %v117
  %215 = vmatpush.msra.mxu0 %v109
  %216 = vmatpush.msra.mxu0 %v101
  %217 = vmatpush.msra.mxu0 %v93
  %218 = vmatpush.msra.mxu0 %v85
  %219 = vmatpush.msra.mxu0 %v77
  %220 = vmatpush.msra.mxu0 %v69
  %221 = vmatpush.msra.mxu0 %v61
  %222 = vmatpush.msra.mxu0 %v53
  %223 = vmatpush.msra.mxu0 %v45
  %224 = vmatpush.msra.mxu0 %v37
  %225 = vmatpush.msra.mxu0 %v29
  %226 = vmatmul.f32.gmra.mxu0 %v170
  %v227 = vpop.f32.mrf.mxu0
  %v228 = vadd.f32 %v151, %v227
  %229 = vmatmul.f32.gmra.mxu0 %v173
  %v230 = vpop.f32.mrf.mxu0
  %v231 = vadd.f32 %v156, %v230
  %232 = vmatmul.f32.gmra.mxu0 %v176
  %v233 = vpop.f32.mrf.mxu0
  %v234 = vadd.f32 %v161, %v233
  %235 = vmatmul.f32.gmra.mxu0 %v179
  %v236 = vpop.f32.mrf.mxu0
  %v237 = vadd.f32 %v166, %v236
  %238 = vdwg.mxu0
  %239 = vmatpush.msra.mxu0 0.0
  %240 = vmatpush.msra.mxu0 %v142
  %241 = vmatpush.msra.mxu0 %v134
  %242 = vmatpush.msra.mxu0 %v126
  %243 = vmatpush.msra.mxu0 %v118
  %244 = vmatpush.msra.mxu0 %v110
  %245 = vmatpush.msra.mxu0 %v102
  %246 = vmatpush.msra.mxu0 %v94
  %247 = vmatpush.msra.mxu0 %v86
  %248 = vmatpush.msra.mxu0 %v78
  %249 = vmatpush.msra.mxu0 %v70
  %250 = vmatpush.msra.mxu0 %v62
  %251 = vmatpush.msra.mxu0 %v54
  %252 = vmatpush.msra.mxu0 %v46
  %253 = vmatpush.msra.mxu0 %v38
  %254 = vmatpush.msra.mxu0 %v30
  %255 = vmatmul.f32.gmra.mxu0 %v170
  %v256 = vpop.f32.mrf.mxu0
  %v257 = vadd.f32 %v151, %v256
  %258 = vmatmul.f32.gmra.mxu0 %v173
  %v259 = vpop.f32.mrf.mxu0
  %v260 = vadd.f32 %v156, %v259
  %261 = vmatmul.f32.gmra.mxu0 %v176
  %v262 = vpop.f32.mrf.mxu0
  %v263 = vadd.f32 %v161, %v262
  %264 = vmatmul.f32.gmra.mxu0 %v179
  %v265 = vpop.f32.mrf.mxu0
  %v266 = vadd.f32 %v166, %v265
  %267 = vdwg.mxu0
  %268 = vmatpush.msra.mxu0 0.0
  %269 = vmatpush.msra.mxu0 %v143
  %270 = vmatpush.msra.mxu0 %v135
  %271 = vmatpush.msra.mxu0 %v127
  %272 = vmatpush.msra.mxu0 %v119
  %273 = vmatpush.msra.mxu0 %v111
  %274 = vmatpush.msra.mxu0 %v103
  %275 = vmatpush.msra.mxu0 %v95
  %276 = vmatpush.msra.mxu0 %v87
  %277 = vmatpush.msra.mxu0 %v79
  %278 = vmatpush.msra.mxu0 %v71
  %279 = vmatpush.msra.mxu0 %v63
  %280 = vmatpush.msra.mxu0 %v55
  %281 = vmatpush.msra.mxu0 %v47
  %282 = vmatpush.msra.mxu0 %v39
  %283 = vmatpush.msra.mxu0 %v31
  %284 = vmatmul.f32.gmra.mxu0 %v170
  %v285 = vpop.f32.mrf.mxu0
  %v286 = vadd.f32 %v151, %v285
  %287 = vmatmul.f32.gmra.mxu0 %v173
  %v288 = vpop.f32.mrf.mxu0
  %v289 = vadd.f32 %v156, %v288
  %290 = vmatmul.f32.gmra.mxu0 %v176
  %v291 = vpop.f32.mrf.mxu0
  %v292 = vadd.f32 %v161, %v291
  %293 = vmatmul.f32.gmra.mxu0 %v179
  %v294 = vpop.f32.mrf.mxu0
  %v295 = vadd.f32 %v166, %v294
  %296 = vdwg.mxu0
  %297 = vmatpush.msra.mxu0 0.0
  %298 = vmatpush.msra.mxu0 %v144
  %299 = vmatpush.msra.mxu0 %v136
  %300 = vmatpush.msra.mxu0 %v128
  %301 = vmatpush.msra.mxu0 %v120
  %302 = vmatpush.msra.mxu0 %v112
  %303 = vmatpush.msra.mxu0 %v104
  %304 = vmatpush.msra.mxu0 %v96
  %305 = vmatpush.msra.mxu0 %v88
  %306 = vmatpush.msra.mxu0 %v80
  %307 = vmatpush.msra.mxu0 %v72
  %308 = vmatpush.msra.mxu0 %v64
  %309 = vmatpush.msra.mxu0 %v56
  %310 = vmatpush.msra.mxu0 %v48
  %311 = vmatpush.msra.mxu0 %v40
  %312 = vmatpush.msra.mxu0 %v32
  %313 = vmatmul.f32.gmra.mxu0 %v170
  %v314 = vpop.f32.mrf.mxu0
  %v315 = vadd.f32 %v151, %v314
  %316 = vmatmul.f32.gmra.mxu0 %v173
  %v317 = vpop.f32.mrf.mxu0
  %v318 = vadd.f32 %v156, %v317
  %319 = vmatmul.f32.gmra.mxu0 %v176
  %v320 = vpop.f32.mrf.mxu0
  %v321 = vadd.f32 %v161, %v320
  %322 = vmatmul.f32.gmra.mxu0 %v179
  %v323 = vpop.f32.mrf.mxu0
  %v324 = vadd.f32 %v166, %v323
  %325 = vdwg.mxu0
  %326 = vmatpush.msra.mxu0 0.0
  %327 = vmatpush.msra.mxu0 %v145
  %328 = vmatpush.msra.mxu0 %v137
  %329 = vmatpush.msra.mxu0 %v129
  %330 = vmatpush.msra.mxu0 %v121
  %331 = vmatpush.msra.mxu0 %v113
  %332 = vmatpush.msra.mxu0 %v105
  %333 = vmatpush.msra.mxu0 %v97
  %334 = vmatpush.msra.mxu0 %v89
  %335 = vmatpush.msra.mxu0 %v81
  %336 = vmatpush.msra.mxu0 %v73
  %337 = vmatpush.msra.mxu0 %v65
  %338 = vmatpush.msra.mxu0 %v57
  %339 = vmatpush.msra.mxu0 %v49
  %340 = vmatpush.msra.mxu0 %v41
  %341 = vmatpush.msra.mxu0 %v33
  %342 = vmatmul.f32.gmra.mxu0 %v170
  %v343 = vpop.f32.mrf.mxu0
  %v344 = vadd.f32 %v151, %v343
  %345 = vmatmul.f32.gmra.mxu0 %v173
  %v346 = vpop.f32.mrf.mxu0
  %v347 = vadd.f32 %v156, %v346
  %348 = vmatmul.f32.gmra.mxu0 %v176
  %v349 = vpop.f32.mrf.mxu0
  %v350 = vadd.f32 %v161, %v349
  %351 = vmatmul.f32.gmra.mxu0 %v179
  %v352 = vpop.f32.mrf.mxu0
  %v353 = vadd.f32 %v166, %v352
  %354 = vdwg.mxu0
  %355 = vmatpush.msra.mxu0 0.0
  %356 = vmatpush.msra.mxu0 %v146
  %357 = vmatpush.msra.mxu0 %v138
  %358 = vmatpush.msra.mxu0 %v130
  %359 = vmatpush.msra.mxu0 %v122
  %360 = vmatpush.msra.mxu0 %v114
  %361 = vmatpush.msra.mxu0 %v106
  %362 = vmatpush.msra.mxu0 %v98
  %363 = vmatpush.msra.mxu0 %v90
  %364 = vmatpush.msra.mxu0 %v82
  %365 = vmatpush.msra.mxu0 %v74
  %366 = vmatpush.msra.mxu0 %v66
  %367 = vmatpush.msra.mxu0 %v58
  %368 = vmatpush.msra.mxu0 %v50
  %369 = vmatpush.msra.mxu0 %v42
  %370 = vmatpush.msra.mxu0 %v34
  %371 = vmatmul.f32.gmra.mxu0 %v170
  %v372 = vpop.f32.mrf.mxu0
  %v373 = vadd.f32 %v151, %v372
  %374 = vmatmul.f32.gmra.mxu0 %v173
  %v375 = vpop.f32.mrf.mxu0
  %v376 = vadd.f32 %v156, %v375
  %377 = vmatmul.f32.gmra.mxu0 %v176
  %v378 = vpop.f32.mrf.mxu0
  %v379 = vadd.f32 %v161, %v378
  %380 = vmatmul.f32.gmra.mxu0 %v179
  %v381 = vpop.f32.mrf.mxu0
  %v382 = vadd.f32 %v166, %v381
  %383 = vdwg.mxu0
  %384 = vmatpush.msra.mxu0 0.0
  %385 = vmatpush.msra.mxu0 %v147
  %386 = vmatpush.msra.mxu0 %v139
  %387 = vmatpush.msra.mxu0 %v131
  %388 = vmatpush.msra.mxu0 %v123
  %389 = vmatpush.msra.mxu0 %v115
  %390 = vmatpush.msra.mxu0 %v107
  %391 = vmatpush.msra.mxu0 %v99
  %392 = vmatpush.msra.mxu0 %v91
  %393 = vmatpush.msra.mxu0 %v83
  %394 = vmatpush.msra.mxu0 %v75
  %395 = vmatpush.msra.mxu0 %v67
  %396 = vmatpush.msra.mxu0 %v59
  %397 = vmatpush.msra.mxu0 %v51
  %398 = vmatpush.msra.mxu0 %v43
  %399 = vmatpush.msra.mxu0 %v35
  %400 = vmatmul.f32.gmra.mxu0 %v170
  %v401 = vpop.f32.mrf.mxu0
  %v402 = vadd.f32 %v151, %v401
  %403 = vmatmul.f32.gmra.mxu0 %v173
  %v404 = vpop.f32.mrf.mxu0
  %v405 = vadd.f32 %v156, %v404
  %406 = vmatmul.f32.gmra.mxu0 %v176
  %v407 = vpop.f32.mrf.mxu0
  %v408 = vadd.f32 %v161, %v407
  %409 = vmatmul.f32.gmra.mxu0 %v179
  %v410 = vpop.f32.mrf.mxu0
  %v411 = vadd.f32 %v166, %v410
  %412 = vdwg.mxu0
  %v413 = vmax.f32 %v199, 0.0
  %v414 = vmax.f32 %v228, 0.0
  %v415 = vmax.f32 %v257, 0.0
  %v416 = vmax.f32 %v286, 0.0
  %v417 = vmax.f32 %v315, 0.0
  %v418 = vmax.f32 %v344, 0.0
  %v419 = vmax.f32 %v373, 0.0
  %v420 = vmax.f32 %v402, 0.0
  %v421 = vmax.f32 %v202, 0.0
  %v422 = vmax.f32 %v231, 0.0
  %v423 = vmax.f32 %v260, 0.0
  %v424 = vmax.f32 %v289, 0.0
  %v425 = vmax.f32 %v318, 0.0
  %v426 = vmax.f32 %v347, 0.0
  %v427 = vmax.f32 %v376, 0.0
  %v428 = vmax.f32 %v405, 0.0
  %v429 = vmax.f32 %v205, 0.0
  %v430 = vmax.f32 %v234, 0.0
  %v431 = vmax.f32 %v263, 0.0
  %v432 = vmax.f32 %v292, 0.0
  %v433 = vmax.f32 %v321, 0.0
  %v434 = vmax.f32 %v350, 0.0
  %v435 = vmax.f32 %v379, 0.0
  %v436 = vmax.f32 %v408, 0.0
  %v437 = vmax.f32 %v208, 0.0
  %v438 = vmax.f32 %v237, 0.0
  %v439 = vmax.f32 %v266, 0.0
  %v440 = vmax.f32 %v295, 0.0
  %v441 = vmax.f32 %v324, 0.0
  %v442 = vmax.f32 %v353, 0.0
  %v443 = vmax.f32 %v382, 0.0
  %v444 = vmax.f32 %v411, 0.0
  %s445 = scalar_lea.vmem %s0, 960
  %v446 = vld [vmem:[%s445] sm:$0xff]
  %v447 = vld [vmem:[%s445 + $0x8] sm:$0xff]
  %v448 = vld [vmem:[%s445 + $0x10] sm:$0xff]
  %v449 = vld [vmem:[%s445 + $0x18] sm:$0xff]
  %v450 = vld [vmem:[%s445 + $0x20] sm:$0xff]
  %v451 = vld [vmem:[%s445 + $0x28] sm:$0xff]
  %v452 = vld [vmem:[%s445 + $0x30] sm:$0xff]
  %v453 = vld [vmem:[%s445 + $0x38] sm:$0xff]
  %v454 = vld [vmem:[%s445 + $0x40] sm:$0xff]
  %v455 = vld [vmem:[%s445 + $0x48] sm:$0xff]
  %v456 = vld [vmem:[%s445 + $0x50] sm:$0xff]
  %v457 = vld [vmem:[%s445 + $0x58] sm:$0xff]
  %v458 = vld [vmem:[%s445 + $0x60] sm:$0xff]
  %v459 = vld [vmem:[%s445 + $0x68] sm:$0xff]
  %v460 = vld [vmem:[%s445 + $0x70] sm:$0xff]
  %v461 = vld [vmem:[%s445 + $0x78] sm:$0xff]
  %v462 = vld [vmem:[%s445 + $0x80] sm:$0xff]
  %v463 = vld [vmem:[%s445 + $0x88] sm:$0xff]
  %v464 = vld [vmem:[%s445 + $0x90] sm:$0xff]
  %v465 = vld [vmem:[%s445 + $0x98] sm:$0xff]
  %v466 = vld [vmem:[%s445 + $0xa0] sm:$0xff]
  %v467 = vld [vmem:[%s445 + $0xa8] sm:$0xff]
  %v468 = vld [vmem:[%s445 + $0xb0] sm:$0xff]
  %v469 = vld [vmem:[%s445 + $0xb8] sm:$0xff]
  %v470 = vld [vmem:[%s445 + $0xc0] sm:$0xff]
  %v471 = vld [vmem:[%s445 + $0xc8] sm:$0xff]
  %v472 = vld [vmem:[%s445 + $0xd0] sm:$0xff]
  %v473 = vld [vmem:[%s445 + $0xd8] sm:$0xff]
  %v474 = vld [vmem:[%s445 + $0xe0] sm:$0xff]
  %v475 = vld [vmem:[%s445 + $0xe8] sm:$0xff]
  %v476 = vld [vmem:[%s445 + $0xf0] sm:$0xff]
  %v477 = vld [vmem:[%s445 + $0xf8] sm:$0xff]
  %v478 = vld [vmem:[%s445 + $0x100] sm:$0xff]
  %v479 = vld [vmem:[%s445 + $0x108] sm:$0xff]
  %v480 = vld [vmem:[%s445 + $0x110] sm:$0xff]
  %v481 = vld [vmem:[%s445 + $0x118] sm:$0xff]
  %v482 = vld [vmem:[%s445 + $0x120] sm:$0xff]
  %v483 = vld [vmem:[%s445 + $0x128] sm:$0xff]
  %v484 = vld [vmem:[%s445 + $0x130] sm:$0xff]
  %v485 = vld [vmem:[%s445 + $0x138] sm:$0xff]
  %v486 = vld [vmem:[%s445 + $0x140] sm:$0xff]
  %v487 = vld [vmem:[%s445 + $0x148] sm:$0xff]
  %v488 = vld [vmem:[%s445 + $0x150] sm:$0xff]
  %v489 = vld [vmem:[%s445 + $0x158] sm:$0xff]
  %v490 = vld [vmem:[%s445 + $0x160] sm:$0xff]
  %v491 = vld [vmem:[%s445 + $0x168] sm:$0xff]
  %v492 = vld [vmem:[%s445 + $0x170] sm:$0xff]
  %v493 = vld [vmem:[%s445 + $0x178] sm:$0xff]
  %v494 = vld [vmem:[%s445 + $0x180] sm:$0xff]
  %v495 = vld [vmem:[%s445 + $0x188] sm:$0xff]
  %v496 = vld [vmem:[%s445 + $0x190] sm:$0xff]
  %v497 = vld [vmem:[%s445 + $0x198] sm:$0xff]
  %v498 = vld [vmem:[%s445 + $0x1a0] sm:$0xff]
  %v499 = vld [vmem:[%s445 + $0x1a8] sm:$0xff]
  %v500 = vld [vmem:[%s445 + $0x1b0] sm:$0xff]
  %v501 = vld [vmem:[%s445 + $0x1b8] sm:$0xff]
  %v502 = vld [vmem:[%s445 + $0x1c0] sm:$0xff]
  %v503 = vld [vmem:[%s445 + $0x1c8] sm:$0xff]
  %v504 = vld [vmem:[%s445 + $0x1d0] sm:$0xff]
  %v505 = vld [vmem:[%s445 + $0x1d8] sm:$0xff]
  %v506 = vld [vmem:[%s445 + $0x1e0] sm:$0xff]
  %v507 = vld [vmem:[%s445 + $0x1e8] sm:$0xff]
  %v508 = vld [vmem:[%s445 + $0x1f0] sm:$0xff]
  %v509 = vld [vmem:[%s445 + $0x1f8] sm:$0xff]
  %v510 = vld [vmem:[%s445 + $0x200] sm:$0xff]
  %v511 = vld [vmem:[%s445 + $0x208] sm:$0xff]
  %v512 = vld [vmem:[%s445 + $0x210] sm:$0xff]
  %v513 = vld [vmem:[%s445 + $0x218] sm:$0xff]
  %v514 = vld [vmem:[%s445 + $0x220] sm:$0xff]
  %v515 = vld [vmem:[%s445 + $0x228] sm:$0xff]
  %v516 = vld [vmem:[%s445 + $0x230] sm:$0xff]
  %v517 = vld [vmem:[%s445 + $0x238] sm:$0xff]
  %v518 = vld [vmem:[%s445 + $0x240] sm:$0xff]
  %v519 = vld [vmem:[%s445 + $0x248] sm:$0xff]
  %v520 = vld [vmem:[%s445 + $0x250] sm:$0xff]
  %v521 = vld [vmem:[%s445 + $0x258] sm:$0xff]
  %v522 = vld [vmem:[%s445 + $0x260] sm:$0xff]
  %v523 = vld [vmem:[%s445 + $0x268] sm:$0xff]
  %v524 = vld [vmem:[%s445 + $0x270] sm:$0xff]
  %v525 = vld [vmem:[%s445 + $0x278] sm:$0xff]
  %v526 = vld [vmem:[%s445 + $0x280] sm:$0xff]
  %v527 = vld [vmem:[%s445 + $0x288] sm:$0xff]
  %v528 = vld [vmem:[%s445 + $0x290] sm:$0xff]
  %v529 = vld [vmem:[%s445 + $0x298] sm:$0xff]
  %v530 = vld [vmem:[%s445 + $0x2a0] sm:$0xff]
  %v531 = vld [vmem:[%s445 + $0x2a8] sm:$0xff]
  %v532 = vld [vmem:[%s445 + $0x2b0] sm:$0xff]
  %v533 = vld [vmem:[%s445 + $0x2b8] sm:$0xff]
  %v534 = vld [vmem:[%s445 + $0x2c0] sm:$0xff]
  %v535 = vld [vmem:[%s445 + $0x2c8] sm:$0xff]
  %v536 = vld [vmem:[%s445 + $0x2d0] sm:$0xff]
  %v537 = vld [vmem:[%s445 + $0x2d8] sm:$0xff]
  %v538 = vld [vmem:[%s445 + $0x2e0] sm:$0xff]
  %v539 = vld [vmem:[%s445 + $0x2e8] sm:$0xff]
  %v540 = vld [vmem:[%s445 + $0x2f0] sm:$0xff]
  %v541 = vld [vmem:[%s445 + $0x2f8] sm:$0xff]
  %v542 = vld [vmem:[%s445 + $0x300] sm:$0xff]
  %v543 = vld [vmem:[%s445 + $0x308] sm:$0xff]
  %v544 = vld [vmem:[%s445 + $0x310] sm:$0xff]
  %v545 = vld [vmem:[%s445 + $0x318] sm:$0xff]
  %v546 = vld [vmem:[%s445 + $0x320] sm:$0xff]
  %v547 = vld [vmem:[%s445 + $0x328] sm:$0xff]
  %v548 = vld [vmem:[%s445 + $0x330] sm:$0xff]
  %v549 = vld [vmem:[%s445 + $0x338] sm:$0xff]
  %v550 = vld [vmem:[%s445 + $0x340] sm:$0xff]
  %v551 = vld [vmem:[%s445 + $0x348] sm:$0xff]
  %v552 = vld [vmem:[%s445 + $0x350] sm:$0xff]
  %v553 = vld [vmem:[%s445 + $0x358] sm:$0xff]
  %v554 = vld [vmem:[%s445 + $0x360] sm:$0xff]
  %v555 = vld [vmem:[%s445 + $0x368] sm:$0xff]
  %v556 = vld [vmem:[%s445 + $0x370] sm:$0xff]
  %v557 = vld [vmem:[%s445 + $0x378] sm:$0xff]
  %v558 = vld [vmem:[%s445 + $0x380] sm:$0xff]
  %v559 = vld [vmem:[%s445 + $0x388] sm:$0xff]
  %v560 = vld [vmem:[%s445 + $0x390] sm:$0xff]
  %v561 = vld [vmem:[%s445 + $0x398] sm:$0xff]
  %v562 = vld [vmem:[%s445 + $0x3a0] sm:$0xff]
  %v563 = vld [vmem:[%s445 + $0x3a8] sm:$0xff]
  %v564 = vld [vmem:[%s445 + $0x3b0] sm:$0xff]
  %v565 = vld [vmem:[%s445 + $0x3b8] sm:$0xff]
  %566 = vmatpush.msra.mxu0 0.0
  %567 = vmatpush.msra.mxu0 %v558
  %568 = vmatpush.msra.mxu0 %v550
  %569 = vmatpush.msra.mxu0 %v542
  %570 = vmatpush.msra.mxu0 %v534
  %571 = vmatpush.msra.mxu0 %v526
  %572 = vmatpush.msra.mxu0 %v518
  %573 = vmatpush.msra.mxu0 %v510
  %574 = vmatpush.msra.mxu0 %v502
  %575 = vmatpush.msra.mxu0 %v494
  %576 = vmatpush.msra.mxu0 %v486
  %577 = vmatpush.msra.mxu0 %v478
  %578 = vmatpush.msra.mxu0 %v470
  %579 = vmatpush.msra.mxu0 %v462
  %580 = vmatpush.msra.mxu0 %v454
  %581 = vmatpush.msra.mxu0 %v446
  %582 = vmatmul.f32.gmra.mxu0 %v170
  %v583 = vpop.f32.mrf.mxu0
  %v584 = vadd.f32 %v151, %v583
  %585 = vmatmul.f32.gmra.mxu0 %v173
  %v586 = vpop.f32.mrf.mxu0
  %v587 = vadd.f32 %v156, %v586
  %588 = vmatmul.f32.gmra.mxu0 %v176
  %v589 = vpop.f32.mrf.mxu0
  %v590 = vadd.f32 %v161, %v589
  %591 = vmatmul.f32.gmra.mxu0 %v179
  %v592 = vpop.f32.mrf.mxu0
  %v593 = vadd.f32 %v166, %v592
  %594 = vdwg.mxu0
  %595 = vmatpush.msra.mxu0 0.0
  %596 = vmatpush.msra.mxu0 %v559
  %597 = vmatpush.msra.mxu0 %v551
  %598 = vmatpush.msra.mxu0 %v543
  %599 = vmatpush.msra.mxu0 %v535
  %600 = vmatpush.msra.mxu0 %v527
  %601 = vmatpush.msra.mxu0 %v519
  %602 = vmatpush.msra.mxu0 %v511
  %603 = vmatpush.msra.mxu0 %v503
  %604 = vmatpush.msra.mxu0 %v495
  %605 = vmatpush.msra.mxu0 %v487
  %606 = vmatpush.msra.mxu0 %v479
  %607 = vmatpush.msra.mxu0 %v471
  %608 = vmatpush.msra.mxu0 %v463
  %609 = vmatpush.msra.mxu0 %v455
  %610 = vmatpush.msra.mxu0 %v447
  %611 = vmatmul.f32.gmra.mxu0 %v170
  %v612 = vpop.f32.mrf.mxu0
  %v613 = vadd.f32 %v151, %v612
  %614 = vmatmul.f32.gmra.mxu0 %v173
  %v615 = vpop.f32.mrf.mxu0
  %v616 = vadd.f32 %v156, %v615
  %617 = vmatmul.f32.gmra.mxu0 %v176
  %v618 = vpop.f32.mrf.mxu0
  %v619 = vadd.f32 %v161, %v618
  %620 = vmatmul.f32.gmra.mxu0 %v179
  %v621 = vpop.f32.mrf.mxu0
  %v622 = vadd.f32 %v166, %v621
  %623 = vdwg.mxu0
  %624 = vmatpush.msra.mxu0 0.0
  %625 = vmatpush.msra.mxu0 %v560
  %626 = vmatpush.msra.mxu0 %v552
  %627 = vmatpush.msra.mxu0 %v544
  %628 = vmatpush.msra.mxu0 %v536
  %629 = vmatpush.msra.mxu0 %v528
  %630 = vmatpush.msra.mxu0 %v520
  %631 = vmatpush.msra.mxu0 %v512
  %632 = vmatpush.msra.mxu0 %v504
  %633 = vmatpush.msra.mxu0 %v496
  %634 = vmatpush.msra.mxu0 %v488
  %635 = vmatpush.msra.mxu0 %v480
  %636 = vmatpush.msra.mxu0 %v472
  %637 = vmatpush.msra.mxu0 %v464
  %638 = vmatpush.msra.mxu0 %v456
  %639 = vmatpush.msra.mxu0 %v448
  %640 = vmatmul.f32.gmra.mxu0 %v170
  %v641 = vpop.f32.mrf.mxu0
  %v642 = vadd.f32 %v151, %v641
  %643 = vmatmul.f32.gmra.mxu0 %v173
  %v644 = vpop.f32.mrf.mxu0
  %v645 = vadd.f32 %v156, %v644
  %646 = vmatmul.f32.gmra.mxu0 %v176
  %v647 = vpop.f32.mrf.mxu0
  %v648 = vadd.f32 %v161, %v647
  %649 = vmatmul.f32.gmra.mxu0 %v179
  %v650 = vpop.f32.mrf.mxu0
  %v651 = vadd.f32 %v166, %v650
  %652 = vdwg.mxu0
  %653 = vmatpush.msra.mxu0 0.0
  %654 = vmatpush.msra.mxu0 %v561
  %655 = vmatpush.msra.mxu0 %v553
  %656 = vmatpush.msra.mxu0 %v545
  %657 = vmatpush.msra.mxu0 %v537
  %658 = vmatpush.msra.mxu0 %v529
  %659 = vmatpush.msra.mxu0 %v521
  %660 = vmatpush.msra.mxu0 %v513
  %661 = vmatpush.msra.mxu0 %v505
  %662 = vmatpush.msra.mxu0 %v497
  %663 = vmatpush.msra.mxu0 %v489
  %664 = vmatpush.msra.mxu0 %v481
  %665 = vmatpush.msra.mxu0 %v473
  %666 = vmatpush.msra.mxu0 %v465
  %667 = vmatpush.msra.mxu0 %v457
  %668 = vmatpush.msra.mxu0 %v449
  %669 = vmatmul.f32.gmra.mxu0 %v170
  %v670 = vpop.f32.mrf.mxu0
  %v671 = vadd.f32 %v151, %v670
  %672 = vmatmul.f32.gmra.mxu0 %v173
  %v673 = vpop.f32.mrf.mxu0
  %v674 = vadd.f32 %v156, %v673
  %675 = vmatmul.f32.gmra.mxu0 %v176
  %v676 = vpop.f32.mrf.mxu0
  %v677 = vadd.f32 %v161, %v676
  %678 = vmatmul.f32.gmra.mxu0 %v179
  %v679 = vpop.f32.mrf.mxu0
  %v680 = vadd.f32 %v166, %v679
  %681 = vdwg.mxu0
  %682 = vmatpush.msra.mxu0 0.0
  %683 = vmatpush.msra.mxu0 %v562
  %684 = vmatpush.msra.mxu0 %v554
  %685 = vmatpush.msra.mxu0 %v546
  %686 = vmatpush.msra.mxu0 %v538
  %687 = vmatpush.msra.mxu0 %v530
  %688 = vmatpush.msra.mxu0 %v522
  %689 = vmatpush.msra.mxu0 %v514
  %690 = vmatpush.msra.mxu0 %v506
  %691 = vmatpush.msra.mxu0 %v498
  %692 = vmatpush.msra.mxu0 %v490
  %693 = vmatpush.msra.mxu0 %v482
  %694 = vmatpush.msra.mxu0 %v474
  %695 = vmatpush.msra.mxu0 %v466
  %696 = vmatpush.msra.mxu0 %v458
  %697 = vmatpush.msra.mxu0 %v450
  %698 = vmatmul.f32.gmra.mxu0 %v170
  %v699 = vpop.f32.mrf.mxu0
  %v700 = vadd.f32 %v151, %v699
  %701 = vmatmul.f32.gmra.mxu0 %v173
  %v702 = vpop.f32.mrf.mxu0
  %v703 = vadd.f32 %v156, %v702
  %704 = vmatmul.f32.gmra.mxu0 %v176
  %v705 = vpop.f32.mrf.mxu0
  %v706 = vadd.f32 %v161, %v705
  %707 = vmatmul.f32.gmra.mxu0 %v179
  %v708 = vpop.f32.mrf.mxu0
  %v709 = vadd.f32 %v166, %v708
  %710 = vdwg.mxu0
  %711 = vmatpush.msra.mxu0 0.0
  %712 = vmatpush.msra.mxu0 %v563
  %713 = vmatpush.msra.mxu0 %v555
  %714 = vmatpush.msra.mxu0 %v547
  %715 = vmatpush.msra.mxu0 %v539
  %716 = vmatpush.msra.mxu0 %v531
  %717 = vmatpush.msra.mxu0 %v523
  %718 = vmatpush.msra.mxu0 %v515
  %719 = vmatpush.msra.mxu0 %v507
  %720 = vmatpush.msra.mxu0 %v499
  %721 = vmatpush.msra.mxu0 %v491
  %722 = vmatpush.msra.mxu0 %v483
  %723 = vmatpush.msra.mxu0 %v475
  %724 = vmatpush.msra.mxu0 %v467
  %725 = vmatpush.msra.mxu0 %v459
  %726 = vmatpush.msra.mxu0 %v451
  %727 = vmatmul.f32.gmra.mxu0 %v170
  %v728 = vpop.f32.mrf.mxu0
  %v729 = vadd.f32 %v151, %v728
  %730 = vmatmul.f32.gmra.mxu0 %v173
  %v731 = vpop.f32.mrf.mxu0
  %v732 = vadd.f32 %v156, %v731
  %733 = vmatmul.f32.gmra.mxu0 %v176
  %v734 = vpop.f32.mrf.mxu0
  %v735 = vadd.f32 %v161, %v734
  %736 = vmatmul.f32.gmra.mxu0 %v179
  %v737 = vpop.f32.mrf.mxu0
  %v738 = vadd.f32 %v166, %v737
  %739 = vdwg.mxu0
  %740 = vmatpush.msra.mxu0 0.0
  %741 = vmatpush.msra.mxu0 %v564
  %742 = vmatpush.msra.mxu0 %v556
  %743 = vmatpush.msra.mxu0 %v548
  %744 = vmatpush.msra.mxu0 %v540
  %745 = vmatpush.msra.mxu0 %v532
  %746 = vmatpush.msra.mxu0 %v524
  %747 = vmatpush.msra.mxu0 %v516
  %748 = vmatpush.msra.mxu0 %v508
  %749 = vmatpush.msra.mxu0 %v500
  %750 = vmatpush.msra.mxu0 %v492
  %751 = vmatpush.msra.mxu0 %v484
  %752 = vmatpush.msra.mxu0 %v476
  %753 = vmatpush.msra.mxu0 %v468
  %754 = vmatpush.msra.mxu0 %v460
  %755 = vmatpush.msra.mxu0 %v452
  %756 = vmatmul.f32.gmra.mxu0 %v170
  %v757 = vpop.f32.mrf.mxu0
  %v758 = vadd.f32 %v151, %v757
  %759 = vmatmul.f32.gmra.mxu0 %v173
  %v760 = vpop.f32.mrf.mxu0
  %v761 = vadd.f32 %v156, %v760
  %762 = vmatmul.f32.gmra.mxu0 %v176
  %v763 = vpop.f32.mrf.mxu0
  %v764 = vadd.f32 %v161, %v763
  %765 = vmatmul.f32.gmra.mxu0 %v179
  %v766 = vpop.f32.mrf.mxu0
  %v767 = vadd.f32 %v166, %v766
  %768 = vdwg.mxu0
  %769 = vmatpush.msra.mxu0 0.0
  %770 = vmatpush.msra.mxu0 %v565
  %771 = vmatpush.msra.mxu0 %v557
  %772 = vmatpush.msra.mxu0 %v549
  %773 = vmatpush.msra.mxu0 %v541
  %774 = vmatpush.msra.mxu0 %v533
  %775 = vmatpush.msra.mxu0 %v525
  %776 = vmatpush.msra.mxu0 %v517
  %777 = vmatpush.msra.mxu0 %v509
  %778 = vmatpush.msra.mxu0 %v501
  %779 = vmatpush.msra.mxu0 %v493
  %780 = vmatpush.msra.mxu0 %v485
  %781 = vmatpush.msra.mxu0 %v477
  %782 = vmatpush.msra.mxu0 %v469
  %783 = vmatpush.msra.mxu0 %v461
  %784 = vmatpush.msra.mxu0 %v453
  %785 = vmatmul.f32.gmra.mxu0 %v170
  %v786 = vpop.f32.mrf.mxu0
  %v787 = vadd.f32 %v151, %v786
  %788 = vmatmul.f32.gmra.mxu0 %v173
  %v789 = vpop.f32.mrf.mxu0
  %v790 = vadd.f32 %v156, %v789
  %791 = vmatmul.f32.gmra.mxu0 %v176
  %v792 = vpop.f32.mrf.mxu0
  %v793 = vadd.f32 %v161, %v792
  %794 = vmatmul.f32.gmra.mxu0 %v179
  %v795 = vpop.f32.mrf.mxu0
  %v796 = vadd.f32 %v166, %v795
  %797 = vdwg.mxu0
  %v798 = vmax.f32 %v584, 0.0
  %v799 = vmax.f32 %v613, 0.0
  %v800 = vmax.f32 %v642, 0.0
  %v801 = vmax.f32 %v671, 0.0
  %v802 = vmax.f32 %v700, 0.0
  %v803 = vmax.f32 %v729, 0.0
  %v804 = vmax.f32 %v758, 0.0
  %v805 = vmax.f32 %v787, 0.0
  %v806 = vmax.f32 %v587, 0.0
  %v807 = vmax.f32 %v616, 0.0
  %v808 = vmax.f32 %v645, 0.0
  %v809 = vmax.f32 %v674, 0.0
  %v810 = vmax.f32 %v703, 0.0
  %v811 = vmax.f32 %v732, 0.0
  %v812 = vmax.f32 %v761, 0.0
  %v813 = vmax.f32 %v790, 0.0
  %v814 = vmax.f32 %v590, 0.0
  %v815 = vmax.f32 %v619, 0.0
  %v816 = vmax.f32 %v648, 0.0
  %v817 = vmax.f32 %v677, 0.0
  %v818 = vmax.f32 %v706, 0.0
  %v819 = vmax.f32 %v735, 0.0
  %v820 = vmax.f32 %v764, 0.0
  %v821 = vmax.f32 %v793, 0.0
  %v822 = vmax.f32 %v593, 0.0
  %v823 = vmax.f32 %v622, 0.0
  %v824 = vmax.f32 %v651, 0.0
  %v825 = vmax.f32 %v680, 0.0
  %v826 = vmax.f32 %v709, 0.0
  %v827 = vmax.f32 %v738, 0.0
  %v828 = vmax.f32 %v767, 0.0
  %v829 = vmax.f32 %v796, 0.0
  %s830 = scalar_lea.vmem %s0, 1920
  %v831 = vld [vmem:[%s830] sm:$0xff]
  %v832 = vld [vmem:[%s830 + $0x8] sm:$0xff]
  %v833 = vld [vmem:[%s830 + $0x10] sm:$0xff]
  %v834 = vld [vmem:[%s830 + $0x18] sm:$0xff]
  %v835 = vld [vmem:[%s830 + $0x20] sm:$0xff]
  %v836 = vld [vmem:[%s830 + $0x28] sm:$0xff]
  %v837 = vld [vmem:[%s830 + $0x30] sm:$0xff]
  %v838 = vld [vmem:[%s830 + $0x38] sm:$0xff]
  %v839 = vld [vmem:[%s830 + $0x40] sm:$0xff]
  %v840 = vld [vmem:[%s830 + $0x48] sm:$0xff]
  %v841 = vld [vmem:[%s830 + $0x50] sm:$0xff]
  %v842 = vld [vmem:[%s830 + $0x58] sm:$0xff]
  %v843 = vld [vmem:[%s830 + $0x60] sm:$0xff]
  %v844 = vld [vmem:[%s830 + $0x68] sm:$0xff]
  %v845 = vld [vmem:[%s830 + $0x70] sm:$0xff]
  %v846 = vld [vmem:[%s830 + $0x78] sm:$0xff]
  %v847 = vld [vmem:[%s830 + $0x80] sm:$0xff]
  %v848 = vld [vmem:[%s830 + $0x88] sm:$0xff]
  %v849 = vld [vmem:[%s830 + $0x90] sm:$0xff]
  %v850 = vld [vmem:[%s830 + $0x98] sm:$0xff]
  %v851 = vld [vmem:[%s830 + $0xa0] sm:$0xff]
  %v852 = vld [vmem:[%s830 + $0xa8] sm:$0xff]
  %v853 = vld [vmem:[%s830 + $0xb0] sm:$0xff]
  %v854 = vld [vmem:[%s830 + $0xb8] sm:$0xff]
  %v855 = vld [vmem:[%s830 + $0xc0] sm:$0xff]
  %v856 = vld [vmem:[%s830 + $0xc8] sm:$0xff]
  %v857 = vld [vmem:[%s830 + $0xd0] sm:$0xff]
  %v858 = vld [vmem:[%s830 + $0xd8] sm:$0xff]
  %v859 = vld [vmem:[%s830 + $0xe0] sm:$0xff]
  %v860 = vld [vmem:[%s830 + $0xe8] sm:$0xff]
  %v861 = vld [vmem:[%s830 + $0xf0] sm:$0xff]
  %v862 = vld [vmem:[%s830 + $0xf8] sm:$0xff]
  %v863 = vld [vmem:[%s830 + $0x100] sm:$0xff]
  %v864 = vld [vmem:[%s830 + $0x108] sm:$0xff]
  %v865 = vld [vmem:[%s830 + $0x110] sm:$0xff]
  %v866 = vld [vmem:[%s830 + $0x118] sm:$0xff]
  %v867 = vld [vmem:[%s830 + $0x120] sm:$0xff]
  %v868 = vld [vmem:[%s830 + $0x128] sm:$0xff]
  %v869 = vld [vmem:[%s830 + $0x130] sm:$0xff]
  %v870 = vld [vmem:[%s830 + $0x138] sm:$0xff]
  %v871 = vld [vmem:[%s830 + $0x140] sm:$0xff]
  %v872 = vld [vmem:[%s830 + $0x148] sm:$0xff]
  %v873 = vld [vmem:[%s830 + $0x150] sm:$0xff]
  %v874 = vld [vmem:[%s830 + $0x158] sm:$0xff]
  %v875 = vld [vmem:[%s830 + $0x160] sm:$0xff]
  %v876 = vld [vmem:[%s830 + $0x168] sm:$0xff]
  %v877 = vld [vmem:[%s830 + $0x170] sm:$0xff]
  %v878 = vld [vmem:[%s830 + $0x178] sm:$0xff]
  %v879 = vld [vmem:[%s830 + $0x180] sm:$0xff]
  %v880 = vld [vmem:[%s830 + $0x188] sm:$0xff]
  %v881 = vld [vmem:[%s830 + $0x190] sm:$0xff]
  %v882 = vld [vmem:[%s830 + $0x198] sm:$0xff]
  %v883 = vld [vmem:[%s830 + $0x1a0] sm:$0xff]
  %v884 = vld [vmem:[%s830 + $0x1a8] sm:$0xff]
  %v885 = vld [vmem:[%s830 + $0x1b0] sm:$0xff]
  %v886 = vld [vmem:[%s830 + $0x1b8] sm:$0xff]
  %v887 = vld [vmem:[%s830 + $0x1c0] sm:$0xff]
  %v888 = vld [vmem:[%s830 + $0x1c8] sm:$0xff]
  %v889 = vld [vmem:[%s830 + $0x1d0] sm:$0xff]
  %v890 = vld [vmem:[%s830 + $0x1d8] sm:$0xff]
  %v891 = vld [vmem:[%s830 + $0x1e0] sm:$0xff]
  %v892 = vld [vmem:[%s830 + $0x1e8] sm:$0xff]
  %v893 = vld [vmem:[%s830 + $0x1f0] sm:$0xff]
  %v894 = vld [vmem:[%s830 + $0x1f8] sm:$0xff]
  %v895 = vld [vmem:[%s830 + $0x200] sm:$0xff]
  %v896 = vld [vmem:[%s830 + $0x208] sm:$0xff]
  %v897 = vld [vmem:[%s830 + $0x210] sm:$0xff]
  %v898 = vld [vmem:[%s830 + $0x218] sm:$0xff]
  %v899 = vld [vmem:[%s830 + $0x220] sm:$0xff]
  %v900 = vld [vmem:[%s830 + $0x228] sm:$0xff]
  %v901 = vld [vmem:[%s830 + $0x230] sm:$0xff]
  %v902 = vld [vmem:[%s830 + $0x238] sm:$0xff]
  %v903 = vld [vmem:[%s830 + $0x240] sm:$0xff]
  %v904 = vld [vmem:[%s830 + $0x248] sm:$0xff]
  %v905 = vld [vmem:[%s830 + $0x250] sm:$0xff]
  %v906 = vld [vmem:[%s830 + $0x258] sm:$0xff]
  %v907 = vld [vmem:[%s830 + $0x260] sm:$0xff]
  %v908 = vld [vmem:[%s830 + $0x268] sm:$0xff]
  %v909 = vld [vmem:[%s830 + $0x270] sm:$0xff]
  %v910 = vld [vmem:[%s830 + $0x278] sm:$0xff]
  %v911 = vld [vmem:[%s830 + $0x280] sm:$0xff]
  %v912 = vld [vmem:[%s830 + $0x288] sm:$0xff]
  %v913 = vld [vmem:[%s830 + $0x290] sm:$0xff]
  %v914 = vld [vmem:[%s830 + $0x298] sm:$0xff]
  %v915 = vld [vmem:[%s830 + $0x2a0] sm:$0xff]
  %v916 = vld [vmem:[%s830 + $0x2a8] sm:$0xff]
  %v917 = vld [vmem:[%s830 + $0x2b0] sm:$0xff]
  %v918 = vld [vmem:[%s830 + $0x2b8] sm:$0xff]
  %v919 = vld [vmem:[%s830 + $0x2c0] sm:$0xff]
  %v920 = vld [vmem:[%s830 + $0x2c8] sm:$0xff]
  %v921 = vld [vmem:[%s830 + $0x2d0] sm:$0xff]
  %v922 = vld [vmem:[%s830 + $0x2d8] sm:$0xff]
  %v923 = vld [vmem:[%s830 + $0x2e0] sm:$0xff]
  %v924 = vld [vmem:[%s830 + $0x2e8] sm:$0xff]
  %v925 = vld [vmem:[%s830 + $0x2f0] sm:$0xff]
  %v926 = vld [vmem:[%s830 + $0x2f8] sm:$0xff]
  %v927 = vld [vmem:[%s830 + $0x300] sm:$0xff]
  %v928 = vld [vmem:[%s830 + $0x308] sm:$0xff]
  %v929 = vld [vmem:[%s830 + $0x310] sm:$0xff]
  %v930 = vld [vmem:[%s830 + $0x318] sm:$0xff]
  %v931 = vld [vmem:[%s830 + $0x320] sm:$0xff]
  %v932 = vld [vmem:[%s830 + $0x328] sm:$0xff]
  %v933 = vld [vmem:[%s830 + $0x330] sm:$0xff]
  %v934 = vld [vmem:[%s830 + $0x338] sm:$0xff]
  %v935 = vld [vmem:[%s830 + $0x340] sm:$0xff]
  %v936 = vld [vmem:[%s830 + $0x348] sm:$0xff]
  %v937 = vld [vmem:[%s830 + $0x350] sm:$0xff]
  %v938 = vld [vmem:[%s830 + $0x358] sm:$0xff]
  %v939 = vld [vmem:[%s830 + $0x360] sm:$0xff]
  %v940 = vld [vmem:[%s830 + $0x368] sm:$0xff]
  %v941 = vld [vmem:[%s830 + $0x370] sm:$0xff]
  %v942 = vld [vmem:[%s830 + $0x378] sm:$0xff]
  %v943 = vld [vmem:[%s830 + $0x380] sm:$0xff]
  %v944 = vld [vmem:[%s830 + $0x388] sm:$0xff]
  %v945 = vld [vmem:[%s830 + $0x390] sm:$0xff]
  %v946 = vld [vmem:[%s830 + $0x398] sm:$0xff]
  %v947 = vld [vmem:[%s830 + $0x3a0] sm:$0xff]
  %v948 = vld [vmem:[%s830 + $0x3a8] sm:$0xff]
  %v949 = vld [vmem:[%s830 + $0x3b0] sm:$0xff]
  %v950 = vld [vmem:[%s830 + $0x3b8] sm:$0xff]
  %951 = vmatpush.msra.mxu0 0.0
  %952 = vmatpush.msra.mxu0 %v943
  %953 = vmatpush.msra.mxu0 %v935
  %954 = vmatpush.msra.mxu0 %v927
  %955 = vmatpush.msra.mxu0 %v919
  %956 = vmatpush.msra.mxu0 %v911
  %957 = vmatpush.msra.mxu0 %v903
  %958 = vmatpush.msra.mxu0 %v895
  %959 = vmatpush.msra.mxu0 %v887
  %960 = vmatpush.msra.mxu0 %v879
  %961 = vmatpush.msra.mxu0 %v871
  %962 = vmatpush.msra.mxu0 %v863
  %963 = vmatpush.msra.mxu0 %v855
  %964 = vmatpush.msra.mxu0 %v847
  %965 = vmatpush.msra.mxu0 %v839
  %966 = vmatpush.msra.mxu0 %v831
  %967 = vmatmul.f32.gmra.mxu0 %v170
  %v968 = vpop.f32.mrf.mxu0
  %v969 = vadd.f32 %v151, %v968
  %970 = vmatmul.f32.gmra.mxu0 %v173
  %v971 = vpop.f32.mrf.mxu0
  %v972 = vadd.f32 %v156, %v971
  %973 = vmatmul.f32.gmra.mxu0 %v176
  %v974 = vpop.f32.mrf.mxu0
  %v975 = vadd.f32 %v161, %v974
  %976 = vmatmul.f32.gmra.mxu0 %v179
  %v977 = vpop.f32.mrf.mxu0
  %v978 = vadd.f32 %v166, %v977
  %979 = vdwg.mxu0
  %980 = vmatpush.msra.mxu0 0.0
  %981 = vmatpush.msra.mxu0 %v944
  %982 = vmatpush.msra.mxu0 %v936
  %983 = vmatpush.msra.mxu0 %v928
  %984 = vmatpush.msra.mxu0 %v920
  %985 = vmatpush.msra.mxu0 %v912
  %986 = vmatpush.msra.mxu0 %v904
  %987 = vmatpush.msra.mxu0 %v896
  %988 = vmatpush.msra.mxu0 %v888
  %989 = vmatpush.msra.mxu0 %v880
  %990 = vmatpush.msra.mxu0 %v872
  %991 = vmatpush.msra.mxu0 %v864
  %992 = vmatpush.msra.mxu0 %v856
  %993 = vmatpush.msra.mxu0 %v848
  %994 = vmatpush.msra.mxu0 %v840
  %995 = vmatpush.msra.mxu0 %v832
  %996 = vmatmul.f32.gmra.mxu0 %v170
  %v997 = vpop.f32.mrf.mxu0
  %v998 = vadd.f32 %v151, %v997
  %999 = vmatmul.f32.gmra.mxu0 %v173
  %v1000 = vpop.f32.mrf.mxu0
  %v1001 = vadd.f32 %v156, %v1000
  %1002 = vmatmul.f32.gmra.mxu0 %v176
  %v1003 = vpop.f32.mrf.mxu0
  %v1004 = vadd.f32 %v161, %v1003
  %1005 = vmatmul.f32.gmra.mxu0 %v179
  %v1006 = vpop.f32.mrf.mxu0
  %v1007 = vadd.f32 %v166, %v1006
  %1008 = vdwg.mxu0
  %1009 = vmatpush.msra.mxu0 0.0
  %1010 = vmatpush.msra.mxu0 %v945
  %1011 = vmatpush.msra.mxu0 %v937
  %1012 = vmatpush.msra.mxu0 %v929
  %1013 = vmatpush.msra.mxu0 %v921
  %1014 = vmatpush.msra.mxu0 %v913
  %1015 = vmatpush.msra.mxu0 %v905
  %1016 = vmatpush.msra.mxu0 %v897
  %1017 = vmatpush.msra.mxu0 %v889
  %1018 = vmatpush.msra.mxu0 %v881
  %1019 = vmatpush.msra.mxu0 %v873
  %1020 = vmatpush.msra.mxu0 %v865
  %1021 = vmatpush.msra.mxu0 %v857
  %1022 = vmatpush.msra.mxu0 %v849
  %1023 = vmatpush.msra.mxu0 %v841
  %1024 = vmatpush.msra.mxu0 %v833
  %1025 = vmatmul.f32.gmra.mxu0 %v170
  %v1026 = vpop.f32.mrf.mxu0
  %v1027 = vadd.f32 %v151, %v1026
  %1028 = vmatmul.f32.gmra.mxu0 %v173
  %v1029 = vpop.f32.mrf.mxu0
  %v1030 = vadd.f32 %v156, %v1029
  %1031 = vmatmul.f32.gmra.mxu0 %v176
  %v1032 = vpop.f32.mrf.mxu0
  %v1033 = vadd.f32 %v161, %v1032
  %1034 = vmatmul.f32.gmra.mxu0 %v179
  %v1035 = vpop.f32.mrf.mxu0
  %v1036 = vadd.f32 %v166, %v1035
  %1037 = vdwg.mxu0
  %1038 = vmatpush.msra.mxu0 0.0
  %1039 = vmatpush.msra.mxu0 %v946
  %1040 = vmatpush.msra.mxu0 %v938
  %1041 = vmatpush.msra.mxu0 %v930
  %1042 = vmatpush.msra.mxu0 %v922
  %1043 = vmatpush.msra.mxu0 %v914
  %1044 = vmatpush.msra.mxu0 %v906
  %1045 = vmatpush.msra.mxu0 %v898
  %1046 = vmatpush.msra.mxu0 %v890
  %1047 = vmatpush.msra.mxu0 %v882
  %1048 = vmatpush.msra.mxu0 %v874
  %1049 = vmatpush.msra.mxu0 %v866
  %1050 = vmatpush.msra.mxu0 %v858
  %1051 = vmatpush.msra.mxu0 %v850
  %1052 = vmatpush.msra.mxu0 %v842
  %1053 = vmatpush.msra.mxu0 %v834
  %1054 = vmatmul.f32.gmra.mxu0 %v170
  %v1055 = vpop.f32.mrf.mxu0
  %v1056 = vadd.f32 %v151, %v1055
  %1057 = vmatmul.f32.gmra.mxu0 %v173
  %v1058 = vpop.f32.mrf.mxu0
  %v1059 = vadd.f32 %v156, %v1058
  %1060 = vmatmul.f32.gmra.mxu0 %v176
  %v1061 = vpop.f32.mrf.mxu0
  %v1062 = vadd.f32 %v161, %v1061
  %1063 = vmatmul.f32.gmra.mxu0 %v179
  %v1064 = vpop.f32.mrf.mxu0
  %v1065 = vadd.f32 %v166, %v1064
  %1066 = vdwg.mxu0
  %1067 = vmatpush.msra.mxu0 0.0
  %1068 = vmatpush.msra.mxu0 %v947
  %1069 = vmatpush.msra.mxu0 %v939
  %1070 = vmatpush.msra.mxu0 %v931
  %1071 = vmatpush.msra.mxu0 %v923
  %1072 = vmatpush.msra.mxu0 %v915
  %1073 = vmatpush.msra.mxu0 %v907
  %1074 = vmatpush.msra.mxu0 %v899
  %1075 = vmatpush.msra.mxu0 %v891
  %1076 = vmatpush.msra.mxu0 %v883
  %1077 = vmatpush.msra.mxu0 %v875
  %1078 = vmatpush.msra.mxu0 %v867
  %1079 = vmatpush.msra.mxu0 %v859
  %1080 = vmatpush.msra.mxu0 %v851
  %1081 = vmatpush.msra.mxu0 %v843
  %1082 = vmatpush.msra.mxu0 %v835
  %1083 = vmatmul.f32.gmra.mxu0 %v170
  %v1084 = vpop.f32.mrf.mxu0
  %v1085 = vadd.f32 %v151, %v1084
  %1086 = vmatmul.f32.gmra.mxu0 %v173
  %v1087 = vpop.f32.mrf.mxu0
  %v1088 = vadd.f32 %v156, %v1087
  %1089 = vmatmul.f32.gmra.mxu0 %v176
  %v1090 = vpop.f32.mrf.mxu0
  %v1091 = vadd.f32 %v161, %v1090
  %1092 = vmatmul.f32.gmra.mxu0 %v179
  %v1093 = vpop.f32.mrf.mxu0
  %v1094 = vadd.f32 %v166, %v1093
  %1095 = vdwg.mxu0
  %1096 = vmatpush.msra.mxu0 0.0
  %1097 = vmatpush.msra.mxu0 %v948
  %1098 = vmatpush.msra.mxu0 %v940
  %1099 = vmatpush.msra.mxu0 %v932
  %1100 = vmatpush.msra.mxu0 %v924
  %1101 = vmatpush.msra.mxu0 %v916
  %1102 = vmatpush.msra.mxu0 %v908
  %1103 = vmatpush.msra.mxu0 %v900
  %1104 = vmatpush.msra.mxu0 %v892
  %1105 = vmatpush.msra.mxu0 %v884
  %1106 = vmatpush.msra.mxu0 %v876
  %1107 = vmatpush.msra.mxu0 %v868
  %1108 = vmatpush.msra.mxu0 %v860
  %1109 = vmatpush.msra.mxu0 %v852
  %1110 = vmatpush.msra.mxu0 %v844
  %1111 = vmatpush.msra.mxu0 %v836
  %1112 = vmatmul.f32.gmra.mxu0 %v170
  %v1113 = vpop.f32.mrf.mxu0
  %v1114 = vadd.f32 %v151, %v1113
  %1115 = vmatmul.f32.gmra.mxu0 %v173
  %v1116 = vpop.f32.mrf.mxu0
  %v1117 = vadd.f32 %v156, %v1116
  %1118 = vmatmul.f32.gmra.mxu0 %v176
  %v1119 = vpop.f32.mrf.mxu0
  %v1120 = vadd.f32 %v161, %v1119
  %1121 = vmatmul.f32.gmra.mxu0 %v179
  %v1122 = vpop.f32.mrf.mxu0
  %v1123 = vadd.f32 %v166, %v1122
  %1124 = vdwg.mxu0
  %1125 = vmatpush.msra.mxu0 0.0
  %1126 = vmatpush.msra.mxu0 %v949
  %1127 = vmatpush.msra.mxu0 %v941
  %1128 = vmatpush.msra.mxu0 %v933
  %1129 = vmatpush.msra.mxu0 %v925
  %1130 = vmatpush.msra.mxu0 %v917
  %1131 = vmatpush.msra.mxu0 %v909
  %1132 = vmatpush.msra.mxu0 %v901
  %1133 = vmatpush.msra.mxu0 %v893
  %1134 = vmatpush.msra.mxu0 %v885
  %1135 = vmatpush.msra.mxu0 %v877
  %1136 = vmatpush.msra.mxu0 %v869
  %1137 = vmatpush.msra.mxu0 %v861
  %1138 = vmatpush.msra.mxu0 %v853
  %1139 = vmatpush.msra.mxu0 %v845
  %1140 = vmatpush.msra.mxu0 %v837
  %1141 = vmatmul.f32.gmra.mxu0 %v170
  %v1142 = vpop.f32.mrf.mxu0
  %v1143 = vadd.f32 %v151, %v1142
  %1144 = vmatmul.f32.gmra.mxu0 %v173
  %v1145 = vpop.f32.mrf.mxu0
  %v1146 = vadd.f32 %v156, %v1145
  %1147 = vmatmul.f32.gmra.mxu0 %v176
  %v1148 = vpop.f32.mrf.mxu0
  %v1149 = vadd.f32 %v161, %v1148
  %1150 = vmatmul.f32.gmra.mxu0 %v179
  %v1151 = vpop.f32.mrf.mxu0
  %v1152 = vadd.f32 %v166, %v1151
  %1153 = vdwg.mxu0
  %1154 = vmatpush.msra.mxu0 0.0
  %1155 = vmatpush.msra.mxu0 %v950
  %1156 = vmatpush.msra.mxu0 %v942
  %1157 = vmatpush.msra.mxu0 %v934
  %1158 = vmatpush.msra.mxu0 %v926
  %1159 = vmatpush.msra.mxu0 %v918
  %1160 = vmatpush.msra.mxu0 %v910
  %1161 = vmatpush.msra.mxu0 %v902
  %1162 = vmatpush.msra.mxu0 %v894
  %1163 = vmatpush.msra.mxu0 %v886
  %1164 = vmatpush.msra.mxu0 %v878
  %1165 = vmatpush.msra.mxu0 %v870
  %1166 = vmatpush.msra.mxu0 %v862
  %1167 = vmatpush.msra.mxu0 %v854
  %1168 = vmatpush.msra.mxu0 %v846
  %1169 = vmatpush.msra.mxu0 %v838
  %1170 = vmatmul.f32.gmra.mxu0 %v170
  %v1171 = vpop.f32.mrf.mxu0
  %v1172 = vadd.f32 %v151, %v1171
  %1173 = vmatmul.f32.gmra.mxu0 %v173
  %v1174 = vpop.f32.mrf.mxu0
  %v1175 = vadd.f32 %v156, %v1174
  %1176 = vmatmul.f32.gmra.mxu0 %v176
  %v1177 = vpop.f32.mrf.mxu0
  %v1178 = vadd.f32 %v161, %v1177
  %1179 = vmatmul.f32.gmra.mxu0 %v179
  %v1180 = vpop.f32.mrf.mxu0
  %v1181 = vadd.f32 %v166, %v1180
  %1182 = vdwg.mxu0
  %v1183 = vmax.f32 %v969, 0.0
  %v1184 = vmax.f32 %v998, 0.0
  %v1185 = vmax.f32 %v1027, 0.0
  %v1186 = vmax.f32 %v1056, 0.0
  %v1187 = vmax.f32 %v1085, 0.0
  %v1188 = vmax.f32 %v1114, 0.0
  %v1189 = vmax.f32 %v1143, 0.0
  %v1190 = vmax.f32 %v1172, 0.0
  %v1191 = vmax.f32 %v972, 0.0
  %v1192 = vmax.f32 %v1001, 0.0
  %v1193 = vmax.f32 %v1030, 0.0
  %v1194 = vmax.f32 %v1059, 0.0
  %v1195 = vmax.f32 %v1088, 0.0
  %v1196 = vmax.f32 %v1117, 0.0
  %v1197 = vmax.f32 %v1146, 0.0
  %v1198 = vmax.f32 %v1175, 0.0
  %v1199 = vmax.f32 %v975, 0.0
  %v1200 = vmax.f32 %v1004, 0.0
  %v1201 = vmax.f32 %v1033, 0.0
  %v1202 = vmax.f32 %v1062, 0.0
  %v1203 = vmax.f32 %v1091, 0.0
  %v1204 = vmax.f32 %v1120, 0.0
  %v1205 = vmax.f32 %v1149, 0.0
  %v1206 = vmax.f32 %v1178, 0.0
  %v1207 = vmax.f32 %v978, 0.0
  %v1208 = vmax.f32 %v1007, 0.0
  %v1209 = vmax.f32 %v1036, 0.0
  %v1210 = vmax.f32 %v1065, 0.0
  %v1211 = vmax.f32 %v1094, 0.0
  %v1212 = vmax.f32 %v1123, 0.0
  %v1213 = vmax.f32 %v1152, 0.0
  %v1214 = vmax.f32 %v1181, 0.0
  %v1215 = vadd.f32 %v413, %v414
  %v1216 = vadd.f32 %v1215, %v415
  %v1217 = vadd.f32 %v1216, %v416
  %v1218 = vadd.f32 %v1217, %v417
  %v1219 = vadd.f32 %v1218, %v418
  %v1220 = vadd.f32 %v1219, %v419
  %vm1221 = vcmask 179200
  %v1222 = vsel %vm1221, %v420, 0.0
  %v1223 = vadd.f32 %v1220, %v1222
  %1224 = vadd.xlane.f32.xlu0 %v1223
  %v1225 = vpop.xlane.xlu0 %1224
  %v1226 = vadd.f32 %v421, %v422
  %v1227 = vadd.f32 %v1226, %v423
  %v1228 = vadd.f32 %v1227, %v424
  %v1229 = vadd.f32 %v1228, %v425
  %v1230 = vadd.f32 %v1229, %v426
  %v1231 = vadd.f32 %v1230, %v427
  %v1232 = vsel %vm1221, %v428, 0.0
  %v1233 = vadd.f32 %v1231, %v1232
  %1234 = vadd.xlane.f32.xlu0 %v1233
  %v1235 = vpop.xlane.xlu0 %1234
  %v1236 = vadd.f32 %v429, %v430
  %v1237 = vadd.f32 %v1236, %v431
  %v1238 = vadd.f32 %v1237, %v432
  %v1239 = vadd.f32 %v1238, %v433
  %v1240 = vadd.f32 %v1239, %v434
  %v1241 = vadd.f32 %v1240, %v435
  %v1242 = vsel %vm1221, %v436, 0.0
  %v1243 = vadd.f32 %v1241, %v1242
  %1244 = vadd.xlane.f32.xlu0 %v1243
  %v1245 = vpop.xlane.xlu0 %1244
  %v1246 = vadd.f32 %v437, %v438
  %v1247 = vadd.f32 %v1246, %v439
  %v1248 = vadd.f32 %v1247, %v440
  %v1249 = vadd.f32 %v1248, %v441
  %v1250 = vadd.f32 %v1249, %v442
  %v1251 = vadd.f32 %v1250, %v443
  %v1252 = vsel %vm1221, %v444, 0.0
  %v1253 = vadd.f32 %v1251, %v1252
  %1254 = vadd.xlane.f32.xlu0 %v1253
  %v1255 = vpop.xlane.xlu0 %1254
  %v1256 = vadd.f32 %v1225, 0.0
  %v1257 = vadd.f32 %v1235, 0.0
  %v1258 = vadd.f32 %v1245, 0.0
  %v1259 = vadd.f32 %v1255, 0.0
  %v1260 = vadd.f32 %v798, %v799
  %v1261 = vadd.f32 %v1260, %v800
  %v1262 = vadd.f32 %v1261, %v801
  %v1263 = vadd.f32 %v1262, %v802
  %v1264 = vadd.f32 %v1263, %v803
  %v1265 = vadd.f32 %v1264, %v804
  %v1266 = vsel %vm1221, %v805, 0.0
  %v1267 = vadd.f32 %v1265, %v1266
  %1268 = vadd.xlane.f32.xlu0 %v1267
  %v1269 = vpop.xlane.xlu0 %1268
  %v1270 = vadd.f32 %v806, %v807
  %v1271 = vadd.f32 %v1270, %v808
  %v1272 = vadd.f32 %v1271, %v809
  %v1273 = vadd.f32 %v1272, %v810
  %v1274 = vadd.f32 %v1273, %v811
  %v1275 = vadd.f32 %v1274, %v812
  %v1276 = vsel %vm1221, %v813, 0.0
  %v1277 = vadd.f32 %v1275, %v1276
  %1278 = vadd.xlane.f32.xlu0 %v1277
  %v1279 = vpop.xlane.xlu0 %1278
  %v1280 = vadd.f32 %v814, %v815
  %v1281 = vadd.f32 %v1280, %v816
  %v1282 = vadd.f32 %v1281, %v817
  %v1283 = vadd.f32 %v1282, %v818
  %v1284 = vadd.f32 %v1283, %v819
  %v1285 = vadd.f32 %v1284, %v820
  %v1286 = vsel %vm1221, %v821, 0.0
  %v1287 = vadd.f32 %v1285, %v1286
  %1288 = vadd.xlane.f32.xlu0 %v1287
  %v1289 = vpop.xlane.xlu0 %1288
  %v1290 = vadd.f32 %v822, %v823
  %v1291 = vadd.f32 %v1290, %v824
  %v1292 = vadd.f32 %v1291, %v825
  %v1293 = vadd.f32 %v1292, %v826
  %v1294 = vadd.f32 %v1293, %v827
  %v1295 = vadd.f32 %v1294, %v828
  %v1296 = vsel %vm1221, %v829, 0.0
  %v1297 = vadd.f32 %v1295, %v1296
  %1298 = vadd.xlane.f32.xlu0 %v1297
  %v1299 = vpop.xlane.xlu0 %1298
  %v1300 = vadd.f32 %v1256, %v1269
  %v1301 = vadd.f32 %v1257, %v1279
  %v1302 = vadd.f32 %v1258, %v1289
  %v1303 = vadd.f32 %v1259, %v1299
  %v1304 = vadd.f32 %v1183, %v1184
  %v1305 = vadd.f32 %v1304, %v1185
  %v1306 = vadd.f32 %v1305, %v1186
  %v1307 = vadd.f32 %v1306, %v1187
  %v1308 = vadd.f32 %v1307, %v1188
  %v1309 = vadd.f32 %v1308, %v1189
  %v1310 = vsel %vm1221, %v1190, 0.0
  %v1311 = vadd.f32 %v1309, %v1310
  %1312 = vadd.xlane.f32.xlu0 %v1311
  %v1313 = vpop.xlane.xlu0 %1312
  %v1314 = vadd.f32 %v1191, %v1192
  %v1315 = vadd.f32 %v1314, %v1193
  %v1316 = vadd.f32 %v1315, %v1194
  %v1317 = vadd.f32 %v1316, %v1195
  %v1318 = vadd.f32 %v1317, %v1196
  %v1319 = vadd.f32 %v1318, %v1197
  %v1320 = vsel %vm1221, %v1198, 0.0
  %v1321 = vadd.f32 %v1319, %v1320
  %1322 = vadd.xlane.f32.xlu0 %v1321
  %v1323 = vpop.xlane.xlu0 %1322
  %v1324 = vadd.f32 %v1199, %v1200
  %v1325 = vadd.f32 %v1324, %v1201
  %v1326 = vadd.f32 %v1325, %v1202
  %v1327 = vadd.f32 %v1326, %v1203
  %v1328 = vadd.f32 %v1327, %v1204
  %v1329 = vadd.f32 %v1328, %v1205
  %v1330 = vsel %vm1221, %v1206, 0.0
  %v1331 = vadd.f32 %v1329, %v1330
  %1332 = vadd.xlane.f32.xlu0 %v1331
  %v1333 = vpop.xlane.xlu0 %1332
  %v1334 = vadd.f32 %v1207, %v1208
  %v1335 = vadd.f32 %v1334, %v1209
  %v1336 = vadd.f32 %v1335, %v1210
  %v1337 = vadd.f32 %v1336, %v1211
  %v1338 = vadd.f32 %v1337, %v1212
  %v1339 = vadd.f32 %v1338, %v1213
  %v1340 = vsel %vm1221, %v1214, 0.0
  %v1341 = vadd.f32 %v1339, %v1340
  %1342 = vadd.xlane.f32.xlu0 %v1341
  %v1343 = vpop.xlane.xlu0 %1342
  %v1344 = vadd.f32 %v1300, %v1313
  %v1345 = vadd.f32 %v1301, %v1323
  %v1346 = vadd.f32 %v1302, %v1333
  %v1347 = vadd.f32 %v1303, %v1343
  %v1348 = vrcp.pop 2754.0
  %v1349 = vmul.f32 2754.0, %v1348
  %v1350 = vsub.f32 1.0, %v1349
  %v1351 = vmul.f32 %v1348, %v1350
  %v1352 = vadd.f32 %v1348, %v1351
  %vm1353 = vweird.f32 %v1348
  %v1354 = vsel %vm1353, %v1348, %v1352
  %v1355 = vmul.f32 %v1344, %v1354
  %v1356 = vmul.f32 %v1345, %v1354
  %v1357 = vmul.f32 %v1346, %v1354
  %v1358 = vmul.f32 %v1347, %v1354
  %v1359 = vsub.f32 %v413, %v1355
  %v1360 = vsub.f32 %v414, %v1355
  %v1361 = vsub.f32 %v415, %v1355
  %v1362 = vsub.f32 %v416, %v1355
  %v1363 = vsub.f32 %v417, %v1355
  %v1364 = vsub.f32 %v418, %v1355
  %v1365 = vsub.f32 %v419, %v1355
  %v1366 = vsub.f32 %v420, %v1355
  %v1367 = vsub.f32 %v421, %v1356
  %v1368 = vsub.f32 %v422, %v1356
  %v1369 = vsub.f32 %v423, %v1356
  %v1370 = vsub.f32 %v424, %v1356
  %v1371 = vsub.f32 %v425, %v1356
  %v1372 = vsub.f32 %v426, %v1356
  %v1373 = vsub.f32 %v427, %v1356
  %v1374 = vsub.f32 %v428, %v1356
  %v1375 = vsub.f32 %v429, %v1357
  %v1376 = vsub.f32 %v430, %v1357
  %v1377 = vsub.f32 %v431, %v1357
  %v1378 = vsub.f32 %v432, %v1357
  %v1379 = vsub.f32 %v433, %v1357
  %v1380 = vsub.f32 %v434, %v1357
  %v1381 = vsub.f32 %v435, %v1357
  %v1382 = vsub.f32 %v436, %v1357
  %v1383 = vsub.f32 %v437, %v1358
  %v1384 = vsub.f32 %v438, %v1358
  %v1385 = vsub.f32 %v439, %v1358
  %v1386 = vsub.f32 %v440, %v1358
  %v1387 = vsub.f32 %v441, %v1358
  %v1388 = vsub.f32 %v442, %v1358
  %v1389 = vsub.f32 %v443, %v1358
  %v1390 = vsub.f32 %v444, %v1358
  %v1391 = vmul.f32 %v1359, %v1359
  %v1392 = vmul.f32 %v1360, %v1360
  %v1393 = vmul.f32 %v1361, %v1361
  %v1394 = vmul.f32 %v1362, %v1362
  %v1395 = vmul.f32 %v1363, %v1363
  %v1396 = vmul.f32 %v1364, %v1364
  %v1397 = vmul.f32 %v1365, %v1365
  %v1398 = vmul.f32 %v1366, %v1366
  %v1399 = vmul.f32 %v1367, %v1367
  %v1400 = vmul.f32 %v1368, %v1368
  %v1401 = vmul.f32 %v1369, %v1369
  %v1402 = vmul.f32 %v1370, %v1370
  %v1403 = vmul.f32 %v1371, %v1371
  %v1404 = vmul.f32 %v1372, %v1372
  %v1405 = vmul.f32 %v1373, %v1373
  %v1406 = vmul.f32 %v1374, %v1374
  %v1407 = vmul.f32 %v1375, %v1375
  %v1408 = vmul.f32 %v1376, %v1376
  %v1409 = vmul.f32 %v1377, %v1377
  %v1410 = vmul.f32 %v1378, %v1378
  %v1411 = vmul.f32 %v1379, %v1379
  %v1412 = vmul.f32 %v1380, %v1380
  %v1413 = vmul.f32 %v1381, %v1381
  %v1414 = vmul.f32 %v1382, %v1382
  %v1415 = vmul.f32 %v1383, %v1383
  %v1416 = vmul.f32 %v1384, %v1384
  %v1417 = vmul.f32 %v1385, %v1385
  %v1418 = vmul.f32 %v1386, %v1386
  %v1419 = vmul.f32 %v1387, %v1387
  %v1420 = vmul.f32 %v1388, %v1388
  %v1421 = vmul.f32 %v1389, %v1389
  %v1422 = vmul.f32 %v1390, %v1390
  %v1423 = vadd.f32 %v1391, %v1392
  %v1424 = vadd.f32 %v1423, %v1393
  %v1425 = vadd.f32 %v1424, %v1394
  %v1426 = vadd.f32 %v1425, %v1395
  %v1427 = vadd.f32 %v1426, %v1396
  %v1428 = vadd.f32 %v1427, %v1397
  %v1429 = vsel %vm1221, %v1398, 0.0
  %v1430 = vadd.f32 %v1428, %v1429
  %1431 = vadd.xlane.f32.xlu0 %v1430
  %v1432 = vpop.xlane.xlu0 %1431
  %v1433 = vadd.f32 %v1399, %v1400
  %v1434 = vadd.f32 %v1433, %v1401
  %v1435 = vadd.f32 %v1434, %v1402
  %v1436 = vadd.f32 %v1435, %v1403
  %v1437 = vadd.f32 %v1436, %v1404
  %v1438 = vadd.f32 %v1437, %v1405
  %v1439 = vsel %vm1221, %v1406, 0.0
  %v1440 = vadd.f32 %v1438, %v1439
  %1441 = vadd.xlane.f32.xlu0 %v1440
  %v1442 = vpop.xlane.xlu0 %1441
  %v1443 = vadd.f32 %v1407, %v1408
  %v1444 = vadd.f32 %v1443, %v1409
  %v1445 = vadd.f32 %v1444, %v1410
  %v1446 = vadd.f32 %v1445, %v1411
  %v1447 = vadd.f32 %v1446, %v1412
  %v1448 = vadd.f32 %v1447, %v1413
  %v1449 = vsel %vm1221, %v1414, 0.0
  %v1450 = vadd.f32 %v1448, %v1449
  %1451 = vadd.xlane.f32.xlu0 %v1450
  %v1452 = vpop.xlane.xlu0 %1451
  %v1453 = vadd.f32 %v1415, %v1416
  %v1454 = vadd.f32 %v1453, %v1417
  %v1455 = vadd.f32 %v1454, %v1418
  %v1456 = vadd.f32 %v1455, %v1419
  %v1457 = vadd.f32 %v1456, %v1420
  %v1458 = vadd.f32 %v1457, %v1421
  %v1459 = vsel %vm1221, %v1422, 0.0
  %v1460 = vadd.f32 %v1458, %v1459
  %1461 = vadd.xlane.f32.xlu0 %v1460
  %v1462 = vpop.xlane.xlu0 %1461
  %v1463 = vadd.f32 %v1432, 0.0
  %v1464 = vadd.f32 %v1442, 0.0
  %v1465 = vadd.f32 %v1452, 0.0
  %v1466 = vadd.f32 %v1462, 0.0
  %v1467 = vsub.f32 %v798, %v1355
  %v1468 = vsub.f32 %v799, %v1355
  %v1469 = vsub.f32 %v800, %v1355
  %v1470 = vsub.f32 %v801, %v1355
  %v1471 = vsub.f32 %v802, %v1355
  %v1472 = vsub.f32 %v803, %v1355
  %v1473 = vsub.f32 %v804, %v1355
  %v1474 = vsub.f32 %v805, %v1355
  %v1475 = vsub.f32 %v806, %v1356
  %v1476 = vsub.f32 %v807, %v1356
  %v1477 = vsub.f32 %v808, %v1356
  %v1478 = vsub.f32 %v809, %v1356
  %v1479 = vsub.f32 %v810, %v1356
  %v1480 = vsub.f32 %v811, %v1356
  %v1481 = vsub.f32 %v812, %v1356
  %v1482 = vsub.f32 %v813, %v1356
  %v1483 = vsub.f32 %v814, %v1357
  %v1484 = vsub.f32 %v815, %v1357
  %v1485 = vsub.f32 %v816, %v1357
  %v1486 = vsub.f32 %v817, %v1357
  %v1487 = vsub.f32 %v818, %v1357
  %v1488 = vsub.f32 %v819, %v1357
  %v1489 = vsub.f32 %v820, %v1357
  %v1490 = vsub.f32 %v821, %v1357
  %v1491 = vsub.f32 %v822, %v1358
  %v1492 = vsub.f32 %v823, %v1358
  %v1493 = vsub.f32 %v824, %v1358
  %v1494 = vsub.f32 %v825, %v1358
  %v1495 = vsub.f32 %v826, %v1358
  %v1496 = vsub.f32 %v827, %v1358
  %v1497 = vsub.f32 %v828, %v1358
  %v1498 = vsub.f32 %v829, %v1358
  %v1499 = vmul.f32 %v1467, %v1467
  %v1500 = vmul.f32 %v1468, %v1468
  %v1501 = vmul.f32 %v1469, %v1469
  %v1502 = vmul.f32 %v1470, %v1470
  %v1503 = vmul.f32 %v1471, %v1471
  %v1504 = vmul.f32 %v1472, %v1472
  %v1505 = vmul.f32 %v1473, %v1473
  %v1506 = vmul.f32 %v1474, %v1474
  %v1507 = vmul.f32 %v1475, %v1475
  %v1508 = vmul.f32 %v1476, %v1476
  %v1509 = vmul.f32 %v1477, %v1477
  %v1510 = vmul.f32 %v1478, %v1478
  %v1511 = vmul.f32 %v1479, %v1479
  %v1512 = vmul.f32 %v1480, %v1480
  %v1513 = vmul.f32 %v1481, %v1481
  %v1514 = vmul.f32 %v1482, %v1482
  %v1515 = vmul.f32 %v1483, %v1483
  %v1516 = vmul.f32 %v1484, %v1484
  %v1517 = vmul.f32 %v1485, %v1485
  %v1518 = vmul.f32 %v1486, %v1486
  %v1519 = vmul.f32 %v1487, %v1487
  %v1520 = vmul.f32 %v1488, %v1488
  %v1521 = vmul.f32 %v1489, %v1489
  %v1522 = vmul.f32 %v1490, %v1490
  %v1523 = vmul.f32 %v1491, %v1491
  %v1524 = vmul.f32 %v1492, %v1492
  %v1525 = vmul.f32 %v1493, %v1493
  %v1526 = vmul.f32 %v1494, %v1494
  %v1527 = vmul.f32 %v1495, %v1495
  %v1528 = vmul.f32 %v1496, %v1496
  %v1529 = vmul.f32 %v1497, %v1497
  %v1530 = vmul.f32 %v1498, %v1498
  %v1531 = vadd.f32 %v1499, %v1500
  %v1532 = vadd.f32 %v1531, %v1501
  %v1533 = vadd.f32 %v1532, %v1502
  %v1534 = vadd.f32 %v1533, %v1503
  %v1535 = vadd.f32 %v1534, %v1504
  %v1536 = vadd.f32 %v1535, %v1505
  %v1537 = vsel %vm1221, %v1506, 0.0
  %v1538 = vadd.f32 %v1536, %v1537
  %1539 = vadd.xlane.f32.xlu0 %v1538
  %v1540 = vpop.xlane.xlu0 %1539
  %v1541 = vadd.f32 %v1507, %v1508
  %v1542 = vadd.f32 %v1541, %v1509
  %v1543 = vadd.f32 %v1542, %v1510
  %v1544 = vadd.f32 %v1543, %v1511
  %v1545 = vadd.f32 %v1544, %v1512
  %v1546 = vadd.f32 %v1545, %v1513
  %v1547 = vsel %vm1221, %v1514, 0.0
  %v1548 = vadd.f32 %v1546, %v1547
  %1549 = vadd.xlane.f32.xlu0 %v1548
  %v1550 = vpop.xlane.xlu0 %1549
  %v1551 = vadd.f32 %v1515, %v1516
  %v1552 = vadd.f32 %v1551, %v1517
  %v1553 = vadd.f32 %v1552, %v1518
  %v1554 = vadd.f32 %v1553, %v1519
  %v1555 = vadd.f32 %v1554, %v1520
  %v1556 = vadd.f32 %v1555, %v1521
  %v1557 = vsel %vm1221, %v1522, 0.0
  %v1558 = vadd.f32 %v1556, %v1557
  %1559 = vadd.xlane.f32.xlu0 %v1558
  %v1560 = vpop.xlane.xlu0 %1559
  %v1561 = vadd.f32 %v1523, %v1524
  %v1562 = vadd.f32 %v1561, %v1525
  %v1563 = vadd.f32 %v1562, %v1526
  %v1564 = vadd.f32 %v1563, %v1527
  %v1565 = vadd.f32 %v1564, %v1528
  %v1566 = vadd.f32 %v1565, %v1529
  %v1567 = vsel %vm1221, %v1530, 0.0
  %v1568 = vadd.f32 %v1566, %v1567
  %1569 = vadd.xlane.f32.xlu0 %v1568
  %v1570 = vpop.xlane.xlu0 %1569
  %v1571 = vadd.f32 %v1463, %v1540
  %v1572 = vadd.f32 %v1464, %v1550
  %v1573 = vadd.f32 %v1465, %v1560
  %v1574 = vadd.f32 %v1466, %v1570
  %v1575 = vsub.f32 %v1183, %v1355
  %v1576 = vsub.f32 %v1184, %v1355
  %v1577 = vsub.f32 %v1185, %v1355
  %v1578 = vsub.f32 %v1186, %v1355
  %v1579 = vsub.f32 %v1187, %v1355
  %v1580 = vsub.f32 %v1188, %v1355
  %v1581 = vsub.f32 %v1189, %v1355
  %v1582 = vsub.f32 %v1190, %v1355
  %v1583 = vsub.f32 %v1191, %v1356
  %v1584 = vsub.f32 %v1192, %v1356
  %v1585 = vsub.f32 %v1193, %v1356
  %v1586 = vsub.f32 %v1194, %v1356
  %v1587 = vsub.f32 %v1195, %v1356
  %v1588 = vsub.f32 %v1196, %v1356
  %v1589 = vsub.f32 %v1197, %v1356
  %v1590 = vsub.f32 %v1198, %v1356
  %v1591 = vsub.f32 %v1199, %v1357
  %v1592 = vsub.f32 %v1200, %v1357
  %v1593 = vsub.f32 %v1201, %v1357
  %v1594 = vsub.f32 %v1202, %v1357
  %v1595 = vsub.f32 %v1203, %v1357
  %v1596 = vsub.f32 %v1204, %v1357
  %v1597 = vsub.f32 %v1205, %v1357
  %v1598 = vsub.f32 %v1206, %v1357
  %v1599 = vsub.f32 %v1207, %v1358
  %v1600 = vsub.f32 %v1208, %v1358
  %v1601 = vsub.f32 %v1209, %v1358
  %v1602 = vsub.f32 %v1210, %v1358
  %v1603 = vsub.f32 %v1211, %v1358
  %v1604 = vsub.f32 %v1212, %v1358
  %v1605 = vsub.f32 %v1213, %v1358
  %v1606 = vsub.f32 %v1214, %v1358
  %v1607 = vmul.f32 %v1575, %v1575
  %v1608 = vmul.f32 %v1576, %v1576
  %v1609 = vmul.f32 %v1577, %v1577
  %v1610 = vmul.f32 %v1578, %v1578
  %v1611 = vmul.f32 %v1579, %v1579
  %v1612 = vmul.f32 %v1580, %v1580
  %v1613 = vmul.f32 %v1581, %v1581
  %v1614 = vmul.f32 %v1582, %v1582
  %v1615 = vmul.f32 %v1583, %v1583
  %v1616 = vmul.f32 %v1584, %v1584
  %v1617 = vmul.f32 %v1585, %v1585
  %v1618 = vmul.f32 %v1586, %v1586
  %v1619 = vmul.f32 %v1587, %v1587
  %v1620 = vmul.f32 %v1588, %v1588
  %v1621 = vmul.f32 %v1589, %v1589
  %v1622 = vmul.f32 %v1590, %v1590
  %v1623 = vmul.f32 %v1591, %v1591
  %v1624 = vmul.f32 %v1592, %v1592
  %v1625 = vmul.f32 %v1593, %v1593
  %v1626 = vmul.f32 %v1594, %v1594
  %v1627 = vmul.f32 %v1595, %v1595
  %v1628 = vmul.f32 %v1596, %v1596
  %v1629 = vmul.f32 %v1597, %v1597
  %v1630 = vmul.f32 %v1598, %v1598
  %v1631 = vmul.f32 %v1599, %v1599
  %v1632 = vmul.f32 %v1600, %v1600
  %v1633 = vmul.f32 %v1601, %v1601
  %v1634 = vmul.f32 %v1602, %v1602
  %v1635 = vmul.f32 %v1603, %v1603
  %v1636 = vmul.f32 %v1604, %v1604
  %v1637 = vmul.f32 %v1605, %v1605
  %v1638 = vmul.f32 %v1606, %v1606
  %v1639 = vadd.f32 %v1607, %v1608
  %v1640 = vadd.f32 %v1639, %v1609
  %v1641 = vadd.f32 %v1640, %v1610
  %v1642 = vadd.f32 %v1641, %v1611
  %v1643 = vadd.f32 %v1642, %v1612
  %v1644 = vadd.f32 %v1643, %v1613
  %v1645 = vsel %vm1221, %v1614, 0.0
  %v1646 = vadd.f32 %v1644, %v1645
  %1647 = vadd.xlane.f32.xlu0 %v1646
  %v1648 = vpop.xlane.xlu0 %1647
  %v1649 = vadd.f32 %v1615, %v1616
  %v1650 = vadd.f32 %v1649, %v1617
  %v1651 = vadd.f32 %v1650, %v1618
  %v1652 = vadd.f32 %v1651, %v1619
  %v1653 = vadd.f32 %v1652, %v1620
  %v1654 = vadd.f32 %v1653, %v1621
  %v1655 = vsel %vm1221, %v1622, 0.0
  %v1656 = vadd.f32 %v1654, %v1655
  %1657 = vadd.xlane.f32.xlu0 %v1656
  %v1658 = vpop.xlane.xlu0 %1657
  %v1659 = vadd.f32 %v1623, %v1624
  %v1660 = vadd.f32 %v1659, %v1625
  %v1661 = vadd.f32 %v1660, %v1626
  %v1662 = vadd.f32 %v1661, %v1627
  %v1663 = vadd.f32 %v1662, %v1628
  %v1664 = vadd.f32 %v1663, %v1629
  %v1665 = vsel %vm1221, %v1630, 0.0
  %v1666 = vadd.f32 %v1664, %v1665
  %1667 = vadd.xlane.f32.xlu0 %v1666
  %v1668 = vpop.xlane.xlu0 %1667
  %v1669 = vadd.f32 %v1631, %v1632
  %v1670 = vadd.f32 %v1669, %v1633
  %v1671 = vadd.f32 %v1670, %v1634
  %v1672 = vadd.f32 %v1671, %v1635
  %v1673 = vadd.f32 %v1672, %v1636
  %v1674 = vadd.f32 %v1673, %v1637
  %v1675 = vsel %vm1221, %v1638, 0.0
  %v1676 = vadd.f32 %v1674, %v1675
  %1677 = vadd.xlane.f32.xlu0 %v1676
  %v1678 = vpop.xlane.xlu0 %1677
  %v1679 = vadd.f32 %v1571, %v1648
  %v1680 = vadd.f32 %v1572, %v1658
  %v1681 = vadd.f32 %v1573, %v1668
  %v1682 = vadd.f32 %v1574, %v1678
  %v1683 = vmul.f32 %v1679, %v1354
  %v1684 = vmul.f32 %v1680, %v1354
  %v1685 = vmul.f32 %v1681, %v1354
  %v1686 = vmul.f32 %v1682, %v1354
  %v1687 = vld [vmem:[%s3] sm:$0xff]
  %v1688 = vld [vmem:[%s3 + $0x8] sm:$0xff]
  %v1689 = vld [vmem:[%s3 + $0x10] sm:$0xff]
  %v1690 = vld [vmem:[%s3 + $0x18] sm:$0xff]
  %v1691 = vadd.f32 %v1683, 1e-05
  %v1692 = vadd.f32 %v1684, 1e-05
  %v1693 = vadd.f32 %v1685, 1e-05
  %v1694 = vadd.f32 %v1686, 1e-05
  %v1695 = vrsqrt.pop %v1691
  %v1696 = vmul.f32 %v1695, %v1691
  %v1697 = vmul.f32 %v1696, %v1695
  %v1698 = vmul.f32 0.5, %v1697
  %v1699 = vsub.f32 1.5, %v1698
  %v1700 = vmul.f32 %v1695, %v1699
  %vm1701 = vweird.f32 %v1691
  %vm1702 = vweird.f32 %v1695
  %vm1703 = vmor %vm1701, %vm1702
  %v1704 = vsel %vm1703, %v1695, %v1700
  %v1705 = vrsqrt.pop %v1692
  %v1706 = vmul.f32 %v1705, %v1692
  %v1707 = vmul.f32 %v1706, %v1705
  %v1708 = vmul.f32 0.5, %v1707
  %v1709 = vsub.f32 1.5, %v1708
  %v1710 = vmul.f32 %v1705, %v1709
  %vm1711 = vweird.f32 %v1692
  %vm1712 = vweird.f32 %v1705
  %vm1713 = vmor %vm1711, %vm1712
  %v1714 = vsel %vm1713, %v1705, %v1710
  %v1715 = vrsqrt.pop %v1693
  %v1716 = vmul.f32 %v1715, %v1693
  %v1717 = vmul.f32 %v1716, %v1715
  %v1718 = vmul.f32 0.5, %v1717
  %v1719 = vsub.f32 1.5, %v1718
  %v1720 = vmul.f32 %v1715, %v1719
  %vm1721 = vweird.f32 %v1693
  %vm1722 = vweird.f32 %v1715
  %vm1723 = vmor %vm1721, %vm1722
  %v1724 = vsel %vm1723, %v1715, %v1720
  %v1725 = vrsqrt.pop %v1694
  %v1726 = vmul.f32 %v1725, %v1694
  %v1727 = vmul.f32 %v1726, %v1725
  %v1728 = vmul.f32 0.5, %v1727
  %v1729 = vsub.f32 1.5, %v1728
  %v1730 = vmul.f32 %v1725, %v1729
  %vm1731 = vweird.f32 %v1694
  %vm1732 = vweird.f32 %v1725
  %vm1733 = vmor %vm1731, %vm1732
  %v1734 = vsel %vm1733, %v1725, %v1730
  %v1735 = vmul.f32 %v1687, %v1704
  %v1736 = vmul.f32 %v1688, %v1714
  %v1737 = vmul.f32 %v1689, %v1724
  %v1738 = vmul.f32 %v1690, %v1734
  %v1739 = vld [vmem:[%s4] sm:$0xff]
  %v1740 = vld [vmem:[%s4 + $0x8] sm:$0xff]
  %v1741 = vld [vmem:[%s4 + $0x10] sm:$0xff]
  %v1742 = vld [vmem:[%s4 + $0x18] sm:$0xff]
  %v1743 = vmul.f32 %v1355, %v1735
  %v1744 = vmul.f32 %v1356, %v1736
  %v1745 = vmul.f32 %v1357, %v1737
  %v1746 = vmul.f32 %v1358, %v1738
  %v1747 = vsub.f32 %v1739, %v1743
  %v1748 = vsub.f32 %v1740, %v1744
  %v1749 = vsub.f32 %v1741, %v1745
  %v1750 = vsub.f32 %v1742, %v1746
  %1752 = vset.pattern.permute.xlu0 0
  %1753 = vperm.xlu0 %1752, %v1735
  %v1754 = vpop.permute.xlu0 %1753
  %1757 = vset.pattern.permute.xlu0 0
  %1758 = vperm.xlu0 %1757, %v1736
  %v1759 = vpop.permute.xlu0 %1758
  %1762 = vset.pattern.permute.xlu0 0
  %1763 = vperm.xlu0 %1762, %v1737
  %v1764 = vpop.permute.xlu0 %1763
  %1767 = vset.pattern.permute.xlu0 0
  %1768 = vperm.xlu0 %1767, %v1738
  %v1769 = vpop.permute.xlu0 %1768
  %v1771 = vmul.f32 %v413, %v1754
  %v1772 = vmul.f32 %v414, %v1754
  %v1773 = vmul.f32 %v415, %v1754
  %v1774 = vmul.f32 %v416, %v1754
  %v1775 = vmul.f32 %v417, %v1754
  %v1776 = vmul.f32 %v418, %v1754
  %v1777 = vmul.f32 %v419, %v1754
  %v1778 = vmul.f32 %v420, %v1754
  %v1779 = vmul.f32 %v421, %v1759
  %v1780 = vmul.f32 %v422, %v1759
  %v1781 = vmul.f32 %v423, %v1759
  %v1782 = vmul.f32 %v424, %v1759
  %v1783 = vmul.f32 %v425, %v1759
  %v1784 = vmul.f32 %v426, %v1759
  %v1785 = vmul.f32 %v427, %v1759
  %v1786 = vmul.f32 %v428, %v1759
  %v1787 = vmul.f32 %v429, %v1764
  %v1788 = vmul.f32 %v430, %v1764
  %v1789 = vmul.f32 %v431, %v1764
  %v1790 = vmul.f32 %v432, %v1764
  %v1791 = vmul.f32 %v433, %v1764
  %v1792 = vmul.f32 %v434, %v1764
  %v1793 = vmul.f32 %v435, %v1764
  %v1794 = vmul.f32 %v436, %v1764
  %v1795 = vmul.f32 %v437, %v1769
  %v1796 = vmul.f32 %v438, %v1769
  %v1797 = vmul.f32 %v439, %v1769
  %v1798 = vmul.f32 %v440, %v1769
  %v1799 = vmul.f32 %v441, %v1769
  %v1800 = vmul.f32 %v442, %v1769
  %v1801 = vmul.f32 %v443, %v1769
  %v1802 = vmul.f32 %v444, %v1769
  %1804 = vset.pattern.permute.xlu0 0
  %1805 = vperm.xlu0 %1804, %v1747
  %v1806 = vpop.permute.xlu0 %1805
  %1809 = vset.pattern.permute.xlu0 0
  %1810 = vperm.xlu0 %1809, %v1748
  %v1811 = vpop.permute.xlu0 %1810
  %1814 = vset.pattern.permute.xlu0 0
  %1815 = vperm.xlu0 %1814, %v1749
  %v1816 = vpop.permute.xlu0 %1815
  %1819 = vset.pattern.permute.xlu0 0
  %1820 = vperm.xlu0 %1819, %v1750
  %v1821 = vpop.permute.xlu0 %1820
  %v1823 = vadd.f32 %v1771, %v1806
  %v1824 = vadd.f32 %v1772, %v1806
  %v1825 = vadd.f32 %v1773, %v1806
  %v1826 = vadd.f32 %v1774, %v1806
  %v1827 = vadd.f32 %v1775, %v1806
  %v1828 = vadd.f32 %v1776, %v1806
  %v1829 = vadd.f32 %v1777, %v1806
  %v1830 = vadd.f32 %v1778, %v1806
  %v1831 = vadd.f32 %v1779, %v1811
  %v1832 = vadd.f32 %v1780, %v1811
  %v1833 = vadd.f32 %v1781, %v1811
  %v1834 = vadd.f32 %v1782, %v1811
  %v1835 = vadd.f32 %v1783, %v1811
  %v1836 = vadd.f32 %v1784, %v1811
  %v1837 = vadd.f32 %v1785, %v1811
  %v1838 = vadd.f32 %v1786, %v1811
  %v1839 = vadd.f32 %v1787, %v1816
  %v1840 = vadd.f32 %v1788, %v1816
  %v1841 = vadd.f32 %v1789, %v1816
  %v1842 = vadd.f32 %v1790, %v1816
  %v1843 = vadd.f32 %v1791, %v1816
  %v1844 = vadd.f32 %v1792, %v1816
  %v1845 = vadd.f32 %v1793, %v1816
  %v1846 = vadd.f32 %v1794, %v1816
  %v1847 = vadd.f32 %v1795, %v1821
  %v1848 = vadd.f32 %v1796, %v1821
  %v1849 = vadd.f32 %v1797, %v1821
  %v1850 = vadd.f32 %v1798, %v1821
  %v1851 = vadd.f32 %v1799, %v1821
  %v1852 = vadd.f32 %v1800, %v1821
  %v1853 = vadd.f32 %v1801, %v1821
  %v1854 = vadd.f32 %v1802, %v1821
  %v1855 = vmul.f32 %v798, %v1754
  %v1856 = vmul.f32 %v799, %v1754
  %v1857 = vmul.f32 %v800, %v1754
  %v1858 = vmul.f32 %v801, %v1754
  %v1859 = vmul.f32 %v802, %v1754
  %v1860 = vmul.f32 %v803, %v1754
  %v1861 = vmul.f32 %v804, %v1754
  %v1862 = vmul.f32 %v805, %v1754
  %v1863 = vmul.f32 %v806, %v1759
  %v1864 = vmul.f32 %v807, %v1759
  %v1865 = vmul.f32 %v808, %v1759
  %v1866 = vmul.f32 %v809, %v1759
  %v1867 = vmul.f32 %v810, %v1759
  %v1868 = vmul.f32 %v811, %v1759
  %v1869 = vmul.f32 %v812, %v1759
  %v1870 = vmul.f32 %v813, %v1759
  %v1871 = vmul.f32 %v814, %v1764
  %v1872 = vmul.f32 %v815, %v1764
  %v1873 = vmul.f32 %v816, %v1764
  %v1874 = vmul.f32 %v817, %v1764
  %v1875 = vmul.f32 %v818, %v1764
  %v1876 = vmul.f32 %v819, %v1764
  %v1877 = vmul.f32 %v820, %v1764
  %v1878 = vmul.f32 %v821, %v1764
  %v1879 = vmul.f32 %v822, %v1769
  %v1880 = vmul.f32 %v823, %v1769
  %v1881 = vmul.f32 %v824, %v1769
  %v1882 = vmul.f32 %v825, %v1769
  %v1883 = vmul.f32 %v826, %v1769
  %v1884 = vmul.f32 %v827, %v1769
  %v1885 = vmul.f32 %v828, %v1769
  %v1886 = vmul.f32 %v829, %v1769
  %v1887 = vadd.f32 %v1855, %v1806
  %v1888 = vadd.f32 %v1856, %v1806
  %v1889 = vadd.f32 %v1857, %v1806
  %v1890 = vadd.f32 %v1858, %v1806
  %v1891 = vadd.f32 %v1859, %v1806
  %v1892 = vadd.f32 %v1860, %v1806
  %v1893 = vadd.f32 %v1861, %v1806
  %v1894 = vadd.f32 %v1862, %v1806
  %v1895 = vadd.f32 %v1863, %v1811
  %v1896 = vadd.f32 %v1864, %v1811
  %v1897 = vadd.f32 %v1865, %v1811
  %v1898 = vadd.f32 %v1866, %v1811
  %v1899 = vadd.f32 %v1867, %v1811
  %v1900 = vadd.f32 %v1868, %v1811
  %v1901 = vadd.f32 %v1869, %v1811
  %v1902 = vadd.f32 %v1870, %v1811
  %v1903 = vadd.f32 %v1871, %v1816
  %v1904 = vadd.f32 %v1872, %v1816
  %v1905 = vadd.f32 %v1873, %v1816
  %v1906 = vadd.f32 %v1874, %v1816
  %v1907 = vadd.f32 %v1875, %v1816
  %v1908 = vadd.f32 %v1876, %v1816
  %v1909 = vadd.f32 %v1877, %v1816
  %v1910 = vadd.f32 %v1878, %v1816
  %v1911 = vadd.f32 %v1879, %v1821
  %v1912 = vadd.f32 %v1880, %v1821
  %v1913 = vadd.f32 %v1881, %v1821
  %v1914 = vadd.f32 %v1882, %v1821
  %v1915 = vadd.f32 %v1883, %v1821
  %v1916 = vadd.f32 %v1884, %v1821
  %v1917 = vadd.f32 %v1885, %v1821
  %v1918 = vadd.f32 %v1886, %v1821
  %v1919 = vmax.f32 %v1823, %v1887
  %v1920 = vmax.f32 %v1824, %v1888
  %v1921 = vmax.f32 %v1825, %v1889
  %v1922 = vmax.f32 %v1826, %v1890
  %v1923 = vmax.f32 %v1827, %v1891
  %v1924 = vmax.f32 %v1828, %v1892
  %v1925 = vmax.f32 %v1829, %v1893
  %v1926 = vmax.f32 %v1830, %v1894
  %v1927 = vmax.f32 %v1831, %v1895
  %v1928 = vmax.f32 %v1832, %v1896
  %v1929 = vmax.f32 %v1833, %v1897
  %v1930 = vmax.f32 %v1834, %v1898
  %v1931 = vmax.f32 %v1835, %v1899
  %v1932 = vmax.f32 %v1836, %v1900
  %v1933 = vmax.f32 %v1837, %v1901
  %v1934 = vmax.f32 %v1838, %v1902
  %v1935 = vmax.f32 %v1839, %v1903
  %v1936 = vmax.f32 %v1840, %v1904
  %v1937 = vmax.f32 %v1841, %v1905
  %v1938 = vmax.f32 %v1842, %v1906
  %v1939 = vmax.f32 %v1843, %v1907
  %v1940 = vmax.f32 %v1844, %v1908
  %v1941 = vmax.f32 %v1845, %v1909
  %v1942 = vmax.f32 %v1846, %v1910
  %v1943 = vmax.f32 %v1847, %v1911
  %v1944 = vmax.f32 %v1848, %v1912
  %v1945 = vmax.f32 %v1849, %v1913
  %v1946 = vmax.f32 %v1850, %v1914
  %v1947 = vmax.f32 %v1851, %v1915
  %v1948 = vmax.f32 %v1852, %v1916
  %v1949 = vmax.f32 %v1853, %v1917
  %v1950 = vmax.f32 %v1854, %v1918
  %v1951 = vmul.f32 %v1183, %v1754
  %v1952 = vmul.f32 %v1184, %v1754
  %v1953 = vmul.f32 %v1185, %v1754
  %v1954 = vmul.f32 %v1186, %v1754
  %v1955 = vmul.f32 %v1187, %v1754
  %v1956 = vmul.f32 %v1188, %v1754
  %v1957 = vmul.f32 %v1189, %v1754
  %v1958 = vmul.f32 %v1190, %v1754
  %v1959 = vmul.f32 %v1191, %v1759
  %v1960 = vmul.f32 %v1192, %v1759
  %v1961 = vmul.f32 %v1193, %v1759
  %v1962 = vmul.f32 %v1194, %v1759
  %v1963 = vmul.f32 %v1195, %v1759
  %v1964 = vmul.f32 %v1196, %v1759
  %v1965 = vmul.f32 %v1197, %v1759
  %v1966 = vmul.f32 %v1198, %v1759
  %v1967 = vmul.f32 %v1199, %v1764
  %v1968 = vmul.f32 %v1200, %v1764
  %v1969 = vmul.f32 %v1201, %v1764
  %v1970 = vmul.f32 %v1202, %v1764
  %v1971 = vmul.f32 %v1203, %v1764
  %v1972 = vmul.f32 %v1204, %v1764
  %v1973 = vmul.f32 %v1205, %v1764
  %v1974 = vmul.f32 %v1206, %v1764
  %v1975 = vmul.f32 %v1207, %v1769
  %v1976 = vmul.f32 %v1208, %v1769
  %v1977 = vmul.f32 %v1209, %v1769
  %v1978 = vmul.f32 %v1210, %v1769
  %v1979 = vmul.f32 %v1211, %v1769
  %v1980 = vmul.f32 %v1212, %v1769
  %v1981 = vmul.f32 %v1213, %v1769
  %v1982 = vmul.f32 %v1214, %v1769
  %v1983 = vadd.f32 %v1951, %v1806
  %v1984 = vadd.f32 %v1952, %v1806
  %v1985 = vadd.f32 %v1953, %v1806
  %v1986 = vadd.f32 %v1954, %v1806
  %v1987 = vadd.f32 %v1955, %v1806
  %v1988 = vadd.f32 %v1956, %v1806
  %v1989 = vadd.f32 %v1957, %v1806
  %v1990 = vadd.f32 %v1958, %v1806
  %v1991 = vadd.f32 %v1959, %v1811
  %v1992 = vadd.f32 %v1960, %v1811
  %v1993 = vadd.f32 %v1961, %v1811
  %v1994 = vadd.f32 %v1962, %v1811
  %v1995 = vadd.f32 %v1963, %v1811
  %v1996 = vadd.f32 %v1964, %v1811
  %v1997 = vadd.f32 %v1965, %v1811
  %v1998 = vadd.f32 %v1966, %v1811
  %v1999 = vadd.f32 %v1967, %v1816
  %v2000 = vadd.f32 %v1968, %v1816
  %v2001 = vadd.f32 %v1969, %v1816
  %v2002 = vadd.f32 %v1970, %v1816
  %v2003 = vadd.f32 %v1971, %v1816
  %v2004 = vadd.f32 %v1972, %v1816
  %v2005 = vadd.f32 %v1973, %v1816
  %v2006 = vadd.f32 %v1974, %v1816
  %v2007 = vadd.f32 %v1975, %v1821
  %v2008 = vadd.f32 %v1976, %v1821
  %v2009 = vadd.f32 %v1977, %v1821
  %v2010 = vadd.f32 %v1978, %v1821
  %v2011 = vadd.f32 %v1979, %v1821
  %v2012 = vadd.f32 %v1980, %v1821
  %v2013 = vadd.f32 %v1981, %v1821
  %v2014 = vadd.f32 %v1982, %v1821
  %v2015 = vmax.f32 %v1919, %v1983
  %v2016 = vmax.f32 %v1920, %v1984
  %v2017 = vmax.f32 %v1921, %v1985
  %v2018 = vmax.f32 %v1922, %v1986
  %v2019 = vmax.f32 %v1923, %v1987
  %v2020 = vmax.f32 %v1924, %v1988
  %v2021 = vmax.f32 %v1925, %v1989
  %v2022 = vmax.f32 %v1926, %v1990
  %v2023 = vmax.f32 %v1927, %v1991
  %v2024 = vmax.f32 %v1928, %v1992
  %v2025 = vmax.f32 %v1929, %v1993
  %v2026 = vmax.f32 %v1930, %v1994
  %v2027 = vmax.f32 %v1931, %v1995
  %v2028 = vmax.f32 %v1932, %v1996
  %v2029 = vmax.f32 %v1933, %v1997
  %v2030 = vmax.f32 %v1934, %v1998
  %v2031 = vmax.f32 %v1935, %v1999
  %v2032 = vmax.f32 %v1936, %v2000
  %v2033 = vmax.f32 %v1937, %v2001
  %v2034 = vmax.f32 %v1938, %v2002
  %v2035 = vmax.f32 %v1939, %v2003
  %v2036 = vmax.f32 %v1940, %v2004
  %v2037 = vmax.f32 %v1941, %v2005
  %v2038 = vmax.f32 %v1942, %v2006
  %v2039 = vmax.f32 %v1943, %v2007
  %v2040 = vmax.f32 %v1944, %v2008
  %v2041 = vmax.f32 %v1945, %v2009
  %v2042 = vmax.f32 %v1946, %v2010
  %v2043 = vmax.f32 %v1947, %v2011
  %v2044 = vmax.f32 %v1948, %v2012
  %v2045 = vmax.f32 %v1949, %v2013
  %v2046 = vmax.f32 %v1950, %v2014
  %2047 = vst [vmem:[%s5] sm:$0xff] %v2015
  %2048 = vst [vmem:[%s5 + $0x8] sm:$0xff] %v2016
  %2049 = vst [vmem:[%s5 + $0x10] sm:$0xff] %v2017
  %2050 = vst [vmem:[%s5 + $0x18] sm:$0xff] %v2018
  %2051 = vst [vmem:[%s5 + $0x20] sm:$0xff] %v2019
  %2052 = vst [vmem:[%s5 + $0x28] sm:$0xff] %v2020
  %2053 = vst [vmem:[%s5 + $0x30] sm:$0xff] %v2021
  %2054 = vst.msk [vmem:[%s5 + $0x38] sm:$0xff] %vm1221, %v2022
  %2055 = vst [vmem:[%s5 + $0x40] sm:$0xff] %v2023
  %2056 = vst [vmem:[%s5 + $0x48] sm:$0xff] %v2024
  %2057 = vst [vmem:[%s5 + $0x50] sm:$0xff] %v2025
  %2058 = vst [vmem:[%s5 + $0x58] sm:$0xff] %v2026
  %2059 = vst [vmem:[%s5 + $0x60] sm:$0xff] %v2027
  %2060 = vst [vmem:[%s5 + $0x68] sm:$0xff] %v2028
  %2061 = vst [vmem:[%s5 + $0x70] sm:$0xff] %v2029
  %2062 = vst.msk [vmem:[%s5 + $0x78] sm:$0xff] %vm1221, %v2030
  %2063 = vst [vmem:[%s5 + $0x80] sm:$0xff] %v2031
  %2064 = vst [vmem:[%s5 + $0x88] sm:$0xff] %v2032
  %2065 = vst [vmem:[%s5 + $0x90] sm:$0xff] %v2033
  %2066 = vst [vmem:[%s5 + $0x98] sm:$0xff] %v2034
  %2067 = vst [vmem:[%s5 + $0xa0] sm:$0xff] %v2035
  %2068 = vst [vmem:[%s5 + $0xa8] sm:$0xff] %v2036
  %2069 = vst [vmem:[%s5 + $0xb0] sm:$0xff] %v2037
  %2070 = vst.msk [vmem:[%s5 + $0xb8] sm:$0xff] %vm1221, %v2038
  %2071 = vst [vmem:[%s5 + $0xc0] sm:$0xff] %v2039
  %2072 = vst [vmem:[%s5 + $0xc8] sm:$0xff] %v2040
  %2073 = vst [vmem:[%s5 + $0xd0] sm:$0xff] %v2041
  %2074 = vst [vmem:[%s5 + $0xd8] sm:$0xff] %v2042
  %2075 = vst [vmem:[%s5 + $0xe0] sm:$0xff] %v2043
  %2076 = vst [vmem:[%s5 + $0xe8] sm:$0xff] %v2044
  %2077 = vst [vmem:[%s5 + $0xf0] sm:$0xff] %v2045
  %2078 = vst.msk [vmem:[%s5 + $0xf8] sm:$0xff] %vm1221, %v2046
  // Predicated region
  $region22: #{embedding_network_forward.3} parent=0 // pred_check
    _
  $region23: #{embedding_network_forward.3} parent=0 // pred_check_branch
    %2080 = sbr.rel (0) target = $region25
  $region24: #{embedding_network_forward.3} parent=0 // pred_region
    _
  $region25: #{embedding_network_forward.3} parent=0 // pred_fallthru
    _
  // Predicated region
  $region26: #{embedding_network_forward.3} parent=0 // pred_check
    _
  $region27: #{embedding_network_forward.3} parent=0 // pred_check_branch
    %2082 = sbr.rel (0) target = $region29
  $region28: #{embedding_network_forward.3} parent=0 // pred_region
    _
  $region29: #{embedding_network_forward.3} parent=0 // pred_fallthru
    _

// kernel: embedding_network_forward.4
$region0: #{embedding_network_forward.4}
  #allocation0 [shape = 'u32[]', space=smem, size = 0x4, offset = 0x4, fixed_abs, tag = 'smem constant byte address 0x4 - core index']
  #allocation1 [shape = 'u32[72,128]{1,0:T(1,128)}', space=vmem, size = 0x9000, scoped, tag = 'internal scratch']
  %s0 = inlined_call_operand.vmem [shape: f32[2,288,72], index: 0, kind: input, shape index: {}]
  %s1 = inlined_call_operand.vmem [shape: f32[64,288], index: 1, kind: input, shape index: {}]
  %s2 = inlined_call_operand.vmem [shape: f32[64,1], index: 2, kind: input, shape index: {}]
  %s3 = inlined_call_operand.vmem [shape: f32[64,1], index: 3, kind: input, shape index: {}]
  %s4 = inlined_call_operand.vmem [shape: f32[64,1], index: 4, kind: input, shape index: {}]
  %s5 = inlined_call_operand.vmem [shape: f32[2,64,72], index: 5, kind: output, shape index: {}]
  %s6 = sld [smem:[#allocation0]]
  $region30: #{embedding_network_forward.4} parent=0
    _
  %s8 = ssub.s32 1, %s6
  %s9 = scalar_select 0, %s8, %s6
  // Predicated region
  $region2: #{embedding_network_forward.4} parent=0 // pred_check
    _
  $region3: #{embedding_network_forward.4} parent=0 // pred_check_branch
    %11 = sbr.rel (0) target = $region5
  $region4: #{embedding_network_forward.4} parent=0 // pred_region
    _
  $region5: #{embedding_network_forward.4} parent=0 // pred_fallthru
    _
  // Predicated region
  $region6: #{embedding_network_forward.4} parent=0 // pred_check
    _
  $region7: #{embedding_network_forward.4} parent=0 // pred_check_branch
    %13 = sbr.rel (0) target = $region9
  $region8: #{embedding_network_forward.4} parent=0 // pred_region
    _
  $region9: #{embedding_network_forward.4} parent=0 // pred_fallthru
    _
  // Predicated region
  $region10: #{embedding_network_forward.4} parent=0 // pred_check
    _
  $region11: #{embedding_network_forward.4} parent=0 // pred_check_branch
    %15 = sbr.rel (0) target = $region13
  $region12: #{embedding_network_forward.4} parent=0 // pred_region
    _
  $region13: #{embedding_network_forward.4} parent=0 // pred_fallthru
    _
  // Predicated region
  $region14: #{embedding_network_forward.4} parent=0 // pred_check
    _
  $region15: #{embedding_network_forward.4} parent=0 // pred_check_branch
    %17 = sbr.rel (0) target = $region17
  $region16: #{embedding_network_forward.4} parent=0 // pred_region
    _
  $region17: #{embedding_network_forward.4} parent=0 // pred_fallthru
    _
  // Predicated region
  $region18: #{embedding_network_forward.4} parent=0 // pred_check
    _
  $region19: #{embedding_network_forward.4} parent=0 // pred_check_branch
    %19 = sbr.rel (0) target = $region21
  $region20: #{embedding_network_forward.4} parent=0 // pred_region
    _
  $region21: #{embedding_network_forward.4} parent=0 // pred_fallthru
    _
  %v20 = vld [vmem:[%s1] sm:$0xff]
  %v21 = vld [vmem:[%s1 + $0x8] sm:$0xff]
  %v22 = vld [vmem:[%s1 + $0x10] sm:$0xff]
  %v23 = vld [vmem:[%s1 + $0x18] sm:$0xff]
  %v24 = vld [vmem:[%s1 + $0x20] sm:$0xff]
  %v25 = vld [vmem:[%s1 + $0x28] sm:$0xff]
  %v26 = vld [vmem:[%s1 + $0x30] sm:$0xff]
  %v27 = vld [vmem:[%s1 + $0x38] sm:$0xff]
  %v28 = vld [vmem:[%s1 + $0x40] sm:$0xff]
  %v29 = vld [vmem:[%s1 + $0x48] sm:$0xff]
  %v30 = vld [vmem:[%s1 + $0x50] sm:$0xff]
  %v31 = vld [vmem:[%s1 + $0x58] sm:$0xff]
  %v32 = vld [vmem:[%s1 + $0x60] sm:$0xff]
  %v33 = vld [vmem:[%s1 + $0x68] sm:$0xff]
  %v34 = vld [vmem:[%s1 + $0x70] sm:$0xff]
  %v35 = vld [vmem:[%s1 + $0x78] sm:$0xff]
  %v36 = vld [vmem:[%s1 + $0x80] sm:$0xff]
  %v37 = vld [vmem:[%s1 + $0x88] sm:$0xff]
  %v38 = vld [vmem:[%s1 + $0x90] sm:$0xff]
  %v39 = vld [vmem:[%s1 + $0x98] sm:$0xff]
  %v40 = vld [vmem:[%s1 + $0xa0] sm:$0xff]
  %v41 = vld [vmem:[%s1 + $0xa8] sm:$0xff]
  %v42 = vld [vmem:[%s1 + $0xb0] sm:$0xff]
  %v43 = vld [vmem:[%s1 + $0xb8] sm:$0xff]
  %v44 = vld [vmem:[%s2] sm:$0xff]
  %v45 = vld [vmem:[%s2 + $0x8] sm:$0xff]
  %v46 = vld [vmem:[%s2 + $0x10] sm:$0xff]
  %v47 = vld [vmem:[%s2 + $0x18] sm:$0xff]
  %v48 = vld [vmem:[%s2 + $0x20] sm:$0xff]
  %v49 = vld [vmem:[%s2 + $0x28] sm:$0xff]
  %v50 = vld [vmem:[%s2 + $0x30] sm:$0xff]
  %v51 = vld [vmem:[%s2 + $0x38] sm:$0xff]
  %v52 = vld [vmem:[%s0] sm:$0xff]
  %v53 = vld [vmem:[%s0 + $0x8] sm:$0xff]
  %v54 = vld [vmem:[%s0 + $0x10] sm:$0xff]
  %v55 = vld [vmem:[%s0 + $0x18] sm:$0xff]
  %v56 = vld [vmem:[%s0 + $0x20] sm:$0xff]
  %v57 = vld [vmem:[%s0 + $0x28] sm:$0xff]
  %v58 = vld [vmem:[%s0 + $0x30] sm:$0xff]
  %v59 = vld [vmem:[%s0 + $0x38] sm:$0xff]
  %v60 = vld [vmem:[%s0 + $0x40] sm:$0xff]
  %v61 = vld [vmem:[%s0 + $0x48] sm:$0xff]
  %v62 = vld [vmem:[%s0 + $0x50] sm:$0xff]
  %v63 = vld [vmem:[%s0 + $0x58] sm:$0xff]
  %v64 = vld [vmem:[%s0 + $0x60] sm:$0xff]
  %v65 = vld [vmem:[%s0 + $0x68] sm:$0xff]
  %v66 = vld [vmem:[%s0 + $0x70] sm:$0xff]
  %v67 = vld [vmem:[%s0 + $0x78] sm:$0xff]
  %v68 = vld [vmem:[%s0 + $0x80] sm:$0xff]
  %v69 = vld [vmem:[%s0 + $0x88] sm:$0xff]
  %v70 = vld [vmem:[%s0 + $0x90] sm:$0xff]
  %v71 = vld [vmem:[%s0 + $0x98] sm:$0xff]
  %v72 = vld [vmem:[%s0 + $0xa0] sm:$0xff]
  %v73 = vld [vmem:[%s0 + $0xa8] sm:$0xff]
  %v74 = vld [vmem:[%s0 + $0xb0] sm:$0xff]
  %v75 = vld [vmem:[%s0 + $0xb8] sm:$0xff]
  %v76 = vld [vmem:[%s0 + $0xc0] sm:$0xff]
  %v77 = vld [vmem:[%s0 + $0xc8] sm:$0xff]
  %v78 = vld [vmem:[%s0 + $0xd0] sm:$0xff]
  %v79 = vld [vmem:[%s0 + $0xd8] sm:$0xff]
  %v80 = vld [vmem:[%s0 + $0xe0] sm:$0xff]
  %v81 = vld [vmem:[%s0 + $0xe8] sm:$0xff]
  %v82 = vld [vmem:[%s0 + $0xf0] sm:$0xff]
  %v83 = vld [vmem:[%s0 + $0xf8] sm:$0xff]
  %v84 = vld [vmem:[%s0 + $0x100] sm:$0xff]
  %v85 = vld [vmem:[%s0 + $0x108] sm:$0xff]
  %v86 = vld [vmem:[%s0 + $0x110] sm:$0xff]
  %v87 = vld [vmem:[%s0 + $0x118] sm:$0xff]
  %89 = vset.pattern.permute.xlu0 0
  %90 = vperm.xlu0 %89, %v44
  %v91 = vpop.permute.xlu0 %90
  %94 = vset.pattern.permute.xlu0 0
  %95 = vperm.xlu0 %94, %v45
  %v96 = vpop.permute.xlu0 %95
  %99 = vset.pattern.permute.xlu0 0
  %100 = vperm.xlu0 %99, %v46
  %v101 = vpop.permute.xlu0 %100
  %104 = vset.pattern.permute.xlu0 0
  %105 = vperm.xlu0 %104, %v47
  %v106 = vpop.permute.xlu0 %105
  %109 = vset.pattern.permute.xlu0 0
  %110 = vperm.xlu0 %109, %v48
  %v111 = vpop.permute.xlu0 %110
  %114 = vset.pattern.permute.xlu0 0
  %115 = vperm.xlu0 %114, %v49
  %v116 = vpop.permute.xlu0 %115
  %119 = vset.pattern.permute.xlu0 0
  %120 = vperm.xlu0 %119, %v50
  %v121 = vpop.permute.xlu0 %120
  %124 = vset.pattern.permute.xlu0 0
  %125 = vperm.xlu0 %124, %v51
  %v126 = vpop.permute.xlu0 %125
  %vm128 = vcmask 261120
  %v130 = vsel %vm128, %v22, 0
  %v133 = vsel %vm128, %v25, 0
  %v136 = vsel %vm128, %v28, 0
  %v139 = vsel %vm128, %v31, 0
  %v142 = vsel %vm128, %v34, 0
  %v145 = vsel %vm128, %v37, 0
  %v148 = vsel %vm128, %v40, 0
  %v151 = vsel %vm128, %v43, 0
  %153 = vmatpush.msra.mxu0 %v67
  %154 = vmatpush.msra.mxu0 %v66
  %155 = vmatpush.msra.mxu0 %v65
  %156 = vmatpush.msra.mxu0 %v64
  %157 = vmatpush.msra.mxu0 %v63
  %158 = vmatpush.msra.mxu0 %v62
  %159 = vmatpush.msra.mxu0 %v61
  %160 = vmatpush.msra.mxu0 %v60
  %161 = vmatpush.msra.mxu0 %v59
  %162 = vmatpush.msra.mxu0 %v58
  %163 = vmatpush.msra.mxu0 %v57
  %164 = vmatpush.msra.mxu0 %v56
  %165 = vmatpush.msra.mxu0 %v55
  %166 = vmatpush.msra.mxu0 %v54
  %167 = vmatpush.msra.mxu0 %v53
  %168 = vmatpush.msra.mxu0 %v52
  %169 = vmatmul.f32.gmra.mxu0 %v20
  %v170 = vpop.f32.mrf.mxu0
  %v171 = vadd.f32 %v91, %v170
  %172 = vmatmul.f32.gmra.mxu0 %v23
  %v173 = vpop.f32.mrf.mxu0
  %v174 = vadd.f32 %v96, %v173
  %175 = vmatmul.f32.gmra.mxu0 %v26
  %v176 = vpop.f32.mrf.mxu0
  %v177 = vadd.f32 %v101, %v176
  %178 = vmatmul.f32.gmra.mxu0 %v29
  %v179 = vpop.f32.mrf.mxu0
  %v180 = vadd.f32 %v106, %v179
  %181 = vmatmul.f32.gmra.mxu0 %v32
  %v182 = vpop.f32.mrf.mxu0
  %v183 = vadd.f32 %v111, %v182
  %184 = vmatmul.f32.gmra.mxu0 %v35
  %v185 = vpop.f32.mrf.mxu0
  %v186 = vadd.f32 %v116, %v185
  %187 = vmatmul.f32.gmra.mxu0 %v38
  %v188 = vpop.f32.mrf.mxu0
  %v189 = vadd.f32 %v121, %v188
  %190 = vmatmul.f32.gmra.mxu0 %v41
  %v191 = vpop.f32.mrf.mxu0
  %v192 = vadd.f32 %v126, %v191
  %193 = vdwg.mxu0
  %194 = vmatpush.msra.mxu0 %v83
  %195 = vmatpush.msra.mxu0 %v82
  %196 = vmatpush.msra.mxu0 %v81
  %197 = vmatpush.msra.mxu0 %v80
  %198 = vmatpush.msra.mxu0 %v79
  %199 = vmatpush.msra.mxu0 %v78
  %200 = vmatpush.msra.mxu0 %v77
  %201 = vmatpush.msra.mxu0 %v76
  %202 = vmatpush.msra.mxu0 %v75
  %203 = vmatpush.msra.mxu0 %v74
  %204 = vmatpush.msra.mxu0 %v73
  %205 = vmatpush.msra.mxu0 %v72
  %206 = vmatpush.msra.mxu0 %v71
  %207 = vmatpush.msra.mxu0 %v70
  %208 = vmatpush.msra.mxu0 %v69
  %209 = vmatpush.msra.mxu0 %v68
  %210 = vmatmul.f32.gmra.mxu0 %v21
  %v211 = vpop.f32.mrf.mxu0
  %v212 = vadd.f32 %v171, %v211
  %213 = vmatmul.f32.gmra.mxu0 %v24
  %v214 = vpop.f32.mrf.mxu0
  %v215 = vadd.f32 %v174, %v214
  %216 = vmatmul.f32.gmra.mxu0 %v27
  %v217 = vpop.f32.mrf.mxu0
  %v218 = vadd.f32 %v177, %v217
  %219 = vmatmul.f32.gmra.mxu0 %v30
  %v220 = vpop.f32.mrf.mxu0
  %v221 = vadd.f32 %v180, %v220
  %222 = vmatmul.f32.gmra.mxu0 %v33
  %v223 = vpop.f32.mrf.mxu0
  %v224 = vadd.f32 %v183, %v223
  %225 = vmatmul.f32.gmra.mxu0 %v36
  %v226 = vpop.f32.mrf.mxu0
  %v227 = vadd.f32 %v186, %v226
  %228 = vmatmul.f32.gmra.mxu0 %v39
  %v229 = vpop.f32.mrf.mxu0
  %v230 = vadd.f32 %v189, %v229
  %231 = vmatmul.f32.gmra.mxu0 %v42
  %v232 = vpop.f32.mrf.mxu0
  %v233 = vadd.f32 %v192, %v232
  %234 = vdwg.mxu0
  %235 = vmatpush.msra.mxu0 0.0
  %236 = vmatpush.msra.mxu0 0.0
  %237 = vmatpush.msra.mxu0 0.0
  %238 = vmatpush.msra.mxu0 0.0
  %239 = vmatpush.msra.mxu0 0.0
  %240 = vmatpush.msra.mxu0 0.0
  %241 = vmatpush.msra.mxu0 0.0
  %242 = vmatpush.msra.mxu0 0.0
  %243 = vmatpush.msra.mxu0 0.0
  %244 = vmatpush.msra.mxu0 0.0
  %245 = vmatpush.msra.mxu0 0.0
  %246 = vmatpush.msra.mxu0 0.0
  %247 = vmatpush.msra.mxu0 %v87
  %248 = vmatpush.msra.mxu0 %v86
  %249 = vmatpush.msra.mxu0 %v85
  %250 = vmatpush.msra.mxu0 %v84
  %251 = vmatmul.f32.gmra.mxu0 %v130
  %v252 = vpop.f32.mrf.mxu0
  %v253 = vadd.f32 %v212, %v252
  %254 = vmatmul.f32.gmra.mxu0 %v133
  %v255 = vpop.f32.mrf.mxu0
  %v256 = vadd.f32 %v215, %v255
  %257 = vmatmul.f32.gmra.mxu0 %v136
  %v258 = vpop.f32.mrf.mxu0
  %v259 = vadd.f32 %v218, %v258
  %260 = vmatmul.f32.gmra.mxu0 %v139
  %v261 = vpop.f32.mrf.mxu0
  %v262 = vadd.f32 %v221, %v261
  %263 = vmatmul.f32.gmra.mxu0 %v142
  %v264 = vpop.f32.mrf.mxu0
  %v265 = vadd.f32 %v224, %v264
  %266 = vmatmul.f32.gmra.mxu0 %v145
  %v267 = vpop.f32.mrf.mxu0
  %v268 = vadd.f32 %v227, %v267
  %269 = vmatmul.f32.gmra.mxu0 %v148
  %v270 = vpop.f32.mrf.mxu0
  %v271 = vadd.f32 %v230, %v270
  %272 = vmatmul.f32.gmra.mxu0 %v151
  %v273 = vpop.f32.mrf.mxu0
  %v274 = vadd.f32 %v233, %v273
  %275 = vdwg.mxu0
  %v276 = vmax.f32 %v253, 0.0
  %v277 = vmax.f32 %v256, 0.0
  %v278 = vmax.f32 %v259, 0.0
  %v279 = vmax.f32 %v262, 0.0
  %v280 = vmax.f32 %v265, 0.0
  %v281 = vmax.f32 %v268, 0.0
  %v282 = vmax.f32 %v271, 0.0
  %v283 = vmax.f32 %v274, 0.0
  %s284 = scalar_lea.vmem %s0, 288
  %v285 = vld [vmem:[%s284] sm:$0xff]
  %v286 = vld [vmem:[%s284 + $0x8] sm:$0xff]
  %v287 = vld [vmem:[%s284 + $0x10] sm:$0xff]
  %v288 = vld [vmem:[%s284 + $0x18] sm:$0xff]
  %v289 = vld [vmem:[%s284 + $0x20] sm:$0xff]
  %v290 = vld [vmem:[%s284 + $0x28] sm:$0xff]
  %v291 = vld [vmem:[%s284 + $0x30] sm:$0xff]
  %v292 = vld [vmem:[%s284 + $0x38] sm:$0xff]
  %v293 = vld [vmem:[%s284 + $0x40] sm:$0xff]
  %v294 = vld [vmem:[%s284 + $0x48] sm:$0xff]
  %v295 = vld [vmem:[%s284 + $0x50] sm:$0xff]
  %v296 = vld [vmem:[%s284 + $0x58] sm:$0xff]
  %v297 = vld [vmem:[%s284 + $0x60] sm:$0xff]
  %v298 = vld [vmem:[%s284 + $0x68] sm:$0xff]
  %v299 = vld [vmem:[%s284 + $0x70] sm:$0xff]
  %v300 = vld [vmem:[%s284 + $0x78] sm:$0xff]
  %v301 = vld [vmem:[%s284 + $0x80] sm:$0xff]
  %v302 = vld [vmem:[%s284 + $0x88] sm:$0xff]
  %v303 = vld [vmem:[%s284 + $0x90] sm:$0xff]
  %v304 = vld [vmem:[%s284 + $0x98] sm:$0xff]
  %v305 = vld [vmem:[%s284 + $0xa0] sm:$0xff]
  %v306 = vld [vmem:[%s284 + $0xa8] sm:$0xff]
  %v307 = vld [vmem:[%s284 + $0xb0] sm:$0xff]
  %v308 = vld [vmem:[%s284 + $0xb8] sm:$0xff]
  %v309 = vld [vmem:[%s284 + $0xc0] sm:$0xff]
  %v310 = vld [vmem:[%s284 + $0xc8] sm:$0xff]
  %v311 = vld [vmem:[%s284 + $0xd0] sm:$0xff]
  %v312 = vld [vmem:[%s284 + $0xd8] sm:$0xff]
  %v313 = vld [vmem:[%s284 + $0xe0] sm:$0xff]
  %v314 = vld [vmem:[%s284 + $0xe8] sm:$0xff]
  %v315 = vld [vmem:[%s284 + $0xf0] sm:$0xff]
  %v316 = vld [vmem:[%s284 + $0xf8] sm:$0xff]
  %v317 = vld [vmem:[%s284 + $0x100] sm:$0xff]
  %v318 = vld [vmem:[%s284 + $0x108] sm:$0xff]
  %v319 = vld [vmem:[%s284 + $0x110] sm:$0xff]
  %v320 = vld [vmem:[%s284 + $0x118] sm:$0xff]
  %321 = vmatpush.msra.mxu0 %v300
  %322 = vmatpush.msra.mxu0 %v299
  %323 = vmatpush.msra.mxu0 %v298
  %324 = vmatpush.msra.mxu0 %v297
  %325 = vmatpush.msra.mxu0 %v296
  %326 = vmatpush.msra.mxu0 %v295
  %327 = vmatpush.msra.mxu0 %v294
  %328 = vmatpush.msra.mxu0 %v293
  %329 = vmatpush.msra.mxu0 %v292
  %330 = vmatpush.msra.mxu0 %v291
  %331 = vmatpush.msra.mxu0 %v290
  %332 = vmatpush.msra.mxu0 %v289
  %333 = vmatpush.msra.mxu0 %v288
  %334 = vmatpush.msra.mxu0 %v287
  %335 = vmatpush.msra.mxu0 %v286
  %336 = vmatpush.msra.mxu0 %v285
  %337 = vmatmul.f32.gmra.mxu0 %v20
  %v338 = vpop.f32.mrf.mxu0
  %v339 = vadd.f32 %v91, %v338
  %340 = vmatmul.f32.gmra.mxu0 %v23
  %v341 = vpop.f32.mrf.mxu0
  %v342 = vadd.f32 %v96, %v341
  %343 = vmatmul.f32.gmra.mxu0 %v26
  %v344 = vpop.f32.mrf.mxu0
  %v345 = vadd.f32 %v101, %v344
  %346 = vmatmul.f32.gmra.mxu0 %v29
  %v347 = vpop.f32.mrf.mxu0
  %v348 = vadd.f32 %v106, %v347
  %349 = vmatmul.f32.gmra.mxu0 %v32
  %v350 = vpop.f32.mrf.mxu0
  %v351 = vadd.f32 %v111, %v350
  %352 = vmatmul.f32.gmra.mxu0 %v35
  %v353 = vpop.f32.mrf.mxu0
  %v354 = vadd.f32 %v116, %v353
  %355 = vmatmul.f32.gmra.mxu0 %v38
  %v356 = vpop.f32.mrf.mxu0
  %v357 = vadd.f32 %v121, %v356
  %358 = vmatmul.f32.gmra.mxu0 %v41
  %v359 = vpop.f32.mrf.mxu0
  %v360 = vadd.f32 %v126, %v359
  %361 = vdwg.mxu0
  %362 = vmatpush.msra.mxu0 %v316
  %363 = vmatpush.msra.mxu0 %v315
  %364 = vmatpush.msra.mxu0 %v314
  %365 = vmatpush.msra.mxu0 %v313
  %366 = vmatpush.msra.mxu0 %v312
  %367 = vmatpush.msra.mxu0 %v311
  %368 = vmatpush.msra.mxu0 %v310
  %369 = vmatpush.msra.mxu0 %v309
  %370 = vmatpush.msra.mxu0 %v308
  %371 = vmatpush.msra.mxu0 %v307
  %372 = vmatpush.msra.mxu0 %v306
  %373 = vmatpush.msra.mxu0 %v305
  %374 = vmatpush.msra.mxu0 %v304
  %375 = vmatpush.msra.mxu0 %v303
  %376 = vmatpush.msra.mxu0 %v302
  %377 = vmatpush.msra.mxu0 %v301
  %378 = vmatmul.f32.gmra.mxu0 %v21
  %v379 = vpop.f32.mrf.mxu0
  %v380 = vadd.f32 %v339, %v379
  %381 = vmatmul.f32.gmra.mxu0 %v24
  %v382 = vpop.f32.mrf.mxu0
  %v383 = vadd.f32 %v342, %v382
  %384 = vmatmul.f32.gmra.mxu0 %v27
  %v385 = vpop.f32.mrf.mxu0
  %v386 = vadd.f32 %v345, %v385
  %387 = vmatmul.f32.gmra.mxu0 %v30
  %v388 = vpop.f32.mrf.mxu0
  %v389 = vadd.f32 %v348, %v388
  %390 = vmatmul.f32.gmra.mxu0 %v33
  %v391 = vpop.f32.mrf.mxu0
  %v392 = vadd.f32 %v351, %v391
  %393 = vmatmul.f32.gmra.mxu0 %v36
  %v394 = vpop.f32.mrf.mxu0
  %v395 = vadd.f32 %v354, %v394
  %396 = vmatmul.f32.gmra.mxu0 %v39
  %v397 = vpop.f32.mrf.mxu0
  %v398 = vadd.f32 %v357, %v397
  %399 = vmatmul.f32.gmra.mxu0 %v42
  %v400 = vpop.f32.mrf.mxu0
  %v401 = vadd.f32 %v360, %v400
  %402 = vdwg.mxu0
  %403 = vmatpush.msra.mxu0 0.0
  %404 = vmatpush.msra.mxu0 0.0
  %405 = vmatpush.msra.mxu0 0.0
  %406 = vmatpush.msra.mxu0 0.0
  %407 = vmatpush.msra.mxu0 0.0
  %408 = vmatpush.msra.mxu0 0.0
  %409 = vmatpush.msra.mxu0 0.0
  %410 = vmatpush.msra.mxu0 0.0
  %411 = vmatpush.msra.mxu0 0.0
  %412 = vmatpush.msra.mxu0 0.0
  %413 = vmatpush.msra.mxu0 0.0
  %414 = vmatpush.msra.mxu0 0.0
  %415 = vmatpush.msra.mxu0 %v320
  %416 = vmatpush.msra.mxu0 %v319
  %417 = vmatpush.msra.mxu0 %v318
  %418 = vmatpush.msra.mxu0 %v317
  %419 = vmatmul.f32.gmra.mxu0 %v130
  %v420 = vpop.f32.mrf.mxu0
  %v421 = vadd.f32 %v380, %v420
  %422 = vmatmul.f32.gmra.mxu0 %v133
  %v423 = vpop.f32.mrf.mxu0
  %v424 = vadd.f32 %v383, %v423
  %425 = vmatmul.f32.gmra.mxu0 %v136
  %v426 = vpop.f32.mrf.mxu0
  %v427 = vadd.f32 %v386, %v426
  %428 = vmatmul.f32.gmra.mxu0 %v139
  %v429 = vpop.f32.mrf.mxu0
  %v430 = vadd.f32 %v389, %v429
  %431 = vmatmul.f32.gmra.mxu0 %v142
  %v432 = vpop.f32.mrf.mxu0
  %v433 = vadd.f32 %v392, %v432
  %434 = vmatmul.f32.gmra.mxu0 %v145
  %v435 = vpop.f32.mrf.mxu0
  %v436 = vadd.f32 %v395, %v435
  %437 = vmatmul.f32.gmra.mxu0 %v148
  %v438 = vpop.f32.mrf.mxu0
  %v439 = vadd.f32 %v398, %v438
  %440 = vmatmul.f32.gmra.mxu0 %v151
  %v441 = vpop.f32.mrf.mxu0
  %v442 = vadd.f32 %v401, %v441
  %443 = vdwg.mxu0
  %v444 = vmax.f32 %v421, 0.0
  %v445 = vmax.f32 %v424, 0.0
  %v446 = vmax.f32 %v427, 0.0
  %v447 = vmax.f32 %v430, 0.0
  %v448 = vmax.f32 %v433, 0.0
  %v449 = vmax.f32 %v436, 0.0
  %v450 = vmax.f32 %v439, 0.0
  %v451 = vmax.f32 %v442, 0.0
  %vm452 = vcmask 588800
  %v453 = vsel %vm452, %v276, 0.0
  %454 = vadd.xlane.f32.xlu0 %v453
  %v455 = vpop.xlane.xlu0 %454
  %v456 = vsel %vm452, %v277, 0.0
  %457 = vadd.xlane.f32.xlu0 %v456
  %v458 = vpop.xlane.xlu0 %457
  %v459 = vsel %vm452, %v278, 0.0
  %460 = vadd.xlane.f32.xlu0 %v459
  %v461 = vpop.xlane.xlu0 %460
  %v462 = vsel %vm452, %v279, 0.0
  %463 = vadd.xlane.f32.xlu0 %v462
  %v464 = vpop.xlane.xlu0 %463
  %v465 = vsel %vm452, %v280, 0.0
  %466 = vadd.xlane.f32.xlu0 %v465
  %v467 = vpop.xlane.xlu0 %466
  %v468 = vsel %vm452, %v281, 0.0
  %469 = vadd.xlane.f32.xlu0 %v468
  %v470 = vpop.xlane.xlu0 %469
  %v471 = vsel %vm452, %v282, 0.0
  %472 = vadd.xlane.f32.xlu0 %v471
  %v473 = vpop.xlane.xlu0 %472
  %v474 = vsel %vm452, %v283, 0.0
  %475 = vadd.xlane.f32.xlu0 %v474
  %v476 = vpop.xlane.xlu0 %475
  %v477 = vadd.f32 %v455, 0.0
  %v478 = vadd.f32 %v458, 0.0
  %v479 = vadd.f32 %v461, 0.0
  %v480 = vadd.f32 %v464, 0.0
  %v481 = vadd.f32 %v467, 0.0
  %v482 = vadd.f32 %v470, 0.0
  %v483 = vadd.f32 %v473, 0.0
  %v484 = vadd.f32 %v476, 0.0
  %v485 = vsel %vm452, %v444, 0.0
  %486 = vadd.xlane.f32.xlu0 %v485
  %v487 = vpop.xlane.xlu0 %486
  %v488 = vsel %vm452, %v445, 0.0
  %489 = vadd.xlane.f32.xlu0 %v488
  %v490 = vpop.xlane.xlu0 %489
  %v491 = vsel %vm452, %v446, 0.0
  %492 = vadd.xlane.f32.xlu0 %v491
  %v493 = vpop.xlane.xlu0 %492
  %v494 = vsel %vm452, %v447, 0.0
  %495 = vadd.xlane.f32.xlu0 %v494
  %v496 = vpop.xlane.xlu0 %495
  %v497 = vsel %vm452, %v448, 0.0
  %498 = vadd.xlane.f32.xlu0 %v497
  %v499 = vpop.xlane.xlu0 %498
  %v500 = vsel %vm452, %v449, 0.0
  %501 = vadd.xlane.f32.xlu0 %v500
  %v502 = vpop.xlane.xlu0 %501
  %v503 = vsel %vm452, %v450, 0.0
  %504 = vadd.xlane.f32.xlu0 %v503
  %v505 = vpop.xlane.xlu0 %504
  %v506 = vsel %vm452, %v451, 0.0
  %507 = vadd.xlane.f32.xlu0 %v506
  %v508 = vpop.xlane.xlu0 %507
  %v509 = vadd.f32 %v477, %v487
  %v510 = vadd.f32 %v478, %v490
  %v511 = vadd.f32 %v479, %v493
  %v512 = vadd.f32 %v480, %v496
  %v513 = vadd.f32 %v481, %v499
  %v514 = vadd.f32 %v482, %v502
  %v515 = vadd.f32 %v483, %v505
  %v516 = vadd.f32 %v484, %v508
  %v517 = vrcp.pop 144.0
  %v518 = vmul.f32 144.0, %v517
  %v519 = vsub.f32 1.0, %v518
  %v520 = vmul.f32 %v517, %v519
  %v521 = vadd.f32 %v517, %v520
  %vm522 = vweird.f32 %v517
  %v523 = vsel %vm522, %v517, %v521
  %v524 = vmul.f32 %v509, %v523
  %v525 = vmul.f32 %v510, %v523
  %v526 = vmul.f32 %v511, %v523
  %v527 = vmul.f32 %v512, %v523
  %v528 = vmul.f32 %v513, %v523
  %v529 = vmul.f32 %v514, %v523
  %v530 = vmul.f32 %v515, %v523
  %v531 = vmul.f32 %v516, %v523
  %v532 = vsub.f32 %v276, %v524
  %v533 = vsub.f32 %v277, %v525
  %v534 = vsub.f32 %v278, %v526
  %v535 = vsub.f32 %v279, %v527
  %v536 = vsub.f32 %v280, %v528
  %v537 = vsub.f32 %v281, %v529
  %v538 = vsub.f32 %v282, %v530
  %v539 = vsub.f32 %v283, %v531
  %v540 = vmul.f32 %v532, %v532
  %v541 = vmul.f32 %v533, %v533
  %v542 = vmul.f32 %v534, %v534
  %v543 = vmul.f32 %v535, %v535
  %v544 = vmul.f32 %v536, %v536
  %v545 = vmul.f32 %v537, %v537
  %v546 = vmul.f32 %v538, %v538
  %v547 = vmul.f32 %v539, %v539
  %v548 = vsel %vm452, %v540, 0.0
  %549 = vadd.xlane.f32.xlu0 %v548
  %v550 = vpop.xlane.xlu0 %549
  %v551 = vsel %vm452, %v541, 0.0
  %552 = vadd.xlane.f32.xlu0 %v551
  %v553 = vpop.xlane.xlu0 %552
  %v554 = vsel %vm452, %v542, 0.0
  %555 = vadd.xlane.f32.xlu0 %v554
  %v556 = vpop.xlane.xlu0 %555
  %v557 = vsel %vm452, %v543, 0.0
  %558 = vadd.xlane.f32.xlu0 %v557
  %v559 = vpop.xlane.xlu0 %558
  %v560 = vsel %vm452, %v544, 0.0
  %561 = vadd.xlane.f32.xlu0 %v560
  %v562 = vpop.xlane.xlu0 %561
  %v563 = vsel %vm452, %v545, 0.0
  %564 = vadd.xlane.f32.xlu0 %v563
  %v565 = vpop.xlane.xlu0 %564
  %v566 = vsel %vm452, %v546, 0.0
  %567 = vadd.xlane.f32.xlu0 %v566
  %v568 = vpop.xlane.xlu0 %567
  %v569 = vsel %vm452, %v547, 0.0
  %570 = vadd.xlane.f32.xlu0 %v569
  %v571 = vpop.xlane.xlu0 %570
  %v572 = vadd.f32 %v550, 0.0
  %v573 = vadd.f32 %v553, 0.0
  %v574 = vadd.f32 %v556, 0.0
  %v575 = vadd.f32 %v559, 0.0
  %v576 = vadd.f32 %v562, 0.0
  %v577 = vadd.f32 %v565, 0.0
  %v578 = vadd.f32 %v568, 0.0
  %v579 = vadd.f32 %v571, 0.0
  %v580 = vsub.f32 %v444, %v524
  %v581 = vsub.f32 %v445, %v525
  %v582 = vsub.f32 %v446, %v526
  %v583 = vsub.f32 %v447, %v527
  %v584 = vsub.f32 %v448, %v528
  %v585 = vsub.f32 %v449, %v529
  %v586 = vsub.f32 %v450, %v530
  %v587 = vsub.f32 %v451, %v531
  %v588 = vmul.f32 %v580, %v580
  %v589 = vmul.f32 %v581, %v581
  %v590 = vmul.f32 %v582, %v582
  %v591 = vmul.f32 %v583, %v583
  %v592 = vmul.f32 %v584, %v584
  %v593 = vmul.f32 %v585, %v585
  %v594 = vmul.f32 %v586, %v586
  %v595 = vmul.f32 %v587, %v587
  %v596 = vsel %vm452, %v588, 0.0
  %597 = vadd.xlane.f32.xlu0 %v596
  %v598 = vpop.xlane.xlu0 %597
  %v599 = vsel %vm452, %v589, 0.0
  %600 = vadd.xlane.f32.xlu0 %v599
  %v601 = vpop.xlane.xlu0 %600
  %v602 = vsel %vm452, %v590, 0.0
  %603 = vadd.xlane.f32.xlu0 %v602
  %v604 = vpop.xlane.xlu0 %603
  %v605 = vsel %vm452, %v591, 0.0
  %606 = vadd.xlane.f32.xlu0 %v605
  %v607 = vpop.xlane.xlu0 %606
  %v608 = vsel %vm452, %v592, 0.0
  %609 = vadd.xlane.f32.xlu0 %v608
  %v610 = vpop.xlane.xlu0 %609
  %v611 = vsel %vm452, %v593, 0.0
  %612 = vadd.xlane.f32.xlu0 %v611
  %v613 = vpop.xlane.xlu0 %612
  %v614 = vsel %vm452, %v594, 0.0
  %615 = vadd.xlane.f32.xlu0 %v614
  %v616 = vpop.xlane.xlu0 %615
  %v617 = vsel %vm452, %v595, 0.0
  %618 = vadd.xlane.f32.xlu0 %v617
  %v619 = vpop.xlane.xlu0 %618
  %v620 = vadd.f32 %v572, %v598
  %v621 = vadd.f32 %v573, %v601
  %v622 = vadd.f32 %v574, %v604
  %v623 = vadd.f32 %v575, %v607
  %v624 = vadd.f32 %v576, %v610
  %v625 = vadd.f32 %v577, %v613
  %v626 = vadd.f32 %v578, %v616
  %v627 = vadd.f32 %v579, %v619
  %v628 = vmul.f32 %v620, %v523
  %v629 = vmul.f32 %v621, %v523
  %v630 = vmul.f32 %v622, %v523
  %v631 = vmul.f32 %v623, %v523
  %v632 = vmul.f32 %v624, %v523
  %v633 = vmul.f32 %v625, %v523
  %v634 = vmul.f32 %v626, %v523
  %v635 = vmul.f32 %v627, %v523
  %v636 = vld [vmem:[%s3] sm:$0xff]
  %v637 = vld [vmem:[%s3 + $0x8] sm:$0xff]
  %v638 = vld [vmem:[%s3 + $0x10] sm:$0xff]
  %v639 = vld [vmem:[%s3 + $0x18] sm:$0xff]
  %v640 = vld [vmem:[%s3 + $0x20] sm:$0xff]
  %v641 = vld [vmem:[%s3 + $0x28] sm:$0xff]
  %v642 = vld [vmem:[%s3 + $0x30] sm:$0xff]
  %v643 = vld [vmem:[%s3 + $0x38] sm:$0xff]
  %v644 = vadd.f32 %v628, 1e-05
  %v645 = vadd.f32 %v629, 1e-05
  %v646 = vadd.f32 %v630, 1e-05
  %v647 = vadd.f32 %v631, 1e-05
  %v648 = vadd.f32 %v632, 1e-05
  %v649 = vadd.f32 %v633, 1e-05
  %v650 = vadd.f32 %v634, 1e-05
  %v651 = vadd.f32 %v635, 1e-05
  %v652 = vrsqrt.pop %v644
  %v653 = vmul.f32 %v652, %v644
  %v654 = vmul.f32 %v653, %v652
  %v655 = vmul.f32 0.5, %v654
  %v656 = vsub.f32 1.5, %v655
  %v657 = vmul.f32 %v652, %v656
  %vm658 = vweird.f32 %v644
  %vm659 = vweird.f32 %v652
  %vm660 = vmor %vm658, %vm659
  %v661 = vsel %vm660, %v652, %v657
  %v662 = vrsqrt.pop %v645
  %v663 = vmul.f32 %v662, %v645
  %v664 = vmul.f32 %v663, %v662
  %v665 = vmul.f32 0.5, %v664
  %v666 = vsub.f32 1.5, %v665
  %v667 = vmul.f32 %v662, %v666
  %vm668 = vweird.f32 %v645
  %vm669 = vweird.f32 %v662
  %vm670 = vmor %vm668, %vm669
  %v671 = vsel %vm670, %v662, %v667
  %v672 = vrsqrt.pop %v646
  %v673 = vmul.f32 %v672, %v646
  %v674 = vmul.f32 %v673, %v672
  %v675 = vmul.f32 0.5, %v674
  %v676 = vsub.f32 1.5, %v675
  %v677 = vmul.f32 %v672, %v676
  %vm678 = vweird.f32 %v646
  %vm679 = vweird.f32 %v672
  %vm680 = vmor %vm678, %vm679
  %v681 = vsel %vm680, %v672, %v677
  %v682 = vrsqrt.pop %v647
  %v683 = vmul.f32 %v682, %v647
  %v684 = vmul.f32 %v683, %v682
  %v685 = vmul.f32 0.5, %v684
  %v686 = vsub.f32 1.5, %v685
  %v687 = vmul.f32 %v682, %v686
  %vm688 = vweird.f32 %v647
  %vm689 = vweird.f32 %v682
  %vm690 = vmor %vm688, %vm689
  %v691 = vsel %vm690, %v682, %v687
  %v692 = vrsqrt.pop %v648
  %v693 = vmul.f32 %v692, %v648
  %v694 = vmul.f32 %v693, %v692
  %v695 = vmul.f32 0.5, %v694
  %v696 = vsub.f32 1.5, %v695
  %v697 = vmul.f32 %v692, %v696
  %vm698 = vweird.f32 %v648
  %vm699 = vweird.f32 %v692
  %vm700 = vmor %vm698, %vm699
  %v701 = vsel %vm700, %v692, %v697
  %v702 = vrsqrt.pop %v649
  %v703 = vmul.f32 %v702, %v649
  %v704 = vmul.f32 %v703, %v702
  %v705 = vmul.f32 0.5, %v704
  %v706 = vsub.f32 1.5, %v705
  %v707 = vmul.f32 %v702, %v706
  %vm708 = vweird.f32 %v649
  %vm709 = vweird.f32 %v702
  %vm710 = vmor %vm708, %vm709
  %v711 = vsel %vm710, %v702, %v707
  %v712 = vrsqrt.pop %v650
  %v713 = vmul.f32 %v712, %v650
  %v714 = vmul.f32 %v713, %v712
  %v715 = vmul.f32 0.5, %v714
  %v716 = vsub.f32 1.5, %v715
  %v717 = vmul.f32 %v712, %v716
  %vm718 = vweird.f32 %v650
  %vm719 = vweird.f32 %v712
  %vm720 = vmor %vm718, %vm719
  %v721 = vsel %vm720, %v712, %v717
  %v722 = vrsqrt.pop %v651
  %v723 = vmul.f32 %v722, %v651
  %v724 = vmul.f32 %v723, %v722
  %v725 = vmul.f32 0.5, %v724
  %v726 = vsub.f32 1.5, %v725
  %v727 = vmul.f32 %v722, %v726
  %vm728 = vweird.f32 %v651
  %vm729 = vweird.f32 %v722
  %vm730 = vmor %vm728, %vm729
  %v731 = vsel %vm730, %v722, %v727
  %v732 = vmul.f32 %v636, %v661
  %v733 = vmul.f32 %v637, %v671
  %v734 = vmul.f32 %v638, %v681
  %v735 = vmul.f32 %v639, %v691
  %v736 = vmul.f32 %v640, %v701
  %v737 = vmul.f32 %v641, %v711
  %v738 = vmul.f32 %v642, %v721
  %v739 = vmul.f32 %v643, %v731
  %v740 = vld [vmem:[%s4] sm:$0xff]
  %v741 = vld [vmem:[%s4 + $0x8] sm:$0xff]
  %v742 = vld [vmem:[%s4 + $0x10] sm:$0xff]
  %v743 = vld [vmem:[%s4 + $0x18] sm:$0xff]
  %v744 = vld [vmem:[%s4 + $0x20] sm:$0xff]
  %v745 = vld [vmem:[%s4 + $0x28] sm:$0xff]
  %v746 = vld [vmem:[%s4 + $0x30] sm:$0xff]
  %v747 = vld [vmem:[%s4 + $0x38] sm:$0xff]
  %v748 = vmul.f32 %v524, %v732
  %v749 = vmul.f32 %v525, %v733
  %v750 = vmul.f32 %v526, %v734
  %v751 = vmul.f32 %v527, %v735
  %v752 = vmul.f32 %v528, %v736
  %v753 = vmul.f32 %v529, %v737
  %v754 = vmul.f32 %v530, %v738
  %v755 = vmul.f32 %v531, %v739
  %v756 = vsub.f32 %v740, %v748
  %v757 = vsub.f32 %v741, %v749
  %v758 = vsub.f32 %v742, %v750
  %v759 = vsub.f32 %v743, %v751
  %v760 = vsub.f32 %v744, %v752
  %v761 = vsub.f32 %v745, %v753
  %v762 = vsub.f32 %v746, %v754
  %v763 = vsub.f32 %v747, %v755
  %765 = vset.pattern.permute.xlu0 0
  %766 = vperm.xlu0 %765, %v732
  %v767 = vpop.permute.xlu0 %766
  %770 = vset.pattern.permute.xlu0 0
  %771 = vperm.xlu0 %770, %v733
  %v772 = vpop.permute.xlu0 %771
  %775 = vset.pattern.permute.xlu0 0
  %776 = vperm.xlu0 %775, %v734
  %v777 = vpop.permute.xlu0 %776
  %780 = vset.pattern.permute.xlu0 0
  %781 = vperm.xlu0 %780, %v735
  %v782 = vpop.permute.xlu0 %781
  %785 = vset.pattern.permute.xlu0 0
  %786 = vperm.xlu0 %785, %v736
  %v787 = vpop.permute.xlu0 %786
  %790 = vset.pattern.permute.xlu0 0
  %791 = vperm.xlu0 %790, %v737
  %v792 = vpop.permute.xlu0 %791
  %795 = vset.pattern.permute.xlu0 0
  %796 = vperm.xlu0 %795, %v738
  %v797 = vpop.permute.xlu0 %796
  %800 = vset.pattern.permute.xlu0 0
  %801 = vperm.xlu0 %800, %v739
  %v802 = vpop.permute.xlu0 %801
  %v804 = vmul.f32 %v276, %v767
  %v805 = vmul.f32 %v277, %v772
  %v806 = vmul.f32 %v278, %v777
  %v807 = vmul.f32 %v279, %v782
  %v808 = vmul.f32 %v280, %v787
  %v809 = vmul.f32 %v281, %v792
  %v810 = vmul.f32 %v282, %v797
  %v811 = vmul.f32 %v283, %v802
  %813 = vset.pattern.permute.xlu0 0
  %814 = vperm.xlu0 %813, %v756
  %v815 = vpop.permute.xlu0 %814
  %818 = vset.pattern.permute.xlu0 0
  %819 = vperm.xlu0 %818, %v757
  %v820 = vpop.permute.xlu0 %819
  %823 = vset.pattern.permute.xlu0 0
  %824 = vperm.xlu0 %823, %v758
  %v825 = vpop.permute.xlu0 %824
  %828 = vset.pattern.permute.xlu0 0
  %829 = vperm.xlu0 %828, %v759
  %v830 = vpop.permute.xlu0 %829
  %833 = vset.pattern.permute.xlu0 0
  %834 = vperm.xlu0 %833, %v760
  %v835 = vpop.permute.xlu0 %834
  %838 = vset.pattern.permute.xlu0 0
  %839 = vperm.xlu0 %838, %v761
  %v840 = vpop.permute.xlu0 %839
  %843 = vset.pattern.permute.xlu0 0
  %844 = vperm.xlu0 %843, %v762
  %v845 = vpop.permute.xlu0 %844
  %848 = vset.pattern.permute.xlu0 0
  %849 = vperm.xlu0 %848, %v763
  %v850 = vpop.permute.xlu0 %849
  %v852 = vadd.f32 %v804, %v815
  %v853 = vadd.f32 %v805, %v820
  %v854 = vadd.f32 %v806, %v825
  %v855 = vadd.f32 %v807, %v830
  %v856 = vadd.f32 %v808, %v835
  %v857 = vadd.f32 %v809, %v840
  %v858 = vadd.f32 %v810, %v845
  %v859 = vadd.f32 %v811, %v850
  %860 = vst.msk [vmem:[%s5] sm:$0xff] %vm452, %v852
  %861 = vst.msk [vmem:[%s5 + $0x8] sm:$0xff] %vm452, %v853
  %862 = vst.msk [vmem:[%s5 + $0x10] sm:$0xff] %vm452, %v854
  %863 = vst.msk [vmem:[%s5 + $0x18] sm:$0xff] %vm452, %v855
  %864 = vst.msk [vmem:[%s5 + $0x20] sm:$0xff] %vm452, %v856
  %865 = vst.msk [vmem:[%s5 + $0x28] sm:$0xff] %vm452, %v857
  %866 = vst.msk [vmem:[%s5 + $0x30] sm:$0xff] %vm452, %v858
  %867 = vst.msk [vmem:[%s5 + $0x38] sm:$0xff] %vm452, %v859
  %v868 = vmul.f32 %v444, %v767
  %v869 = vmul.f32 %v445, %v772
  %v870 = vmul.f32 %v446, %v777
  %v871 = vmul.f32 %v447, %v782
  %v872 = vmul.f32 %v448, %v787
  %v873 = vmul.f32 %v449, %v792
  %v874 = vmul.f32 %v450, %v797
  %v875 = vmul.f32 %v451, %v802
  %v876 = vadd.f32 %v868, %v815
  %v877 = vadd.f32 %v869, %v820
  %v878 = vadd.f32 %v870, %v825
  %v879 = vadd.f32 %v871, %v830
  %v880 = vadd.f32 %v872, %v835
  %v881 = vadd.f32 %v873, %v840
  %v882 = vadd.f32 %v874, %v845
  %v883 = vadd.f32 %v875, %v850
  %s884 = scalar_lea.vmem %s5, 64
  %885 = vst.msk [vmem:[%s884] sm:$0xff] %vm452, %v876
  %886 = vst.msk [vmem:[%s884 + $0x8] sm:$0xff] %vm452, %v877
  %887 = vst.msk [vmem:[%s884 + $0x10] sm:$0xff] %vm452, %v878
  %888 = vst.msk [vmem:[%s884 + $0x18] sm:$0xff] %vm452, %v879
  %889 = vst.msk [vmem:[%s884 + $0x20] sm:$0xff] %vm452, %v880
  %890 = vst.msk [vmem:[%s884 + $0x28] sm:$0xff] %vm452, %v881
  %891 = vst.msk [vmem:[%s884 + $0x30] sm:$0xff] %vm452, %v882
  %892 = vst.msk [vmem:[%s884 + $0x38] sm:$0xff] %vm452, %v883
  // Predicated region
  $region22: #{embedding_network_forward.4} parent=0 // pred_check
    _
  $region23: #{embedding_network_forward.4} parent=0 // pred_check_branch
    %894 = sbr.rel (0) target = $region25
  $region24: #{embedding_network_forward.4} parent=0 // pred_region
    _
  $region25: #{embedding_network_forward.4} parent=0 // pred_fallthru
    _
  // Predicated region
  $region26: #{embedding_network_forward.4} parent=0 // pred_check
    _
  $region27: #{embedding_network_forward.4} parent=0 // pred_check_branch
    %896 = sbr.rel (0) target = $region29
  $region28: #{embedding_network_forward.4} parent=0 // pred_region
    _
  $region29: #{embedding_network_forward.4} parent=0 // pred_fallthru
    _

// kernel: embedding_network_forward.5
$region0: #{embedding_network_forward.5}
  #allocation0 [shape = 'u32[]', space=smem, size = 0x4, offset = 0x4, fixed_abs, tag = 'smem constant byte address 0x4 - core index']
  #allocation1 [shape = 'u32[72,128]{1,0:T(1,128)}', space=vmem, size = 0x9000, scoped, tag = 'internal scratch']
  %s0 = inlined_call_operand.vmem [shape: f32[2,4608], index: 0, kind: input, shape index: {}]
  %s1 = inlined_call_operand.vmem [shape: bf16[4608,600], index: 1, kind: input, shape index: {}]
  %s2 = inlined_call_operand.vmem [shape: f32[1,600], index: 2, kind: input, shape index: {}]
  %s3 = inlined_call_operand.vmem [shape: f32[2,6], index: 3, kind: input, shape index: {}]
  %s4 = inlined_call_operand.vmem [shape: f32[6,600], index: 4, kind: input, shape index: {}]
  %s5 = inlined_call_operand.vmem [shape: f32[1,600], index: 5, kind: input, shape index: {}]
  %s6 = inlined_call_operand.hbm [shape: f32[2,1200], index: 6, kind: output, shape index: {}]
  %s7 = sld [smem:[#allocation0]]
  $region34: #{embedding_network_forward.5} parent=0
    _
  %s9 = ssub.s32 1, %s7
  %s10 = scalar_select 0, %s9, %s7
  $region1: #{embedding_network_forward.5} parent=0
    #allocation2 [shape = 'u8[10240]{0}', space=vmem, size = 0x2800, scoped, tag = 'output window, operand 0, single buffered']
    #allocation3 [shape = 's32[1]{0}', space=sflag, size = 0x4, scoped, tag = 'scoped memory for embedding_network_forward.5']
    %11 = vsyncpa [#allocation3], 0
    // Predicated region
    $region2: #{embedding_network_forward.5} parent=1 // pred_check
      _
    $region3: #{embedding_network_forward.5} parent=1 // pred_check_branch
      %13 = sbr.rel (0) target = $region5
    $region4: #{embedding_network_forward.5} parent=1 // pred_region
      _
    $region5: #{embedding_network_forward.5} parent=1 // pred_fallthru
      _
    // Predicated region
    $region6: #{embedding_network_forward.5} parent=1 // pred_check
      _
    $region7: #{embedding_network_forward.5} parent=1 // pred_check_branch
      %15 = sbr.rel (0) target = $region9
    $region8: #{embedding_network_forward.5} parent=1 // pred_region
      _
    $region9: #{embedding_network_forward.5} parent=1 // pred_fallthru
      _
    // Predicated region
    $region10: #{embedding_network_forward.5} parent=1 // pred_check
      _
    $region11: #{embedding_network_forward.5} parent=1 // pred_check_branch
      %17 = sbr.rel (0) target = $region13
    $region12: #{embedding_network_forward.5} parent=1 // pred_region
      _
    $region13: #{embedding_network_forward.5} parent=1 // pred_fallthru
      _
    // Predicated region
    $region14: #{embedding_network_forward.5} parent=1 // pred_check
      _
    $region15: #{embedding_network_forward.5} parent=1 // pred_check_branch
      %19 = sbr.rel (0) target = $region17
    $region16: #{embedding_network_forward.5} parent=1 // pred_region
      _
    $region17: #{embedding_network_forward.5} parent=1 // pred_fallthru
      _
    // Predicated region
    $region18: #{embedding_network_forward.5} parent=1 // pred_check
      _
    $region19: #{embedding_network_forward.5} parent=1 // pred_check_branch
      %21 = sbr.rel (0) target = $region21
    $region20: #{embedding_network_forward.5} parent=1 // pred_region
      _
    $region21: #{embedding_network_forward.5} parent=1 // pred_fallthru
      _
    // Predicated region
    $region22: #{embedding_network_forward.5} parent=1 // pred_check
      _
    $region23: #{embedding_network_forward.5} parent=1 // pred_check_branch
      %23 = sbr.rel (0) target = $region25
    $region24: #{embedding_network_forward.5} parent=1 // pred_region
      _
    $region25: #{embedding_network_forward.5} parent=1 // pred_fallthru
      _
    %v24 = vld [vmem:[%s0] sm:$0xff]
    %v25 = vld [vmem:[%s0 + $0x8] sm:$0xff]
    %v26 = vld [vmem:[%s0 + $0x10] sm:$0xff]
    %v27 = vld [vmem:[%s0 + $0x18] sm:$0xff]
    %v28 = vld [vmem:[%s0 + $0x20] sm:$0xff]
    %v29 = vld [vmem:[%s0 + $0x28] sm:$0xff]
    %v30 = vld [vmem:[%s0 + $0x30] sm:$0xff]
    %v31 = vld [vmem:[%s0 + $0x38] sm:$0xff]
    %v32 = vld [vmem:[%s0 + $0x40] sm:$0xff]
    %42 = vst [vmem:[#allocation1] ss:$4 sm:$0xff] %v24
    %s43 = scalar_lea.vmem [#allocation1], 32
    %44 = vst [vmem:[%s43] ss:$4 sm:$0xff] %v25
    %v45 = vld.sshfl [vmem:[#allocation1] sm:$0xff pattern:$0x73625140]
    %v46 = vld.sshfl [vmem:[#allocation1 + $0x8] sm:$0xff pattern:$0x73625140]
    %v47 = vld.sshfl [vmem:[#allocation1 + $0x10] sm:$0xff pattern:$0x73625140]
    %v48 = vld.sshfl [vmem:[#allocation1 + $0x18] sm:$0xff pattern:$0x73625140]
    %v49 = vld.sshfl [vmem:[#allocation1 + $0x20] sm:$0xff pattern:$0x73625140]
    %v50 = vld.sshfl [vmem:[#allocation1 + $0x28] sm:$0xff pattern:$0x73625140]
    %v51 = vld.sshfl [vmem:[#allocation1 + $0x30] sm:$0xff pattern:$0x73625140]
    %v52 = vld.sshfl [vmem:[#allocation1 + $0x38] sm:$0xff pattern:$0x73625140]
    %53 = vst [vmem:[#allocation1] ss:$4 sm:$0xff] %v26
    %54 = vst [vmem:[%s43] ss:$4 sm:$0xff] %v27
    %v55 = vld.sshfl [vmem:[#allocation1] sm:$0xff pattern:$0x73625140]
    %v56 = vld.sshfl [vmem:[#allocation1 + $0x8] sm:$0xff pattern:$0x73625140]
    %v57 = vld.sshfl [vmem:[#allocation1 + $0x10] sm:$0xff pattern:$0x73625140]
    %v58 = vld.sshfl [vmem:[#allocation1 + $0x18] sm:$0xff pattern:$0x73625140]
    %v59 = vld.sshfl [vmem:[#allocation1 + $0x20] sm:$0xff pattern:$0x73625140]
    %v60 = vld.sshfl [vmem:[#allocation1 + $0x28] sm:$0xff pattern:$0x73625140]
    %v61 = vld.sshfl [vmem:[#allocation1 + $0x30] sm:$0xff pattern:$0x73625140]
    %v62 = vld.sshfl [vmem:[#allocation1 + $0x38] sm:$0xff pattern:$0x73625140]
    %63 = vst [vmem:[#allocation1] ss:$4 sm:$0xff] %v28
    %64 = vst [vmem:[%s43] ss:$4 sm:$0xff] %v29
    %v65 = vld.sshfl [vmem:[#allocation1] sm:$0xff pattern:$0x73625140]
    %v66 = vld.sshfl [vmem:[#allocation1 + $0x8] sm:$0xff pattern:$0x73625140]
    %v67 = vld.sshfl [vmem:[#allocation1 + $0x10] sm:$0xff pattern:$0x73625140]
    %v68 = vld.sshfl [vmem:[#allocation1 + $0x18] sm:$0xff pattern:$0x73625140]
    %v69 = vld.sshfl [vmem:[#allocation1 + $0x20] sm:$0xff pattern:$0x73625140]
    %v70 = vld.sshfl [vmem:[#allocation1 + $0x28] sm:$0xff pattern:$0x73625140]
    %v71 = vld.sshfl [vmem:[#allocation1 + $0x30] sm:$0xff pattern:$0x73625140]
    %v72 = vld.sshfl [vmem:[#allocation1 + $0x38] sm:$0xff pattern:$0x73625140]
    %73 = vst [vmem:[#allocation1] ss:$4 sm:$0xff] %v30
    %74 = vst [vmem:[%s43] ss:$4 sm:$0xff] %v31
    %v75 = vld.sshfl [vmem:[#allocation1] sm:$0xff pattern:$0x73625140]
    %v76 = vld.sshfl [vmem:[#allocation1 + $0x8] sm:$0xff pattern:$0x73625140]
    %v77 = vld.sshfl [vmem:[#allocation1 + $0x10] sm:$0xff pattern:$0x73625140]
    %v78 = vld.sshfl [vmem:[#allocation1 + $0x18] sm:$0xff pattern:$0x73625140]
    %v79 = vld.sshfl [vmem:[#allocation1 + $0x20] sm:$0xff pattern:$0x73625140]
    %v80 = vld.sshfl [vmem:[#allocation1 + $0x28] sm:$0xff pattern:$0x73625140]
    %v81 = vld.sshfl [vmem:[#allocation1 + $0x30] sm:$0xff pattern:$0x73625140]
    %v82 = vld.sshfl [vmem:[#allocation1 + $0x38] sm:$0xff pattern:$0x73625140]
    %83 = vst [vmem:[#allocation1] ss:$4 sm:$0xff] %v32
    %v84 = vld.sshfl [vmem:[#allocation1] sm:$0xff pattern:$0x73625140]
    %v85 = vld.sshfl [vmem:[#allocation1 + $0x8] sm:$0xff pattern:$0x73625140]
    %v86 = vld.sshfl [vmem:[#allocation1 + $0x10] sm:$0xff pattern:$0x73625140]
    %v87 = vld.sshfl [vmem:[#allocation1 + $0x18] sm:$0xff pattern:$0x73625140]
    %v124 = vpack.c.bf16 %v45, %v45
    %v125 = vpack.c.bf16 %v46, %v46
    %v126 = vpack.c.bf16 %v47, %v47
    %v127 = vpack.c.bf16 %v48, %v48
    %v128 = vpack.c.bf16 %v49, %v49
    %v129 = vpack.c.bf16 %v50, %v50
    %v130 = vpack.c.bf16 %v51, %v51
    %v131 = vpack.c.bf16 %v52, %v52
    %v132 = vpack.c.bf16 %v55, %v55
    %v133 = vpack.c.bf16 %v56, %v56
    %v134 = vpack.c.bf16 %v57, %v57
    %v135 = vpack.c.bf16 %v58, %v58
    %v136 = vpack.c.bf16 %v59, %v59
    %v137 = vpack.c.bf16 %v60, %v60
    %v138 = vpack.c.bf16 %v61, %v61
    %v139 = vpack.c.bf16 %v62, %v62
    %v140 = vpack.c.bf16 %v65, %v65
    %v141 = vpack.c.bf16 %v66, %v66
    %v142 = vpack.c.bf16 %v67, %v67
    %v143 = vpack.c.bf16 %v68, %v68
    %v144 = vpack.c.bf16 %v69, %v69
    %v145 = vpack.c.bf16 %v70, %v70
    %v146 = vpack.c.bf16 %v71, %v71
    %v147 = vpack.c.bf16 %v72, %v72
    %v148 = vpack.c.bf16 %v75, %v75
    %v149 = vpack.c.bf16 %v76, %v76
    %v150 = vpack.c.bf16 %v77, %v77
    %v151 = vpack.c.bf16 %v78, %v78
    %v152 = vpack.c.bf16 %v79, %v79
    %v153 = vpack.c.bf16 %v80, %v80
    %v154 = vpack.c.bf16 %v81, %v81
    %v155 = vpack.c.bf16 %v82, %v82
    %v156 = vpack.c.bf16 %v84, %v84
    %v157 = vpack.c.bf16 %v85, %v85
    %v158 = vpack.c.bf16 %v86, %v86
    %v159 = vpack.c.bf16 %v87, %v87
    %v160 = vld [vmem:[%s1] sm:$0xff]
    %v161 = vld [vmem:[%s1 + $0x8] sm:$0xff]
    %v162 = vld [vmem:[%s1 + $0x10] sm:$0xf]
    %v163 = vld [vmem:[%s1 + $0x14] sm:$0xff]
    %v164 = vld [vmem:[%s1 + $0x1c] sm:$0xff]
    %v165 = vld [vmem:[%s1 + $0x24] sm:$0xf]
    %v166 = vld [vmem:[%s1 + $0x28] sm:$0xff]
    %v167 = vld [vmem:[%s1 + $0x30] sm:$0xff]
    %v168 = vld [vmem:[%s1 + $0x38] sm:$0xf]
    %v169 = vld [vmem:[%s1 + $0x3c] sm:$0xff]
    %v170 = vld [vmem:[%s1 + $0x44] sm:$0xff]
    %v171 = vld [vmem:[%s1 + $0x4c] sm:$0xf]
    %v172 = vld [vmem:[%s1 + $0x50] sm:$0xff]
    %v173 = vld [vmem:[%s1 + $0x58] sm:$0xff]
    %v174 = vld [vmem:[%s1 + $0x60] sm:$0xf]
    %v175 = vld [vmem:[%s1 + $0x64] sm:$0xff]
    %v176 = vld [vmem:[%s1 + $0x6c] sm:$0xff]
    %v177 = vld [vmem:[%s1 + $0x74] sm:$0xf]
    %v178 = vld [vmem:[%s1 + $0x78] sm:$0xff]
    %v179 = vld [vmem:[%s1 + $0x80] sm:$0xff]
    %v180 = vld [vmem:[%s1 + $0x88] sm:$0xf]
    %v181 = vld [vmem:[%s1 + $0x8c] sm:$0xff]
    %v182 = vld [vmem:[%s1 + $0x94] sm:$0xff]
    %v183 = vld [vmem:[%s1 + $0x9c] sm:$0xf]
    %v184 = vld [vmem:[%s1 + $0xa0] sm:$0xff]
    %v185 = vld [vmem:[%s1 + $0xa8] sm:$0xff]
    %v186 = vld [vmem:[%s1 + $0xb0] sm:$0xf]
    %v187 = vld [vmem:[%s1 + $0xb4] sm:$0xff]
    %v188 = vld [vmem:[%s1 + $0xbc] sm:$0xff]
    %v189 = vld [vmem:[%s1 + $0xc4] sm:$0xf]
    %v190 = vld [vmem:[%s1 + $0xc8] sm:$0xff]
    %v191 = vld [vmem:[%s1 + $0xd0] sm:$0xff]
    %v192 = vld [vmem:[%s1 + $0xd8] sm:$0xf]
    %v193 = vld [vmem:[%s1 + $0xdc] sm:$0xff]
    %v194 = vld [vmem:[%s1 + $0xe4] sm:$0xff]
    %v195 = vld [vmem:[%s1 + $0xec] sm:$0xf]
    %v196 = vld [vmem:[%s1 + $0xf0] sm:$0xff]
    %v197 = vld [vmem:[%s1 + $0xf8] sm:$0xff]
    %v198 = vld [vmem:[%s1 + $0x100] sm:$0xf]
    %v199 = vld [vmem:[%s1 + $0x104] sm:$0xff]
    %v200 = vld [vmem:[%s1 + $0x10c] sm:$0xff]
    %v201 = vld [vmem:[%s1 + $0x114] sm:$0xf]
    %v202 = vld [vmem:[%s1 + $0x118] sm:$0xff]
    %v203 = vld [vmem:[%s1 + $0x120] sm:$0xff]
    %v204 = vld [vmem:[%s1 + $0x128] sm:$0xf]
    %v205 = vld [vmem:[%s1 + $0x12c] sm:$0xff]
    %v206 = vld [vmem:[%s1 + $0x134] sm:$0xff]
    %v207 = vld [vmem:[%s1 + $0x13c] sm:$0xf]
    %v208 = vld [vmem:[%s1 + $0x140] sm:$0xff]
    %v209 = vld [vmem:[%s1 + $0x148] sm:$0xff]
    %v210 = vld [vmem:[%s1 + $0x150] sm:$0xf]
    %v211 = vld [vmem:[%s1 + $0x154] sm:$0xff]
    %v212 = vld [vmem:[%s1 + $0x15c] sm:$0xff]
    %v213 = vld [vmem:[%s1 + $0x164] sm:$0xf]
    %v214 = vld [vmem:[%s1 + $0x168] sm:$0xff]
    %v215 = vld [vmem:[%s1 + $0x170] sm:$0xff]
    %v216 = vld [vmem:[%s1 + $0x178] sm:$0xf]
    %v217 = vld [vmem:[%s1 + $0x17c] sm:$0xff]
    %v218 = vld [vmem:[%s1 + $0x184] sm:$0xff]
    %v219 = vld [vmem:[%s1 + $0x18c] sm:$0xf]
    %v220 = vld [vmem:[%s1 + $0x190] sm:$0xff]
    %v221 = vld [vmem:[%s1 + $0x198] sm:$0xff]
    %v222 = vld [vmem:[%s1 + $0x1a0] sm:$0xf]
    %v223 = vld [vmem:[%s1 + $0x1a4] sm:$0xff]
    %v224 = vld [vmem:[%s1 + $0x1ac] sm:$0xff]
    %v225 = vld [vmem:[%s1 + $0x1b4] sm:$0xf]
    %v226 = vld [vmem:[%s1 + $0x1b8] sm:$0xff]
    %v227 = vld [vmem:[%s1 + $0x1c0] sm:$0xff]
    %v228 = vld [vmem:[%s1 + $0x1c8] sm:$0xf]
    %v229 = vld [vmem:[%s1 + $0x1cc] sm:$0xff]
    %v230 = vld [vmem:[%s1 + $0x1d4] sm:$0xff]
    %v231 = vld [vmem:[%s1 + $0x1dc] sm:$0xf]
    %v232 = vld [vmem:[%s1 + $0x1e0] sm:$0xff]
    %v233 = vld [vmem:[%s1 + $0x1e8] sm:$0xff]
    %v234 = vld [vmem:[%s1 + $0x1f0] sm:$0xf]
    %v235 = vld [vmem:[%s1 + $0x1f4] sm:$0xff]
    %v236 = vld [vmem:[%s1 + $0x1fc] sm:$0xff]
    %v237 = vld [vmem:[%s1 + $0x204] sm:$0xf]
    %v238 = vld [vmem:[%s1 + $0x208] sm:$0xff]
    %v239 = vld [vmem:[%s1 + $0x210] sm:$0xff]
    %v240 = vld [vmem:[%s1 + $0x218] sm:$0xf]
    %v241 = vld [vmem:[%s1 + $0x21c] sm:$0xff]
    %v242 = vld [vmem:[%s1 + $0x224] sm:$0xff]
    %v243 = vld [vmem:[%s1 + $0x22c] sm:$0xf]
    %v244 = vld [vmem:[%s1 + $0x230] sm:$0xff]
    %v245 = vld [vmem:[%s1 + $0x238] sm:$0xff]
    %v246 = vld [vmem:[%s1 + $0x240] sm:$0xf]
    %v247 = vld [vmem:[%s1 + $0x244] sm:$0xff]
    %v248 = vld [vmem:[%s1 + $0x24c] sm:$0xff]
    %v249 = vld [vmem:[%s1 + $0x254] sm:$0xf]
    %v250 = vld [vmem:[%s1 + $0x258] sm:$0xff]
    %v251 = vld [vmem:[%s1 + $0x260] sm:$0xff]
    %v252 = vld [vmem:[%s1 + $0x268] sm:$0xf]
    %v253 = vld [vmem:[%s1 + $0x26c] sm:$0xff]
    %v254 = vld [vmem:[%s1 + $0x274] sm:$0xff]
    %v255 = vld [vmem:[%s1 + $0x27c] sm:$0xf]
    %v256 = vld [vmem:[%s1 + $0x280] sm:$0xff]
    %v257 = vld [vmem:[%s1 + $0x288] sm:$0xff]
    %v258 = vld [vmem:[%s1 + $0x290] sm:$0xf]
    %v259 = vld [vmem:[%s1 + $0x294] sm:$0xff]
    %v260 = vld [vmem:[%s1 + $0x29c] sm:$0xff]
    %v261 = vld [vmem:[%s1 + $0x2a4] sm:$0xf]
    %v262 = vld [vmem:[%s1 + $0x2a8] sm:$0xff]
    %v263 = vld [vmem:[%s1 + $0x2b0] sm:$0xff]
    %v264 = vld [vmem:[%s1 + $0x2b8] sm:$0xf]
    %v265 = vld [vmem:[%s1 + $0x2bc] sm:$0xff]
    %v266 = vld [vmem:[%s1 + $0x2c4] sm:$0xff]
    %v267 = vld [vmem:[%s1 + $0x2cc] sm:$0xf]
    %v268 = vld [vmem:[%s1 + $0x2d0] sm:$0xff]
    %v269 = vld [vmem:[%s1 + $0x2d8] sm:$0xff]
    %v270 = vld [vmem:[%s1 + $0x2e0] sm:$0xf]
    %v271 = vld [vmem:[%s1 + $0x2e4] sm:$0xff]
    %v272 = vld [vmem:[%s1 + $0x2ec] sm:$0xff]
    %v273 = vld [vmem:[%s1 + $0x2f4] sm:$0xf]
    %v274 = vld [vmem:[%s1 + $0x2f8] sm:$0xff]
    %v275 = vld [vmem:[%s1 + $0x300] sm:$0xff]
    %v276 = vld [vmem:[%s1 + $0x308] sm:$0xf]
    %v277 = vld [vmem:[%s1 + $0x30c] sm:$0xff]
    %v278 = vld [vmem:[%s1 + $0x314] sm:$0xff]
    %v279 = vld [vmem:[%s1 + $0x31c] sm:$0xf]
    %v280 = vld [vmem:[%s1 + $0x320] sm:$0xff]
    %v281 = vld [vmem:[%s1 + $0x328] sm:$0xff]
    %v282 = vld [vmem:[%s1 + $0x330] sm:$0xf]
    %v283 = vld [vmem:[%s1 + $0x334] sm:$0xff]
    %v284 = vld [vmem:[%s1 + $0x33c] sm:$0xff]
    %v285 = vld [vmem:[%s1 + $0x344] sm:$0xf]
    %v286 = vld [vmem:[%s1 + $0x348] sm:$0xff]
    %v287 = vld [vmem:[%s1 + $0x350] sm:$0xff]
    %v288 = vld [vmem:[%s1 + $0x358] sm:$0xf]
    %v289 = vld [vmem:[%s1 + $0x35c] sm:$0xff]
    %v290 = vld [vmem:[%s1 + $0x364] sm:$0xff]
    %v291 = vld [vmem:[%s1 + $0x36c] sm:$0xf]
    %v292 = vld [vmem:[%s1 + $0x370] sm:$0xff]
    %v293 = vld [vmem:[%s1 + $0x378] sm:$0xff]
    %v294 = vld [vmem:[%s1 + $0x380] sm:$0xf]
    %v295 = vld [vmem:[%s1 + $0x384] sm:$0xff]
    %v296 = vld [vmem:[%s1 + $0x38c] sm:$0xff]
    %v297 = vld [vmem:[%s1 + $0x394] sm:$0xf]
    %v298 = vld [vmem:[%s1 + $0x398] sm:$0xff]
    %v299 = vld [vmem:[%s1 + $0x3a0] sm:$0xff]
    %v300 = vld [vmem:[%s1 + $0x3a8] sm:$0xf]
    %v301 = vld [vmem:[%s1 + $0x3ac] sm:$0xff]
    %v302 = vld [vmem:[%s1 + $0x3b4] sm:$0xff]
    %v303 = vld [vmem:[%s1 + $0x3bc] sm:$0xf]
    %v304 = vld [vmem:[%s1 + $0x3c0] sm:$0xff]
    %v305 = vld [vmem:[%s1 + $0x3c8] sm:$0xff]
    %v306 = vld [vmem:[%s1 + $0x3d0] sm:$0xf]
    %v307 = vld [vmem:[%s1 + $0x3d4] sm:$0xff]
    %v308 = vld [vmem:[%s1 + $0x3dc] sm:$0xff]
    %v309 = vld [vmem:[%s1 + $0x3e4] sm:$0xf]
    %v310 = vld [vmem:[%s1 + $0x3e8] sm:$0xff]
    %v311 = vld [vmem:[%s1 + $0x3f0] sm:$0xff]
    %v312 = vld [vmem:[%s1 + $0x3f8] sm:$0xf]
    %v313 = vld [vmem:[%s1 + $0x3fc] sm:$0xff]
    %v314 = vld [vmem:[%s1 + $0x404] sm:$0xff]
    %v315 = vld [vmem:[%s1 + $0x40c] sm:$0xf]
    %v316 = vld [vmem:[%s1 + $0x410] sm:$0xff]
    %v317 = vld [vmem:[%s1 + $0x418] sm:$0xff]
    %v318 = vld [vmem:[%s1 + $0x420] sm:$0xf]
    %v319 = vld [vmem:[%s1 + $0x424] sm:$0xff]
    %v320 = vld [vmem:[%s1 + $0x42c] sm:$0xff]
    %v321 = vld [vmem:[%s1 + $0x434] sm:$0xf]
    %v322 = vld [vmem:[%s1 + $0x438] sm:$0xff]
    %v323 = vld [vmem:[%s1 + $0x440] sm:$0xff]
    %v324 = vld [vmem:[%s1 + $0x448] sm:$0xf]
    %v325 = vld [vmem:[%s1 + $0x44c] sm:$0xff]
    %v326 = vld [vmem:[%s1 + $0x454] sm:$0xff]
    %v327 = vld [vmem:[%s1 + $0x45c] sm:$0xf]
    %v328 = vld [vmem:[%s1 + $0x460] sm:$0xff]
    %v329 = vld [vmem:[%s1 + $0x468] sm:$0xff]
    %v330 = vld [vmem:[%s1 + $0x470] sm:$0xf]
    %v331 = vld [vmem:[%s1 + $0x474] sm:$0xff]
    %v332 = vld [vmem:[%s1 + $0x47c] sm:$0xff]
    %v333 = vld [vmem:[%s1 + $0x484] sm:$0xf]
    %v334 = vld [vmem:[%s1 + $0x488] sm:$0xff]
    %v335 = vld [vmem:[%s1 + $0x490] sm:$0xff]
    %v336 = vld [vmem:[%s1 + $0x498] sm:$0xf]
    %v337 = vld [vmem:[%s1 + $0x49c] sm:$0xff]
    %v338 = vld [vmem:[%s1 + $0x4a4] sm:$0xff]
    %v339 = vld [vmem:[%s1 + $0x4ac] sm:$0xf]
    %v340 = vld [vmem:[%s1 + $0x4b0] sm:$0xff]
    %v341 = vld [vmem:[%s1 + $0x4b8] sm:$0xff]
    %v342 = vld [vmem:[%s1 + $0x4c0] sm:$0xf]
    %v343 = vld [vmem:[%s1 + $0x4c4] sm:$0xff]
    %v344 = vld [vmem:[%s1 + $0x4cc] sm:$0xff]
    %v345 = vld [vmem:[%s1 + $0x4d4] sm:$0xf]
    %v346 = vld [vmem:[%s1 + $0x4d8] sm:$0xff]
    %v347 = vld [vmem:[%s1 + $0x4e0] sm:$0xff]
    %v348 = vld [vmem:[%s1 + $0x4e8] sm:$0xf]
    %v349 = vld [vmem:[%s1 + $0x4ec] sm:$0xff]
    %v350 = vld [vmem:[%s1 + $0x4f4] sm:$0xff]
    %v351 = vld [vmem:[%s1 + $0x4fc] sm:$0xf]
    %v352 = vld [vmem:[%s1 + $0x500] sm:$0xff]
    %v353 = vld [vmem:[%s1 + $0x508] sm:$0xff]
    %v354 = vld [vmem:[%s1 + $0x510] sm:$0xf]
    %v355 = vld [vmem:[%s1 + $0x514] sm:$0xff]
    %v356 = vld [vmem:[%s1 + $0x51c] sm:$0xff]
    %v357 = vld [vmem:[%s1 + $0x524] sm:$0xf]
    %v358 = vld [vmem:[%s1 + $0x528] sm:$0xff]
    %v359 = vld [vmem:[%s1 + $0x530] sm:$0xff]
    %v360 = vld [vmem:[%s1 + $0x538] sm:$0xf]
    %v361 = vld [vmem:[%s1 + $0x53c] sm:$0xff]
    %v362 = vld [vmem:[%s1 + $0x544] sm:$0xff]
    %v363 = vld [vmem:[%s1 + $0x54c] sm:$0xf]
    %v364 = vld [vmem:[%s1 + $0x550] sm:$0xff]
    %v365 = vld [vmem:[%s1 + $0x558] sm:$0xff]
    %v366 = vld [vmem:[%s1 + $0x560] sm:$0xf]
    %v367 = vld [vmem:[%s1 + $0x564] sm:$0xff]
    %v368 = vld [vmem:[%s1 + $0x56c] sm:$0xff]
    %v369 = vld [vmem:[%s1 + $0x574] sm:$0xf]
    %v370 = vld [vmem:[%s1 + $0x578] sm:$0xff]
    %v371 = vld [vmem:[%s1 + $0x580] sm:$0xff]
    %v372 = vld [vmem:[%s1 + $0x588] sm:$0xf]
    %v373 = vld [vmem:[%s1 + $0x58c] sm:$0xff]
    %v374 = vld [vmem:[%s1 + $0x594] sm:$0xff]
    %v375 = vld [vmem:[%s1 + $0x59c] sm:$0xf]
    %v376 = vld [vmem:[%s1 + $0x5a0] sm:$0xff]
    %v377 = vld [vmem:[%s1 + $0x5a8] sm:$0xff]
    %v378 = vld [vmem:[%s1 + $0x5b0] sm:$0xf]
    %v379 = vld [vmem:[%s1 + $0x5b4] sm:$0xff]
    %v380 = vld [vmem:[%s1 + $0x5bc] sm:$0xff]
    %v381 = vld [vmem:[%s1 + $0x5c4] sm:$0xf]
    %v382 = vld [vmem:[%s1 + $0x5c8] sm:$0xff]
    %v383 = vld [vmem:[%s1 + $0x5d0] sm:$0xff]
    %v384 = vld [vmem:[%s1 + $0x5d8] sm:$0xf]
    %v385 = vld [vmem:[%s1 + $0x5dc] sm:$0xff]
    %v386 = vld [vmem:[%s1 + $0x5e4] sm:$0xff]
    %v387 = vld [vmem:[%s1 + $0x5ec] sm:$0xf]
    %v388 = vld [vmem:[%s1 + $0x5f0] sm:$0xff]
    %v389 = vld [vmem:[%s1 + $0x5f8] sm:$0xff]
    %v390 = vld [vmem:[%s1 + $0x600] sm:$0xf]
    %v391 = vld [vmem:[%s1 + $0x604] sm:$0xff]
    %v392 = vld [vmem:[%s1 + $0x60c] sm:$0xff]
    %v393 = vld [vmem:[%s1 + $0x614] sm:$0xf]
    %v394 = vld [vmem:[%s1 + $0x618] sm:$0xff]
    %v395 = vld [vmem:[%s1 + $0x620] sm:$0xff]
    %v396 = vld [vmem:[%s1 + $0x628] sm:$0xf]
    %v397 = vld [vmem:[%s1 + $0x62c] sm:$0xff]
    %v398 = vld [vmem:[%s1 + $0x634] sm:$0xff]
    %v399 = vld [vmem:[%s1 + $0x63c] sm:$0xf]
    %v400 = vld [vmem:[%s1 + $0x640] sm:$0xff]
    %v401 = vld [vmem:[%s1 + $0x648] sm:$0xff]
    %v402 = vld [vmem:[%s1 + $0x650] sm:$0xf]
    %v403 = vld [vmem:[%s1 + $0x654] sm:$0xff]
    %v404 = vld [vmem:[%s1 + $0x65c] sm:$0xff]
    %v405 = vld [vmem:[%s1 + $0x664] sm:$0xf]
    %v406 = vld [vmem:[%s1 + $0x668] sm:$0xff]
    %v407 = vld [vmem:[%s1 + $0x670] sm:$0xff]
    %v408 = vld [vmem:[%s1 + $0x678] sm:$0xf]
    %v409 = vld [vmem:[%s1 + $0x67c] sm:$0xff]
    %v410 = vld [vmem:[%s1 + $0x684] sm:$0xff]
    %v411 = vld [vmem:[%s1 + $0x68c] sm:$0xf]
    %v412 = vld [vmem:[%s1 + $0x690] sm:$0xff]
    %v413 = vld [vmem:[%s1 + $0x698] sm:$0xff]
    %v414 = vld [vmem:[%s1 + $0x6a0] sm:$0xf]
    %v415 = vld [vmem:[%s1 + $0x6a4] sm:$0xff]
    %v416 = vld [vmem:[%s1 + $0x6ac] sm:$0xff]
    %v417 = vld [vmem:[%s1 + $0x6b4] sm:$0xf]
    %v418 = vld [vmem:[%s1 + $0x6b8] sm:$0xff]
    %v419 = vld [vmem:[%s1 + $0x6c0] sm:$0xff]
    %v420 = vld [vmem:[%s1 + $0x6c8] sm:$0xf]
    %v421 = vld [vmem:[%s1 + $0x6cc] sm:$0xff]
    %v422 = vld [vmem:[%s1 + $0x6d4] sm:$0xff]
    %v423 = vld [vmem:[%s1 + $0x6dc] sm:$0xf]
    %v424 = vld [vmem:[%s1 + $0x6e0] sm:$0xff]
    %v425 = vld [vmem:[%s1 + $0x6e8] sm:$0xff]
    %v426 = vld [vmem:[%s1 + $0x6f0] sm:$0xf]
    %v427 = vld [vmem:[%s1 + $0x6f4] sm:$0xff]
    %v428 = vld [vmem:[%s1 + $0x6fc] sm:$0xff]
    %v429 = vld [vmem:[%s1 + $0x704] sm:$0xf]
    %v430 = vld [vmem:[%s1 + $0x708] sm:$0xff]
    %v431 = vld [vmem:[%s1 + $0x710] sm:$0xff]
    %v432 = vld [vmem:[%s1 + $0x718] sm:$0xf]
    %v433 = vld [vmem:[%s1 + $0x71c] sm:$0xff]
    %v434 = vld [vmem:[%s1 + $0x724] sm:$0xff]
    %v435 = vld [vmem:[%s1 + $0x72c] sm:$0xf]
    %v436 = vld [vmem:[%s1 + $0x730] sm:$0xff]
    %v437 = vld [vmem:[%s1 + $0x738] sm:$0xff]
    %v438 = vld [vmem:[%s1 + $0x740] sm:$0xf]
    %v439 = vld [vmem:[%s1 + $0x744] sm:$0xff]
    %v440 = vld [vmem:[%s1 + $0x74c] sm:$0xff]
    %v441 = vld [vmem:[%s1 + $0x754] sm:$0xf]
    %v442 = vld [vmem:[%s1 + $0x758] sm:$0xff]
    %v443 = vld [vmem:[%s1 + $0x760] sm:$0xff]
    %v444 = vld [vmem:[%s1 + $0x768] sm:$0xf]
    %v445 = vld [vmem:[%s1 + $0x76c] sm:$0xff]
    %v446 = vld [vmem:[%s1 + $0x774] sm:$0xff]
    %v447 = vld [vmem:[%s1 + $0x77c] sm:$0xf]
    %v448 = vld [vmem:[%s1 + $0x780] sm:$0xff]
    %v449 = vld [vmem:[%s1 + $0x788] sm:$0xff]
    %v450 = vld [vmem:[%s1 + $0x790] sm:$0xf]
    %v451 = vld [vmem:[%s1 + $0x794] sm:$0xff]
    %v452 = vld [vmem:[%s1 + $0x79c] sm:$0xff]
    %v453 = vld [vmem:[%s1 + $0x7a4] sm:$0xf]
    %v454 = vld [vmem:[%s1 + $0x7a8] sm:$0xff]
    %v455 = vld [vmem:[%s1 + $0x7b0] sm:$0xff]
    %v456 = vld [vmem:[%s1 + $0x7b8] sm:$0xf]
    %v457 = vld [vmem:[%s1 + $0x7bc] sm:$0xff]
    %v458 = vld [vmem:[%s1 + $0x7c4] sm:$0xff]
    %v459 = vld [vmem:[%s1 + $0x7cc] sm:$0xf]
    %v460 = vld [vmem:[%s1 + $0x7d0] sm:$0xff]
    %v461 = vld [vmem:[%s1 + $0x7d8] sm:$0xff]
    %v462 = vld [vmem:[%s1 + $0x7e0] sm:$0xf]
    %v463 = vld [vmem:[%s1 + $0x7e4] sm:$0xff]
    %v464 = vld [vmem:[%s1 + $0x7ec] sm:$0xff]
    %v465 = vld [vmem:[%s1 + $0x7f4] sm:$0xf]
    %v466 = vld [vmem:[%s1 + $0x7f8] sm:$0xff]
    %v467 = vld [vmem:[%s1 + $0x800] sm:$0xff]
    %v468 = vld [vmem:[%s1 + $0x808] sm:$0xf]
    %v469 = vld [vmem:[%s1 + $0x80c] sm:$0xff]
    %v470 = vld [vmem:[%s1 + $0x814] sm:$0xff]
    %v471 = vld [vmem:[%s1 + $0x81c] sm:$0xf]
    %v472 = vld [vmem:[%s1 + $0x820] sm:$0xff]
    %v473 = vld [vmem:[%s1 + $0x828] sm:$0xff]
    %v474 = vld [vmem:[%s1 + $0x830] sm:$0xf]
    %v475 = vld [vmem:[%s1 + $0x834] sm:$0xff]
    %v476 = vld [vmem:[%s1 + $0x83c] sm:$0xff]
    %v477 = vld [vmem:[%s1 + $0x844] sm:$0xf]
    %v478 = vld [vmem:[%s1 + $0x848] sm:$0xff]
    %v479 = vld [vmem:[%s1 + $0x850] sm:$0xff]
    %v480 = vld [vmem:[%s1 + $0x858] sm:$0xf]
    %v481 = vld [vmem:[%s1 + $0x85c] sm:$0xff]
    %v482 = vld [vmem:[%s1 + $0x864] sm:$0xff]
    %v483 = vld [vmem:[%s1 + $0x86c] sm:$0xf]
    %v484 = vld [vmem:[%s1 + $0x870] sm:$0xff]
    %v485 = vld [vmem:[%s1 + $0x878] sm:$0xff]
    %v486 = vld [vmem:[%s1 + $0x880] sm:$0xf]
    %v487 = vld [vmem:[%s1 + $0x884] sm:$0xff]
    %v488 = vld [vmem:[%s1 + $0x88c] sm:$0xff]
    %v489 = vld [vmem:[%s1 + $0x894] sm:$0xf]
    %v490 = vld [vmem:[%s1 + $0x898] sm:$0xff]
    %v491 = vld [vmem:[%s1 + $0x8a0] sm:$0xff]
    %v492 = vld [vmem:[%s1 + $0x8a8] sm:$0xf]
    %v493 = vld [vmem:[%s1 + $0x8ac] sm:$0xff]
    %v494 = vld [vmem:[%s1 + $0x8b4] sm:$0xff]
    %v495 = vld [vmem:[%s1 + $0x8bc] sm:$0xf]
    %v496 = vld [vmem:[%s1 + $0x8c0] sm:$0xff]
    %v497 = vld [vmem:[%s1 + $0x8c8] sm:$0xff]
    %v498 = vld [vmem:[%s1 + $0x8d0] sm:$0xf]
    %v499 = vld [vmem:[%s1 + $0x8d4] sm:$0xff]
    %v500 = vld [vmem:[%s1 + $0x8dc] sm:$0xff]
    %v501 = vld [vmem:[%s1 + $0x8e4] sm:$0xf]
    %v502 = vld [vmem:[%s1 + $0x8e8] sm:$0xff]
    %v503 = vld [vmem:[%s1 + $0x8f0] sm:$0xff]
    %v504 = vld [vmem:[%s1 + $0x8f8] sm:$0xf]
    %v505 = vld [vmem:[%s1 + $0x8fc] sm:$0xff]
    %v506 = vld [vmem:[%s1 + $0x904] sm:$0xff]
    %v507 = vld [vmem:[%s1 + $0x90c] sm:$0xf]
    %v508 = vld [vmem:[%s1 + $0x910] sm:$0xff]
    %v509 = vld [vmem:[%s1 + $0x918] sm:$0xff]
    %v510 = vld [vmem:[%s1 + $0x920] sm:$0xf]
    %v511 = vld [vmem:[%s1 + $0x924] sm:$0xff]
    %v512 = vld [vmem:[%s1 + $0x92c] sm:$0xff]
    %v513 = vld [vmem:[%s1 + $0x934] sm:$0xf]
    %v514 = vld [vmem:[%s1 + $0x938] sm:$0xff]
    %v515 = vld [vmem:[%s1 + $0x940] sm:$0xff]
    %v516 = vld [vmem:[%s1 + $0x948] sm:$0xf]
    %v517 = vld [vmem:[%s1 + $0x94c] sm:$0xff]
    %v518 = vld [vmem:[%s1 + $0x954] sm:$0xff]
    %v519 = vld [vmem:[%s1 + $0x95c] sm:$0xf]
    %v520 = vld [vmem:[%s1 + $0x960] sm:$0xff]
    %v521 = vld [vmem:[%s1 + $0x968] sm:$0xff]
    %v522 = vld [vmem:[%s1 + $0x970] sm:$0xf]
    %v523 = vld [vmem:[%s1 + $0x974] sm:$0xff]
    %v524 = vld [vmem:[%s1 + $0x97c] sm:$0xff]
    %v525 = vld [vmem:[%s1 + $0x984] sm:$0xf]
    %v526 = vld [vmem:[%s1 + $0x988] sm:$0xff]
    %v527 = vld [vmem:[%s1 + $0x990] sm:$0xff]
    %v528 = vld [vmem:[%s1 + $0x998] sm:$0xf]
    %v529 = vld [vmem:[%s1 + $0x99c] sm:$0xff]
    %v530 = vld [vmem:[%s1 + $0x9a4] sm:$0xff]
    %v531 = vld [vmem:[%s1 + $0x9ac] sm:$0xf]
    %v532 = vld [vmem:[%s1 + $0x9b0] sm:$0xff]
    %v533 = vld [vmem:[%s1 + $0x9b8] sm:$0xff]
    %v534 = vld [vmem:[%s1 + $0x9c0] sm:$0xf]
    %v535 = vld [vmem:[%s1 + $0x9c4] sm:$0xff]
    %v536 = vld [vmem:[%s1 + $0x9cc] sm:$0xff]
    %v537 = vld [vmem:[%s1 + $0x9d4] sm:$0xf]
    %v538 = vld [vmem:[%s1 + $0x9d8] sm:$0xff]
    %v539 = vld [vmem:[%s1 + $0x9e0] sm:$0xff]
    %v540 = vld [vmem:[%s1 + $0x9e8] sm:$0xf]
    %v541 = vld [vmem:[%s1 + $0x9ec] sm:$0xff]
    %v542 = vld [vmem:[%s1 + $0x9f4] sm:$0xff]
    %v543 = vld [vmem:[%s1 + $0x9fc] sm:$0xf]
    %v544 = vld [vmem:[%s1 + $0xa00] sm:$0xff]
    %v545 = vld [vmem:[%s1 + $0xa08] sm:$0xff]
    %v546 = vld [vmem:[%s1 + $0xa10] sm:$0xf]
    %v547 = vld [vmem:[%s1 + $0xa14] sm:$0xff]
    %v548 = vld [vmem:[%s1 + $0xa1c] sm:$0xff]
    %v549 = vld [vmem:[%s1 + $0xa24] sm:$0xf]
    %v550 = vld [vmem:[%s1 + $0xa28] sm:$0xff]
    %v551 = vld [vmem:[%s1 + $0xa30] sm:$0xff]
    %v552 = vld [vmem:[%s1 + $0xa38] sm:$0xf]
    %v553 = vld [vmem:[%s1 + $0xa3c] sm:$0xff]
    %v554 = vld [vmem:[%s1 + $0xa44] sm:$0xff]
    %v555 = vld [vmem:[%s1 + $0xa4c] sm:$0xf]
    %v556 = vld [vmem:[%s1 + $0xa50] sm:$0xff]
    %v557 = vld [vmem:[%s1 + $0xa58] sm:$0xff]
    %v558 = vld [vmem:[%s1 + $0xa60] sm:$0xf]
    %v559 = vld [vmem:[%s1 + $0xa64] sm:$0xff]
    %v560 = vld [vmem:[%s1 + $0xa6c] sm:$0xff]
    %v561 = vld [vmem:[%s1 + $0xa74] sm:$0xf]
    %v562 = vld [vmem:[%s1 + $0xa78] sm:$0xff]
    %v563 = vld [vmem:[%s1 + $0xa80] sm:$0xff]
    %v564 = vld [vmem:[%s1 + $0xa88] sm:$0xf]
    %v565 = vld [vmem:[%s1 + $0xa8c] sm:$0xff]
    %v566 = vld [vmem:[%s1 + $0xa94] sm:$0xff]
    %v567 = vld [vmem:[%s1 + $0xa9c] sm:$0xf]
    %v568 = vld [vmem:[%s1 + $0xaa0] sm:$0xff]
    %v569 = vld [vmem:[%s1 + $0xaa8] sm:$0xff]
    %v570 = vld [vmem:[%s1 + $0xab0] sm:$0xf]
    %v571 = vld [vmem:[%s1 + $0xab4] sm:$0xff]
    %v572 = vld [vmem:[%s1 + $0xabc] sm:$0xff]
    %v573 = vld [vmem:[%s1 + $0xac4] sm:$0xf]
    %v574 = vld [vmem:[%s1 + $0xac8] sm:$0xff]
    %v575 = vld [vmem:[%s1 + $0xad0] sm:$0xff]
    %v576 = vld [vmem:[%s1 + $0xad8] sm:$0xf]
    %v577 = vld [vmem:[%s1 + $0xadc] sm:$0xff]
    %v578 = vld [vmem:[%s1 + $0xae4] sm:$0xff]
    %v579 = vld [vmem:[%s1 + $0xaec] sm:$0xf]
    %v580 = vld [vmem:[%s1 + $0xaf0] sm:$0xff]
    %v581 = vld [vmem:[%s1 + $0xaf8] sm:$0xff]
    %v582 = vld [vmem:[%s1 + $0xb00] sm:$0xf]
    %v583 = vld [vmem:[%s1 + $0xb04] sm:$0xff]
    %v584 = vld [vmem:[%s1 + $0xb0c] sm:$0xff]
    %v585 = vld [vmem:[%s1 + $0xb14] sm:$0xf]
    %v586 = vld [vmem:[%s1 + $0xb18] sm:$0xff]
    %v587 = vld [vmem:[%s1 + $0xb20] sm:$0xff]
    %v588 = vld [vmem:[%s1 + $0xb28] sm:$0xf]
    %v589 = vld [vmem:[%s1 + $0xb2c] sm:$0xff]
    %v590 = vld [vmem:[%s1 + $0xb34] sm:$0xff]
    %v591 = vld [vmem:[%s1 + $0xb3c] sm:$0xf]
    %v592 = vld [vmem:[%s1 + $0xb40] sm:$0xff]
    %v593 = vld [vmem:[%s1 + $0xb48] sm:$0xff]
    %v594 = vld [vmem:[%s1 + $0xb50] sm:$0xf]
    %v595 = vld [vmem:[%s1 + $0xb54] sm:$0xff]
    %v596 = vld [vmem:[%s1 + $0xb5c] sm:$0xff]
    %v597 = vld [vmem:[%s1 + $0xb64] sm:$0xf]
    %v598 = vld [vmem:[%s1 + $0xb68] sm:$0xff]
    %v599 = vld [vmem:[%s1 + $0xb70] sm:$0xff]
    %v600 = vld [vmem:[%s1 + $0xb78] sm:$0xf]
    %v601 = vld [vmem:[%s1 + $0xb7c] sm:$0xff]
    %v602 = vld [vmem:[%s1 + $0xb84] sm:$0xff]
    %v603 = vld [vmem:[%s1 + $0xb8c] sm:$0xf]
    %v604 = vld [vmem:[%s1 + $0xb90] sm:$0xff]
    %v605 = vld [vmem:[%s1 + $0xb98] sm:$0xff]
    %v606 = vld [vmem:[%s1 + $0xba0] sm:$0xf]
    %v607 = vld [vmem:[%s1 + $0xba4] sm:$0xff]
    %v608 = vld [vmem:[%s1 + $0xbac] sm:$0xff]
    %v609 = vld [vmem:[%s1 + $0xbb4] sm:$0xf]
    %v610 = vld [vmem:[%s1 + $0xbb8] sm:$0xff]
    %v611 = vld [vmem:[%s1 + $0xbc0] sm:$0xff]
    %v612 = vld [vmem:[%s1 + $0xbc8] sm:$0xf]
    %v613 = vld [vmem:[%s1 + $0xbcc] sm:$0xff]
    %v614 = vld [vmem:[%s1 + $0xbd4] sm:$0xff]
    %v615 = vld [vmem:[%s1 + $0xbdc] sm:$0xf]
    %v616 = vld [vmem:[%s1 + $0xbe0] sm:$0xff]
    %v617 = vld [vmem:[%s1 + $0xbe8] sm:$0xff]
    %v618 = vld [vmem:[%s1 + $0xbf0] sm:$0xf]
    %v619 = vld [vmem:[%s1 + $0xbf4] sm:$0xff]
    %v620 = vld [vmem:[%s1 + $0xbfc] sm:$0xff]
    %v621 = vld [vmem:[%s1 + $0xc04] sm:$0xf]
    %v622 = vld [vmem:[%s1 + $0xc08] sm:$0xff]
    %v623 = vld [vmem:[%s1 + $0xc10] sm:$0xff]
    %v624 = vld [vmem:[%s1 + $0xc18] sm:$0xf]
    %v625 = vld [vmem:[%s1 + $0xc1c] sm:$0xff]
    %v626 = vld [vmem:[%s1 + $0xc24] sm:$0xff]
    %v627 = vld [vmem:[%s1 + $0xc2c] sm:$0xf]
    %v628 = vld [vmem:[%s1 + $0xc30] sm:$0xff]
    %v629 = vld [vmem:[%s1 + $0xc38] sm:$0xff]
    %v630 = vld [vmem:[%s1 + $0xc40] sm:$0xf]
    %v631 = vld [vmem:[%s1 + $0xc44] sm:$0xff]
    %v632 = vld [vmem:[%s1 + $0xc4c] sm:$0xff]
    %v633 = vld [vmem:[%s1 + $0xc54] sm:$0xf]
    %v634 = vld [vmem:[%s1 + $0xc58] sm:$0xff]
    %v635 = vld [vmem:[%s1 + $0xc60] sm:$0xff]
    %v636 = vld [vmem:[%s1 + $0xc68] sm:$0xf]
    %v637 = vld [vmem:[%s1 + $0xc6c] sm:$0xff]
    %v638 = vld [vmem:[%s1 + $0xc74] sm:$0xff]
    %v639 = vld [vmem:[%s1 + $0xc7c] sm:$0xf]
    %v640 = vld [vmem:[%s1 + $0xc80] sm:$0xff]
    %v641 = vld [vmem:[%s1 + $0xc88] sm:$0xff]
    %v642 = vld [vmem:[%s1 + $0xc90] sm:$0xf]
    %v643 = vld [vmem:[%s1 + $0xc94] sm:$0xff]
    %v644 = vld [vmem:[%s1 + $0xc9c] sm:$0xff]
    %v645 = vld [vmem:[%s1 + $0xca4] sm:$0xf]
    %v646 = vld [vmem:[%s1 + $0xca8] sm:$0xff]
    %v647 = vld [vmem:[%s1 + $0xcb0] sm:$0xff]
    %v648 = vld [vmem:[%s1 + $0xcb8] sm:$0xf]
    %v649 = vld [vmem:[%s1 + $0xcbc] sm:$0xff]
    %v650 = vld [vmem:[%s1 + $0xcc4] sm:$0xff]
    %v651 = vld [vmem:[%s1 + $0xccc] sm:$0xf]
    %v652 = vld [vmem:[%s1 + $0xcd0] sm:$0xff]
    %v653 = vld [vmem:[%s1 + $0xcd8] sm:$0xff]
    %v654 = vld [vmem:[%s1 + $0xce0] sm:$0xf]
    %v655 = vld [vmem:[%s1 + $0xce4] sm:$0xff]
    %v656 = vld [vmem:[%s1 + $0xcec] sm:$0xff]
    %v657 = vld [vmem:[%s1 + $0xcf4] sm:$0xf]
    %v658 = vld [vmem:[%s1 + $0xcf8] sm:$0xff]
    %v659 = vld [vmem:[%s1 + $0xd00] sm:$0xff]
    %v660 = vld [vmem:[%s1 + $0xd08] sm:$0xf]
    %v661 = vld [vmem:[%s1 + $0xd0c] sm:$0xff]
    %v662 = vld [vmem:[%s1 + $0xd14] sm:$0xff]
    %v663 = vld [vmem:[%s1 + $0xd1c] sm:$0xf]
    %v664 = vld [vmem:[%s1 + $0xd20] sm:$0xff]
    %v665 = vld [vmem:[%s1 + $0xd28] sm:$0xff]
    %v666 = vld [vmem:[%s1 + $0xd30] sm:$0xf]
    %v667 = vld [vmem:[%s1 + $0xd34] sm:$0xff]
    %v668 = vld [vmem:[%s1 + $0xd3c] sm:$0xff]
    %v669 = vld [vmem:[%s1 + $0xd44] sm:$0xf]
    %v670 = vld [vmem:[%s1 + $0xd48] sm:$0xff]
    %v671 = vld [vmem:[%s1 + $0xd50] sm:$0xff]
    %v672 = vld [vmem:[%s1 + $0xd58] sm:$0xf]
    %v673 = vld [vmem:[%s1 + $0xd5c] sm:$0xff]
    %v674 = vld [vmem:[%s1 + $0xd64] sm:$0xff]
    %v675 = vld [vmem:[%s1 + $0xd6c] sm:$0xf]
    %v676 = vld [vmem:[%s1 + $0xd70] sm:$0xff]
    %v677 = vld [vmem:[%s1 + $0xd78] sm:$0xff]
    %v678 = vld [vmem:[%s1 + $0xd80] sm:$0xf]
    %v679 = vld [vmem:[%s1 + $0xd84] sm:$0xff]
    %v680 = vld [vmem:[%s1 + $0xd8c] sm:$0xff]
    %v681 = vld [vmem:[%s1 + $0xd94] sm:$0xf]
    %v682 = vld [vmem:[%s1 + $0xd98] sm:$0xff]
    %v683 = vld [vmem:[%s1 + $0xda0] sm:$0xff]
    %v684 = vld [vmem:[%s1 + $0xda8] sm:$0xf]
    %v685 = vld [vmem:[%s1 + $0xdac] sm:$0xff]
    %v686 = vld [vmem:[%s1 + $0xdb4] sm:$0xff]
    %v687 = vld [vmem:[%s1 + $0xdbc] sm:$0xf]
    %v688 = vld [vmem:[%s1 + $0xdc0] sm:$0xff]
    %v689 = vld [vmem:[%s1 + $0xdc8] sm:$0xff]
    %v690 = vld [vmem:[%s1 + $0xdd0] sm:$0xf]
    %v691 = vld [vmem:[%s1 + $0xdd4] sm:$0xff]
    %v692 = vld [vmem:[%s1 + $0xddc] sm:$0xff]
    %v693 = vld [vmem:[%s1 + $0xde4] sm:$0xf]
    %v694 = vld [vmem:[%s1 + $0xde8] sm:$0xff]
    %v695 = vld [vmem:[%s1 + $0xdf0] sm:$0xff]
    %v696 = vld [vmem:[%s1 + $0xdf8] sm:$0xf]
    %v697 = vld [vmem:[%s1 + $0xdfc] sm:$0xff]
    %v698 = vld [vmem:[%s1 + $0xe04] sm:$0xff]
    %v699 = vld [vmem:[%s1 + $0xe0c] sm:$0xf]
    %v700 = vld [vmem:[%s1 + $0xe10] sm:$0xff]
    %v701 = vld [vmem:[%s1 + $0xe18] sm:$0xff]
    %v702 = vld [vmem:[%s1 + $0xe20] sm:$0xf]
    %v703 = vld [vmem:[%s1 + $0xe24] sm:$0xff]
    %v704 = vld [vmem:[%s1 + $0xe2c] sm:$0xff]
    %v705 = vld [vmem:[%s1 + $0xe34] sm:$0xf]
    %v706 = vld [vmem:[%s1 + $0xe38] sm:$0xff]
    %v707 = vld [vmem:[%s1 + $0xe40] sm:$0xff]
    %v708 = vld [vmem:[%s1 + $0xe48] sm:$0xf]
    %v709 = vld [vmem:[%s1 + $0xe4c] sm:$0xff]
    %v710 = vld [vmem:[%s1 + $0xe54] sm:$0xff]
    %v711 = vld [vmem:[%s1 + $0xe5c] sm:$0xf]
    %v712 = vld [vmem:[%s1 + $0xe60] sm:$0xff]
    %v713 = vld [vmem:[%s1 + $0xe68] sm:$0xff]
    %v714 = vld [vmem:[%s1 + $0xe70] sm:$0xf]
    %v715 = vld [vmem:[%s1 + $0xe74] sm:$0xff]
    %v716 = vld [vmem:[%s1 + $0xe7c] sm:$0xff]
    %v717 = vld [vmem:[%s1 + $0xe84] sm:$0xf]
    %v718 = vld [vmem:[%s1 + $0xe88] sm:$0xff]
    %v719 = vld [vmem:[%s1 + $0xe90] sm:$0xff]
    %v720 = vld [vmem:[%s1 + $0xe98] sm:$0xf]
    %v721 = vld [vmem:[%s1 + $0xe9c] sm:$0xff]
    %v722 = vld [vmem:[%s1 + $0xea4] sm:$0xff]
    %v723 = vld [vmem:[%s1 + $0xeac] sm:$0xf]
    %v724 = vld [vmem:[%s1 + $0xeb0] sm:$0xff]
    %v725 = vld [vmem:[%s1 + $0xeb8] sm:$0xff]
    %v726 = vld [vmem:[%s1 + $0xec0] sm:$0xf]
    %v727 = vld [vmem:[%s1 + $0xec4] sm:$0xff]
    %v728 = vld [vmem:[%s1 + $0xecc] sm:$0xff]
    %v729 = vld [vmem:[%s1 + $0xed4] sm:$0xf]
    %v730 = vld [vmem:[%s1 + $0xed8] sm:$0xff]
    %v731 = vld [vmem:[%s1 + $0xee0] sm:$0xff]
    %v732 = vld [vmem:[%s1 + $0xee8] sm:$0xf]
    %v733 = vld [vmem:[%s1 + $0xeec] sm:$0xff]
    %v734 = vld [vmem:[%s1 + $0xef4] sm:$0xff]
    %v735 = vld [vmem:[%s1 + $0xefc] sm:$0xf]
    %v736 = vld [vmem:[%s1 + $0xf00] sm:$0xff]
    %v737 = vld [vmem:[%s1 + $0xf08] sm:$0xff]
    %v738 = vld [vmem:[%s1 + $0xf10] sm:$0xf]
    %v739 = vld [vmem:[%s1 + $0xf14] sm:$0xff]
    %v740 = vld [vmem:[%s1 + $0xf1c] sm:$0xff]
    %v741 = vld [vmem:[%s1 + $0xf24] sm:$0xf]
    %v742 = vld [vmem:[%s1 + $0xf28] sm:$0xff]
    %v743 = vld [vmem:[%s1 + $0xf30] sm:$0xff]
    %v744 = vld [vmem:[%s1 + $0xf38] sm:$0xf]
    %v745 = vld [vmem:[%s1 + $0xf3c] sm:$0xff]
    %v746 = vld [vmem:[%s1 + $0xf44] sm:$0xff]
    %v747 = vld [vmem:[%s1 + $0xf4c] sm:$0xf]
    %v748 = vld [vmem:[%s1 + $0xf50] sm:$0xff]
    %v749 = vld [vmem:[%s1 + $0xf58] sm:$0xff]
    %v750 = vld [vmem:[%s1 + $0xf60] sm:$0xf]
    %v751 = vld [vmem:[%s1 + $0xf64] sm:$0xff]
    %v752 = vld [vmem:[%s1 + $0xf6c] sm:$0xff]
    %v753 = vld [vmem:[%s1 + $0xf74] sm:$0xf]
    %v754 = vld [vmem:[%s1 + $0xf78] sm:$0xff]
    %v755 = vld [vmem:[%s1 + $0xf80] sm:$0xff]
    %v756 = vld [vmem:[%s1 + $0xf88] sm:$0xf]
    %v757 = vld [vmem:[%s1 + $0xf8c] sm:$0xff]
    %v758 = vld [vmem:[%s1 + $0xf94] sm:$0xff]
    %v759 = vld [vmem:[%s1 + $0xf9c] sm:$0xf]
    %v760 = vld [vmem:[%s1 + $0xfa0] sm:$0xff]
    %v761 = vld [vmem:[%s1 + $0xfa8] sm:$0xff]
    %v762 = vld [vmem:[%s1 + $0xfb0] sm:$0xf]
    %v763 = vld [vmem:[%s1 + $0xfb4] sm:$0xff]
    %v764 = vld [vmem:[%s1 + $0xfbc] sm:$0xff]
    %v765 = vld [vmem:[%s1 + $0xfc4] sm:$0xf]
    %v766 = vld [vmem:[%s1 + $0xfc8] sm:$0xff]
    %v767 = vld [vmem:[%s1 + $0xfd0] sm:$0xff]
    %v768 = vld [vmem:[%s1 + $0xfd8] sm:$0xf]
    %v769 = vld [vmem:[%s1 + $0xfdc] sm:$0xff]
    %v770 = vld [vmem:[%s1 + $0xfe4] sm:$0xff]
    %v771 = vld [vmem:[%s1 + $0xfec] sm:$0xf]
    %v772 = vld [vmem:[%s1 + $0xff0] sm:$0xff]
    %v773 = vld [vmem:[%s1 + $0xff8] sm:$0xff]
    %v774 = vld [vmem:[%s1 + $0x1000] sm:$0xf]
    %v775 = vld [vmem:[%s1 + $0x1004] sm:$0xff]
    %v776 = vld [vmem:[%s1 + $0x100c] sm:$0xff]
    %v777 = vld [vmem:[%s1 + $0x1014] sm:$0xf]
    %v778 = vld [vmem:[%s1 + $0x1018] sm:$0xff]
    %v779 = vld [vmem:[%s1 + $0x1020] sm:$0xff]
    %v780 = vld [vmem:[%s1 + $0x1028] sm:$0xf]
    %v781 = vld [vmem:[%s1 + $0x102c] sm:$0xff]
    %v782 = vld [vmem:[%s1 + $0x1034] sm:$0xff]
    %v783 = vld [vmem:[%s1 + $0x103c] sm:$0xf]
    %v784 = vld [vmem:[%s1 + $0x1040] sm:$0xff]
    %v785 = vld [vmem:[%s1 + $0x1048] sm:$0xff]
    %v786 = vld [vmem:[%s1 + $0x1050] sm:$0xf]
    %v787 = vld [vmem:[%s1 + $0x1054] sm:$0xff]
    %v788 = vld [vmem:[%s1 + $0x105c] sm:$0xff]
    %v789 = vld [vmem:[%s1 + $0x1064] sm:$0xf]
    %v790 = vld [vmem:[%s1 + $0x1068] sm:$0xff]
    %v791 = vld [vmem:[%s1 + $0x1070] sm:$0xff]
    %v792 = vld [vmem:[%s1 + $0x1078] sm:$0xf]
    %v793 = vld [vmem:[%s1 + $0x107c] sm:$0xff]
    %v794 = vld [vmem:[%s1 + $0x1084] sm:$0xff]
    %v795 = vld [vmem:[%s1 + $0x108c] sm:$0xf]
    %v796 = vld [vmem:[%s1 + $0x1090] sm:$0xff]
    %v797 = vld [vmem:[%s1 + $0x1098] sm:$0xff]
    %v798 = vld [vmem:[%s1 + $0x10a0] sm:$0xf]
    %v799 = vld [vmem:[%s1 + $0x10a4] sm:$0xff]
    %v800 = vld [vmem:[%s1 + $0x10ac] sm:$0xff]
    %v801 = vld [vmem:[%s1 + $0x10b4] sm:$0xf]
    %v802 = vld [vmem:[%s1 + $0x10b8] sm:$0xff]
    %v803 = vld [vmem:[%s1 + $0x10c0] sm:$0xff]
    %v804 = vld [vmem:[%s1 + $0x10c8] sm:$0xf]
    %v805 = vld [vmem:[%s1 + $0x10cc] sm:$0xff]
    %v806 = vld [vmem:[%s1 + $0x10d4] sm:$0xff]
    %v807 = vld [vmem:[%s1 + $0x10dc] sm:$0xf]
    %v808 = vld [vmem:[%s1 + $0x10e0] sm:$0xff]
    %v809 = vld [vmem:[%s1 + $0x10e8] sm:$0xff]
    %v810 = vld [vmem:[%s1 + $0x10f0] sm:$0xf]
    %v811 = vld [vmem:[%s1 + $0x10f4] sm:$0xff]
    %v812 = vld [vmem:[%s1 + $0x10fc] sm:$0xff]
    %v813 = vld [vmem:[%s1 + $0x1104] sm:$0xf]
    %v814 = vld [vmem:[%s1 + $0x1108] sm:$0xff]
    %v815 = vld [vmem:[%s1 + $0x1110] sm:$0xff]
    %v816 = vld [vmem:[%s1 + $0x1118] sm:$0xf]
    %v817 = vld [vmem:[%s1 + $0x111c] sm:$0xff]
    %v818 = vld [vmem:[%s1 + $0x1124] sm:$0xff]
    %v819 = vld [vmem:[%s1 + $0x112c] sm:$0xf]
    %v820 = vld [vmem:[%s1 + $0x1130] sm:$0xff]
    %v821 = vld [vmem:[%s1 + $0x1138] sm:$0xff]
    %v822 = vld [vmem:[%s1 + $0x1140] sm:$0xf]
    %v823 = vld [vmem:[%s1 + $0x1144] sm:$0xff]
    %v824 = vld [vmem:[%s1 + $0x114c] sm:$0xff]
    %v825 = vld [vmem:[%s1 + $0x1154] sm:$0xf]
    %v826 = vld [vmem:[%s1 + $0x1158] sm:$0xff]
    %v827 = vld [vmem:[%s1 + $0x1160] sm:$0xff]
    %v828 = vld [vmem:[%s1 + $0x1168] sm:$0xf]
    %v829 = vld [vmem:[%s1 + $0x116c] sm:$0xff]
    %v830 = vld [vmem:[%s1 + $0x1174] sm:$0xff]
    %v831 = vld [vmem:[%s1 + $0x117c] sm:$0xf]
    %v832 = vld [vmem:[%s1 + $0x1180] sm:$0xff]
    %v833 = vld [vmem:[%s1 + $0x1188] sm:$0xff]
    %v834 = vld [vmem:[%s1 + $0x1190] sm:$0xf]
    %v835 = vld [vmem:[%s1 + $0x1194] sm:$0xff]
    %v836 = vld [vmem:[%s1 + $0x119c] sm:$0xff]
    %v837 = vld [vmem:[%s1 + $0x11a4] sm:$0xf]
    %v838 = vld [vmem:[%s1 + $0x11a8] sm:$0xff]
    %v839 = vld [vmem:[%s1 + $0x11b0] sm:$0xff]
    %v840 = vld [vmem:[%s1 + $0x11b8] sm:$0xf]
    %v841 = vld [vmem:[%s1 + $0x11bc] sm:$0xff]
    %v842 = vld [vmem:[%s1 + $0x11c4] sm:$0xff]
    %v843 = vld [vmem:[%s1 + $0x11cc] sm:$0xf]
    %v844 = vld [vmem:[%s1 + $0x11d0] sm:$0xff]
    %v845 = vld [vmem:[%s1 + $0x11d8] sm:$0xff]
    %v846 = vld [vmem:[%s1 + $0x11e0] sm:$0xf]
    %v847 = vld [vmem:[%s1 + $0x11e4] sm:$0xff]
    %v848 = vld [vmem:[%s1 + $0x11ec] sm:$0xff]
    %v849 = vld [vmem:[%s1 + $0x11f4] sm:$0xf]
    %v850 = vld [vmem:[%s1 + $0x11f8] sm:$0xff]
    %v851 = vld [vmem:[%s1 + $0x1200] sm:$0xff]
    %v852 = vld [vmem:[%s1 + $0x1208] sm:$0xf]
    %v853 = vld [vmem:[%s1 + $0x120c] sm:$0xff]
    %v854 = vld [vmem:[%s1 + $0x1214] sm:$0xff]
    %v855 = vld [vmem:[%s1 + $0x121c] sm:$0xf]
    %v856 = vld [vmem:[%s1 + $0x1220] sm:$0xff]
    %v857 = vld [vmem:[%s1 + $0x1228] sm:$0xff]
    %v858 = vld [vmem:[%s1 + $0x1230] sm:$0xf]
    %v859 = vld [vmem:[%s1 + $0x1234] sm:$0xff]
    %v860 = vld [vmem:[%s1 + $0x123c] sm:$0xff]
    %v861 = vld [vmem:[%s1 + $0x1244] sm:$0xf]
    %v862 = vld [vmem:[%s1 + $0x1248] sm:$0xff]
    %v863 = vld [vmem:[%s1 + $0x1250] sm:$0xff]
    %v864 = vld [vmem:[%s1 + $0x1258] sm:$0xf]
    %v865 = vld [vmem:[%s1 + $0x125c] sm:$0xff]
    %v866 = vld [vmem:[%s1 + $0x1264] sm:$0xff]
    %v867 = vld [vmem:[%s1 + $0x126c] sm:$0xf]
    %v868 = vld [vmem:[%s1 + $0x1270] sm:$0xff]
    %v869 = vld [vmem:[%s1 + $0x1278] sm:$0xff]
    %v870 = vld [vmem:[%s1 + $0x1280] sm:$0xf]
    %v871 = vld [vmem:[%s1 + $0x1284] sm:$0xff]
    %v872 = vld [vmem:[%s1 + $0x128c] sm:$0xff]
    %v873 = vld [vmem:[%s1 + $0x1294] sm:$0xf]
    %v874 = vld [vmem:[%s1 + $0x1298] sm:$0xff]
    %v875 = vld [vmem:[%s1 + $0x12a0] sm:$0xff]
    %v876 = vld [vmem:[%s1 + $0x12a8] sm:$0xf]
    %v877 = vld [vmem:[%s1 + $0x12ac] sm:$0xff]
    %v878 = vld [vmem:[%s1 + $0x12b4] sm:$0xff]
    %v879 = vld [vmem:[%s1 + $0x12bc] sm:$0xf]
    %v880 = vld [vmem:[%s1 + $0x12c0] sm:$0xff]
    %v881 = vld [vmem:[%s1 + $0x12c8] sm:$0xff]
    %v882 = vld [vmem:[%s1 + $0x12d0] sm:$0xf]
    %v883 = vld [vmem:[%s1 + $0x12d4] sm:$0xff]
    %v884 = vld [vmem:[%s1 + $0x12dc] sm:$0xff]
    %v885 = vld [vmem:[%s1 + $0x12e4] sm:$0xf]
    %v886 = vld [vmem:[%s1 + $0x12e8] sm:$0xff]
    %v887 = vld [vmem:[%s1 + $0x12f0] sm:$0xff]
    %v888 = vld [vmem:[%s1 + $0x12f8] sm:$0xf]
    %v889 = vld [vmem:[%s1 + $0x12fc] sm:$0xff]
    %v890 = vld [vmem:[%s1 + $0x1304] sm:$0xff]
    %v891 = vld [vmem:[%s1 + $0x130c] sm:$0xf]
    %v892 = vld [vmem:[%s1 + $0x1310] sm:$0xff]
    %v893 = vld [vmem:[%s1 + $0x1318] sm:$0xff]
    %v894 = vld [vmem:[%s1 + $0x1320] sm:$0xf]
    %v895 = vld [vmem:[%s1 + $0x1324] sm:$0xff]
    %v896 = vld [vmem:[%s1 + $0x132c] sm:$0xff]
    %v897 = vld [vmem:[%s1 + $0x1334] sm:$0xf]
    %v898 = vld [vmem:[%s1 + $0x1338] sm:$0xff]
    %v899 = vld [vmem:[%s1 + $0x1340] sm:$0xff]
    %v900 = vld [vmem:[%s1 + $0x1348] sm:$0xf]
    %v901 = vld [vmem:[%s1 + $0x134c] sm:$0xff]
    %v902 = vld [vmem:[%s1 + $0x1354] sm:$0xff]
    %v903 = vld [vmem:[%s1 + $0x135c] sm:$0xf]
    %v904 = vld [vmem:[%s1 + $0x1360] sm:$0xff]
    %v905 = vld [vmem:[%s1 + $0x1368] sm:$0xff]
    %v906 = vld [vmem:[%s1 + $0x1370] sm:$0xf]
    %v907 = vld [vmem:[%s1 + $0x1374] sm:$0xff]
    %v908 = vld [vmem:[%s1 + $0x137c] sm:$0xff]
    %v909 = vld [vmem:[%s1 + $0x1384] sm:$0xf]
    %v910 = vld [vmem:[%s1 + $0x1388] sm:$0xff]
    %v911 = vld [vmem:[%s1 + $0x1390] sm:$0xff]
    %v912 = vld [vmem:[%s1 + $0x1398] sm:$0xf]
    %v913 = vld [vmem:[%s1 + $0x139c] sm:$0xff]
    %v914 = vld [vmem:[%s1 + $0x13a4] sm:$0xff]
    %v915 = vld [vmem:[%s1 + $0x13ac] sm:$0xf]
    %v916 = vld [vmem:[%s1 + $0x13b0] sm:$0xff]
    %v917 = vld [vmem:[%s1 + $0x13b8] sm:$0xff]
    %v918 = vld [vmem:[%s1 + $0x13c0] sm:$0xf]
    %v919 = vld [vmem:[%s1 + $0x13c4] sm:$0xff]
    %v920 = vld [vmem:[%s1 + $0x13cc] sm:$0xff]
    %v921 = vld [vmem:[%s1 + $0x13d4] sm:$0xf]
    %v922 = vld [vmem:[%s1 + $0x13d8] sm:$0xff]
    %v923 = vld [vmem:[%s1 + $0x13e0] sm:$0xff]
    %v924 = vld [vmem:[%s1 + $0x13e8] sm:$0xf]
    %v925 = vld [vmem:[%s1 + $0x13ec] sm:$0xff]
    %v926 = vld [vmem:[%s1 + $0x13f4] sm:$0xff]
    %v927 = vld [vmem:[%s1 + $0x13fc] sm:$0xf]
    %v928 = vld [vmem:[%s1 + $0x1400] sm:$0xff]
    %v929 = vld [vmem:[%s1 + $0x1408] sm:$0xff]
    %v930 = vld [vmem:[%s1 + $0x1410] sm:$0xf]
    %v931 = vld [vmem:[%s1 + $0x1414] sm:$0xff]
    %v932 = vld [vmem:[%s1 + $0x141c] sm:$0xff]
    %v933 = vld [vmem:[%s1 + $0x1424] sm:$0xf]
    %v934 = vld [vmem:[%s1 + $0x1428] sm:$0xff]
    %v935 = vld [vmem:[%s1 + $0x1430] sm:$0xff]
    %v936 = vld [vmem:[%s1 + $0x1438] sm:$0xf]
    %v937 = vld [vmem:[%s1 + $0x143c] sm:$0xff]
    %v938 = vld [vmem:[%s1 + $0x1444] sm:$0xff]
    %v939 = vld [vmem:[%s1 + $0x144c] sm:$0xf]
    %v940 = vld [vmem:[%s1 + $0x1450] sm:$0xff]
    %v941 = vld [vmem:[%s1 + $0x1458] sm:$0xff]
    %v942 = vld [vmem:[%s1 + $0x1460] sm:$0xf]
    %v943 = vld [vmem:[%s1 + $0x1464] sm:$0xff]
    %v944 = vld [vmem:[%s1 + $0x146c] sm:$0xff]
    %v945 = vld [vmem:[%s1 + $0x1474] sm:$0xf]
    %v946 = vld [vmem:[%s1 + $0x1478] sm:$0xff]
    %v947 = vld [vmem:[%s1 + $0x1480] sm:$0xff]
    %v948 = vld [vmem:[%s1 + $0x1488] sm:$0xf]
    %v949 = vld [vmem:[%s1 + $0x148c] sm:$0xff]
    %v950 = vld [vmem:[%s1 + $0x1494] sm:$0xff]
    %v951 = vld [vmem:[%s1 + $0x149c] sm:$0xf]
    %v952 = vld [vmem:[%s1 + $0x14a0] sm:$0xff]
    %v953 = vld [vmem:[%s1 + $0x14a8] sm:$0xff]
    %v954 = vld [vmem:[%s1 + $0x14b0] sm:$0xf]
    %v955 = vld [vmem:[%s1 + $0x14b4] sm:$0xff]
    %v956 = vld [vmem:[%s1 + $0x14bc] sm:$0xff]
    %v957 = vld [vmem:[%s1 + $0x14c4] sm:$0xf]
    %v958 = vld [vmem:[%s1 + $0x14c8] sm:$0xff]
    %v959 = vld [vmem:[%s1 + $0x14d0] sm:$0xff]
    %v960 = vld [vmem:[%s1 + $0x14d8] sm:$0xf]
    %v961 = vld [vmem:[%s1 + $0x14dc] sm:$0xff]
    %v962 = vld [vmem:[%s1 + $0x14e4] sm:$0xff]
    %v963 = vld [vmem:[%s1 + $0x14ec] sm:$0xf]
    %v964 = vld [vmem:[%s1 + $0x14f0] sm:$0xff]
    %v965 = vld [vmem:[%s1 + $0x14f8] sm:$0xff]
    %v966 = vld [vmem:[%s1 + $0x1500] sm:$0xf]
    %v967 = vld [vmem:[%s1 + $0x1504] sm:$0xff]
    %v968 = vld [vmem:[%s1 + $0x150c] sm:$0xff]
    %v969 = vld [vmem:[%s1 + $0x1514] sm:$0xf]
    %v970 = vld [vmem:[%s1 + $0x1518] sm:$0xff]
    %v971 = vld [vmem:[%s1 + $0x1520] sm:$0xff]
    %v972 = vld [vmem:[%s1 + $0x1528] sm:$0xf]
    %v973 = vld [vmem:[%s1 + $0x152c] sm:$0xff]
    %v974 = vld [vmem:[%s1 + $0x1534] sm:$0xff]
    %v975 = vld [vmem:[%s1 + $0x153c] sm:$0xf]
    %v976 = vld [vmem:[%s1 + $0x1540] sm:$0xff]
    %v977 = vld [vmem:[%s1 + $0x1548] sm:$0xff]
    %v978 = vld [vmem:[%s1 + $0x1550] sm:$0xf]
    %v979 = vld [vmem:[%s1 + $0x1554] sm:$0xff]
    %v980 = vld [vmem:[%s1 + $0x155c] sm:$0xff]
    %v981 = vld [vmem:[%s1 + $0x1564] sm:$0xf]
    %v982 = vld [vmem:[%s1 + $0x1568] sm:$0xff]
    %v983 = vld [vmem:[%s1 + $0x1570] sm:$0xff]
    %v984 = vld [vmem:[%s1 + $0x1578] sm:$0xf]
    %v985 = vld [vmem:[%s1 + $0x157c] sm:$0xff]
    %v986 = vld [vmem:[%s1 + $0x1584] sm:$0xff]
    %v987 = vld [vmem:[%s1 + $0x158c] sm:$0xf]
    %v988 = vld [vmem:[%s1 + $0x1590] sm:$0xff]
    %v989 = vld [vmem:[%s1 + $0x1598] sm:$0xff]
    %v990 = vld [vmem:[%s1 + $0x15a0] sm:$0xf]
    %v991 = vld [vmem:[%s1 + $0x15a4] sm:$0xff]
    %v992 = vld [vmem:[%s1 + $0x15ac] sm:$0xff]
    %v993 = vld [vmem:[%s1 + $0x15b4] sm:$0xf]
    %v994 = vld [vmem:[%s1 + $0x15b8] sm:$0xff]
    %v995 = vld [vmem:[%s1 + $0x15c0] sm:$0xff]
    %v996 = vld [vmem:[%s1 + $0x15c8] sm:$0xf]
    %v997 = vld [vmem:[%s1 + $0x15cc] sm:$0xff]
    %v998 = vld [vmem:[%s1 + $0x15d4] sm:$0xff]
    %v999 = vld [vmem:[%s1 + $0x15dc] sm:$0xf]
    %v1000 = vld [vmem:[%s1 + $0x15e0] sm:$0xff]
    %v1001 = vld [vmem:[%s1 + $0x15e8] sm:$0xff]
    %v1002 = vld [vmem:[%s1 + $0x15f0] sm:$0xf]
    %v1003 = vld [vmem:[%s1 + $0x15f4] sm:$0xff]
    %v1004 = vld [vmem:[%s1 + $0x15fc] sm:$0xff]
    %v1005 = vld [vmem:[%s1 + $0x1604] sm:$0xf]
    %v1006 = vld [vmem:[%s1 + $0x1608] sm:$0xff]
    %v1007 = vld [vmem:[%s1 + $0x1610] sm:$0xff]
    %v1008 = vld [vmem:[%s1 + $0x1618] sm:$0xf]
    %v1009 = vld [vmem:[%s1 + $0x161c] sm:$0xff]
    %v1010 = vld [vmem:[%s1 + $0x1624] sm:$0xff]
    %v1011 = vld [vmem:[%s1 + $0x162c] sm:$0xf]
    %v1012 = vld [vmem:[%s1 + $0x1630] sm:$0xff]
    %v1013 = vld [vmem:[%s1 + $0x1638] sm:$0xff]
    %v1014 = vld [vmem:[%s1 + $0x1640] sm:$0xf]
    %v1015 = vld [vmem:[%s1 + $0x1644] sm:$0xff]
    %v1016 = vld [vmem:[%s1 + $0x164c] sm:$0xff]
    %v1017 = vld [vmem:[%s1 + $0x1654] sm:$0xf]
    %v1018 = vld [vmem:[%s1 + $0x1658] sm:$0xff]
    %v1019 = vld [vmem:[%s1 + $0x1660] sm:$0xff]
    %v1020 = vld [vmem:[%s1 + $0x1668] sm:$0xf]
    %v1021 = vld [vmem:[%s1 + $0x166c] sm:$0xff]
    %v1022 = vld [vmem:[%s1 + $0x1674] sm:$0xff]
    %v1023 = vld [vmem:[%s1 + $0x167c] sm:$0xf]
    %v1024 = vld [vmem:[%s1 + $0x1680] sm:$0xff]
    %v1025 = vld [vmem:[%s1 + $0x1688] sm:$0xff]
    %v1026 = vld [vmem:[%s1 + $0x1690] sm:$0xf]
    %v1027 = vld [vmem:[%s1 + $0x1694] sm:$0xff]
    %v1028 = vld [vmem:[%s1 + $0x169c] sm:$0xff]
    %v1029 = vld [vmem:[%s1 + $0x16a4] sm:$0xf]
    %v1030 = vld [vmem:[%s1 + $0x16a8] sm:$0xff]
    %v1031 = vld [vmem:[%s1 + $0x16b0] sm:$0xff]
    %v1032 = vld [vmem:[%s1 + $0x16b8] sm:$0xf]
    %v1033 = vld [vmem:[%s1 + $0x16bc] sm:$0xff]
    %v1034 = vld [vmem:[%s1 + $0x16c4] sm:$0xff]
    %v1035 = vld [vmem:[%s1 + $0x16cc] sm:$0xf]
    %v1036 = vld [vmem:[%s1 + $0x16d0] sm:$0xff]
    %v1037 = vld [vmem:[%s1 + $0x16d8] sm:$0xff]
    %v1038 = vld [vmem:[%s1 + $0x16e0] sm:$0xf]
    %v1039 = vld [vmem:[%s1 + $0x16e4] sm:$0xff]
    %v1040 = vld [vmem:[%s1 + $0x16ec] sm:$0xff]
    %v1041 = vld [vmem:[%s1 + $0x16f4] sm:$0xf]
    %v1042 = vld [vmem:[%s1 + $0x16f8] sm:$0xff]
    %v1043 = vld [vmem:[%s1 + $0x1700] sm:$0xff]
    %v1044 = vld [vmem:[%s1 + $0x1708] sm:$0xf]
    %v1045 = vld [vmem:[%s1 + $0x170c] sm:$0xff]
    %v1046 = vld [vmem:[%s1 + $0x1714] sm:$0xff]
    %v1047 = vld [vmem:[%s1 + $0x171c] sm:$0xf]
    %v1048 = vld [vmem:[%s1 + $0x1720] sm:$0xff]
    %v1049 = vld [vmem:[%s1 + $0x1728] sm:$0xff]
    %v1050 = vld [vmem:[%s1 + $0x1730] sm:$0xf]
    %v1051 = vld [vmem:[%s1 + $0x1734] sm:$0xff]
    %v1052 = vld [vmem:[%s1 + $0x173c] sm:$0xff]
    %v1053 = vld [vmem:[%s1 + $0x1744] sm:$0xf]
    %v1054 = vld [vmem:[%s1 + $0x1748] sm:$0xff]
    %v1055 = vld [vmem:[%s1 + $0x1750] sm:$0xff]
    %v1056 = vld [vmem:[%s1 + $0x1758] sm:$0xf]
    %v1057 = vld [vmem:[%s1 + $0x175c] sm:$0xff]
    %v1058 = vld [vmem:[%s1 + $0x1764] sm:$0xff]
    %v1059 = vld [vmem:[%s1 + $0x176c] sm:$0xf]
    %v1060 = vld [vmem:[%s1 + $0x1770] sm:$0xff]
    %v1061 = vld [vmem:[%s1 + $0x1778] sm:$0xff]
    %v1062 = vld [vmem:[%s1 + $0x1780] sm:$0xf]
    %v1063 = vld [vmem:[%s1 + $0x1784] sm:$0xff]
    %v1064 = vld [vmem:[%s1 + $0x178c] sm:$0xff]
    %v1065 = vld [vmem:[%s1 + $0x1794] sm:$0xf]
    %v1066 = vld [vmem:[%s1 + $0x1798] sm:$0xff]
    %v1067 = vld [vmem:[%s1 + $0x17a0] sm:$0xff]
    %v1068 = vld [vmem:[%s1 + $0x17a8] sm:$0xf]
    %v1069 = vld [vmem:[%s1 + $0x17ac] sm:$0xff]
    %v1070 = vld [vmem:[%s1 + $0x17b4] sm:$0xff]
    %v1071 = vld [vmem:[%s1 + $0x17bc] sm:$0xf]
    %v1072 = vld [vmem:[%s1 + $0x17c0] sm:$0xff]
    %v1073 = vld [vmem:[%s1 + $0x17c8] sm:$0xff]
    %v1074 = vld [vmem:[%s1 + $0x17d0] sm:$0xf]
    %v1075 = vld [vmem:[%s1 + $0x17d4] sm:$0xff]
    %v1076 = vld [vmem:[%s1 + $0x17dc] sm:$0xff]
    %v1077 = vld [vmem:[%s1 + $0x17e4] sm:$0xf]
    %v1078 = vld [vmem:[%s1 + $0x17e8] sm:$0xff]
    %v1079 = vld [vmem:[%s1 + $0x17f0] sm:$0xff]
    %v1080 = vld [vmem:[%s1 + $0x17f8] sm:$0xf]
    %v1081 = vld [vmem:[%s1 + $0x17fc] sm:$0xff]
    %v1082 = vld [vmem:[%s1 + $0x1804] sm:$0xff]
    %v1083 = vld [vmem:[%s1 + $0x180c] sm:$0xf]
    %v1084 = vld [vmem:[%s1 + $0x1810] sm:$0xff]
    %v1085 = vld [vmem:[%s1 + $0x1818] sm:$0xff]
    %v1086 = vld [vmem:[%s1 + $0x1820] sm:$0xf]
    %v1087 = vld [vmem:[%s1 + $0x1824] sm:$0xff]
    %v1088 = vld [vmem:[%s1 + $0x182c] sm:$0xff]
    %v1089 = vld [vmem:[%s1 + $0x1834] sm:$0xf]
    %v1090 = vld [vmem:[%s1 + $0x1838] sm:$0xff]
    %v1091 = vld [vmem:[%s1 + $0x1840] sm:$0xff]
    %v1092 = vld [vmem:[%s1 + $0x1848] sm:$0xf]
    %v1093 = vld [vmem:[%s1 + $0x184c] sm:$0xff]
    %v1094 = vld [vmem:[%s1 + $0x1854] sm:$0xff]
    %v1095 = vld [vmem:[%s1 + $0x185c] sm:$0xf]
    %v1096 = vld [vmem:[%s1 + $0x1860] sm:$0xff]
    %v1097 = vld [vmem:[%s1 + $0x1868] sm:$0xff]
    %v1098 = vld [vmem:[%s1 + $0x1870] sm:$0xf]
    %v1099 = vld [vmem:[%s1 + $0x1874] sm:$0xff]
    %v1100 = vld [vmem:[%s1 + $0x187c] sm:$0xff]
    %v1101 = vld [vmem:[%s1 + $0x1884] sm:$0xf]
    %v1102 = vld [vmem:[%s1 + $0x1888] sm:$0xff]
    %v1103 = vld [vmem:[%s1 + $0x1890] sm:$0xff]
    %v1104 = vld [vmem:[%s1 + $0x1898] sm:$0xf]
    %v1105 = vld [vmem:[%s1 + $0x189c] sm:$0xff]
    %v1106 = vld [vmem:[%s1 + $0x18a4] sm:$0xff]
    %v1107 = vld [vmem:[%s1 + $0x18ac] sm:$0xf]
    %v1108 = vld [vmem:[%s1 + $0x18b0] sm:$0xff]
    %v1109 = vld [vmem:[%s1 + $0x18b8] sm:$0xff]
    %v1110 = vld [vmem:[%s1 + $0x18c0] sm:$0xf]
    %v1111 = vld [vmem:[%s1 + $0x18c4] sm:$0xff]
    %v1112 = vld [vmem:[%s1 + $0x18cc] sm:$0xff]
    %v1113 = vld [vmem:[%s1 + $0x18d4] sm:$0xf]
    %v1114 = vld [vmem:[%s1 + $0x18d8] sm:$0xff]
    %v1115 = vld [vmem:[%s1 + $0x18e0] sm:$0xff]
    %v1116 = vld [vmem:[%s1 + $0x18e8] sm:$0xf]
    %v1117 = vld [vmem:[%s1 + $0x18ec] sm:$0xff]
    %v1118 = vld [vmem:[%s1 + $0x18f4] sm:$0xff]
    %v1119 = vld [vmem:[%s1 + $0x18fc] sm:$0xf]
    %v1120 = vld [vmem:[%s1 + $0x1900] sm:$0xff]
    %v1121 = vld [vmem:[%s1 + $0x1908] sm:$0xff]
    %v1122 = vld [vmem:[%s1 + $0x1910] sm:$0xf]
    %v1123 = vld [vmem:[%s1 + $0x1914] sm:$0xff]
    %v1124 = vld [vmem:[%s1 + $0x191c] sm:$0xff]
    %v1125 = vld [vmem:[%s1 + $0x1924] sm:$0xf]
    %v1126 = vld [vmem:[%s1 + $0x1928] sm:$0xff]
    %v1127 = vld [vmem:[%s1 + $0x1930] sm:$0xff]
    %v1128 = vld [vmem:[%s1 + $0x1938] sm:$0xf]
    %v1129 = vld [vmem:[%s1 + $0x193c] sm:$0xff]
    %v1130 = vld [vmem:[%s1 + $0x1944] sm:$0xff]
    %v1131 = vld [vmem:[%s1 + $0x194c] sm:$0xf]
    %v1132 = vld [vmem:[%s1 + $0x1950] sm:$0xff]
    %v1133 = vld [vmem:[%s1 + $0x1958] sm:$0xff]
    %v1134 = vld [vmem:[%s1 + $0x1960] sm:$0xf]
    %v1135 = vld [vmem:[%s1 + $0x1964] sm:$0xff]
    %v1136 = vld [vmem:[%s1 + $0x196c] sm:$0xff]
    %v1137 = vld [vmem:[%s1 + $0x1974] sm:$0xf]
    %v1138 = vld [vmem:[%s1 + $0x1978] sm:$0xff]
    %v1139 = vld [vmem:[%s1 + $0x1980] sm:$0xff]
    %v1140 = vld [vmem:[%s1 + $0x1988] sm:$0xf]
    %v1141 = vld [vmem:[%s1 + $0x198c] sm:$0xff]
    %v1142 = vld [vmem:[%s1 + $0x1994] sm:$0xff]
    %v1143 = vld [vmem:[%s1 + $0x199c] sm:$0xf]
    %v1144 = vld [vmem:[%s1 + $0x19a0] sm:$0xff]
    %v1145 = vld [vmem:[%s1 + $0x19a8] sm:$0xff]
    %v1146 = vld [vmem:[%s1 + $0x19b0] sm:$0xf]
    %v1147 = vld [vmem:[%s1 + $0x19b4] sm:$0xff]
    %v1148 = vld [vmem:[%s1 + $0x19bc] sm:$0xff]
    %v1149 = vld [vmem:[%s1 + $0x19c4] sm:$0xf]
    %v1150 = vld [vmem:[%s1 + $0x19c8] sm:$0xff]
    %v1151 = vld [vmem:[%s1 + $0x19d0] sm:$0xff]
    %v1152 = vld [vmem:[%s1 + $0x19d8] sm:$0xf]
    %v1153 = vld [vmem:[%s1 + $0x19dc] sm:$0xff]
    %v1154 = vld [vmem:[%s1 + $0x19e4] sm:$0xff]
    %v1155 = vld [vmem:[%s1 + $0x19ec] sm:$0xf]
    %v1156 = vld [vmem:[%s1 + $0x19f0] sm:$0xff]
    %v1157 = vld [vmem:[%s1 + $0x19f8] sm:$0xff]
    %v1158 = vld [vmem:[%s1 + $0x1a00] sm:$0xf]
    %v1159 = vld [vmem:[%s1 + $0x1a04] sm:$0xff]
    %v1160 = vld [vmem:[%s1 + $0x1a0c] sm:$0xff]
    %v1161 = vld [vmem:[%s1 + $0x1a14] sm:$0xf]
    %v1162 = vld [vmem:[%s1 + $0x1a18] sm:$0xff]
    %v1163 = vld [vmem:[%s1 + $0x1a20] sm:$0xff]
    %v1164 = vld [vmem:[%s1 + $0x1a28] sm:$0xf]
    %v1165 = vld [vmem:[%s1 + $0x1a2c] sm:$0xff]
    %v1166 = vld [vmem:[%s1 + $0x1a34] sm:$0xff]
    %v1167 = vld [vmem:[%s1 + $0x1a3c] sm:$0xf]
    %v1168 = vld [vmem:[%s1 + $0x1a40] sm:$0xff]
    %v1169 = vld [vmem:[%s1 + $0x1a48] sm:$0xff]
    %v1170 = vld [vmem:[%s1 + $0x1a50] sm:$0xf]
    %v1171 = vld [vmem:[%s1 + $0x1a54] sm:$0xff]
    %v1172 = vld [vmem:[%s1 + $0x1a5c] sm:$0xff]
    %v1173 = vld [vmem:[%s1 + $0x1a64] sm:$0xf]
    %v1174 = vld [vmem:[%s1 + $0x1a68] sm:$0xff]
    %v1175 = vld [vmem:[%s1 + $0x1a70] sm:$0xff]
    %v1176 = vld [vmem:[%s1 + $0x1a78] sm:$0xf]
    %v1177 = vld [vmem:[%s1 + $0x1a7c] sm:$0xff]
    %v1178 = vld [vmem:[%s1 + $0x1a84] sm:$0xff]
    %v1179 = vld [vmem:[%s1 + $0x1a8c] sm:$0xf]
    %v1180 = vld [vmem:[%s1 + $0x1a90] sm:$0xff]
    %v1181 = vld [vmem:[%s1 + $0x1a98] sm:$0xff]
    %v1182 = vld [vmem:[%s1 + $0x1aa0] sm:$0xf]
    %v1183 = vld [vmem:[%s1 + $0x1aa4] sm:$0xff]
    %v1184 = vld [vmem:[%s1 + $0x1aac] sm:$0xff]
    %v1185 = vld [vmem:[%s1 + $0x1ab4] sm:$0xf]
    %v1186 = vld [vmem:[%s1 + $0x1ab8] sm:$0xff]
    %v1187 = vld [vmem:[%s1 + $0x1ac0] sm:$0xff]
    %v1188 = vld [vmem:[%s1 + $0x1ac8] sm:$0xf]
    %v1189 = vld [vmem:[%s1 + $0x1acc] sm:$0xff]
    %v1190 = vld [vmem:[%s1 + $0x1ad4] sm:$0xff]
    %v1191 = vld [vmem:[%s1 + $0x1adc] sm:$0xf]
    %v1192 = vld [vmem:[%s1 + $0x1ae0] sm:$0xff]
    %v1193 = vld [vmem:[%s1 + $0x1ae8] sm:$0xff]
    %v1194 = vld [vmem:[%s1 + $0x1af0] sm:$0xf]
    %v1195 = vld [vmem:[%s1 + $0x1af4] sm:$0xff]
    %v1196 = vld [vmem:[%s1 + $0x1afc] sm:$0xff]
    %v1197 = vld [vmem:[%s1 + $0x1b04] sm:$0xf]
    %v1198 = vld [vmem:[%s1 + $0x1b08] sm:$0xff]
    %v1199 = vld [vmem:[%s1 + $0x1b10] sm:$0xff]
    %v1200 = vld [vmem:[%s1 + $0x1b18] sm:$0xf]
    %v1201 = vld [vmem:[%s1 + $0x1b1c] sm:$0xff]
    %v1202 = vld [vmem:[%s1 + $0x1b24] sm:$0xff]
    %v1203 = vld [vmem:[%s1 + $0x1b2c] sm:$0xf]
    %v1204 = vld [vmem:[%s1 + $0x1b30] sm:$0xff]
    %v1205 = vld [vmem:[%s1 + $0x1b38] sm:$0xff]
    %v1206 = vld [vmem:[%s1 + $0x1b40] sm:$0xf]
    %v1207 = vld [vmem:[%s1 + $0x1b44] sm:$0xff]
    %v1208 = vld [vmem:[%s1 + $0x1b4c] sm:$0xff]
    %v1209 = vld [vmem:[%s1 + $0x1b54] sm:$0xf]
    %v1210 = vld [vmem:[%s1 + $0x1b58] sm:$0xff]
    %v1211 = vld [vmem:[%s1 + $0x1b60] sm:$0xff]
    %v1212 = vld [vmem:[%s1 + $0x1b68] sm:$0xf]
    %v1213 = vld [vmem:[%s1 + $0x1b6c] sm:$0xff]
    %v1214 = vld [vmem:[%s1 + $0x1b74] sm:$0xff]
    %v1215 = vld [vmem:[%s1 + $0x1b7c] sm:$0xf]
    %v1216 = vld [vmem:[%s1 + $0x1b80] sm:$0xff]
    %v1217 = vld [vmem:[%s1 + $0x1b88] sm:$0xff]
    %v1218 = vld [vmem:[%s1 + $0x1b90] sm:$0xf]
    %v1219 = vld [vmem:[%s1 + $0x1b94] sm:$0xff]
    %v1220 = vld [vmem:[%s1 + $0x1b9c] sm:$0xff]
    %v1221 = vld [vmem:[%s1 + $0x1ba4] sm:$0xf]
    %v1222 = vld [vmem:[%s1 + $0x1ba8] sm:$0xff]
    %v1223 = vld [vmem:[%s1 + $0x1bb0] sm:$0xff]
    %v1224 = vld [vmem:[%s1 + $0x1bb8] sm:$0xf]
    %v1225 = vld [vmem:[%s1 + $0x1bbc] sm:$0xff]
    %v1226 = vld [vmem:[%s1 + $0x1bc4] sm:$0xff]
    %v1227 = vld [vmem:[%s1 + $0x1bcc] sm:$0xf]
    %v1228 = vld [vmem:[%s1 + $0x1bd0] sm:$0xff]
    %v1229 = vld [vmem:[%s1 + $0x1bd8] sm:$0xff]
    %v1230 = vld [vmem:[%s1 + $0x1be0] sm:$0xf]
    %v1231 = vld [vmem:[%s1 + $0x1be4] sm:$0xff]
    %v1232 = vld [vmem:[%s1 + $0x1bec] sm:$0xff]
    %v1233 = vld [vmem:[%s1 + $0x1bf4] sm:$0xf]
    %v1234 = vld [vmem:[%s1 + $0x1bf8] sm:$0xff]
    %v1235 = vld [vmem:[%s1 + $0x1c00] sm:$0xff]
    %v1236 = vld [vmem:[%s1 + $0x1c08] sm:$0xf]
    %v1237 = vld [vmem:[%s1 + $0x1c0c] sm:$0xff]
    %v1238 = vld [vmem:[%s1 + $0x1c14] sm:$0xff]
    %v1239 = vld [vmem:[%s1 + $0x1c1c] sm:$0xf]
    %v1240 = vld [vmem:[%s1 + $0x1c20] sm:$0xff]
    %v1241 = vld [vmem:[%s1 + $0x1c28] sm:$0xff]
    %v1242 = vld [vmem:[%s1 + $0x1c30] sm:$0xf]
    %v1243 = vld [vmem:[%s1 + $0x1c34] sm:$0xff]
    %v1244 = vld [vmem:[%s1 + $0x1c3c] sm:$0xff]
    %v1245 = vld [vmem:[%s1 + $0x1c44] sm:$0xf]
    %v1246 = vld [vmem:[%s1 + $0x1c48] sm:$0xff]
    %v1247 = vld [vmem:[%s1 + $0x1c50] sm:$0xff]
    %v1248 = vld [vmem:[%s1 + $0x1c58] sm:$0xf]
    %v1249 = vld [vmem:[%s1 + $0x1c5c] sm:$0xff]
    %v1250 = vld [vmem:[%s1 + $0x1c64] sm:$0xff]
    %v1251 = vld [vmem:[%s1 + $0x1c6c] sm:$0xf]
    %v1252 = vld [vmem:[%s1 + $0x1c70] sm:$0xff]
    %v1253 = vld [vmem:[%s1 + $0x1c78] sm:$0xff]
    %v1254 = vld [vmem:[%s1 + $0x1c80] sm:$0xf]
    %v1255 = vld [vmem:[%s1 + $0x1c84] sm:$0xff]
    %v1256 = vld [vmem:[%s1 + $0x1c8c] sm:$0xff]
    %v1257 = vld [vmem:[%s1 + $0x1c94] sm:$0xf]
    %v1258 = vld [vmem:[%s1 + $0x1c98] sm:$0xff]
    %v1259 = vld [vmem:[%s1 + $0x1ca0] sm:$0xff]
    %v1260 = vld [vmem:[%s1 + $0x1ca8] sm:$0xf]
    %v1261 = vld [vmem:[%s1 + $0x1cac] sm:$0xff]
    %v1262 = vld [vmem:[%s1 + $0x1cb4] sm:$0xff]
    %v1263 = vld [vmem:[%s1 + $0x1cbc] sm:$0xf]
    %v1264 = vld [vmem:[%s1 + $0x1cc0] sm:$0xff]
    %v1265 = vld [vmem:[%s1 + $0x1cc8] sm:$0xff]
    %v1266 = vld [vmem:[%s1 + $0x1cd0] sm:$0xf]
    %v1267 = vld [vmem:[%s1 + $0x1cd4] sm:$0xff]
    %v1268 = vld [vmem:[%s1 + $0x1cdc] sm:$0xff]
    %v1269 = vld [vmem:[%s1 + $0x1ce4] sm:$0xf]
    %v1270 = vld [vmem:[%s1 + $0x1ce8] sm:$0xff]
    %v1271 = vld [vmem:[%s1 + $0x1cf0] sm:$0xff]
    %v1272 = vld [vmem:[%s1 + $0x1cf8] sm:$0xf]
    %v1273 = vld [vmem:[%s1 + $0x1cfc] sm:$0xff]
    %v1274 = vld [vmem:[%s1 + $0x1d04] sm:$0xff]
    %v1275 = vld [vmem:[%s1 + $0x1d0c] sm:$0xf]
    %v1276 = vld [vmem:[%s1 + $0x1d10] sm:$0xff]
    %v1277 = vld [vmem:[%s1 + $0x1d18] sm:$0xff]
    %v1278 = vld [vmem:[%s1 + $0x1d20] sm:$0xf]
    %v1279 = vld [vmem:[%s1 + $0x1d24] sm:$0xff]
    %v1280 = vld [vmem:[%s1 + $0x1d2c] sm:$0xff]
    %v1281 = vld [vmem:[%s1 + $0x1d34] sm:$0xf]
    %v1282 = vld [vmem:[%s1 + $0x1d38] sm:$0xff]
    %v1283 = vld [vmem:[%s1 + $0x1d40] sm:$0xff]
    %v1284 = vld [vmem:[%s1 + $0x1d48] sm:$0xf]
    %v1285 = vld [vmem:[%s1 + $0x1d4c] sm:$0xff]
    %v1286 = vld [vmem:[%s1 + $0x1d54] sm:$0xff]
    %v1287 = vld [vmem:[%s1 + $0x1d5c] sm:$0xf]
    %v1288 = vld [vmem:[%s1 + $0x1d60] sm:$0xff]
    %v1289 = vld [vmem:[%s1 + $0x1d68] sm:$0xff]
    %v1290 = vld [vmem:[%s1 + $0x1d70] sm:$0xf]
    %v1291 = vld [vmem:[%s1 + $0x1d74] sm:$0xff]
    %v1292 = vld [vmem:[%s1 + $0x1d7c] sm:$0xff]
    %v1293 = vld [vmem:[%s1 + $0x1d84] sm:$0xf]
    %v1294 = vld [vmem:[%s1 + $0x1d88] sm:$0xff]
    %v1295 = vld [vmem:[%s1 + $0x1d90] sm:$0xff]
    %v1296 = vld [vmem:[%s1 + $0x1d98] sm:$0xf]
    %v1297 = vld [vmem:[%s1 + $0x1d9c] sm:$0xff]
    %v1298 = vld [vmem:[%s1 + $0x1da4] sm:$0xff]
    %v1299 = vld [vmem:[%s1 + $0x1dac] sm:$0xf]
    %v1300 = vld [vmem:[%s1 + $0x1db0] sm:$0xff]
    %v1301 = vld [vmem:[%s1 + $0x1db8] sm:$0xff]
    %v1302 = vld [vmem:[%s1 + $0x1dc0] sm:$0xf]
    %v1303 = vld [vmem:[%s1 + $0x1dc4] sm:$0xff]
    %v1304 = vld [vmem:[%s1 + $0x1dcc] sm:$0xff]
    %v1305 = vld [vmem:[%s1 + $0x1dd4] sm:$0xf]
    %v1306 = vld [vmem:[%s1 + $0x1dd8] sm:$0xff]
    %v1307 = vld [vmem:[%s1 + $0x1de0] sm:$0xff]
    %v1308 = vld [vmem:[%s1 + $0x1de8] sm:$0xf]
    %v1309 = vld [vmem:[%s1 + $0x1dec] sm:$0xff]
    %v1310 = vld [vmem:[%s1 + $0x1df4] sm:$0xff]
    %v1311 = vld [vmem:[%s1 + $0x1dfc] sm:$0xf]
    %v1312 = vld [vmem:[%s1 + $0x1e00] sm:$0xff]
    %v1313 = vld [vmem:[%s1 + $0x1e08] sm:$0xff]
    %v1314 = vld [vmem:[%s1 + $0x1e10] sm:$0xf]
    %v1315 = vld [vmem:[%s1 + $0x1e14] sm:$0xff]
    %v1316 = vld [vmem:[%s1 + $0x1e1c] sm:$0xff]
    %v1317 = vld [vmem:[%s1 + $0x1e24] sm:$0xf]
    %v1318 = vld [vmem:[%s1 + $0x1e28] sm:$0xff]
    %v1319 = vld [vmem:[%s1 + $0x1e30] sm:$0xff]
    %v1320 = vld [vmem:[%s1 + $0x1e38] sm:$0xf]
    %v1321 = vld [vmem:[%s1 + $0x1e3c] sm:$0xff]
    %v1322 = vld [vmem:[%s1 + $0x1e44] sm:$0xff]
    %v1323 = vld [vmem:[%s1 + $0x1e4c] sm:$0xf]
    %v1324 = vld [vmem:[%s1 + $0x1e50] sm:$0xff]
    %v1325 = vld [vmem:[%s1 + $0x1e58] sm:$0xff]
    %v1326 = vld [vmem:[%s1 + $0x1e60] sm:$0xf]
    %v1327 = vld [vmem:[%s1 + $0x1e64] sm:$0xff]
    %v1328 = vld [vmem:[%s1 + $0x1e6c] sm:$0xff]
    %v1329 = vld [vmem:[%s1 + $0x1e74] sm:$0xf]
    %v1330 = vld [vmem:[%s1 + $0x1e78] sm:$0xff]
    %v1331 = vld [vmem:[%s1 + $0x1e80] sm:$0xff]
    %v1332 = vld [vmem:[%s1 + $0x1e88] sm:$0xf]
    %v1333 = vld [vmem:[%s1 + $0x1e8c] sm:$0xff]
    %v1334 = vld [vmem:[%s1 + $0x1e94] sm:$0xff]
    %v1335 = vld [vmem:[%s1 + $0x1e9c] sm:$0xf]
    %v1336 = vld [vmem:[%s1 + $0x1ea0] sm:$0xff]
    %v1337 = vld [vmem:[%s1 + $0x1ea8] sm:$0xff]
    %v1338 = vld [vmem:[%s1 + $0x1eb0] sm:$0xf]
    %v1339 = vld [vmem:[%s1 + $0x1eb4] sm:$0xff]
    %v1340 = vld [vmem:[%s1 + $0x1ebc] sm:$0xff]
    %v1341 = vld [vmem:[%s1 + $0x1ec4] sm:$0xf]
    %v1342 = vld [vmem:[%s1 + $0x1ec8] sm:$0xff]
    %v1343 = vld [vmem:[%s1 + $0x1ed0] sm:$0xff]
    %v1344 = vld [vmem:[%s1 + $0x1ed8] sm:$0xf]
    %v1345 = vld [vmem:[%s1 + $0x1edc] sm:$0xff]
    %v1346 = vld [vmem:[%s1 + $0x1ee4] sm:$0xff]
    %v1347 = vld [vmem:[%s1 + $0x1eec] sm:$0xf]
    %v1348 = vld [vmem:[%s1 + $0x1ef0] sm:$0xff]
    %v1349 = vld [vmem:[%s1 + $0x1ef8] sm:$0xff]
    %v1350 = vld [vmem:[%s1 + $0x1f00] sm:$0xf]
    %v1351 = vld [vmem:[%s1 + $0x1f04] sm:$0xff]
    %v1352 = vld [vmem:[%s1 + $0x1f0c] sm:$0xff]
    %v1353 = vld [vmem:[%s1 + $0x1f14] sm:$0xf]
    %v1354 = vld [vmem:[%s1 + $0x1f18] sm:$0xff]
    %v1355 = vld [vmem:[%s1 + $0x1f20] sm:$0xff]
    %v1356 = vld [vmem:[%s1 + $0x1f28] sm:$0xf]
    %v1357 = vld [vmem:[%s1 + $0x1f2c] sm:$0xff]
    %v1358 = vld [vmem:[%s1 + $0x1f34] sm:$0xff]
    %v1359 = vld [vmem:[%s1 + $0x1f3c] sm:$0xf]
    %v1360 = vld [vmem:[%s1 + $0x1f40] sm:$0xff]
    %v1361 = vld [vmem:[%s1 + $0x1f48] sm:$0xff]
    %v1362 = vld [vmem:[%s1 + $0x1f50] sm:$0xf]
    %v1363 = vld [vmem:[%s1 + $0x1f54] sm:$0xff]
    %v1364 = vld [vmem:[%s1 + $0x1f5c] sm:$0xff]
    %v1365 = vld [vmem:[%s1 + $0x1f64] sm:$0xf]
    %v1366 = vld [vmem:[%s1 + $0x1f68] sm:$0xff]
    %v1367 = vld [vmem:[%s1 + $0x1f70] sm:$0xff]
    %v1368 = vld [vmem:[%s1 + $0x1f78] sm:$0xf]
    %v1369 = vld [vmem:[%s1 + $0x1f7c] sm:$0xff]
    %v1370 = vld [vmem:[%s1 + $0x1f84] sm:$0xff]
    %v1371 = vld [vmem:[%s1 + $0x1f8c] sm:$0xf]
    %v1372 = vld [vmem:[%s1 + $0x1f90] sm:$0xff]
    %v1373 = vld [vmem:[%s1 + $0x1f98] sm:$0xff]
    %v1374 = vld [vmem:[%s1 + $0x1fa0] sm:$0xf]
    %v1375 = vld [vmem:[%s1 + $0x1fa4] sm:$0xff]
    %v1376 = vld [vmem:[%s1 + $0x1fac] sm:$0xff]
    %v1377 = vld [vmem:[%s1 + $0x1fb4] sm:$0xf]
    %v1378 = vld [vmem:[%s1 + $0x1fb8] sm:$0xff]
    %v1379 = vld [vmem:[%s1 + $0x1fc0] sm:$0xff]
    %v1380 = vld [vmem:[%s1 + $0x1fc8] sm:$0xf]
    %v1381 = vld [vmem:[%s1 + $0x1fcc] sm:$0xff]
    %v1382 = vld [vmem:[%s1 + $0x1fd4] sm:$0xff]
    %v1383 = vld [vmem:[%s1 + $0x1fdc] sm:$0xf]
    %v1384 = vld [vmem:[%s1 + $0x1fe0] sm:$0xff]
    %v1385 = vld [vmem:[%s1 + $0x1fe8] sm:$0xff]
    %v1386 = vld [vmem:[%s1 + $0x1ff0] sm:$0xf]
    %v1387 = vld [vmem:[%s1 + $0x1ff4] sm:$0xff]
    %v1388 = vld [vmem:[%s1 + $0x1ffc] sm:$0xff]
    %v1389 = vld [vmem:[%s1 + $0x2004] sm:$0xf]
    %v1390 = vld [vmem:[%s1 + $0x2008] sm:$0xff]
    %v1391 = vld [vmem:[%s1 + $0x2010] sm:$0xff]
    %v1392 = vld [vmem:[%s1 + $0x2018] sm:$0xf]
    %v1393 = vld [vmem:[%s1 + $0x201c] sm:$0xff]
    %v1394 = vld [vmem:[%s1 + $0x2024] sm:$0xff]
    %v1395 = vld [vmem:[%s1 + $0x202c] sm:$0xf]
    %v1396 = vld [vmem:[%s1 + $0x2030] sm:$0xff]
    %v1397 = vld [vmem:[%s1 + $0x2038] sm:$0xff]
    %v1398 = vld [vmem:[%s1 + $0x2040] sm:$0xf]
    %v1399 = vld [vmem:[%s1 + $0x2044] sm:$0xff]
    %v1400 = vld [vmem:[%s1 + $0x204c] sm:$0xff]
    %v1401 = vld [vmem:[%s1 + $0x2054] sm:$0xf]
    %v1402 = vld [vmem:[%s1 + $0x2058] sm:$0xff]
    %v1403 = vld [vmem:[%s1 + $0x2060] sm:$0xff]
    %v1404 = vld [vmem:[%s1 + $0x2068] sm:$0xf]
    %v1405 = vld [vmem:[%s1 + $0x206c] sm:$0xff]
    %v1406 = vld [vmem:[%s1 + $0x2074] sm:$0xff]
    %v1407 = vld [vmem:[%s1 + $0x207c] sm:$0xf]
    %v1408 = vld [vmem:[%s1 + $0x2080] sm:$0xff]
    %v1409 = vld [vmem:[%s1 + $0x2088] sm:$0xff]
    %v1410 = vld [vmem:[%s1 + $0x2090] sm:$0xf]
    %v1411 = vld [vmem:[%s1 + $0x2094] sm:$0xff]
    %v1412 = vld [vmem:[%s1 + $0x209c] sm:$0xff]
    %v1413 = vld [vmem:[%s1 + $0x20a4] sm:$0xf]
    %v1414 = vld [vmem:[%s1 + $0x20a8] sm:$0xff]
    %v1415 = vld [vmem:[%s1 + $0x20b0] sm:$0xff]
    %v1416 = vld [vmem:[%s1 + $0x20b8] sm:$0xf]
    %v1417 = vld [vmem:[%s1 + $0x20bc] sm:$0xff]
    %v1418 = vld [vmem:[%s1 + $0x20c4] sm:$0xff]
    %v1419 = vld [vmem:[%s1 + $0x20cc] sm:$0xf]
    %v1420 = vld [vmem:[%s1 + $0x20d0] sm:$0xff]
    %v1421 = vld [vmem:[%s1 + $0x20d8] sm:$0xff]
    %v1422 = vld [vmem:[%s1 + $0x20e0] sm:$0xf]
    %v1423 = vld [vmem:[%s1 + $0x20e4] sm:$0xff]
    %v1424 = vld [vmem:[%s1 + $0x20ec] sm:$0xff]
    %v1425 = vld [vmem:[%s1 + $0x20f4] sm:$0xf]
    %v1426 = vld [vmem:[%s1 + $0x20f8] sm:$0xff]
    %v1427 = vld [vmem:[%s1 + $0x2100] sm:$0xff]
    %v1428 = vld [vmem:[%s1 + $0x2108] sm:$0xf]
    %v1429 = vld [vmem:[%s1 + $0x210c] sm:$0xff]
    %v1430 = vld [vmem:[%s1 + $0x2114] sm:$0xff]
    %v1431 = vld [vmem:[%s1 + $0x211c] sm:$0xf]
    %v1432 = vld [vmem:[%s1 + $0x2120] sm:$0xff]
    %v1433 = vld [vmem:[%s1 + $0x2128] sm:$0xff]
    %v1434 = vld [vmem:[%s1 + $0x2130] sm:$0xf]
    %v1435 = vld [vmem:[%s1 + $0x2134] sm:$0xff]
    %v1436 = vld [vmem:[%s1 + $0x213c] sm:$0xff]
    %v1437 = vld [vmem:[%s1 + $0x2144] sm:$0xf]
    %v1438 = vld [vmem:[%s1 + $0x2148] sm:$0xff]
    %v1439 = vld [vmem:[%s1 + $0x2150] sm:$0xff]
    %v1440 = vld [vmem:[%s1 + $0x2158] sm:$0xf]
    %v1441 = vld [vmem:[%s1 + $0x215c] sm:$0xff]
    %v1442 = vld [vmem:[%s1 + $0x2164] sm:$0xff]
    %v1443 = vld [vmem:[%s1 + $0x216c] sm:$0xf]
    %v1444 = vld [vmem:[%s1 + $0x2170] sm:$0xff]
    %v1445 = vld [vmem:[%s1 + $0x2178] sm:$0xff]
    %v1446 = vld [vmem:[%s1 + $0x2180] sm:$0xf]
    %v1447 = vld [vmem:[%s1 + $0x2184] sm:$0xff]
    %v1448 = vld [vmem:[%s1 + $0x218c] sm:$0xff]
    %v1449 = vld [vmem:[%s1 + $0x2194] sm:$0xf]
    %v1450 = vld [vmem:[%s1 + $0x2198] sm:$0xff]
    %v1451 = vld [vmem:[%s1 + $0x21a0] sm:$0xff]
    %v1452 = vld [vmem:[%s1 + $0x21a8] sm:$0xf]
    %v1453 = vld [vmem:[%s1 + $0x21ac] sm:$0xff]
    %v1454 = vld [vmem:[%s1 + $0x21b4] sm:$0xff]
    %v1455 = vld [vmem:[%s1 + $0x21bc] sm:$0xf]
    %v1456 = vld [vmem:[%s1 + $0x21c0] sm:$0xff]
    %v1457 = vld [vmem:[%s1 + $0x21c8] sm:$0xff]
    %v1458 = vld [vmem:[%s1 + $0x21d0] sm:$0xf]
    %v1459 = vld [vmem:[%s1 + $0x21d4] sm:$0xff]
    %v1460 = vld [vmem:[%s1 + $0x21dc] sm:$0xff]
    %v1461 = vld [vmem:[%s1 + $0x21e4] sm:$0xf]
    %v1462 = vld [vmem:[%s1 + $0x21e8] sm:$0xff]
    %v1463 = vld [vmem:[%s1 + $0x21f0] sm:$0xff]
    %v1464 = vld [vmem:[%s1 + $0x21f8] sm:$0xf]
    %v1465 = vld [vmem:[%s1 + $0x21fc] sm:$0xff]
    %v1466 = vld [vmem:[%s1 + $0x2204] sm:$0xff]
    %v1467 = vld [vmem:[%s1 + $0x220c] sm:$0xf]
    %v1468 = vld [vmem:[%s1 + $0x2210] sm:$0xff]
    %v1469 = vld [vmem:[%s1 + $0x2218] sm:$0xff]
    %v1470 = vld [vmem:[%s1 + $0x2220] sm:$0xf]
    %v1471 = vld [vmem:[%s1 + $0x2224] sm:$0xff]
    %v1472 = vld [vmem:[%s1 + $0x222c] sm:$0xff]
    %v1473 = vld [vmem:[%s1 + $0x2234] sm:$0xf]
    %v1474 = vld [vmem:[%s1 + $0x2238] sm:$0xff]
    %v1475 = vld [vmem:[%s1 + $0x2240] sm:$0xff]
    %v1476 = vld [vmem:[%s1 + $0x2248] sm:$0xf]
    %v1477 = vld [vmem:[%s1 + $0x224c] sm:$0xff]
    %v1478 = vld [vmem:[%s1 + $0x2254] sm:$0xff]
    %v1479 = vld [vmem:[%s1 + $0x225c] sm:$0xf]
    %v1480 = vld [vmem:[%s1 + $0x2260] sm:$0xff]
    %v1481 = vld [vmem:[%s1 + $0x2268] sm:$0xff]
    %v1482 = vld [vmem:[%s1 + $0x2270] sm:$0xf]
    %v1483 = vld [vmem:[%s1 + $0x2274] sm:$0xff]
    %v1484 = vld [vmem:[%s1 + $0x227c] sm:$0xff]
    %v1485 = vld [vmem:[%s1 + $0x2284] sm:$0xf]
    %v1486 = vld [vmem:[%s1 + $0x2288] sm:$0xff]
    %v1487 = vld [vmem:[%s1 + $0x2290] sm:$0xff]
    %v1488 = vld [vmem:[%s1 + $0x2298] sm:$0xf]
    %v1489 = vld [vmem:[%s1 + $0x229c] sm:$0xff]
    %v1490 = vld [vmem:[%s1 + $0x22a4] sm:$0xff]
    %v1491 = vld [vmem:[%s1 + $0x22ac] sm:$0xf]
    %v1492 = vld [vmem:[%s1 + $0x22b0] sm:$0xff]
    %v1493 = vld [vmem:[%s1 + $0x22b8] sm:$0xff]
    %v1494 = vld [vmem:[%s1 + $0x22c0] sm:$0xf]
    %v1495 = vld [vmem:[%s1 + $0x22c4] sm:$0xff]
    %v1496 = vld [vmem:[%s1 + $0x22cc] sm:$0xff]
    %v1497 = vld [vmem:[%s1 + $0x22d4] sm:$0xf]
    %v1498 = vld [vmem:[%s1 + $0x22d8] sm:$0xff]
    %v1499 = vld [vmem:[%s1 + $0x22e0] sm:$0xff]
    %v1500 = vld [vmem:[%s1 + $0x22e8] sm:$0xf]
    %v1501 = vld [vmem:[%s1 + $0x22ec] sm:$0xff]
    %v1502 = vld [vmem:[%s1 + $0x22f4] sm:$0xff]
    %v1503 = vld [vmem:[%s1 + $0x22fc] sm:$0xf]
    %v1504 = vld [vmem:[%s1 + $0x2300] sm:$0xff]
    %v1505 = vld [vmem:[%s1 + $0x2308] sm:$0xff]
    %v1506 = vld [vmem:[%s1 + $0x2310] sm:$0xf]
    %v1507 = vld [vmem:[%s1 + $0x2314] sm:$0xff]
    %v1508 = vld [vmem:[%s1 + $0x231c] sm:$0xff]
    %v1509 = vld [vmem:[%s1 + $0x2324] sm:$0xf]
    %v1510 = vld [vmem:[%s1 + $0x2328] sm:$0xff]
    %v1511 = vld [vmem:[%s1 + $0x2330] sm:$0xff]
    %v1512 = vld [vmem:[%s1 + $0x2338] sm:$0xf]
    %v1513 = vld [vmem:[%s1 + $0x233c] sm:$0xff]
    %v1514 = vld [vmem:[%s1 + $0x2344] sm:$0xff]
    %v1515 = vld [vmem:[%s1 + $0x234c] sm:$0xf]
    %v1516 = vld [vmem:[%s1 + $0x2350] sm:$0xff]
    %v1517 = vld [vmem:[%s1 + $0x2358] sm:$0xff]
    %v1518 = vld [vmem:[%s1 + $0x2360] sm:$0xf]
    %v1519 = vld [vmem:[%s1 + $0x2364] sm:$0xff]
    %v1520 = vld [vmem:[%s1 + $0x236c] sm:$0xff]
    %v1521 = vld [vmem:[%s1 + $0x2374] sm:$0xf]
    %v1522 = vld [vmem:[%s1 + $0x2378] sm:$0xff]
    %v1523 = vld [vmem:[%s1 + $0x2380] sm:$0xff]
    %v1524 = vld [vmem:[%s1 + $0x2388] sm:$0xf]
    %v1525 = vld [vmem:[%s1 + $0x238c] sm:$0xff]
    %v1526 = vld [vmem:[%s1 + $0x2394] sm:$0xff]
    %v1527 = vld [vmem:[%s1 + $0x239c] sm:$0xf]
    %v1528 = vld [vmem:[%s1 + $0x23a0] sm:$0xff]
    %v1529 = vld [vmem:[%s1 + $0x23a8] sm:$0xff]
    %v1530 = vld [vmem:[%s1 + $0x23b0] sm:$0xf]
    %v1531 = vld [vmem:[%s1 + $0x23b4] sm:$0xff]
    %v1532 = vld [vmem:[%s1 + $0x23bc] sm:$0xff]
    %v1533 = vld [vmem:[%s1 + $0x23c4] sm:$0xf]
    %v1534 = vld [vmem:[%s1 + $0x23c8] sm:$0xff]
    %v1535 = vld [vmem:[%s1 + $0x23d0] sm:$0xff]
    %v1536 = vld [vmem:[%s1 + $0x23d8] sm:$0xf]
    %v1537 = vld [vmem:[%s1 + $0x23dc] sm:$0xff]
    %v1538 = vld [vmem:[%s1 + $0x23e4] sm:$0xff]
    %v1539 = vld [vmem:[%s1 + $0x23ec] sm:$0xf]
    %v1540 = vld [vmem:[%s1 + $0x23f0] sm:$0xff]
    %v1541 = vld [vmem:[%s1 + $0x23f8] sm:$0xff]
    %v1542 = vld [vmem:[%s1 + $0x2400] sm:$0xf]
    %v1543 = vld [vmem:[%s1 + $0x2404] sm:$0xff]
    %v1544 = vld [vmem:[%s1 + $0x240c] sm:$0xff]
    %v1545 = vld [vmem:[%s1 + $0x2414] sm:$0xf]
    %v1546 = vld [vmem:[%s1 + $0x2418] sm:$0xff]
    %v1547 = vld [vmem:[%s1 + $0x2420] sm:$0xff]
    %v1548 = vld [vmem:[%s1 + $0x2428] sm:$0xf]
    %v1549 = vld [vmem:[%s1 + $0x242c] sm:$0xff]
    %v1550 = vld [vmem:[%s1 + $0x2434] sm:$0xff]
    %v1551 = vld [vmem:[%s1 + $0x243c] sm:$0xf]
    %v1552 = vld [vmem:[%s1 + $0x2440] sm:$0xff]
    %v1553 = vld [vmem:[%s1 + $0x2448] sm:$0xff]
    %v1554 = vld [vmem:[%s1 + $0x2450] sm:$0xf]
    %v1555 = vld [vmem:[%s1 + $0x2454] sm:$0xff]
    %v1556 = vld [vmem:[%s1 + $0x245c] sm:$0xff]
    %v1557 = vld [vmem:[%s1 + $0x2464] sm:$0xf]
    %v1558 = vld [vmem:[%s1 + $0x2468] sm:$0xff]
    %v1559 = vld [vmem:[%s1 + $0x2470] sm:$0xff]
    %v1560 = vld [vmem:[%s1 + $0x2478] sm:$0xf]
    %v1561 = vld [vmem:[%s1 + $0x247c] sm:$0xff]
    %v1562 = vld [vmem:[%s1 + $0x2484] sm:$0xff]
    %v1563 = vld [vmem:[%s1 + $0x248c] sm:$0xf]
    %v1564 = vld [vmem:[%s1 + $0x2490] sm:$0xff]
    %v1565 = vld [vmem:[%s1 + $0x2498] sm:$0xff]
    %v1566 = vld [vmem:[%s1 + $0x24a0] sm:$0xf]
    %v1567 = vld [vmem:[%s1 + $0x24a4] sm:$0xff]
    %v1568 = vld [vmem:[%s1 + $0x24ac] sm:$0xff]
    %v1569 = vld [vmem:[%s1 + $0x24b4] sm:$0xf]
    %v1570 = vld [vmem:[%s1 + $0x24b8] sm:$0xff]
    %v1571 = vld [vmem:[%s1 + $0x24c0] sm:$0xff]
    %v1572 = vld [vmem:[%s1 + $0x24c8] sm:$0xf]
    %v1573 = vld [vmem:[%s1 + $0x24cc] sm:$0xff]
    %v1574 = vld [vmem:[%s1 + $0x24d4] sm:$0xff]
    %v1575 = vld [vmem:[%s1 + $0x24dc] sm:$0xf]
    %v1576 = vld [vmem:[%s1 + $0x24e0] sm:$0xff]
    %v1577 = vld [vmem:[%s1 + $0x24e8] sm:$0xff]
    %v1578 = vld [vmem:[%s1 + $0x24f0] sm:$0xf]
    %v1579 = vld [vmem:[%s1 + $0x24f4] sm:$0xff]
    %v1580 = vld [vmem:[%s1 + $0x24fc] sm:$0xff]
    %v1581 = vld [vmem:[%s1 + $0x2504] sm:$0xf]
    %v1582 = vld [vmem:[%s1 + $0x2508] sm:$0xff]
    %v1583 = vld [vmem:[%s1 + $0x2510] sm:$0xff]
    %v1584 = vld [vmem:[%s1 + $0x2518] sm:$0xf]
    %v1585 = vld [vmem:[%s1 + $0x251c] sm:$0xff]
    %v1586 = vld [vmem:[%s1 + $0x2524] sm:$0xff]
    %v1587 = vld [vmem:[%s1 + $0x252c] sm:$0xf]
    %v1588 = vld [vmem:[%s1 + $0x2530] sm:$0xff]
    %v1589 = vld [vmem:[%s1 + $0x2538] sm:$0xff]
    %v1590 = vld [vmem:[%s1 + $0x2540] sm:$0xf]
    %v1591 = vld [vmem:[%s1 + $0x2544] sm:$0xff]
    %v1592 = vld [vmem:[%s1 + $0x254c] sm:$0xff]
    %v1593 = vld [vmem:[%s1 + $0x2554] sm:$0xf]
    %v1594 = vld [vmem:[%s1 + $0x2558] sm:$0xff]
    %v1595 = vld [vmem:[%s1 + $0x2560] sm:$0xff]
    %v1596 = vld [vmem:[%s1 + $0x2568] sm:$0xf]
    %v1597 = vld [vmem:[%s1 + $0x256c] sm:$0xff]
    %v1598 = vld [vmem:[%s1 + $0x2574] sm:$0xff]
    %v1599 = vld [vmem:[%s1 + $0x257c] sm:$0xf]
    %v1600 = vld [vmem:[%s1 + $0x2580] sm:$0xff]
    %v1601 = vld [vmem:[%s1 + $0x2588] sm:$0xff]
    %v1602 = vld [vmem:[%s1 + $0x2590] sm:$0xf]
    %v1603 = vld [vmem:[%s1 + $0x2594] sm:$0xff]
    %v1604 = vld [vmem:[%s1 + $0x259c] sm:$0xff]
    %v1605 = vld [vmem:[%s1 + $0x25a4] sm:$0xf]
    %v1606 = vld [vmem:[%s1 + $0x25a8] sm:$0xff]
    %v1607 = vld [vmem:[%s1 + $0x25b0] sm:$0xff]
    %v1608 = vld [vmem:[%s1 + $0x25b8] sm:$0xf]
    %v1609 = vld [vmem:[%s1 + $0x25bc] sm:$0xff]
    %v1610 = vld [vmem:[%s1 + $0x25c4] sm:$0xff]
    %v1611 = vld [vmem:[%s1 + $0x25cc] sm:$0xf]
    %v1612 = vld [vmem:[%s1 + $0x25d0] sm:$0xff]
    %v1613 = vld [vmem:[%s1 + $0x25d8] sm:$0xff]
    %v1614 = vld [vmem:[%s1 + $0x25e0] sm:$0xf]
    %v1615 = vld [vmem:[%s1 + $0x25e4] sm:$0xff]
    %v1616 = vld [vmem:[%s1 + $0x25ec] sm:$0xff]
    %v1617 = vld [vmem:[%s1 + $0x25f4] sm:$0xf]
    %v1618 = vld [vmem:[%s1 + $0x25f8] sm:$0xff]
    %v1619 = vld [vmem:[%s1 + $0x2600] sm:$0xff]
    %v1620 = vld [vmem:[%s1 + $0x2608] sm:$0xf]
    %v1621 = vld [vmem:[%s1 + $0x260c] sm:$0xff]
    %v1622 = vld [vmem:[%s1 + $0x2614] sm:$0xff]
    %v1623 = vld [vmem:[%s1 + $0x261c] sm:$0xf]
    %v1624 = vld [vmem:[%s1 + $0x2620] sm:$0xff]
    %v1625 = vld [vmem:[%s1 + $0x2628] sm:$0xff]
    %v1626 = vld [vmem:[%s1 + $0x2630] sm:$0xf]
    %v1627 = vld [vmem:[%s1 + $0x2634] sm:$0xff]
    %v1628 = vld [vmem:[%s1 + $0x263c] sm:$0xff]
    %v1629 = vld [vmem:[%s1 + $0x2644] sm:$0xf]
    %v1630 = vld [vmem:[%s1 + $0x2648] sm:$0xff]
    %v1631 = vld [vmem:[%s1 + $0x2650] sm:$0xff]
    %v1632 = vld [vmem:[%s1 + $0x2658] sm:$0xf]
    %v1633 = vld [vmem:[%s1 + $0x265c] sm:$0xff]
    %v1634 = vld [vmem:[%s1 + $0x2664] sm:$0xff]
    %v1635 = vld [vmem:[%s1 + $0x266c] sm:$0xf]
    %v1636 = vld [vmem:[%s1 + $0x2670] sm:$0xff]
    %v1637 = vld [vmem:[%s1 + $0x2678] sm:$0xff]
    %v1638 = vld [vmem:[%s1 + $0x2680] sm:$0xf]
    %v1639 = vld [vmem:[%s1 + $0x2684] sm:$0xff]
    %v1640 = vld [vmem:[%s1 + $0x268c] sm:$0xff]
    %v1641 = vld [vmem:[%s1 + $0x2694] sm:$0xf]
    %v1642 = vld [vmem:[%s1 + $0x2698] sm:$0xff]
    %v1643 = vld [vmem:[%s1 + $0x26a0] sm:$0xff]
    %v1644 = vld [vmem:[%s1 + $0x26a8] sm:$0xf]
    %v1645 = vld [vmem:[%s1 + $0x26ac] sm:$0xff]
    %v1646 = vld [vmem:[%s1 + $0x26b4] sm:$0xff]
    %v1647 = vld [vmem:[%s1 + $0x26bc] sm:$0xf]
    %v1648 = vld [vmem:[%s1 + $0x26c0] sm:$0xff]
    %v1649 = vld [vmem:[%s1 + $0x26c8] sm:$0xff]
    %v1650 = vld [vmem:[%s1 + $0x26d0] sm:$0xf]
    %v1651 = vld [vmem:[%s1 + $0x26d4] sm:$0xff]
    %v1652 = vld [vmem:[%s1 + $0x26dc] sm:$0xff]
    %v1653 = vld [vmem:[%s1 + $0x26e4] sm:$0xf]
    %v1654 = vld [vmem:[%s1 + $0x26e8] sm:$0xff]
    %v1655 = vld [vmem:[%s1 + $0x26f0] sm:$0xff]
    %v1656 = vld [vmem:[%s1 + $0x26f8] sm:$0xf]
    %v1657 = vld [vmem:[%s1 + $0x26fc] sm:$0xff]
    %v1658 = vld [vmem:[%s1 + $0x2704] sm:$0xff]
    %v1659 = vld [vmem:[%s1 + $0x270c] sm:$0xf]
    %v1660 = vld [vmem:[%s1 + $0x2710] sm:$0xff]
    %v1661 = vld [vmem:[%s1 + $0x2718] sm:$0xff]
    %v1662 = vld [vmem:[%s1 + $0x2720] sm:$0xf]
    %v1663 = vld [vmem:[%s1 + $0x2724] sm:$0xff]
    %v1664 = vld [vmem:[%s1 + $0x272c] sm:$0xff]
    %v1665 = vld [vmem:[%s1 + $0x2734] sm:$0xf]
    %v1666 = vld [vmem:[%s1 + $0x2738] sm:$0xff]
    %v1667 = vld [vmem:[%s1 + $0x2740] sm:$0xff]
    %v1668 = vld [vmem:[%s1 + $0x2748] sm:$0xf]
    %v1669 = vld [vmem:[%s1 + $0x274c] sm:$0xff]
    %v1670 = vld [vmem:[%s1 + $0x2754] sm:$0xff]
    %v1671 = vld [vmem:[%s1 + $0x275c] sm:$0xf]
    %v1672 = vld [vmem:[%s1 + $0x2760] sm:$0xff]
    %v1673 = vld [vmem:[%s1 + $0x2768] sm:$0xff]
    %v1674 = vld [vmem:[%s1 + $0x2770] sm:$0xf]
    %v1675 = vld [vmem:[%s1 + $0x2774] sm:$0xff]
    %v1676 = vld [vmem:[%s1 + $0x277c] sm:$0xff]
    %v1677 = vld [vmem:[%s1 + $0x2784] sm:$0xf]
    %v1678 = vld [vmem:[%s1 + $0x2788] sm:$0xff]
    %v1679 = vld [vmem:[%s1 + $0x2790] sm:$0xff]
    %v1680 = vld [vmem:[%s1 + $0x2798] sm:$0xf]
    %v1681 = vld [vmem:[%s1 + $0x279c] sm:$0xff]
    %v1682 = vld [vmem:[%s1 + $0x27a4] sm:$0xff]
    %v1683 = vld [vmem:[%s1 + $0x27ac] sm:$0xf]
    %v1684 = vld [vmem:[%s1 + $0x27b0] sm:$0xff]
    %v1685 = vld [vmem:[%s1 + $0x27b8] sm:$0xff]
    %v1686 = vld [vmem:[%s1 + $0x27c0] sm:$0xf]
    %v1687 = vld [vmem:[%s1 + $0x27c4] sm:$0xff]
    %v1688 = vld [vmem:[%s1 + $0x27cc] sm:$0xff]
    %v1689 = vld [vmem:[%s1 + $0x27d4] sm:$0xf]
    %v1690 = vld [vmem:[%s1 + $0x27d8] sm:$0xff]
    %v1691 = vld [vmem:[%s1 + $0x27e0] sm:$0xff]
    %v1692 = vld [vmem:[%s1 + $0x27e8] sm:$0xf]
    %v1693 = vld [vmem:[%s1 + $0x27ec] sm:$0xff]
    %v1694 = vld [vmem:[%s1 + $0x27f4] sm:$0xff]
    %v1695 = vld [vmem:[%s1 + $0x27fc] sm:$0xf]
    %v1696 = vld [vmem:[%s1 + $0x2800] sm:$0xff]
    %v1697 = vld [vmem:[%s1 + $0x2808] sm:$0xff]
    %v1698 = vld [vmem:[%s1 + $0x2810] sm:$0xf]
    %v1699 = vld [vmem:[%s1 + $0x2814] sm:$0xff]
    %v1700 = vld [vmem:[%s1 + $0x281c] sm:$0xff]
    %v1701 = vld [vmem:[%s1 + $0x2824] sm:$0xf]
    %v1702 = vld [vmem:[%s1 + $0x2828] sm:$0xff]
    %v1703 = vld [vmem:[%s1 + $0x2830] sm:$0xff]
    %v1704 = vld [vmem:[%s1 + $0x2838] sm:$0xf]
    %v1705 = vld [vmem:[%s1 + $0x283c] sm:$0xff]
    %v1706 = vld [vmem:[%s1 + $0x2844] sm:$0xff]
    %v1707 = vld [vmem:[%s1 + $0x284c] sm:$0xf]
    %v1708 = vld [vmem:[%s1 + $0x2850] sm:$0xff]
    %v1709 = vld [vmem:[%s1 + $0x2858] sm:$0xff]
    %v1710 = vld [vmem:[%s1 + $0x2860] sm:$0xf]
    %v1711 = vld [vmem:[%s1 + $0x2864] sm:$0xff]
    %v1712 = vld [vmem:[%s1 + $0x286c] sm:$0xff]
    %v1713 = vld [vmem:[%s1 + $0x2874] sm:$0xf]
    %v1714 = vld [vmem:[%s1 + $0x2878] sm:$0xff]
    %v1715 = vld [vmem:[%s1 + $0x2880] sm:$0xff]
    %v1716 = vld [vmem:[%s1 + $0x2888] sm:$0xf]
    %v1717 = vld [vmem:[%s1 + $0x288c] sm:$0xff]
    %v1718 = vld [vmem:[%s1 + $0x2894] sm:$0xff]
    %v1719 = vld [vmem:[%s1 + $0x289c] sm:$0xf]
    %v1720 = vld [vmem:[%s1 + $0x28a0] sm:$0xff]
    %v1721 = vld [vmem:[%s1 + $0x28a8] sm:$0xff]
    %v1722 = vld [vmem:[%s1 + $0x28b0] sm:$0xf]
    %v1723 = vld [vmem:[%s1 + $0x28b4] sm:$0xff]
    %v1724 = vld [vmem:[%s1 + $0x28bc] sm:$0xff]
    %v1725 = vld [vmem:[%s1 + $0x28c4] sm:$0xf]
    %v1726 = vld [vmem:[%s1 + $0x28c8] sm:$0xff]
    %v1727 = vld [vmem:[%s1 + $0x28d0] sm:$0xff]
    %v1728 = vld [vmem:[%s1 + $0x28d8] sm:$0xf]
    %v1729 = vld [vmem:[%s1 + $0x28dc] sm:$0xff]
    %v1730 = vld [vmem:[%s1 + $0x28e4] sm:$0xff]
    %v1731 = vld [vmem:[%s1 + $0x28ec] sm:$0xf]
    %v1732 = vld [vmem:[%s1 + $0x28f0] sm:$0xff]
    %v1733 = vld [vmem:[%s1 + $0x28f8] sm:$0xff]
    %v1734 = vld [vmem:[%s1 + $0x2900] sm:$0xf]
    %v1735 = vld [vmem:[%s1 + $0x2904] sm:$0xff]
    %v1736 = vld [vmem:[%s1 + $0x290c] sm:$0xff]
    %v1737 = vld [vmem:[%s1 + $0x2914] sm:$0xf]
    %v1738 = vld [vmem:[%s1 + $0x2918] sm:$0xff]
    %v1739 = vld [vmem:[%s1 + $0x2920] sm:$0xff]
    %v1740 = vld [vmem:[%s1 + $0x2928] sm:$0xf]
    %v1741 = vld [vmem:[%s1 + $0x292c] sm:$0xff]
    %v1742 = vld [vmem:[%s1 + $0x2934] sm:$0xff]
    %v1743 = vld [vmem:[%s1 + $0x293c] sm:$0xf]
    %v1744 = vld [vmem:[%s1 + $0x2940] sm:$0xff]
    %v1745 = vld [vmem:[%s1 + $0x2948] sm:$0xff]
    %v1746 = vld [vmem:[%s1 + $0x2950] sm:$0xf]
    %v1747 = vld [vmem:[%s1 + $0x2954] sm:$0xff]
    %v1748 = vld [vmem:[%s1 + $0x295c] sm:$0xff]
    %v1749 = vld [vmem:[%s1 + $0x2964] sm:$0xf]
    %v1750 = vld [vmem:[%s1 + $0x2968] sm:$0xff]
    %v1751 = vld [vmem:[%s1 + $0x2970] sm:$0xff]
    %v1752 = vld [vmem:[%s1 + $0x2978] sm:$0xf]
    %v1753 = vld [vmem:[%s1 + $0x297c] sm:$0xff]
    %v1754 = vld [vmem:[%s1 + $0x2984] sm:$0xff]
    %v1755 = vld [vmem:[%s1 + $0x298c] sm:$0xf]
    %v1756 = vld [vmem:[%s1 + $0x2990] sm:$0xff]
    %v1757 = vld [vmem:[%s1 + $0x2998] sm:$0xff]
    %v1758 = vld [vmem:[%s1 + $0x29a0] sm:$0xf]
    %v1759 = vld [vmem:[%s1 + $0x29a4] sm:$0xff]
    %v1760 = vld [vmem:[%s1 + $0x29ac] sm:$0xff]
    %v1761 = vld [vmem:[%s1 + $0x29b4] sm:$0xf]
    %v1762 = vld [vmem:[%s1 + $0x29b8] sm:$0xff]
    %v1763 = vld [vmem:[%s1 + $0x29c0] sm:$0xff]
    %v1764 = vld [vmem:[%s1 + $0x29c8] sm:$0xf]
    %v1765 = vld [vmem:[%s1 + $0x29cc] sm:$0xff]
    %v1766 = vld [vmem:[%s1 + $0x29d4] sm:$0xff]
    %v1767 = vld [vmem:[%s1 + $0x29dc] sm:$0xf]
    %v1768 = vld [vmem:[%s1 + $0x29e0] sm:$0xff]
    %v1769 = vld [vmem:[%s1 + $0x29e8] sm:$0xff]
    %v1770 = vld [vmem:[%s1 + $0x29f0] sm:$0xf]
    %v1771 = vld [vmem:[%s1 + $0x29f4] sm:$0xff]
    %v1772 = vld [vmem:[%s1 + $0x29fc] sm:$0xff]
    %v1773 = vld [vmem:[%s1 + $0x2a04] sm:$0xf]
    %v1774 = vld [vmem:[%s1 + $0x2a08] sm:$0xff]
    %v1775 = vld [vmem:[%s1 + $0x2a10] sm:$0xff]
    %v1776 = vld [vmem:[%s1 + $0x2a18] sm:$0xf]
    %v1777 = vld [vmem:[%s1 + $0x2a1c] sm:$0xff]
    %v1778 = vld [vmem:[%s1 + $0x2a24] sm:$0xff]
    %v1779 = vld [vmem:[%s1 + $0x2a2c] sm:$0xf]
    %v1780 = vld [vmem:[%s1 + $0x2a30] sm:$0xff]
    %v1781 = vld [vmem:[%s1 + $0x2a38] sm:$0xff]
    %v1782 = vld [vmem:[%s1 + $0x2a40] sm:$0xf]
    %v1783 = vld [vmem:[%s1 + $0x2a44] sm:$0xff]
    %v1784 = vld [vmem:[%s1 + $0x2a4c] sm:$0xff]
    %v1785 = vld [vmem:[%s1 + $0x2a54] sm:$0xf]
    %v1786 = vld [vmem:[%s1 + $0x2a58] sm:$0xff]
    %v1787 = vld [vmem:[%s1 + $0x2a60] sm:$0xff]
    %v1788 = vld [vmem:[%s1 + $0x2a68] sm:$0xf]
    %v1789 = vld [vmem:[%s1 + $0x2a6c] sm:$0xff]
    %v1790 = vld [vmem:[%s1 + $0x2a74] sm:$0xff]
    %v1791 = vld [vmem:[%s1 + $0x2a7c] sm:$0xf]
    %v1792 = vld [vmem:[%s1 + $0x2a80] sm:$0xff]
    %v1793 = vld [vmem:[%s1 + $0x2a88] sm:$0xff]
    %v1794 = vld [vmem:[%s1 + $0x2a90] sm:$0xf]
    %v1795 = vld [vmem:[%s1 + $0x2a94] sm:$0xff]
    %v1796 = vld [vmem:[%s1 + $0x2a9c] sm:$0xff]
    %v1797 = vld [vmem:[%s1 + $0x2aa4] sm:$0xf]
    %v1798 = vld [vmem:[%s1 + $0x2aa8] sm:$0xff]
    %v1799 = vld [vmem:[%s1 + $0x2ab0] sm:$0xff]
    %v1800 = vld [vmem:[%s1 + $0x2ab8] sm:$0xf]
    %v1801 = vld [vmem:[%s1 + $0x2abc] sm:$0xff]
    %v1802 = vld [vmem:[%s1 + $0x2ac4] sm:$0xff]
    %v1803 = vld [vmem:[%s1 + $0x2acc] sm:$0xf]
    %v1804 = vld [vmem:[%s1 + $0x2ad0] sm:$0xff]
    %v1805 = vld [vmem:[%s1 + $0x2ad8] sm:$0xff]
    %v1806 = vld [vmem:[%s1 + $0x2ae0] sm:$0xf]
    %v1807 = vld [vmem:[%s1 + $0x2ae4] sm:$0xff]
    %v1808 = vld [vmem:[%s1 + $0x2aec] sm:$0xff]
    %v1809 = vld [vmem:[%s1 + $0x2af4] sm:$0xf]
    %v1810 = vld [vmem:[%s1 + $0x2af8] sm:$0xff]
    %v1811 = vld [vmem:[%s1 + $0x2b00] sm:$0xff]
    %v1812 = vld [vmem:[%s1 + $0x2b08] sm:$0xf]
    %v1813 = vld [vmem:[%s1 + $0x2b0c] sm:$0xff]
    %v1814 = vld [vmem:[%s1 + $0x2b14] sm:$0xff]
    %v1815 = vld [vmem:[%s1 + $0x2b1c] sm:$0xf]
    %v1816 = vld [vmem:[%s1 + $0x2b20] sm:$0xff]
    %v1817 = vld [vmem:[%s1 + $0x2b28] sm:$0xff]
    %v1818 = vld [vmem:[%s1 + $0x2b30] sm:$0xf]
    %v1819 = vld [vmem:[%s1 + $0x2b34] sm:$0xff]
    %v1820 = vld [vmem:[%s1 + $0x2b3c] sm:$0xff]
    %v1821 = vld [vmem:[%s1 + $0x2b44] sm:$0xf]
    %v1822 = vld [vmem:[%s1 + $0x2b48] sm:$0xff]
    %v1823 = vld [vmem:[%s1 + $0x2b50] sm:$0xff]
    %v1824 = vld [vmem:[%s1 + $0x2b58] sm:$0xf]
    %v1825 = vld [vmem:[%s1 + $0x2b5c] sm:$0xff]
    %v1826 = vld [vmem:[%s1 + $0x2b64] sm:$0xff]
    %v1827 = vld [vmem:[%s1 + $0x2b6c] sm:$0xf]
    %v1828 = vld [vmem:[%s1 + $0x2b70] sm:$0xff]
    %v1829 = vld [vmem:[%s1 + $0x2b78] sm:$0xff]
    %v1830 = vld [vmem:[%s1 + $0x2b80] sm:$0xf]
    %v1831 = vld [vmem:[%s1 + $0x2b84] sm:$0xff]
    %v1832 = vld [vmem:[%s1 + $0x2b8c] sm:$0xff]
    %v1833 = vld [vmem:[%s1 + $0x2b94] sm:$0xf]
    %v1834 = vld [vmem:[%s1 + $0x2b98] sm:$0xff]
    %v1835 = vld [vmem:[%s1 + $0x2ba0] sm:$0xff]
    %v1836 = vld [vmem:[%s1 + $0x2ba8] sm:$0xf]
    %v1837 = vld [vmem:[%s1 + $0x2bac] sm:$0xff]
    %v1838 = vld [vmem:[%s1 + $0x2bb4] sm:$0xff]
    %v1839 = vld [vmem:[%s1 + $0x2bbc] sm:$0xf]
    %v1840 = vld [vmem:[%s1 + $0x2bc0] sm:$0xff]
    %v1841 = vld [vmem:[%s1 + $0x2bc8] sm:$0xff]
    %v1842 = vld [vmem:[%s1 + $0x2bd0] sm:$0xf]
    %v1843 = vld [vmem:[%s1 + $0x2bd4] sm:$0xff]
    %v1844 = vld [vmem:[%s1 + $0x2bdc] sm:$0xff]
    %v1845 = vld [vmem:[%s1 + $0x2be4] sm:$0xf]
    %v1846 = vld [vmem:[%s1 + $0x2be8] sm:$0xff]
    %v1847 = vld [vmem:[%s1 + $0x2bf0] sm:$0xff]
    %v1848 = vld [vmem:[%s1 + $0x2bf8] sm:$0xf]
    %v1849 = vld [vmem:[%s1 + $0x2bfc] sm:$0xff]
    %v1850 = vld [vmem:[%s1 + $0x2c04] sm:$0xff]
    %v1851 = vld [vmem:[%s1 + $0x2c0c] sm:$0xf]
    %v1852 = vld [vmem:[%s1 + $0x2c10] sm:$0xff]
    %v1853 = vld [vmem:[%s1 + $0x2c18] sm:$0xff]
    %v1854 = vld [vmem:[%s1 + $0x2c20] sm:$0xf]
    %v1855 = vld [vmem:[%s1 + $0x2c24] sm:$0xff]
    %v1856 = vld [vmem:[%s1 + $0x2c2c] sm:$0xff]
    %v1857 = vld [vmem:[%s1 + $0x2c34] sm:$0xf]
    %v1858 = vld [vmem:[%s1 + $0x2c38] sm:$0xff]
    %v1859 = vld [vmem:[%s1 + $0x2c40] sm:$0xff]
    %v1860 = vld [vmem:[%s1 + $0x2c48] sm:$0xf]
    %v1861 = vld [vmem:[%s1 + $0x2c4c] sm:$0xff]
    %v1862 = vld [vmem:[%s1 + $0x2c54] sm:$0xff]
    %v1863 = vld [vmem:[%s1 + $0x2c5c] sm:$0xf]
    %v1864 = vld [vmem:[%s1 + $0x2c60] sm:$0xff]
    %v1865 = vld [vmem:[%s1 + $0x2c68] sm:$0xff]
    %v1866 = vld [vmem:[%s1 + $0x2c70] sm:$0xf]
    %v1867 = vld [vmem:[%s1 + $0x2c74] sm:$0xff]
    %v1868 = vld [vmem:[%s1 + $0x2c7c] sm:$0xff]
    %v1869 = vld [vmem:[%s1 + $0x2c84] sm:$0xf]
    %v1870 = vld [vmem:[%s1 + $0x2c88] sm:$0xff]
    %v1871 = vld [vmem:[%s1 + $0x2c90] sm:$0xff]
    %v1872 = vld [vmem:[%s1 + $0x2c98] sm:$0xf]
    %v1873 = vld [vmem:[%s1 + $0x2c9c] sm:$0xff]
    %v1874 = vld [vmem:[%s1 + $0x2ca4] sm:$0xff]
    %v1875 = vld [vmem:[%s1 + $0x2cac] sm:$0xf]
    %v1876 = vld [vmem:[%s1 + $0x2cb0] sm:$0xff]
    %v1877 = vld [vmem:[%s1 + $0x2cb8] sm:$0xff]
    %v1878 = vld [vmem:[%s1 + $0x2cc0] sm:$0xf]
    %v1879 = vld [vmem:[%s1 + $0x2cc4] sm:$0xff]
    %v1880 = vld [vmem:[%s1 + $0x2ccc] sm:$0xff]
    %v1881 = vld [vmem:[%s1 + $0x2cd4] sm:$0xf]
    %v1882 = vld [vmem:[%s1 + $0x2cd8] sm:$0xff]
    %v1883 = vld [vmem:[%s1 + $0x2ce0] sm:$0xff]
    %v1884 = vld [vmem:[%s1 + $0x2ce8] sm:$0xf]
    %v1885 = vld [vmem:[%s1 + $0x2cec] sm:$0xff]
    %v1886 = vld [vmem:[%s1 + $0x2cf4] sm:$0xff]
    %v1887 = vld [vmem:[%s1 + $0x2cfc] sm:$0xf]
    %v1888 = vld [vmem:[%s2] sm:$0x1f]
    %v1890 = vperm.slane %v1888, 0
    %v1891 = vperm.slane %v1888, 1
    %v1892 = vperm.slane %v1888, 2
    %v1893 = vperm.slane %v1888, 3
    %v1894 = vperm.slane %v1888, 4
    %v3628 = vunpack.c.l.b16 %v160
    %v3629 = vunpack.c.h.b16 %v160
    %v3630 = vunpack.c.l.b16 %v161
    %v3631 = vunpack.c.h.b16 %v161
    %v3632 = vunpack.c.l.b16 %v162
    %v3633 = vunpack.c.l.b16 %v163
    %v3634 = vunpack.c.h.b16 %v163
    %v3635 = vunpack.c.l.b16 %v164
    %v3636 = vunpack.c.h.b16 %v164
    %v3637 = vunpack.c.l.b16 %v165
    %v3638 = vunpack.c.l.b16 %v166
    %v3639 = vunpack.c.h.b16 %v166
    %v3640 = vunpack.c.l.b16 %v167
    %v3641 = vunpack.c.h.b16 %v167
    %v3642 = vunpack.c.l.b16 %v168
    %v3643 = vunpack.c.l.b16 %v169
    %v3644 = vunpack.c.h.b16 %v169
    %v3645 = vunpack.c.l.b16 %v170
    %v3646 = vunpack.c.h.b16 %v170
    %v3647 = vunpack.c.l.b16 %v171
    %v3648 = vunpack.c.l.b16 %v172
    %v3649 = vunpack.c.h.b16 %v172
    %v3650 = vunpack.c.l.b16 %v173
    %v3651 = vunpack.c.h.b16 %v173
    %v3652 = vunpack.c.l.b16 %v174
    %v3653 = vunpack.c.l.b16 %v175
    %v3654 = vunpack.c.h.b16 %v175
    %v3655 = vunpack.c.l.b16 %v176
    %v3656 = vunpack.c.h.b16 %v176
    %v3657 = vunpack.c.l.b16 %v177
    %v3658 = vunpack.c.l.b16 %v178
    %v3659 = vunpack.c.h.b16 %v178
    %v3660 = vunpack.c.l.b16 %v179
    %v3661 = vunpack.c.h.b16 %v179
    %v3662 = vunpack.c.l.b16 %v180
    %v3663 = vunpack.c.l.b16 %v181
    %v3664 = vunpack.c.h.b16 %v181
    %v3665 = vunpack.c.l.b16 %v182
    %v3666 = vunpack.c.h.b16 %v182
    %v3667 = vunpack.c.l.b16 %v183
    %v3668 = vunpack.c.l.b16 %v184
    %v3669 = vunpack.c.h.b16 %v184
    %v3670 = vunpack.c.l.b16 %v185
    %v3671 = vunpack.c.h.b16 %v185
    %v3672 = vunpack.c.l.b16 %v186
    %v3673 = vunpack.c.l.b16 %v187
    %v3674 = vunpack.c.h.b16 %v187
    %v3675 = vunpack.c.l.b16 %v188
    %v3676 = vunpack.c.h.b16 %v188
    %v3677 = vunpack.c.l.b16 %v189
    %v3678 = vunpack.c.l.b16 %v190
    %v3679 = vunpack.c.h.b16 %v190
    %v3680 = vunpack.c.l.b16 %v191
    %v3681 = vunpack.c.h.b16 %v191
    %v3682 = vunpack.c.l.b16 %v192
    %v3683 = vunpack.c.l.b16 %v193
    %v3684 = vunpack.c.h.b16 %v193
    %v3685 = vunpack.c.l.b16 %v194
    %v3686 = vunpack.c.h.b16 %v194
    %v3687 = vunpack.c.l.b16 %v195
    %v3688 = vunpack.c.l.b16 %v196
    %v3689 = vunpack.c.h.b16 %v196
    %v3690 = vunpack.c.l.b16 %v197
    %v3691 = vunpack.c.h.b16 %v197
    %v3692 = vunpack.c.l.b16 %v198
    %v3693 = vunpack.c.l.b16 %v199
    %v3694 = vunpack.c.h.b16 %v199
    %v3695 = vunpack.c.l.b16 %v200
    %v3696 = vunpack.c.h.b16 %v200
    %v3697 = vunpack.c.l.b16 %v201
    %v3698 = vunpack.c.l.b16 %v202
    %v3699 = vunpack.c.h.b16 %v202
    %v3700 = vunpack.c.l.b16 %v203
    %v3701 = vunpack.c.h.b16 %v203
    %v3702 = vunpack.c.l.b16 %v204
    %v3703 = vunpack.c.l.b16 %v205
    %v3704 = vunpack.c.h.b16 %v205
    %v3705 = vunpack.c.l.b16 %v206
    %v3706 = vunpack.c.h.b16 %v206
    %v3707 = vunpack.c.l.b16 %v207
    %v3708 = vunpack.c.l.b16 %v208
    %v3709 = vunpack.c.h.b16 %v208
    %v3710 = vunpack.c.l.b16 %v209
    %v3711 = vunpack.c.h.b16 %v209
    %v3712 = vunpack.c.l.b16 %v210
    %v3713 = vunpack.c.l.b16 %v211
    %v3714 = vunpack.c.h.b16 %v211
    %v3715 = vunpack.c.l.b16 %v212
    %v3716 = vunpack.c.h.b16 %v212
    %v3717 = vunpack.c.l.b16 %v213
    %v3718 = vunpack.c.l.b16 %v214
    %v3719 = vunpack.c.h.b16 %v214
    %v3720 = vunpack.c.l.b16 %v215
    %v3721 = vunpack.c.h.b16 %v215
    %v3722 = vunpack.c.l.b16 %v216
    %v3723 = vunpack.c.l.b16 %v217
    %v3724 = vunpack.c.h.b16 %v217
    %v3725 = vunpack.c.l.b16 %v218
    %v3726 = vunpack.c.h.b16 %v218
    %v3727 = vunpack.c.l.b16 %v219
    %v3728 = vunpack.c.l.b16 %v220
    %v3729 = vunpack.c.h.b16 %v220
    %v3730 = vunpack.c.l.b16 %v221
    %v3731 = vunpack.c.h.b16 %v221
    %v3732 = vunpack.c.l.b16 %v222
    %v3733 = vunpack.c.l.b16 %v223
    %v3734 = vunpack.c.h.b16 %v223
    %v3735 = vunpack.c.l.b16 %v224
    %v3736 = vunpack.c.h.b16 %v224
    %v3737 = vunpack.c.l.b16 %v225
    %v3738 = vunpack.c.l.b16 %v226
    %v3739 = vunpack.c.h.b16 %v226
    %v3740 = vunpack.c.l.b16 %v227
    %v3741 = vunpack.c.h.b16 %v227
    %v3742 = vunpack.c.l.b16 %v228
    %v3743 = vunpack.c.l.b16 %v229
    %v3744 = vunpack.c.h.b16 %v229
    %v3745 = vunpack.c.l.b16 %v230
    %v3746 = vunpack.c.h.b16 %v230
    %v3747 = vunpack.c.l.b16 %v231
    %v3748 = vunpack.c.l.b16 %v232
    %v3749 = vunpack.c.h.b16 %v232
    %v3750 = vunpack.c.l.b16 %v233
    %v3751 = vunpack.c.h.b16 %v233
    %v3752 = vunpack.c.l.b16 %v234
    %v3753 = vunpack.c.l.b16 %v235
    %v3754 = vunpack.c.h.b16 %v235
    %v3755 = vunpack.c.l.b16 %v236
    %v3756 = vunpack.c.h.b16 %v236
    %v3757 = vunpack.c.l.b16 %v237
    %v3758 = vunpack.c.l.b16 %v238
    %v3759 = vunpack.c.h.b16 %v238
    %v3760 = vunpack.c.l.b16 %v239
    %v3761 = vunpack.c.h.b16 %v239
    %v3762 = vunpack.c.l.b16 %v240
    %v3763 = vunpack.c.l.b16 %v241
    %v3764 = vunpack.c.h.b16 %v241
    %v3765 = vunpack.c.l.b16 %v242
    %v3766 = vunpack.c.h.b16 %v242
    %v3767 = vunpack.c.l.b16 %v243
    %v3768 = vunpack.c.l.b16 %v244
    %v3769 = vunpack.c.h.b16 %v244
    %v3770 = vunpack.c.l.b16 %v245
    %v3771 = vunpack.c.h.b16 %v245
    %v3772 = vunpack.c.l.b16 %v246
    %v3773 = vunpack.c.l.b16 %v247
    %v3774 = vunpack.c.h.b16 %v247
    %v3775 = vunpack.c.l.b16 %v248
    %v3776 = vunpack.c.h.b16 %v248
    %v3777 = vunpack.c.l.b16 %v249
    %v3778 = vunpack.c.l.b16 %v250
    %v3779 = vunpack.c.h.b16 %v250
    %v3780 = vunpack.c.l.b16 %v251
    %v3781 = vunpack.c.h.b16 %v251
    %v3782 = vunpack.c.l.b16 %v252
    %v3783 = vunpack.c.l.b16 %v253
    %v3784 = vunpack.c.h.b16 %v253
    %v3785 = vunpack.c.l.b16 %v254
    %v3786 = vunpack.c.h.b16 %v254
    %v3787 = vunpack.c.l.b16 %v255
    %v3788 = vunpack.c.l.b16 %v256
    %v3789 = vunpack.c.h.b16 %v256
    %v3790 = vunpack.c.l.b16 %v257
    %v3791 = vunpack.c.h.b16 %v257
    %v3792 = vunpack.c.l.b16 %v258
    %v3793 = vunpack.c.l.b16 %v259
    %v3794 = vunpack.c.h.b16 %v259
    %v3795 = vunpack.c.l.b16 %v260
    %v3796 = vunpack.c.h.b16 %v260
    %v3797 = vunpack.c.l.b16 %v261
    %v3798 = vunpack.c.l.b16 %v262
    %v3799 = vunpack.c.h.b16 %v262
    %v3800 = vunpack.c.l.b16 %v263
    %v3801 = vunpack.c.h.b16 %v263
    %v3802 = vunpack.c.l.b16 %v264
    %v3803 = vunpack.c.l.b16 %v265
    %v3804 = vunpack.c.h.b16 %v265
    %v3805 = vunpack.c.l.b16 %v266
    %v3806 = vunpack.c.h.b16 %v266
    %v3807 = vunpack.c.l.b16 %v267
    %v3808 = vunpack.c.l.b16 %v268
    %v3809 = vunpack.c.h.b16 %v268
    %v3810 = vunpack.c.l.b16 %v269
    %v3811 = vunpack.c.h.b16 %v269
    %v3812 = vunpack.c.l.b16 %v270
    %v3813 = vunpack.c.l.b16 %v271
    %v3814 = vunpack.c.h.b16 %v271
    %v3815 = vunpack.c.l.b16 %v272
    %v3816 = vunpack.c.h.b16 %v272
    %v3817 = vunpack.c.l.b16 %v273
    %v3818 = vunpack.c.l.b16 %v274
    %v3819 = vunpack.c.h.b16 %v274
    %v3820 = vunpack.c.l.b16 %v275
    %v3821 = vunpack.c.h.b16 %v275
    %v3822 = vunpack.c.l.b16 %v276
    %v3823 = vunpack.c.l.b16 %v277
    %v3824 = vunpack.c.h.b16 %v277
    %v3825 = vunpack.c.l.b16 %v278
    %v3826 = vunpack.c.h.b16 %v278
    %v3827 = vunpack.c.l.b16 %v279
    %v3828 = vunpack.c.l.b16 %v280
    %v3829 = vunpack.c.h.b16 %v280
    %v3830 = vunpack.c.l.b16 %v281
    %v3831 = vunpack.c.h.b16 %v281
    %v3832 = vunpack.c.l.b16 %v282
    %v3833 = vunpack.c.l.b16 %v283
    %v3834 = vunpack.c.h.b16 %v283
    %v3835 = vunpack.c.l.b16 %v284
    %v3836 = vunpack.c.h.b16 %v284
    %v3837 = vunpack.c.l.b16 %v285
    %v3838 = vunpack.c.l.b16 %v286
    %v3839 = vunpack.c.h.b16 %v286
    %v3840 = vunpack.c.l.b16 %v287
    %v3841 = vunpack.c.h.b16 %v287
    %v3842 = vunpack.c.l.b16 %v288
    %v3843 = vunpack.c.l.b16 %v289
    %v3844 = vunpack.c.h.b16 %v289
    %v3845 = vunpack.c.l.b16 %v290
    %v3846 = vunpack.c.h.b16 %v290
    %v3847 = vunpack.c.l.b16 %v291
    %v3848 = vunpack.c.l.b16 %v292
    %v3849 = vunpack.c.h.b16 %v292
    %v3850 = vunpack.c.l.b16 %v293
    %v3851 = vunpack.c.h.b16 %v293
    %v3852 = vunpack.c.l.b16 %v294
    %v3853 = vunpack.c.l.b16 %v295
    %v3854 = vunpack.c.h.b16 %v295
    %v3855 = vunpack.c.l.b16 %v296
    %v3856 = vunpack.c.h.b16 %v296
    %v3857 = vunpack.c.l.b16 %v297
    %v3858 = vunpack.c.l.b16 %v298
    %v3859 = vunpack.c.h.b16 %v298
    %v3860 = vunpack.c.l.b16 %v299
    %v3861 = vunpack.c.h.b16 %v299
    %v3862 = vunpack.c.l.b16 %v300
    %v3863 = vunpack.c.l.b16 %v301
    %v3864 = vunpack.c.h.b16 %v301
    %v3865 = vunpack.c.l.b16 %v302
    %v3866 = vunpack.c.h.b16 %v302
    %v3867 = vunpack.c.l.b16 %v303
    %v3868 = vunpack.c.l.b16 %v304
    %v3869 = vunpack.c.h.b16 %v304
    %v3870 = vunpack.c.l.b16 %v305
    %v3871 = vunpack.c.h.b16 %v305
    %v3872 = vunpack.c.l.b16 %v306
    %v3873 = vunpack.c.l.b16 %v307
    %v3874 = vunpack.c.h.b16 %v307
    %v3875 = vunpack.c.l.b16 %v308
    %v3876 = vunpack.c.h.b16 %v308
    %v3877 = vunpack.c.l.b16 %v309
    %v3878 = vunpack.c.l.b16 %v310
    %v3879 = vunpack.c.h.b16 %v310
    %v3880 = vunpack.c.l.b16 %v311
    %v3881 = vunpack.c.h.b16 %v311
    %v3882 = vunpack.c.l.b16 %v312
    %v3883 = vunpack.c.l.b16 %v313
    %v3884 = vunpack.c.h.b16 %v313
    %v3885 = vunpack.c.l.b16 %v314
    %v3886 = vunpack.c.h.b16 %v314
    %v3887 = vunpack.c.l.b16 %v315
    %v3888 = vunpack.c.l.b16 %v316
    %v3889 = vunpack.c.h.b16 %v316
    %v3890 = vunpack.c.l.b16 %v317
    %v3891 = vunpack.c.h.b16 %v317
    %v3892 = vunpack.c.l.b16 %v318
    %v3893 = vunpack.c.l.b16 %v319
    %v3894 = vunpack.c.h.b16 %v319
    %v3895 = vunpack.c.l.b16 %v320
    %v3896 = vunpack.c.h.b16 %v320
    %v3897 = vunpack.c.l.b16 %v321
    %v3898 = vunpack.c.l.b16 %v322
    %v3899 = vunpack.c.h.b16 %v322
    %v3900 = vunpack.c.l.b16 %v323
    %v3901 = vunpack.c.h.b16 %v323
    %v3902 = vunpack.c.l.b16 %v324
    %v3903 = vunpack.c.l.b16 %v325
    %v3904 = vunpack.c.h.b16 %v325
    %v3905 = vunpack.c.l.b16 %v326
    %v3906 = vunpack.c.h.b16 %v326
    %v3907 = vunpack.c.l.b16 %v327
    %v3908 = vunpack.c.l.b16 %v328
    %v3909 = vunpack.c.h.b16 %v328
    %v3910 = vunpack.c.l.b16 %v329
    %v3911 = vunpack.c.h.b16 %v329
    %v3912 = vunpack.c.l.b16 %v330
    %v3913 = vunpack.c.l.b16 %v331
    %v3914 = vunpack.c.h.b16 %v331
    %v3915 = vunpack.c.l.b16 %v332
    %v3916 = vunpack.c.h.b16 %v332
    %v3917 = vunpack.c.l.b16 %v333
    %v3918 = vunpack.c.l.b16 %v334
    %v3919 = vunpack.c.h.b16 %v334
    %v3920 = vunpack.c.l.b16 %v335
    %v3921 = vunpack.c.h.b16 %v335
    %v3922 = vunpack.c.l.b16 %v336
    %v3923 = vunpack.c.l.b16 %v337
    %v3924 = vunpack.c.h.b16 %v337
    %v3925 = vunpack.c.l.b16 %v338
    %v3926 = vunpack.c.h.b16 %v338
    %v3927 = vunpack.c.l.b16 %v339
    %v3928 = vunpack.c.l.b16 %v340
    %v3929 = vunpack.c.h.b16 %v340
    %v3930 = vunpack.c.l.b16 %v341
    %v3931 = vunpack.c.h.b16 %v341
    %v3932 = vunpack.c.l.b16 %v342
    %v3933 = vunpack.c.l.b16 %v343
    %v3934 = vunpack.c.h.b16 %v343
    %v3935 = vunpack.c.l.b16 %v344
    %v3936 = vunpack.c.h.b16 %v344
    %v3937 = vunpack.c.l.b16 %v345
    %v3938 = vunpack.c.l.b16 %v346
    %v3939 = vunpack.c.h.b16 %v346
    %v3940 = vunpack.c.l.b16 %v347
    %v3941 = vunpack.c.h.b16 %v347
    %v3942 = vunpack.c.l.b16 %v348
    %v3943 = vunpack.c.l.b16 %v349
    %v3944 = vunpack.c.h.b16 %v349
    %v3945 = vunpack.c.l.b16 %v350
    %v3946 = vunpack.c.h.b16 %v350
    %v3947 = vunpack.c.l.b16 %v351
    %v3948 = vunpack.c.l.b16 %v352
    %v3949 = vunpack.c.h.b16 %v352
    %v3950 = vunpack.c.l.b16 %v353
    %v3951 = vunpack.c.h.b16 %v353
    %v3952 = vunpack.c.l.b16 %v354
    %v3953 = vunpack.c.l.b16 %v355
    %v3954 = vunpack.c.h.b16 %v355
    %v3955 = vunpack.c.l.b16 %v356
    %v3956 = vunpack.c.h.b16 %v356
    %v3957 = vunpack.c.l.b16 %v357
    %v3958 = vunpack.c.l.b16 %v358
    %v3959 = vunpack.c.h.b16 %v358
    %v3960 = vunpack.c.l.b16 %v359
    %v3961 = vunpack.c.h.b16 %v359
    %v3962 = vunpack.c.l.b16 %v360
    %v3963 = vunpack.c.l.b16 %v361
    %v3964 = vunpack.c.h.b16 %v361
    %v3965 = vunpack.c.l.b16 %v362
    %v3966 = vunpack.c.h.b16 %v362
    %v3967 = vunpack.c.l.b16 %v363
    %v3968 = vunpack.c.l.b16 %v364
    %v3969 = vunpack.c.h.b16 %v364
    %v3970 = vunpack.c.l.b16 %v365
    %v3971 = vunpack.c.h.b16 %v365
    %v3972 = vunpack.c.l.b16 %v366
    %v3973 = vunpack.c.l.b16 %v367
    %v3974 = vunpack.c.h.b16 %v367
    %v3975 = vunpack.c.l.b16 %v368
    %v3976 = vunpack.c.h.b16 %v368
    %v3977 = vunpack.c.l.b16 %v369
    %v3978 = vunpack.c.l.b16 %v370
    %v3979 = vunpack.c.h.b16 %v370
    %v3980 = vunpack.c.l.b16 %v371
    %v3981 = vunpack.c.h.b16 %v371
    %v3982 = vunpack.c.l.b16 %v372
    %v3983 = vunpack.c.l.b16 %v373
    %v3984 = vunpack.c.h.b16 %v373
    %v3985 = vunpack.c.l.b16 %v374
    %v3986 = vunpack.c.h.b16 %v374
    %v3987 = vunpack.c.l.b16 %v375
    %v3988 = vunpack.c.l.b16 %v376
    %v3989 = vunpack.c.h.b16 %v376
    %v3990 = vunpack.c.l.b16 %v377
    %v3991 = vunpack.c.h.b16 %v377
    %v3992 = vunpack.c.l.b16 %v378
    %v3993 = vunpack.c.l.b16 %v379
    %v3994 = vunpack.c.h.b16 %v379
    %v3995 = vunpack.c.l.b16 %v380
    %v3996 = vunpack.c.h.b16 %v380
    %v3997 = vunpack.c.l.b16 %v381
    %v3998 = vunpack.c.l.b16 %v382
    %v3999 = vunpack.c.h.b16 %v382
    %v4000 = vunpack.c.l.b16 %v383
    %v4001 = vunpack.c.h.b16 %v383
    %v4002 = vunpack.c.l.b16 %v384
    %v4003 = vunpack.c.l.b16 %v385
    %v4004 = vunpack.c.h.b16 %v385
    %v4005 = vunpack.c.l.b16 %v386
    %v4006 = vunpack.c.h.b16 %v386
    %v4007 = vunpack.c.l.b16 %v387
    %v4008 = vunpack.c.l.b16 %v388
    %v4009 = vunpack.c.h.b16 %v388
    %v4010 = vunpack.c.l.b16 %v389
    %v4011 = vunpack.c.h.b16 %v389
    %v4012 = vunpack.c.l.b16 %v390
    %v4013 = vunpack.c.l.b16 %v391
    %v4014 = vunpack.c.h.b16 %v391
    %v4015 = vunpack.c.l.b16 %v392
    %v4016 = vunpack.c.h.b16 %v392
    %v4017 = vunpack.c.l.b16 %v393
    %v4018 = vunpack.c.l.b16 %v394
    %v4019 = vunpack.c.h.b16 %v394
    %v4020 = vunpack.c.l.b16 %v395
    %v4021 = vunpack.c.h.b16 %v395
    %v4022 = vunpack.c.l.b16 %v396
    %v4023 = vunpack.c.l.b16 %v397
    %v4024 = vunpack.c.h.b16 %v397
    %v4025 = vunpack.c.l.b16 %v398
    %v4026 = vunpack.c.h.b16 %v398
    %v4027 = vunpack.c.l.b16 %v399
    %v4028 = vunpack.c.l.b16 %v400
    %v4029 = vunpack.c.h.b16 %v400
    %v4030 = vunpack.c.l.b16 %v401
    %v4031 = vunpack.c.h.b16 %v401
    %v4032 = vunpack.c.l.b16 %v402
    %v4033 = vunpack.c.l.b16 %v403
    %v4034 = vunpack.c.h.b16 %v403
    %v4035 = vunpack.c.l.b16 %v404
    %v4036 = vunpack.c.h.b16 %v404
    %v4037 = vunpack.c.l.b16 %v405
    %v4038 = vunpack.c.l.b16 %v406
    %v4039 = vunpack.c.h.b16 %v406
    %v4040 = vunpack.c.l.b16 %v407
    %v4041 = vunpack.c.h.b16 %v407
    %v4042 = vunpack.c.l.b16 %v408
    %v4043 = vunpack.c.l.b16 %v409
    %v4044 = vunpack.c.h.b16 %v409
    %v4045 = vunpack.c.l.b16 %v410
    %v4046 = vunpack.c.h.b16 %v410
    %v4047 = vunpack.c.l.b16 %v411
    %v4048 = vunpack.c.l.b16 %v412
    %v4049 = vunpack.c.h.b16 %v412
    %v4050 = vunpack.c.l.b16 %v413
    %v4051 = vunpack.c.h.b16 %v413
    %v4052 = vunpack.c.l.b16 %v414
    %v4053 = vunpack.c.l.b16 %v415
    %v4054 = vunpack.c.h.b16 %v415
    %v4055 = vunpack.c.l.b16 %v416
    %v4056 = vunpack.c.h.b16 %v416
    %v4057 = vunpack.c.l.b16 %v417
    %v4058 = vunpack.c.l.b16 %v418
    %v4059 = vunpack.c.h.b16 %v418
    %v4060 = vunpack.c.l.b16 %v419
    %v4061 = vunpack.c.h.b16 %v419
    %v4062 = vunpack.c.l.b16 %v420
    %v4063 = vunpack.c.l.b16 %v421
    %v4064 = vunpack.c.h.b16 %v421
    %v4065 = vunpack.c.l.b16 %v422
    %v4066 = vunpack.c.h.b16 %v422
    %v4067 = vunpack.c.l.b16 %v423
    %v4068 = vunpack.c.l.b16 %v424
    %v4069 = vunpack.c.h.b16 %v424
    %v4070 = vunpack.c.l.b16 %v425
    %v4071 = vunpack.c.h.b16 %v425
    %v4072 = vunpack.c.l.b16 %v426
    %v4073 = vunpack.c.l.b16 %v427
    %v4074 = vunpack.c.h.b16 %v427
    %v4075 = vunpack.c.l.b16 %v428
    %v4076 = vunpack.c.h.b16 %v428
    %v4077 = vunpack.c.l.b16 %v429
    %v4078 = vunpack.c.l.b16 %v430
    %v4079 = vunpack.c.h.b16 %v430
    %v4080 = vunpack.c.l.b16 %v431
    %v4081 = vunpack.c.h.b16 %v431
    %v4082 = vunpack.c.l.b16 %v432
    %v4083 = vunpack.c.l.b16 %v433
    %v4084 = vunpack.c.h.b16 %v433
    %v4085 = vunpack.c.l.b16 %v434
    %v4086 = vunpack.c.h.b16 %v434
    %v4087 = vunpack.c.l.b16 %v435
    %v4088 = vunpack.c.l.b16 %v436
    %v4089 = vunpack.c.h.b16 %v436
    %v4090 = vunpack.c.l.b16 %v437
    %v4091 = vunpack.c.h.b16 %v437
    %v4092 = vunpack.c.l.b16 %v438
    %v4093 = vunpack.c.l.b16 %v439
    %v4094 = vunpack.c.h.b16 %v439
    %v4095 = vunpack.c.l.b16 %v440
    %v4096 = vunpack.c.h.b16 %v440
    %v4097 = vunpack.c.l.b16 %v441
    %v4098 = vunpack.c.l.b16 %v442
    %v4099 = vunpack.c.h.b16 %v442
    %v4100 = vunpack.c.l.b16 %v443
    %v4101 = vunpack.c.h.b16 %v443
    %v4102 = vunpack.c.l.b16 %v444
    %v4103 = vunpack.c.l.b16 %v445
    %v4104 = vunpack.c.h.b16 %v445
    %v4105 = vunpack.c.l.b16 %v446
    %v4106 = vunpack.c.h.b16 %v446
    %v4107 = vunpack.c.l.b16 %v447
    %v4108 = vunpack.c.l.b16 %v448
    %v4109 = vunpack.c.h.b16 %v448
    %v4110 = vunpack.c.l.b16 %v449
    %v4111 = vunpack.c.h.b16 %v449
    %v4112 = vunpack.c.l.b16 %v450
    %v4113 = vunpack.c.l.b16 %v451
    %v4114 = vunpack.c.h.b16 %v451
    %v4115 = vunpack.c.l.b16 %v452
    %v4116 = vunpack.c.h.b16 %v452
    %v4117 = vunpack.c.l.b16 %v453
    %v4118 = vunpack.c.l.b16 %v454
    %v4119 = vunpack.c.h.b16 %v454
    %v4120 = vunpack.c.l.b16 %v455
    %v4121 = vunpack.c.h.b16 %v455
    %v4122 = vunpack.c.l.b16 %v456
    %v4123 = vunpack.c.l.b16 %v457
    %v4124 = vunpack.c.h.b16 %v457
    %v4125 = vunpack.c.l.b16 %v458
    %v4126 = vunpack.c.h.b16 %v458
    %v4127 = vunpack.c.l.b16 %v459
    %v4128 = vunpack.c.l.b16 %v460
    %v4129 = vunpack.c.h.b16 %v460
    %v4130 = vunpack.c.l.b16 %v461
    %v4131 = vunpack.c.h.b16 %v461
    %v4132 = vunpack.c.l.b16 %v462
    %v4133 = vunpack.c.l.b16 %v463
    %v4134 = vunpack.c.h.b16 %v463
    %v4135 = vunpack.c.l.b16 %v464
    %v4136 = vunpack.c.h.b16 %v464
    %v4137 = vunpack.c.l.b16 %v465
    %v4138 = vunpack.c.l.b16 %v466
    %v4139 = vunpack.c.h.b16 %v466
    %v4140 = vunpack.c.l.b16 %v467
    %v4141 = vunpack.c.h.b16 %v467
    %v4142 = vunpack.c.l.b16 %v468
    %v4143 = vunpack.c.l.b16 %v469
    %v4144 = vunpack.c.h.b16 %v469
    %v4145 = vunpack.c.l.b16 %v470
    %v4146 = vunpack.c.h.b16 %v470
    %v4147 = vunpack.c.l.b16 %v471
    %v4148 = vunpack.c.l.b16 %v472
    %v4149 = vunpack.c.h.b16 %v472
    %v4150 = vunpack.c.l.b16 %v473
    %v4151 = vunpack.c.h.b16 %v473
    %v4152 = vunpack.c.l.b16 %v474
    %v4153 = vunpack.c.l.b16 %v475
    %v4154 = vunpack.c.h.b16 %v475
    %v4155 = vunpack.c.l.b16 %v476
    %v4156 = vunpack.c.h.b16 %v476
    %v4157 = vunpack.c.l.b16 %v477
    %v4158 = vunpack.c.l.b16 %v478
    %v4159 = vunpack.c.h.b16 %v478
    %v4160 = vunpack.c.l.b16 %v479
    %v4161 = vunpack.c.h.b16 %v479
    %v4162 = vunpack.c.l.b16 %v480
    %v4163 = vunpack.c.l.b16 %v481
    %v4164 = vunpack.c.h.b16 %v481
    %v4165 = vunpack.c.l.b16 %v482
    %v4166 = vunpack.c.h.b16 %v482
    %v4167 = vunpack.c.l.b16 %v483
    %v4168 = vunpack.c.l.b16 %v484
    %v4169 = vunpack.c.h.b16 %v484
    %v4170 = vunpack.c.l.b16 %v485
    %v4171 = vunpack.c.h.b16 %v485
    %v4172 = vunpack.c.l.b16 %v486
    %v4173 = vunpack.c.l.b16 %v487
    %v4174 = vunpack.c.h.b16 %v487
    %v4175 = vunpack.c.l.b16 %v488
    %v4176 = vunpack.c.h.b16 %v488
    %v4177 = vunpack.c.l.b16 %v489
    %v4178 = vunpack.c.l.b16 %v490
    %v4179 = vunpack.c.h.b16 %v490
    %v4180 = vunpack.c.l.b16 %v491
    %v4181 = vunpack.c.h.b16 %v491
    %v4182 = vunpack.c.l.b16 %v492
    %v4183 = vunpack.c.l.b16 %v493
    %v4184 = vunpack.c.h.b16 %v493
    %v4185 = vunpack.c.l.b16 %v494
    %v4186 = vunpack.c.h.b16 %v494
    %v4187 = vunpack.c.l.b16 %v495
    %v4188 = vunpack.c.l.b16 %v496
    %v4189 = vunpack.c.h.b16 %v496
    %v4190 = vunpack.c.l.b16 %v497
    %v4191 = vunpack.c.h.b16 %v497
    %v4192 = vunpack.c.l.b16 %v498
    %v4193 = vunpack.c.l.b16 %v499
    %v4194 = vunpack.c.h.b16 %v499
    %v4195 = vunpack.c.l.b16 %v500
    %v4196 = vunpack.c.h.b16 %v500
    %v4197 = vunpack.c.l.b16 %v501
    %v4198 = vunpack.c.l.b16 %v502
    %v4199 = vunpack.c.h.b16 %v502
    %v4200 = vunpack.c.l.b16 %v503
    %v4201 = vunpack.c.h.b16 %v503
    %v4202 = vunpack.c.l.b16 %v504
    %v4203 = vunpack.c.l.b16 %v505
    %v4204 = vunpack.c.h.b16 %v505
    %v4205 = vunpack.c.l.b16 %v506
    %v4206 = vunpack.c.h.b16 %v506
    %v4207 = vunpack.c.l.b16 %v507
    %v4208 = vunpack.c.l.b16 %v508
    %v4209 = vunpack.c.h.b16 %v508
    %v4210 = vunpack.c.l.b16 %v509
    %v4211 = vunpack.c.h.b16 %v509
    %v4212 = vunpack.c.l.b16 %v510
    %v4213 = vunpack.c.l.b16 %v511
    %v4214 = vunpack.c.h.b16 %v511
    %v4215 = vunpack.c.l.b16 %v512
    %v4216 = vunpack.c.h.b16 %v512
    %v4217 = vunpack.c.l.b16 %v513
    %v4218 = vunpack.c.l.b16 %v514
    %v4219 = vunpack.c.h.b16 %v514
    %v4220 = vunpack.c.l.b16 %v515
    %v4221 = vunpack.c.h.b16 %v515
    %v4222 = vunpack.c.l.b16 %v516
    %v4223 = vunpack.c.l.b16 %v517
    %v4224 = vunpack.c.h.b16 %v517
    %v4225 = vunpack.c.l.b16 %v518
    %v4226 = vunpack.c.h.b16 %v518
    %v4227 = vunpack.c.l.b16 %v519
    %v4228 = vunpack.c.l.b16 %v520
    %v4229 = vunpack.c.h.b16 %v520
    %v4230 = vunpack.c.l.b16 %v521
    %v4231 = vunpack.c.h.b16 %v521
    %v4232 = vunpack.c.l.b16 %v522
    %v4233 = vunpack.c.l.b16 %v523
    %v4234 = vunpack.c.h.b16 %v523
    %v4235 = vunpack.c.l.b16 %v524
    %v4236 = vunpack.c.h.b16 %v524
    %v4237 = vunpack.c.l.b16 %v525
    %v4238 = vunpack.c.l.b16 %v526
    %v4239 = vunpack.c.h.b16 %v526
    %v4240 = vunpack.c.l.b16 %v527
    %v4241 = vunpack.c.h.b16 %v527
    %v4242 = vunpack.c.l.b16 %v528
    %v4243 = vunpack.c.l.b16 %v529
    %v4244 = vunpack.c.h.b16 %v529
    %v4245 = vunpack.c.l.b16 %v530
    %v4246 = vunpack.c.h.b16 %v530
    %v4247 = vunpack.c.l.b16 %v531
    %v4248 = vunpack.c.l.b16 %v532
    %v4249 = vunpack.c.h.b16 %v532
    %v4250 = vunpack.c.l.b16 %v533
    %v4251 = vunpack.c.h.b16 %v533
    %v4252 = vunpack.c.l.b16 %v534
    %v4253 = vunpack.c.l.b16 %v535
    %v4254 = vunpack.c.h.b16 %v535
    %v4255 = vunpack.c.l.b16 %v536
    %v4256 = vunpack.c.h.b16 %v536
    %v4257 = vunpack.c.l.b16 %v537
    %v4258 = vunpack.c.l.b16 %v538
    %v4259 = vunpack.c.h.b16 %v538
    %v4260 = vunpack.c.l.b16 %v539
    %v4261 = vunpack.c.h.b16 %v539
    %v4262 = vunpack.c.l.b16 %v540
    %v4263 = vunpack.c.l.b16 %v541
    %v4264 = vunpack.c.h.b16 %v541
    %v4265 = vunpack.c.l.b16 %v542
    %v4266 = vunpack.c.h.b16 %v542
    %v4267 = vunpack.c.l.b16 %v543
    %v4268 = vunpack.c.l.b16 %v544
    %v4269 = vunpack.c.h.b16 %v544
    %v4270 = vunpack.c.l.b16 %v545
    %v4271 = vunpack.c.h.b16 %v545
    %v4272 = vunpack.c.l.b16 %v546
    %v4273 = vunpack.c.l.b16 %v547
    %v4274 = vunpack.c.h.b16 %v547
    %v4275 = vunpack.c.l.b16 %v548
    %v4276 = vunpack.c.h.b16 %v548
    %v4277 = vunpack.c.l.b16 %v549
    %v4278 = vunpack.c.l.b16 %v550
    %v4279 = vunpack.c.h.b16 %v550
    %v4280 = vunpack.c.l.b16 %v551
    %v4281 = vunpack.c.h.b16 %v551
    %v4282 = vunpack.c.l.b16 %v552
    %v4283 = vunpack.c.l.b16 %v553
    %v4284 = vunpack.c.h.b16 %v553
    %v4285 = vunpack.c.l.b16 %v554
    %v4286 = vunpack.c.h.b16 %v554
    %v4287 = vunpack.c.l.b16 %v555
    %v4288 = vunpack.c.l.b16 %v556
    %v4289 = vunpack.c.h.b16 %v556
    %v4290 = vunpack.c.l.b16 %v557
    %v4291 = vunpack.c.h.b16 %v557
    %v4292 = vunpack.c.l.b16 %v558
    %v4293 = vunpack.c.l.b16 %v559
    %v4294 = vunpack.c.h.b16 %v559
    %v4295 = vunpack.c.l.b16 %v560
    %v4296 = vunpack.c.h.b16 %v560
    %v4297 = vunpack.c.l.b16 %v561
    %v4298 = vunpack.c.l.b16 %v562
    %v4299 = vunpack.c.h.b16 %v562
    %v4300 = vunpack.c.l.b16 %v563
    %v4301 = vunpack.c.h.b16 %v563
    %v4302 = vunpack.c.l.b16 %v564
    %v4303 = vunpack.c.l.b16 %v565
    %v4304 = vunpack.c.h.b16 %v565
    %v4305 = vunpack.c.l.b16 %v566
    %v4306 = vunpack.c.h.b16 %v566
    %v4307 = vunpack.c.l.b16 %v567
    %v4308 = vunpack.c.l.b16 %v568
    %v4309 = vunpack.c.h.b16 %v568
    %v4310 = vunpack.c.l.b16 %v569
    %v4311 = vunpack.c.h.b16 %v569
    %v4312 = vunpack.c.l.b16 %v570
    %v4313 = vunpack.c.l.b16 %v571
    %v4314 = vunpack.c.h.b16 %v571
    %v4315 = vunpack.c.l.b16 %v572
    %v4316 = vunpack.c.h.b16 %v572
    %v4317 = vunpack.c.l.b16 %v573
    %v4318 = vunpack.c.l.b16 %v574
    %v4319 = vunpack.c.h.b16 %v574
    %v4320 = vunpack.c.l.b16 %v575
    %v4321 = vunpack.c.h.b16 %v575
    %v4322 = vunpack.c.l.b16 %v576
    %v4323 = vunpack.c.l.b16 %v577
    %v4324 = vunpack.c.h.b16 %v577
    %v4325 = vunpack.c.l.b16 %v578
    %v4326 = vunpack.c.h.b16 %v578
    %v4327 = vunpack.c.l.b16 %v579
    %v4328 = vunpack.c.l.b16 %v580
    %v4329 = vunpack.c.h.b16 %v580
    %v4330 = vunpack.c.l.b16 %v581
    %v4331 = vunpack.c.h.b16 %v581
    %v4332 = vunpack.c.l.b16 %v582
    %v4333 = vunpack.c.l.b16 %v583
    %v4334 = vunpack.c.h.b16 %v583
    %v4335 = vunpack.c.l.b16 %v584
    %v4336 = vunpack.c.h.b16 %v584
    %v4337 = vunpack.c.l.b16 %v585
    %v4338 = vunpack.c.l.b16 %v586
    %v4339 = vunpack.c.h.b16 %v586
    %v4340 = vunpack.c.l.b16 %v587
    %v4341 = vunpack.c.h.b16 %v587
    %v4342 = vunpack.c.l.b16 %v588
    %v4343 = vunpack.c.l.b16 %v589
    %v4344 = vunpack.c.h.b16 %v589
    %v4345 = vunpack.c.l.b16 %v590
    %v4346 = vunpack.c.h.b16 %v590
    %v4347 = vunpack.c.l.b16 %v591
    %v4348 = vunpack.c.l.b16 %v592
    %v4349 = vunpack.c.h.b16 %v592
    %v4350 = vunpack.c.l.b16 %v593
    %v4351 = vunpack.c.h.b16 %v593
    %v4352 = vunpack.c.l.b16 %v594
    %v4353 = vunpack.c.l.b16 %v595
    %v4354 = vunpack.c.h.b16 %v595
    %v4355 = vunpack.c.l.b16 %v596
    %v4356 = vunpack.c.h.b16 %v596
    %v4357 = vunpack.c.l.b16 %v597
    %v4358 = vunpack.c.l.b16 %v598
    %v4359 = vunpack.c.h.b16 %v598
    %v4360 = vunpack.c.l.b16 %v599
    %v4361 = vunpack.c.h.b16 %v599
    %v4362 = vunpack.c.l.b16 %v600
    %v4363 = vunpack.c.l.b16 %v601
    %v4364 = vunpack.c.h.b16 %v601
    %v4365 = vunpack.c.l.b16 %v602
    %v4366 = vunpack.c.h.b16 %v602
    %v4367 = vunpack.c.l.b16 %v603
    %v4368 = vunpack.c.l.b16 %v604
    %v4369 = vunpack.c.h.b16 %v604
    %v4370 = vunpack.c.l.b16 %v605
    %v4371 = vunpack.c.h.b16 %v605
    %v4372 = vunpack.c.l.b16 %v606
    %v4373 = vunpack.c.l.b16 %v607
    %v4374 = vunpack.c.h.b16 %v607
    %v4375 = vunpack.c.l.b16 %v608
    %v4376 = vunpack.c.h.b16 %v608
    %v4377 = vunpack.c.l.b16 %v609
    %v4378 = vunpack.c.l.b16 %v610
    %v4379 = vunpack.c.h.b16 %v610
    %v4380 = vunpack.c.l.b16 %v611
    %v4381 = vunpack.c.h.b16 %v611
    %v4382 = vunpack.c.l.b16 %v612
    %v4383 = vunpack.c.l.b16 %v613
    %v4384 = vunpack.c.h.b16 %v613
    %v4385 = vunpack.c.l.b16 %v614
    %v4386 = vunpack.c.h.b16 %v614
    %v4387 = vunpack.c.l.b16 %v615
    %v4388 = vunpack.c.l.b16 %v616
    %v4389 = vunpack.c.h.b16 %v616
    %v4390 = vunpack.c.l.b16 %v617
    %v4391 = vunpack.c.h.b16 %v617
    %v4392 = vunpack.c.l.b16 %v618
    %v4393 = vunpack.c.l.b16 %v619
    %v4394 = vunpack.c.h.b16 %v619
    %v4395 = vunpack.c.l.b16 %v620
    %v4396 = vunpack.c.h.b16 %v620
    %v4397 = vunpack.c.l.b16 %v621
    %v4398 = vunpack.c.l.b16 %v622
    %v4399 = vunpack.c.h.b16 %v622
    %v4400 = vunpack.c.l.b16 %v623
    %v4401 = vunpack.c.h.b16 %v623
    %v4402 = vunpack.c.l.b16 %v624
    %v4403 = vunpack.c.l.b16 %v625
    %v4404 = vunpack.c.h.b16 %v625
    %v4405 = vunpack.c.l.b16 %v626
    %v4406 = vunpack.c.h.b16 %v626
    %v4407 = vunpack.c.l.b16 %v627
    %v4408 = vunpack.c.l.b16 %v628
    %v4409 = vunpack.c.h.b16 %v628
    %v4410 = vunpack.c.l.b16 %v629
    %v4411 = vunpack.c.h.b16 %v629
    %v4412 = vunpack.c.l.b16 %v630
    %v4413 = vunpack.c.l.b16 %v631
    %v4414 = vunpack.c.h.b16 %v631
    %v4415 = vunpack.c.l.b16 %v632
    %v4416 = vunpack.c.h.b16 %v632
    %v4417 = vunpack.c.l.b16 %v633
    %v4418 = vunpack.c.l.b16 %v634
    %v4419 = vunpack.c.h.b16 %v634
    %v4420 = vunpack.c.l.b16 %v635
    %v4421 = vunpack.c.h.b16 %v635
    %v4422 = vunpack.c.l.b16 %v636
    %v4423 = vunpack.c.l.b16 %v637
    %v4424 = vunpack.c.h.b16 %v637
    %v4425 = vunpack.c.l.b16 %v638
    %v4426 = vunpack.c.h.b16 %v638
    %v4427 = vunpack.c.l.b16 %v639
    %v4428 = vunpack.c.l.b16 %v640
    %v4429 = vunpack.c.h.b16 %v640
    %v4430 = vunpack.c.l.b16 %v641
    %v4431 = vunpack.c.h.b16 %v641
    %v4432 = vunpack.c.l.b16 %v642
    %v4433 = vunpack.c.l.b16 %v643
    %v4434 = vunpack.c.h.b16 %v643
    %v4435 = vunpack.c.l.b16 %v644
    %v4436 = vunpack.c.h.b16 %v644
    %v4437 = vunpack.c.l.b16 %v645
    %v4438 = vunpack.c.l.b16 %v646
    %v4439 = vunpack.c.h.b16 %v646
    %v4440 = vunpack.c.l.b16 %v647
    %v4441 = vunpack.c.h.b16 %v647
    %v4442 = vunpack.c.l.b16 %v648
    %v4443 = vunpack.c.l.b16 %v649
    %v4444 = vunpack.c.h.b16 %v649
    %v4445 = vunpack.c.l.b16 %v650
    %v4446 = vunpack.c.h.b16 %v650
    %v4447 = vunpack.c.l.b16 %v651
    %v4448 = vunpack.c.l.b16 %v652
    %v4449 = vunpack.c.h.b16 %v652
    %v4450 = vunpack.c.l.b16 %v653
    %v4451 = vunpack.c.h.b16 %v653
    %v4452 = vunpack.c.l.b16 %v654
    %v4453 = vunpack.c.l.b16 %v655
    %v4454 = vunpack.c.h.b16 %v655
    %v4455 = vunpack.c.l.b16 %v656
    %v4456 = vunpack.c.h.b16 %v656
    %v4457 = vunpack.c.l.b16 %v657
    %v4458 = vunpack.c.l.b16 %v658
    %v4459 = vunpack.c.h.b16 %v658
    %v4460 = vunpack.c.l.b16 %v659
    %v4461 = vunpack.c.h.b16 %v659
    %v4462 = vunpack.c.l.b16 %v660
    %v4463 = vunpack.c.l.b16 %v661
    %v4464 = vunpack.c.h.b16 %v661
    %v4465 = vunpack.c.l.b16 %v662
    %v4466 = vunpack.c.h.b16 %v662
    %v4467 = vunpack.c.l.b16 %v663
    %v4468 = vunpack.c.l.b16 %v664
    %v4469 = vunpack.c.h.b16 %v664
    %v4470 = vunpack.c.l.b16 %v665
    %v4471 = vunpack.c.h.b16 %v665
    %v4472 = vunpack.c.l.b16 %v666
    %v4473 = vunpack.c.l.b16 %v667
    %v4474 = vunpack.c.h.b16 %v667
    %v4475 = vunpack.c.l.b16 %v668
    %v4476 = vunpack.c.h.b16 %v668
    %v4477 = vunpack.c.l.b16 %v669
    %v4478 = vunpack.c.l.b16 %v670
    %v4479 = vunpack.c.h.b16 %v670
    %v4480 = vunpack.c.l.b16 %v671
    %v4481 = vunpack.c.h.b16 %v671
    %v4482 = vunpack.c.l.b16 %v672
    %v4483 = vunpack.c.l.b16 %v673
    %v4484 = vunpack.c.h.b16 %v673
    %v4485 = vunpack.c.l.b16 %v674
    %v4486 = vunpack.c.h.b16 %v674
    %v4487 = vunpack.c.l.b16 %v675
    %v4488 = vunpack.c.l.b16 %v676
    %v4489 = vunpack.c.h.b16 %v676
    %v4490 = vunpack.c.l.b16 %v677
    %v4491 = vunpack.c.h.b16 %v677
    %v4492 = vunpack.c.l.b16 %v678
    %v4493 = vunpack.c.l.b16 %v679
    %v4494 = vunpack.c.h.b16 %v679
    %v4495 = vunpack.c.l.b16 %v680
    %v4496 = vunpack.c.h.b16 %v680
    %v4497 = vunpack.c.l.b16 %v681
    %v4498 = vunpack.c.l.b16 %v682
    %v4499 = vunpack.c.h.b16 %v682
    %v4500 = vunpack.c.l.b16 %v683
    %v4501 = vunpack.c.h.b16 %v683
    %v4502 = vunpack.c.l.b16 %v684
    %v4503 = vunpack.c.l.b16 %v685
    %v4504 = vunpack.c.h.b16 %v685
    %v4505 = vunpack.c.l.b16 %v686
    %v4506 = vunpack.c.h.b16 %v686
    %v4507 = vunpack.c.l.b16 %v687
    %v4508 = vunpack.c.l.b16 %v688
    %v4509 = vunpack.c.h.b16 %v688
    %v4510 = vunpack.c.l.b16 %v689
    %v4511 = vunpack.c.h.b16 %v689
    %v4512 = vunpack.c.l.b16 %v690
    %v4513 = vunpack.c.l.b16 %v691
    %v4514 = vunpack.c.h.b16 %v691
    %v4515 = vunpack.c.l.b16 %v692
    %v4516 = vunpack.c.h.b16 %v692
    %v4517 = vunpack.c.l.b16 %v693
    %v4518 = vunpack.c.l.b16 %v694
    %v4519 = vunpack.c.h.b16 %v694
    %v4520 = vunpack.c.l.b16 %v695
    %v4521 = vunpack.c.h.b16 %v695
    %v4522 = vunpack.c.l.b16 %v696
    %v4523 = vunpack.c.l.b16 %v697
    %v4524 = vunpack.c.h.b16 %v697
    %v4525 = vunpack.c.l.b16 %v698
    %v4526 = vunpack.c.h.b16 %v698
    %v4527 = vunpack.c.l.b16 %v699
    %v4528 = vunpack.c.l.b16 %v700
    %v4529 = vunpack.c.h.b16 %v700
    %v4530 = vunpack.c.l.b16 %v701
    %v4531 = vunpack.c.h.b16 %v701
    %v4532 = vunpack.c.l.b16 %v702
    %v4533 = vunpack.c.l.b16 %v703
    %v4534 = vunpack.c.h.b16 %v703
    %v4535 = vunpack.c.l.b16 %v704
    %v4536 = vunpack.c.h.b16 %v704
    %v4537 = vunpack.c.l.b16 %v705
    %v4538 = vunpack.c.l.b16 %v706
    %v4539 = vunpack.c.h.b16 %v706
    %v4540 = vunpack.c.l.b16 %v707
    %v4541 = vunpack.c.h.b16 %v707
    %v4542 = vunpack.c.l.b16 %v708
    %v4543 = vunpack.c.l.b16 %v709
    %v4544 = vunpack.c.h.b16 %v709
    %v4545 = vunpack.c.l.b16 %v710
    %v4546 = vunpack.c.h.b16 %v710
    %v4547 = vunpack.c.l.b16 %v711
    %v4548 = vunpack.c.l.b16 %v712
    %v4549 = vunpack.c.h.b16 %v712
    %v4550 = vunpack.c.l.b16 %v713
    %v4551 = vunpack.c.h.b16 %v713
    %v4552 = vunpack.c.l.b16 %v714
    %v4553 = vunpack.c.l.b16 %v715
    %v4554 = vunpack.c.h.b16 %v715
    %v4555 = vunpack.c.l.b16 %v716
    %v4556 = vunpack.c.h.b16 %v716
    %v4557 = vunpack.c.l.b16 %v717
    %v4558 = vunpack.c.l.b16 %v718
    %v4559 = vunpack.c.h.b16 %v718
    %v4560 = vunpack.c.l.b16 %v719
    %v4561 = vunpack.c.h.b16 %v719
    %v4562 = vunpack.c.l.b16 %v720
    %v4563 = vunpack.c.l.b16 %v721
    %v4564 = vunpack.c.h.b16 %v721
    %v4565 = vunpack.c.l.b16 %v722
    %v4566 = vunpack.c.h.b16 %v722
    %v4567 = vunpack.c.l.b16 %v723
    %v4568 = vunpack.c.l.b16 %v724
    %v4569 = vunpack.c.h.b16 %v724
    %v4570 = vunpack.c.l.b16 %v725
    %v4571 = vunpack.c.h.b16 %v725
    %v4572 = vunpack.c.l.b16 %v726
    %v4573 = vunpack.c.l.b16 %v727
    %v4574 = vunpack.c.h.b16 %v727
    %v4575 = vunpack.c.l.b16 %v728
    %v4576 = vunpack.c.h.b16 %v728
    %v4577 = vunpack.c.l.b16 %v729
    %v4578 = vunpack.c.l.b16 %v730
    %v4579 = vunpack.c.h.b16 %v730
    %v4580 = vunpack.c.l.b16 %v731
    %v4581 = vunpack.c.h.b16 %v731
    %v4582 = vunpack.c.l.b16 %v732
    %v4583 = vunpack.c.l.b16 %v733
    %v4584 = vunpack.c.h.b16 %v733
    %v4585 = vunpack.c.l.b16 %v734
    %v4586 = vunpack.c.h.b16 %v734
    %v4587 = vunpack.c.l.b16 %v735
    %v4588 = vunpack.c.l.b16 %v736
    %v4589 = vunpack.c.h.b16 %v736
    %v4590 = vunpack.c.l.b16 %v737
    %v4591 = vunpack.c.h.b16 %v737
    %v4592 = vunpack.c.l.b16 %v738
    %v4593 = vunpack.c.l.b16 %v739
    %v4594 = vunpack.c.h.b16 %v739
    %v4595 = vunpack.c.l.b16 %v740
    %v4596 = vunpack.c.h.b16 %v740
    %v4597 = vunpack.c.l.b16 %v741
    %v4598 = vunpack.c.l.b16 %v742
    %v4599 = vunpack.c.h.b16 %v742
    %v4600 = vunpack.c.l.b16 %v743
    %v4601 = vunpack.c.h.b16 %v743
    %v4602 = vunpack.c.l.b16 %v744
    %v4603 = vunpack.c.l.b16 %v745
    %v4604 = vunpack.c.h.b16 %v745
    %v4605 = vunpack.c.l.b16 %v746
    %v4606 = vunpack.c.h.b16 %v746
    %v4607 = vunpack.c.l.b16 %v747
    %v4608 = vunpack.c.l.b16 %v748
    %v4609 = vunpack.c.h.b16 %v748
    %v4610 = vunpack.c.l.b16 %v749
    %v4611 = vunpack.c.h.b16 %v749
    %v4612 = vunpack.c.l.b16 %v750
    %v4613 = vunpack.c.l.b16 %v751
    %v4614 = vunpack.c.h.b16 %v751
    %v4615 = vunpack.c.l.b16 %v752
    %v4616 = vunpack.c.h.b16 %v752
    %v4617 = vunpack.c.l.b16 %v753
    %v4618 = vunpack.c.l.b16 %v754
    %v4619 = vunpack.c.h.b16 %v754
    %v4620 = vunpack.c.l.b16 %v755
    %v4621 = vunpack.c.h.b16 %v755
    %v4622 = vunpack.c.l.b16 %v756
    %v4623 = vunpack.c.l.b16 %v757
    %v4624 = vunpack.c.h.b16 %v757
    %v4625 = vunpack.c.l.b16 %v758
    %v4626 = vunpack.c.h.b16 %v758
    %v4627 = vunpack.c.l.b16 %v759
    %v4628 = vunpack.c.l.b16 %v760
    %v4629 = vunpack.c.h.b16 %v760
    %v4630 = vunpack.c.l.b16 %v761
    %v4631 = vunpack.c.h.b16 %v761
    %v4632 = vunpack.c.l.b16 %v762
    %v4633 = vunpack.c.l.b16 %v763
    %v4634 = vunpack.c.h.b16 %v763
    %v4635 = vunpack.c.l.b16 %v764
    %v4636 = vunpack.c.h.b16 %v764
    %v4637 = vunpack.c.l.b16 %v765
    %v4638 = vunpack.c.l.b16 %v766
    %v4639 = vunpack.c.h.b16 %v766
    %v4640 = vunpack.c.l.b16 %v767
    %v4641 = vunpack.c.h.b16 %v767
    %v4642 = vunpack.c.l.b16 %v768
    %v4643 = vunpack.c.l.b16 %v769
    %v4644 = vunpack.c.h.b16 %v769
    %v4645 = vunpack.c.l.b16 %v770
    %v4646 = vunpack.c.h.b16 %v770
    %v4647 = vunpack.c.l.b16 %v771
    %v4648 = vunpack.c.l.b16 %v772
    %v4649 = vunpack.c.h.b16 %v772
    %v4650 = vunpack.c.l.b16 %v773
    %v4651 = vunpack.c.h.b16 %v773
    %v4652 = vunpack.c.l.b16 %v774
    %v4653 = vunpack.c.l.b16 %v775
    %v4654 = vunpack.c.h.b16 %v775
    %v4655 = vunpack.c.l.b16 %v776
    %v4656 = vunpack.c.h.b16 %v776
    %v4657 = vunpack.c.l.b16 %v777
    %v4658 = vunpack.c.l.b16 %v778
    %v4659 = vunpack.c.h.b16 %v778
    %v4660 = vunpack.c.l.b16 %v779
    %v4661 = vunpack.c.h.b16 %v779
    %v4662 = vunpack.c.l.b16 %v780
    %v4663 = vunpack.c.l.b16 %v781
    %v4664 = vunpack.c.h.b16 %v781
    %v4665 = vunpack.c.l.b16 %v782
    %v4666 = vunpack.c.h.b16 %v782
    %v4667 = vunpack.c.l.b16 %v783
    %v4668 = vunpack.c.l.b16 %v784
    %v4669 = vunpack.c.h.b16 %v784
    %v4670 = vunpack.c.l.b16 %v785
    %v4671 = vunpack.c.h.b16 %v785
    %v4672 = vunpack.c.l.b16 %v786
    %v4673 = vunpack.c.l.b16 %v787
    %v4674 = vunpack.c.h.b16 %v787
    %v4675 = vunpack.c.l.b16 %v788
    %v4676 = vunpack.c.h.b16 %v788
    %v4677 = vunpack.c.l.b16 %v789
    %v4678 = vunpack.c.l.b16 %v790
    %v4679 = vunpack.c.h.b16 %v790
    %v4680 = vunpack.c.l.b16 %v791
    %v4681 = vunpack.c.h.b16 %v791
    %v4682 = vunpack.c.l.b16 %v792
    %v4683 = vunpack.c.l.b16 %v793
    %v4684 = vunpack.c.h.b16 %v793
    %v4685 = vunpack.c.l.b16 %v794
    %v4686 = vunpack.c.h.b16 %v794
    %v4687 = vunpack.c.l.b16 %v795
    %v4688 = vunpack.c.l.b16 %v796
    %v4689 = vunpack.c.h.b16 %v796
    %v4690 = vunpack.c.l.b16 %v797
    %v4691 = vunpack.c.h.b16 %v797
    %v4692 = vunpack.c.l.b16 %v798
    %v4693 = vunpack.c.l.b16 %v799
    %v4694 = vunpack.c.h.b16 %v799
    %v4695 = vunpack.c.l.b16 %v800
    %v4696 = vunpack.c.h.b16 %v800
    %v4697 = vunpack.c.l.b16 %v801
    %v4698 = vunpack.c.l.b16 %v802
    %v4699 = vunpack.c.h.b16 %v802
    %v4700 = vunpack.c.l.b16 %v803
    %v4701 = vunpack.c.h.b16 %v803
    %v4702 = vunpack.c.l.b16 %v804
    %v4703 = vunpack.c.l.b16 %v805
    %v4704 = vunpack.c.h.b16 %v805
    %v4705 = vunpack.c.l.b16 %v806
    %v4706 = vunpack.c.h.b16 %v806
    %v4707 = vunpack.c.l.b16 %v807
    %v4708 = vunpack.c.l.b16 %v808
    %v4709 = vunpack.c.h.b16 %v808
    %v4710 = vunpack.c.l.b16 %v809
    %v4711 = vunpack.c.h.b16 %v809
    %v4712 = vunpack.c.l.b16 %v810
    %v4713 = vunpack.c.l.b16 %v811
    %v4714 = vunpack.c.h.b16 %v811
    %v4715 = vunpack.c.l.b16 %v812
    %v4716 = vunpack.c.h.b16 %v812
    %v4717 = vunpack.c.l.b16 %v813
    %v4718 = vunpack.c.l.b16 %v814
    %v4719 = vunpack.c.h.b16 %v814
    %v4720 = vunpack.c.l.b16 %v815
    %v4721 = vunpack.c.h.b16 %v815
    %v4722 = vunpack.c.l.b16 %v816
    %v4723 = vunpack.c.l.b16 %v817
    %v4724 = vunpack.c.h.b16 %v817
    %v4725 = vunpack.c.l.b16 %v818
    %v4726 = vunpack.c.h.b16 %v818
    %v4727 = vunpack.c.l.b16 %v819
    %v4728 = vunpack.c.l.b16 %v820
    %v4729 = vunpack.c.h.b16 %v820
    %v4730 = vunpack.c.l.b16 %v821
    %v4731 = vunpack.c.h.b16 %v821
    %v4732 = vunpack.c.l.b16 %v822
    %v4733 = vunpack.c.l.b16 %v823
    %v4734 = vunpack.c.h.b16 %v823
    %v4735 = vunpack.c.l.b16 %v824
    %v4736 = vunpack.c.h.b16 %v824
    %v4737 = vunpack.c.l.b16 %v825
    %v4738 = vunpack.c.l.b16 %v826
    %v4739 = vunpack.c.h.b16 %v826
    %v4740 = vunpack.c.l.b16 %v827
    %v4741 = vunpack.c.h.b16 %v827
    %v4742 = vunpack.c.l.b16 %v828
    %v4743 = vunpack.c.l.b16 %v829
    %v4744 = vunpack.c.h.b16 %v829
    %v4745 = vunpack.c.l.b16 %v830
    %v4746 = vunpack.c.h.b16 %v830
    %v4747 = vunpack.c.l.b16 %v831
    %v4748 = vunpack.c.l.b16 %v832
    %v4749 = vunpack.c.h.b16 %v832
    %v4750 = vunpack.c.l.b16 %v833
    %v4751 = vunpack.c.h.b16 %v833
    %v4752 = vunpack.c.l.b16 %v834
    %v4753 = vunpack.c.l.b16 %v835
    %v4754 = vunpack.c.h.b16 %v835
    %v4755 = vunpack.c.l.b16 %v836
    %v4756 = vunpack.c.h.b16 %v836
    %v4757 = vunpack.c.l.b16 %v837
    %v4758 = vunpack.c.l.b16 %v838
    %v4759 = vunpack.c.h.b16 %v838
    %v4760 = vunpack.c.l.b16 %v839
    %v4761 = vunpack.c.h.b16 %v839
    %v4762 = vunpack.c.l.b16 %v840
    %v4763 = vunpack.c.l.b16 %v841
    %v4764 = vunpack.c.h.b16 %v841
    %v4765 = vunpack.c.l.b16 %v842
    %v4766 = vunpack.c.h.b16 %v842
    %v4767 = vunpack.c.l.b16 %v843
    %v4768 = vunpack.c.l.b16 %v844
    %v4769 = vunpack.c.h.b16 %v844
    %v4770 = vunpack.c.l.b16 %v845
    %v4771 = vunpack.c.h.b16 %v845
    %v4772 = vunpack.c.l.b16 %v846
    %v4773 = vunpack.c.l.b16 %v847
    %v4774 = vunpack.c.h.b16 %v847
    %v4775 = vunpack.c.l.b16 %v848
    %v4776 = vunpack.c.h.b16 %v848
    %v4777 = vunpack.c.l.b16 %v849
    %v4778 = vunpack.c.l.b16 %v850
    %v4779 = vunpack.c.h.b16 %v850
    %v4780 = vunpack.c.l.b16 %v851
    %v4781 = vunpack.c.h.b16 %v851
    %v4782 = vunpack.c.l.b16 %v852
    %v4783 = vunpack.c.l.b16 %v853
    %v4784 = vunpack.c.h.b16 %v853
    %v4785 = vunpack.c.l.b16 %v854
    %v4786 = vunpack.c.h.b16 %v854
    %v4787 = vunpack.c.l.b16 %v855
    %v4788 = vunpack.c.l.b16 %v856
    %v4789 = vunpack.c.h.b16 %v856
    %v4790 = vunpack.c.l.b16 %v857
    %v4791 = vunpack.c.h.b16 %v857
    %v4792 = vunpack.c.l.b16 %v858
    %v4793 = vunpack.c.l.b16 %v859
    %v4794 = vunpack.c.h.b16 %v859
    %v4795 = vunpack.c.l.b16 %v860
    %v4796 = vunpack.c.h.b16 %v860
    %v4797 = vunpack.c.l.b16 %v861
    %v4798 = vunpack.c.l.b16 %v862
    %v4799 = vunpack.c.h.b16 %v862
    %v4800 = vunpack.c.l.b16 %v863
    %v4801 = vunpack.c.h.b16 %v863
    %v4802 = vunpack.c.l.b16 %v864
    %v4803 = vunpack.c.l.b16 %v865
    %v4804 = vunpack.c.h.b16 %v865
    %v4805 = vunpack.c.l.b16 %v866
    %v4806 = vunpack.c.h.b16 %v866
    %v4807 = vunpack.c.l.b16 %v867
    %v4808 = vunpack.c.l.b16 %v868
    %v4809 = vunpack.c.h.b16 %v868
    %v4810 = vunpack.c.l.b16 %v869
    %v4811 = vunpack.c.h.b16 %v869
    %v4812 = vunpack.c.l.b16 %v870
    %v4813 = vunpack.c.l.b16 %v871
    %v4814 = vunpack.c.h.b16 %v871
    %v4815 = vunpack.c.l.b16 %v872
    %v4816 = vunpack.c.h.b16 %v872
    %v4817 = vunpack.c.l.b16 %v873
    %v4818 = vunpack.c.l.b16 %v874
    %v4819 = vunpack.c.h.b16 %v874
    %v4820 = vunpack.c.l.b16 %v875
    %v4821 = vunpack.c.h.b16 %v875
    %v4822 = vunpack.c.l.b16 %v876
    %v4823 = vunpack.c.l.b16 %v877
    %v4824 = vunpack.c.h.b16 %v877
    %v4825 = vunpack.c.l.b16 %v878
    %v4826 = vunpack.c.h.b16 %v878
    %v4827 = vunpack.c.l.b16 %v879
    %v4828 = vunpack.c.l.b16 %v880
    %v4829 = vunpack.c.h.b16 %v880
    %v4830 = vunpack.c.l.b16 %v881
    %v4831 = vunpack.c.h.b16 %v881
    %v4832 = vunpack.c.l.b16 %v882
    %v4833 = vunpack.c.l.b16 %v883
    %v4834 = vunpack.c.h.b16 %v883
    %v4835 = vunpack.c.l.b16 %v884
    %v4836 = vunpack.c.h.b16 %v884
    %v4837 = vunpack.c.l.b16 %v885
    %v4838 = vunpack.c.l.b16 %v886
    %v4839 = vunpack.c.h.b16 %v886
    %v4840 = vunpack.c.l.b16 %v887
    %v4841 = vunpack.c.h.b16 %v887
    %v4842 = vunpack.c.l.b16 %v888
    %v4843 = vunpack.c.l.b16 %v889
    %v4844 = vunpack.c.h.b16 %v889
    %v4845 = vunpack.c.l.b16 %v890
    %v4846 = vunpack.c.h.b16 %v890
    %v4847 = vunpack.c.l.b16 %v891
    %v4848 = vunpack.c.l.b16 %v892
    %v4849 = vunpack.c.h.b16 %v892
    %v4850 = vunpack.c.l.b16 %v893
    %v4851 = vunpack.c.h.b16 %v893
    %v4852 = vunpack.c.l.b16 %v894
    %v4853 = vunpack.c.l.b16 %v895
    %v4854 = vunpack.c.h.b16 %v895
    %v4855 = vunpack.c.l.b16 %v896
    %v4856 = vunpack.c.h.b16 %v896
    %v4857 = vunpack.c.l.b16 %v897
    %v4858 = vunpack.c.l.b16 %v898
    %v4859 = vunpack.c.h.b16 %v898
    %v4860 = vunpack.c.l.b16 %v899
    %v4861 = vunpack.c.h.b16 %v899
    %v4862 = vunpack.c.l.b16 %v900
    %v4863 = vunpack.c.l.b16 %v901
    %v4864 = vunpack.c.h.b16 %v901
    %v4865 = vunpack.c.l.b16 %v902
    %v4866 = vunpack.c.h.b16 %v902
    %v4867 = vunpack.c.l.b16 %v903
    %v4868 = vunpack.c.l.b16 %v904
    %v4869 = vunpack.c.h.b16 %v904
    %v4870 = vunpack.c.l.b16 %v905
    %v4871 = vunpack.c.h.b16 %v905
    %v4872 = vunpack.c.l.b16 %v906
    %v4873 = vunpack.c.l.b16 %v907
    %v4874 = vunpack.c.h.b16 %v907
    %v4875 = vunpack.c.l.b16 %v908
    %v4876 = vunpack.c.h.b16 %v908
    %v4877 = vunpack.c.l.b16 %v909
    %v4878 = vunpack.c.l.b16 %v910
    %v4879 = vunpack.c.h.b16 %v910
    %v4880 = vunpack.c.l.b16 %v911
    %v4881 = vunpack.c.h.b16 %v911
    %v4882 = vunpack.c.l.b16 %v912
    %v4883 = vunpack.c.l.b16 %v913
    %v4884 = vunpack.c.h.b16 %v913
    %v4885 = vunpack.c.l.b16 %v914
    %v4886 = vunpack.c.h.b16 %v914
    %v4887 = vunpack.c.l.b16 %v915
    %v4888 = vunpack.c.l.b16 %v916
    %v4889 = vunpack.c.h.b16 %v916
    %v4890 = vunpack.c.l.b16 %v917
    %v4891 = vunpack.c.h.b16 %v917
    %v4892 = vunpack.c.l.b16 %v918
    %v4893 = vunpack.c.l.b16 %v919
    %v4894 = vunpack.c.h.b16 %v919
    %v4895 = vunpack.c.l.b16 %v920
    %v4896 = vunpack.c.h.b16 %v920
    %v4897 = vunpack.c.l.b16 %v921
    %v4898 = vunpack.c.l.b16 %v922
    %v4899 = vunpack.c.h.b16 %v922
    %v4900 = vunpack.c.l.b16 %v923
    %v4901 = vunpack.c.h.b16 %v923
    %v4902 = vunpack.c.l.b16 %v924
    %v4903 = vunpack.c.l.b16 %v925
    %v4904 = vunpack.c.h.b16 %v925
    %v4905 = vunpack.c.l.b16 %v926
    %v4906 = vunpack.c.h.b16 %v926
    %v4907 = vunpack.c.l.b16 %v927
    %v4908 = vunpack.c.l.b16 %v928
    %v4909 = vunpack.c.h.b16 %v928
    %v4910 = vunpack.c.l.b16 %v929
    %v4911 = vunpack.c.h.b16 %v929
    %v4912 = vunpack.c.l.b16 %v930
    %v4913 = vunpack.c.l.b16 %v931
    %v4914 = vunpack.c.h.b16 %v931
    %v4915 = vunpack.c.l.b16 %v932
    %v4916 = vunpack.c.h.b16 %v932
    %v4917 = vunpack.c.l.b16 %v933
    %v4918 = vunpack.c.l.b16 %v934
    %v4919 = vunpack.c.h.b16 %v934
    %v4920 = vunpack.c.l.b16 %v935
    %v4921 = vunpack.c.h.b16 %v935
    %v4922 = vunpack.c.l.b16 %v936
    %v4923 = vunpack.c.l.b16 %v937
    %v4924 = vunpack.c.h.b16 %v937
    %v4925 = vunpack.c.l.b16 %v938
    %v4926 = vunpack.c.h.b16 %v938
    %v4927 = vunpack.c.l.b16 %v939
    %v4928 = vunpack.c.l.b16 %v940
    %v4929 = vunpack.c.h.b16 %v940
    %v4930 = vunpack.c.l.b16 %v941
    %v4931 = vunpack.c.h.b16 %v941
    %v4932 = vunpack.c.l.b16 %v942
    %v4933 = vunpack.c.l.b16 %v943
    %v4934 = vunpack.c.h.b16 %v943
    %v4935 = vunpack.c.l.b16 %v944
    %v4936 = vunpack.c.h.b16 %v944
    %v4937 = vunpack.c.l.b16 %v945
    %v4938 = vunpack.c.l.b16 %v946
    %v4939 = vunpack.c.h.b16 %v946
    %v4940 = vunpack.c.l.b16 %v947
    %v4941 = vunpack.c.h.b16 %v947
    %v4942 = vunpack.c.l.b16 %v948
    %v4943 = vunpack.c.l.b16 %v949
    %v4944 = vunpack.c.h.b16 %v949
    %v4945 = vunpack.c.l.b16 %v950
    %v4946 = vunpack.c.h.b16 %v950
    %v4947 = vunpack.c.l.b16 %v951
    %v4948 = vunpack.c.l.b16 %v952
    %v4949 = vunpack.c.h.b16 %v952
    %v4950 = vunpack.c.l.b16 %v953
    %v4951 = vunpack.c.h.b16 %v953
    %v4952 = vunpack.c.l.b16 %v954
    %v4953 = vunpack.c.l.b16 %v955
    %v4954 = vunpack.c.h.b16 %v955
    %v4955 = vunpack.c.l.b16 %v956
    %v4956 = vunpack.c.h.b16 %v956
    %v4957 = vunpack.c.l.b16 %v957
    %v4958 = vunpack.c.l.b16 %v958
    %v4959 = vunpack.c.h.b16 %v958
    %v4960 = vunpack.c.l.b16 %v959
    %v4961 = vunpack.c.h.b16 %v959
    %v4962 = vunpack.c.l.b16 %v960
    %v4963 = vunpack.c.l.b16 %v961
    %v4964 = vunpack.c.h.b16 %v961
    %v4965 = vunpack.c.l.b16 %v962
    %v4966 = vunpack.c.h.b16 %v962
    %v4967 = vunpack.c.l.b16 %v963
    %v4968 = vunpack.c.l.b16 %v964
    %v4969 = vunpack.c.h.b16 %v964
    %v4970 = vunpack.c.l.b16 %v965
    %v4971 = vunpack.c.h.b16 %v965
    %v4972 = vunpack.c.l.b16 %v966
    %v4973 = vunpack.c.l.b16 %v967
    %v4974 = vunpack.c.h.b16 %v967
    %v4975 = vunpack.c.l.b16 %v968
    %v4976 = vunpack.c.h.b16 %v968
    %v4977 = vunpack.c.l.b16 %v969
    %v4978 = vunpack.c.l.b16 %v970
    %v4979 = vunpack.c.h.b16 %v970
    %v4980 = vunpack.c.l.b16 %v971
    %v4981 = vunpack.c.h.b16 %v971
    %v4982 = vunpack.c.l.b16 %v972
    %v4983 = vunpack.c.l.b16 %v973
    %v4984 = vunpack.c.h.b16 %v973
    %v4985 = vunpack.c.l.b16 %v974
    %v4986 = vunpack.c.h.b16 %v974
    %v4987 = vunpack.c.l.b16 %v975
    %v4988 = vunpack.c.l.b16 %v976
    %v4989 = vunpack.c.h.b16 %v976
    %v4990 = vunpack.c.l.b16 %v977
    %v4991 = vunpack.c.h.b16 %v977
    %v4992 = vunpack.c.l.b16 %v978
    %v4993 = vunpack.c.l.b16 %v979
    %v4994 = vunpack.c.h.b16 %v979
    %v4995 = vunpack.c.l.b16 %v980
    %v4996 = vunpack.c.h.b16 %v980
    %v4997 = vunpack.c.l.b16 %v981
    %v4998 = vunpack.c.l.b16 %v982
    %v4999 = vunpack.c.h.b16 %v982
    %v5000 = vunpack.c.l.b16 %v983
    %v5001 = vunpack.c.h.b16 %v983
    %v5002 = vunpack.c.l.b16 %v984
    %v5003 = vunpack.c.l.b16 %v985
    %v5004 = vunpack.c.h.b16 %v985
    %v5005 = vunpack.c.l.b16 %v986
    %v5006 = vunpack.c.h.b16 %v986
    %v5007 = vunpack.c.l.b16 %v987
    %v5008 = vunpack.c.l.b16 %v988
    %v5009 = vunpack.c.h.b16 %v988
    %v5010 = vunpack.c.l.b16 %v989
    %v5011 = vunpack.c.h.b16 %v989
    %v5012 = vunpack.c.l.b16 %v990
    %v5013 = vunpack.c.l.b16 %v991
    %v5014 = vunpack.c.h.b16 %v991
    %v5015 = vunpack.c.l.b16 %v992
    %v5016 = vunpack.c.h.b16 %v992
    %v5017 = vunpack.c.l.b16 %v993
    %v5018 = vunpack.c.l.b16 %v994
    %v5019 = vunpack.c.h.b16 %v994
    %v5020 = vunpack.c.l.b16 %v995
    %v5021 = vunpack.c.h.b16 %v995
    %v5022 = vunpack.c.l.b16 %v996
    %v5023 = vunpack.c.l.b16 %v997
    %v5024 = vunpack.c.h.b16 %v997
    %v5025 = vunpack.c.l.b16 %v998
    %v5026 = vunpack.c.h.b16 %v998
    %v5027 = vunpack.c.l.b16 %v999
    %v5028 = vunpack.c.l.b16 %v1000
    %v5029 = vunpack.c.h.b16 %v1000
    %v5030 = vunpack.c.l.b16 %v1001
    %v5031 = vunpack.c.h.b16 %v1001
    %v5032 = vunpack.c.l.b16 %v1002
    %v5033 = vunpack.c.l.b16 %v1003
    %v5034 = vunpack.c.h.b16 %v1003
    %v5035 = vunpack.c.l.b16 %v1004
    %v5036 = vunpack.c.h.b16 %v1004
    %v5037 = vunpack.c.l.b16 %v1005
    %v5038 = vunpack.c.l.b16 %v1006
    %v5039 = vunpack.c.h.b16 %v1006
    %v5040 = vunpack.c.l.b16 %v1007
    %v5041 = vunpack.c.h.b16 %v1007
    %v5042 = vunpack.c.l.b16 %v1008
    %v5043 = vunpack.c.l.b16 %v1009
    %v5044 = vunpack.c.h.b16 %v1009
    %v5045 = vunpack.c.l.b16 %v1010
    %v5046 = vunpack.c.h.b16 %v1010
    %v5047 = vunpack.c.l.b16 %v1011
    %v5048 = vunpack.c.l.b16 %v1012
    %v5049 = vunpack.c.h.b16 %v1012
    %v5050 = vunpack.c.l.b16 %v1013
    %v5051 = vunpack.c.h.b16 %v1013
    %v5052 = vunpack.c.l.b16 %v1014
    %v5053 = vunpack.c.l.b16 %v1015
    %v5054 = vunpack.c.h.b16 %v1015
    %v5055 = vunpack.c.l.b16 %v1016
    %v5056 = vunpack.c.h.b16 %v1016
    %v5057 = vunpack.c.l.b16 %v1017
    %v5058 = vunpack.c.l.b16 %v1018
    %v5059 = vunpack.c.h.b16 %v1018
    %v5060 = vunpack.c.l.b16 %v1019
    %v5061 = vunpack.c.h.b16 %v1019
    %v5062 = vunpack.c.l.b16 %v1020
    %v5063 = vunpack.c.l.b16 %v1021
    %v5064 = vunpack.c.h.b16 %v1021
    %v5065 = vunpack.c.l.b16 %v1022
    %v5066 = vunpack.c.h.b16 %v1022
    %v5067 = vunpack.c.l.b16 %v1023
    %v5068 = vunpack.c.l.b16 %v1024
    %v5069 = vunpack.c.h.b16 %v1024
    %v5070 = vunpack.c.l.b16 %v1025
    %v5071 = vunpack.c.h.b16 %v1025
    %v5072 = vunpack.c.l.b16 %v1026
    %v5073 = vunpack.c.l.b16 %v1027
    %v5074 = vunpack.c.h.b16 %v1027
    %v5075 = vunpack.c.l.b16 %v1028
    %v5076 = vunpack.c.h.b16 %v1028
    %v5077 = vunpack.c.l.b16 %v1029
    %v5078 = vunpack.c.l.b16 %v1030
    %v5079 = vunpack.c.h.b16 %v1030
    %v5080 = vunpack.c.l.b16 %v1031
    %v5081 = vunpack.c.h.b16 %v1031
    %v5082 = vunpack.c.l.b16 %v1032
    %v5083 = vunpack.c.l.b16 %v1033
    %v5084 = vunpack.c.h.b16 %v1033
    %v5085 = vunpack.c.l.b16 %v1034
    %v5086 = vunpack.c.h.b16 %v1034
    %v5087 = vunpack.c.l.b16 %v1035
    %v5088 = vunpack.c.l.b16 %v1036
    %v5089 = vunpack.c.h.b16 %v1036
    %v5090 = vunpack.c.l.b16 %v1037
    %v5091 = vunpack.c.h.b16 %v1037
    %v5092 = vunpack.c.l.b16 %v1038
    %v5093 = vunpack.c.l.b16 %v1039
    %v5094 = vunpack.c.h.b16 %v1039
    %v5095 = vunpack.c.l.b16 %v1040
    %v5096 = vunpack.c.h.b16 %v1040
    %v5097 = vunpack.c.l.b16 %v1041
    %v5098 = vunpack.c.l.b16 %v1042
    %v5099 = vunpack.c.h.b16 %v1042
    %v5100 = vunpack.c.l.b16 %v1043
    %v5101 = vunpack.c.h.b16 %v1043
    %v5102 = vunpack.c.l.b16 %v1044
    %v5103 = vunpack.c.l.b16 %v1045
    %v5104 = vunpack.c.h.b16 %v1045
    %v5105 = vunpack.c.l.b16 %v1046
    %v5106 = vunpack.c.h.b16 %v1046
    %v5107 = vunpack.c.l.b16 %v1047
    %v5108 = vunpack.c.l.b16 %v1048
    %v5109 = vunpack.c.h.b16 %v1048
    %v5110 = vunpack.c.l.b16 %v1049
    %v5111 = vunpack.c.h.b16 %v1049
    %v5112 = vunpack.c.l.b16 %v1050
    %v5113 = vunpack.c.l.b16 %v1051
    %v5114 = vunpack.c.h.b16 %v1051
    %v5115 = vunpack.c.l.b16 %v1052
    %v5116 = vunpack.c.h.b16 %v1052
    %v5117 = vunpack.c.l.b16 %v1053
    %v5118 = vunpack.c.l.b16 %v1054
    %v5119 = vunpack.c.h.b16 %v1054
    %v5120 = vunpack.c.l.b16 %v1055
    %v5121 = vunpack.c.h.b16 %v1055
    %v5122 = vunpack.c.l.b16 %v1056
    %v5123 = vunpack.c.l.b16 %v1057
    %v5124 = vunpack.c.h.b16 %v1057
    %v5125 = vunpack.c.l.b16 %v1058
    %v5126 = vunpack.c.h.b16 %v1058
    %v5127 = vunpack.c.l.b16 %v1059
    %v5128 = vunpack.c.l.b16 %v1060
    %v5129 = vunpack.c.h.b16 %v1060
    %v5130 = vunpack.c.l.b16 %v1061
    %v5131 = vunpack.c.h.b16 %v1061
    %v5132 = vunpack.c.l.b16 %v1062
    %v5133 = vunpack.c.l.b16 %v1063
    %v5134 = vunpack.c.h.b16 %v1063
    %v5135 = vunpack.c.l.b16 %v1064
    %v5136 = vunpack.c.h.b16 %v1064
    %v5137 = vunpack.c.l.b16 %v1065
    %v5138 = vunpack.c.l.b16 %v1066
    %v5139 = vunpack.c.h.b16 %v1066
    %v5140 = vunpack.c.l.b16 %v1067
    %v5141 = vunpack.c.h.b16 %v1067
    %v5142 = vunpack.c.l.b16 %v1068
    %v5143 = vunpack.c.l.b16 %v1069
    %v5144 = vunpack.c.h.b16 %v1069
    %v5145 = vunpack.c.l.b16 %v1070
    %v5146 = vunpack.c.h.b16 %v1070
    %v5147 = vunpack.c.l.b16 %v1071
    %v5148 = vunpack.c.l.b16 %v1072
    %v5149 = vunpack.c.h.b16 %v1072
    %v5150 = vunpack.c.l.b16 %v1073
    %v5151 = vunpack.c.h.b16 %v1073
    %v5152 = vunpack.c.l.b16 %v1074
    %v5153 = vunpack.c.l.b16 %v1075
    %v5154 = vunpack.c.h.b16 %v1075
    %v5155 = vunpack.c.l.b16 %v1076
    %v5156 = vunpack.c.h.b16 %v1076
    %v5157 = vunpack.c.l.b16 %v1077
    %v5158 = vunpack.c.l.b16 %v1078
    %v5159 = vunpack.c.h.b16 %v1078
    %v5160 = vunpack.c.l.b16 %v1079
    %v5161 = vunpack.c.h.b16 %v1079
    %v5162 = vunpack.c.l.b16 %v1080
    %v5163 = vunpack.c.l.b16 %v1081
    %v5164 = vunpack.c.h.b16 %v1081
    %v5165 = vunpack.c.l.b16 %v1082
    %v5166 = vunpack.c.h.b16 %v1082
    %v5167 = vunpack.c.l.b16 %v1083
    %v5168 = vunpack.c.l.b16 %v1084
    %v5169 = vunpack.c.h.b16 %v1084
    %v5170 = vunpack.c.l.b16 %v1085
    %v5171 = vunpack.c.h.b16 %v1085
    %v5172 = vunpack.c.l.b16 %v1086
    %v5173 = vunpack.c.l.b16 %v1087
    %v5174 = vunpack.c.h.b16 %v1087
    %v5175 = vunpack.c.l.b16 %v1088
    %v5176 = vunpack.c.h.b16 %v1088
    %v5177 = vunpack.c.l.b16 %v1089
    %v5178 = vunpack.c.l.b16 %v1090
    %v5179 = vunpack.c.h.b16 %v1090
    %v5180 = vunpack.c.l.b16 %v1091
    %v5181 = vunpack.c.h.b16 %v1091
    %v5182 = vunpack.c.l.b16 %v1092
    %v5183 = vunpack.c.l.b16 %v1093
    %v5184 = vunpack.c.h.b16 %v1093
    %v5185 = vunpack.c.l.b16 %v1094
    %v5186 = vunpack.c.h.b16 %v1094
    %v5187 = vunpack.c.l.b16 %v1095
    %v5188 = vunpack.c.l.b16 %v1096
    %v5189 = vunpack.c.h.b16 %v1096
    %v5190 = vunpack.c.l.b16 %v1097
    %v5191 = vunpack.c.h.b16 %v1097
    %v5192 = vunpack.c.l.b16 %v1098
    %v5193 = vunpack.c.l.b16 %v1099
    %v5194 = vunpack.c.h.b16 %v1099
    %v5195 = vunpack.c.l.b16 %v1100
    %v5196 = vunpack.c.h.b16 %v1100
    %v5197 = vunpack.c.l.b16 %v1101
    %v5198 = vunpack.c.l.b16 %v1102
    %v5199 = vunpack.c.h.b16 %v1102
    %v5200 = vunpack.c.l.b16 %v1103
    %v5201 = vunpack.c.h.b16 %v1103
    %v5202 = vunpack.c.l.b16 %v1104
    %v5203 = vunpack.c.l.b16 %v1105
    %v5204 = vunpack.c.h.b16 %v1105
    %v5205 = vunpack.c.l.b16 %v1106
    %v5206 = vunpack.c.h.b16 %v1106
    %v5207 = vunpack.c.l.b16 %v1107
    %v5208 = vunpack.c.l.b16 %v1108
    %v5209 = vunpack.c.h.b16 %v1108
    %v5210 = vunpack.c.l.b16 %v1109
    %v5211 = vunpack.c.h.b16 %v1109
    %v5212 = vunpack.c.l.b16 %v1110
    %v5213 = vunpack.c.l.b16 %v1111
    %v5214 = vunpack.c.h.b16 %v1111
    %v5215 = vunpack.c.l.b16 %v1112
    %v5216 = vunpack.c.h.b16 %v1112
    %v5217 = vunpack.c.l.b16 %v1113
    %v5218 = vunpack.c.l.b16 %v1114
    %v5219 = vunpack.c.h.b16 %v1114
    %v5220 = vunpack.c.l.b16 %v1115
    %v5221 = vunpack.c.h.b16 %v1115
    %v5222 = vunpack.c.l.b16 %v1116
    %v5223 = vunpack.c.l.b16 %v1117
    %v5224 = vunpack.c.h.b16 %v1117
    %v5225 = vunpack.c.l.b16 %v1118
    %v5226 = vunpack.c.h.b16 %v1118
    %v5227 = vunpack.c.l.b16 %v1119
    %v5228 = vunpack.c.l.b16 %v1120
    %v5229 = vunpack.c.h.b16 %v1120
    %v5230 = vunpack.c.l.b16 %v1121
    %v5231 = vunpack.c.h.b16 %v1121
    %v5232 = vunpack.c.l.b16 %v1122
    %v5233 = vunpack.c.l.b16 %v1123
    %v5234 = vunpack.c.h.b16 %v1123
    %v5235 = vunpack.c.l.b16 %v1124
    %v5236 = vunpack.c.h.b16 %v1124
    %v5237 = vunpack.c.l.b16 %v1125
    %v5238 = vunpack.c.l.b16 %v1126
    %v5239 = vunpack.c.h.b16 %v1126
    %v5240 = vunpack.c.l.b16 %v1127
    %v5241 = vunpack.c.h.b16 %v1127
    %v5242 = vunpack.c.l.b16 %v1128
    %v5243 = vunpack.c.l.b16 %v1129
    %v5244 = vunpack.c.h.b16 %v1129
    %v5245 = vunpack.c.l.b16 %v1130
    %v5246 = vunpack.c.h.b16 %v1130
    %v5247 = vunpack.c.l.b16 %v1131
    %v5248 = vunpack.c.l.b16 %v1132
    %v5249 = vunpack.c.h.b16 %v1132
    %v5250 = vunpack.c.l.b16 %v1133
    %v5251 = vunpack.c.h.b16 %v1133
    %v5252 = vunpack.c.l.b16 %v1134
    %v5253 = vunpack.c.l.b16 %v1135
    %v5254 = vunpack.c.h.b16 %v1135
    %v5255 = vunpack.c.l.b16 %v1136
    %v5256 = vunpack.c.h.b16 %v1136
    %v5257 = vunpack.c.l.b16 %v1137
    %v5258 = vunpack.c.l.b16 %v1138
    %v5259 = vunpack.c.h.b16 %v1138
    %v5260 = vunpack.c.l.b16 %v1139
    %v5261 = vunpack.c.h.b16 %v1139
    %v5262 = vunpack.c.l.b16 %v1140
    %v5263 = vunpack.c.l.b16 %v1141
    %v5264 = vunpack.c.h.b16 %v1141
    %v5265 = vunpack.c.l.b16 %v1142
    %v5266 = vunpack.c.h.b16 %v1142
    %v5267 = vunpack.c.l.b16 %v1143
    %v5268 = vunpack.c.l.b16 %v1144
    %v5269 = vunpack.c.h.b16 %v1144
    %v5270 = vunpack.c.l.b16 %v1145
    %v5271 = vunpack.c.h.b16 %v1145
    %v5272 = vunpack.c.l.b16 %v1146
    %v5273 = vunpack.c.l.b16 %v1147
    %v5274 = vunpack.c.h.b16 %v1147
    %v5275 = vunpack.c.l.b16 %v1148
    %v5276 = vunpack.c.h.b16 %v1148
    %v5277 = vunpack.c.l.b16 %v1149
    %v5278 = vunpack.c.l.b16 %v1150
    %v5279 = vunpack.c.h.b16 %v1150
    %v5280 = vunpack.c.l.b16 %v1151
    %v5281 = vunpack.c.h.b16 %v1151
    %v5282 = vunpack.c.l.b16 %v1152
    %v5283 = vunpack.c.l.b16 %v1153
    %v5284 = vunpack.c.h.b16 %v1153
    %v5285 = vunpack.c.l.b16 %v1154
    %v5286 = vunpack.c.h.b16 %v1154
    %v5287 = vunpack.c.l.b16 %v1155
    %v5288 = vunpack.c.l.b16 %v1156
    %v5289 = vunpack.c.h.b16 %v1156
    %v5290 = vunpack.c.l.b16 %v1157
    %v5291 = vunpack.c.h.b16 %v1157
    %v5292 = vunpack.c.l.b16 %v1158
    %v5293 = vunpack.c.l.b16 %v1159
    %v5294 = vunpack.c.h.b16 %v1159
    %v5295 = vunpack.c.l.b16 %v1160
    %v5296 = vunpack.c.h.b16 %v1160
    %v5297 = vunpack.c.l.b16 %v1161
    %v5298 = vunpack.c.l.b16 %v1162
    %v5299 = vunpack.c.h.b16 %v1162
    %v5300 = vunpack.c.l.b16 %v1163
    %v5301 = vunpack.c.h.b16 %v1163
    %v5302 = vunpack.c.l.b16 %v1164
    %v5303 = vunpack.c.l.b16 %v1165
    %v5304 = vunpack.c.h.b16 %v1165
    %v5305 = vunpack.c.l.b16 %v1166
    %v5306 = vunpack.c.h.b16 %v1166
    %v5307 = vunpack.c.l.b16 %v1167
    %v5308 = vunpack.c.l.b16 %v1168
    %v5309 = vunpack.c.h.b16 %v1168
    %v5310 = vunpack.c.l.b16 %v1169
    %v5311 = vunpack.c.h.b16 %v1169
    %v5312 = vunpack.c.l.b16 %v1170
    %v5313 = vunpack.c.l.b16 %v1171
    %v5314 = vunpack.c.h.b16 %v1171
    %v5315 = vunpack.c.l.b16 %v1172
    %v5316 = vunpack.c.h.b16 %v1172
    %v5317 = vunpack.c.l.b16 %v1173
    %v5318 = vunpack.c.l.b16 %v1174
    %v5319 = vunpack.c.h.b16 %v1174
    %v5320 = vunpack.c.l.b16 %v1175
    %v5321 = vunpack.c.h.b16 %v1175
    %v5322 = vunpack.c.l.b16 %v1176
    %v5323 = vunpack.c.l.b16 %v1177
    %v5324 = vunpack.c.h.b16 %v1177
    %v5325 = vunpack.c.l.b16 %v1178
    %v5326 = vunpack.c.h.b16 %v1178
    %v5327 = vunpack.c.l.b16 %v1179
    %v5328 = vunpack.c.l.b16 %v1180
    %v5329 = vunpack.c.h.b16 %v1180
    %v5330 = vunpack.c.l.b16 %v1181
    %v5331 = vunpack.c.h.b16 %v1181
    %v5332 = vunpack.c.l.b16 %v1182
    %v5333 = vunpack.c.l.b16 %v1183
    %v5334 = vunpack.c.h.b16 %v1183
    %v5335 = vunpack.c.l.b16 %v1184
    %v5336 = vunpack.c.h.b16 %v1184
    %v5337 = vunpack.c.l.b16 %v1185
    %v5338 = vunpack.c.l.b16 %v1186
    %v5339 = vunpack.c.h.b16 %v1186
    %v5340 = vunpack.c.l.b16 %v1187
    %v5341 = vunpack.c.h.b16 %v1187
    %v5342 = vunpack.c.l.b16 %v1188
    %v5343 = vunpack.c.l.b16 %v1189
    %v5344 = vunpack.c.h.b16 %v1189
    %v5345 = vunpack.c.l.b16 %v1190
    %v5346 = vunpack.c.h.b16 %v1190
    %v5347 = vunpack.c.l.b16 %v1191
    %v5348 = vunpack.c.l.b16 %v1192
    %v5349 = vunpack.c.h.b16 %v1192
    %v5350 = vunpack.c.l.b16 %v1193
    %v5351 = vunpack.c.h.b16 %v1193
    %v5352 = vunpack.c.l.b16 %v1194
    %v5353 = vunpack.c.l.b16 %v1195
    %v5354 = vunpack.c.h.b16 %v1195
    %v5355 = vunpack.c.l.b16 %v1196
    %v5356 = vunpack.c.h.b16 %v1196
    %v5357 = vunpack.c.l.b16 %v1197
    %v5358 = vunpack.c.l.b16 %v1198
    %v5359 = vunpack.c.h.b16 %v1198
    %v5360 = vunpack.c.l.b16 %v1199
    %v5361 = vunpack.c.h.b16 %v1199
    %v5362 = vunpack.c.l.b16 %v1200
    %v5363 = vunpack.c.l.b16 %v1201
    %v5364 = vunpack.c.h.b16 %v1201
    %v5365 = vunpack.c.l.b16 %v1202
    %v5366 = vunpack.c.h.b16 %v1202
    %v5367 = vunpack.c.l.b16 %v1203
    %v5368 = vunpack.c.l.b16 %v1204
    %v5369 = vunpack.c.h.b16 %v1204
    %v5370 = vunpack.c.l.b16 %v1205
    %v5371 = vunpack.c.h.b16 %v1205
    %v5372 = vunpack.c.l.b16 %v1206
    %v5373 = vunpack.c.l.b16 %v1207
    %v5374 = vunpack.c.h.b16 %v1207
    %v5375 = vunpack.c.l.b16 %v1208
    %v5376 = vunpack.c.h.b16 %v1208
    %v5377 = vunpack.c.l.b16 %v1209
    %v5378 = vunpack.c.l.b16 %v1210
    %v5379 = vunpack.c.h.b16 %v1210
    %v5380 = vunpack.c.l.b16 %v1211
    %v5381 = vunpack.c.h.b16 %v1211
    %v5382 = vunpack.c.l.b16 %v1212
    %v5383 = vunpack.c.l.b16 %v1213
    %v5384 = vunpack.c.h.b16 %v1213
    %v5385 = vunpack.c.l.b16 %v1214
    %v5386 = vunpack.c.h.b16 %v1214
    %v5387 = vunpack.c.l.b16 %v1215
    %v5388 = vunpack.c.l.b16 %v1216
    %v5389 = vunpack.c.h.b16 %v1216
    %v5390 = vunpack.c.l.b16 %v1217
    %v5391 = vunpack.c.h.b16 %v1217
    %v5392 = vunpack.c.l.b16 %v1218
    %v5393 = vunpack.c.l.b16 %v1219
    %v5394 = vunpack.c.h.b16 %v1219
    %v5395 = vunpack.c.l.b16 %v1220
    %v5396 = vunpack.c.h.b16 %v1220
    %v5397 = vunpack.c.l.b16 %v1221
    %v5398 = vunpack.c.l.b16 %v1222
    %v5399 = vunpack.c.h.b16 %v1222
    %v5400 = vunpack.c.l.b16 %v1223
    %v5401 = vunpack.c.h.b16 %v1223
    %v5402 = vunpack.c.l.b16 %v1224
    %v5403 = vunpack.c.l.b16 %v1225
    %v5404 = vunpack.c.h.b16 %v1225
    %v5405 = vunpack.c.l.b16 %v1226
    %v5406 = vunpack.c.h.b16 %v1226
    %v5407 = vunpack.c.l.b16 %v1227
    %v5408 = vunpack.c.l.b16 %v1228
    %v5409 = vunpack.c.h.b16 %v1228
    %v5410 = vunpack.c.l.b16 %v1229
    %v5411 = vunpack.c.h.b16 %v1229
    %v5412 = vunpack.c.l.b16 %v1230
    %v5413 = vunpack.c.l.b16 %v1231
    %v5414 = vunpack.c.h.b16 %v1231
    %v5415 = vunpack.c.l.b16 %v1232
    %v5416 = vunpack.c.h.b16 %v1232
    %v5417 = vunpack.c.l.b16 %v1233
    %v5418 = vunpack.c.l.b16 %v1234
    %v5419 = vunpack.c.h.b16 %v1234
    %v5420 = vunpack.c.l.b16 %v1235
    %v5421 = vunpack.c.h.b16 %v1235
    %v5422 = vunpack.c.l.b16 %v1236
    %v5423 = vunpack.c.l.b16 %v1237
    %v5424 = vunpack.c.h.b16 %v1237
    %v5425 = vunpack.c.l.b16 %v1238
    %v5426 = vunpack.c.h.b16 %v1238
    %v5427 = vunpack.c.l.b16 %v1239
    %v5428 = vunpack.c.l.b16 %v1240
    %v5429 = vunpack.c.h.b16 %v1240
    %v5430 = vunpack.c.l.b16 %v1241
    %v5431 = vunpack.c.h.b16 %v1241
    %v5432 = vunpack.c.l.b16 %v1242
    %v5433 = vunpack.c.l.b16 %v1243
    %v5434 = vunpack.c.h.b16 %v1243
    %v5435 = vunpack.c.l.b16 %v1244
    %v5436 = vunpack.c.h.b16 %v1244
    %v5437 = vunpack.c.l.b16 %v1245
    %v5438 = vunpack.c.l.b16 %v1246
    %v5439 = vunpack.c.h.b16 %v1246
    %v5440 = vunpack.c.l.b16 %v1247
    %v5441 = vunpack.c.h.b16 %v1247
    %v5442 = vunpack.c.l.b16 %v1248
    %v5443 = vunpack.c.l.b16 %v1249
    %v5444 = vunpack.c.h.b16 %v1249
    %v5445 = vunpack.c.l.b16 %v1250
    %v5446 = vunpack.c.h.b16 %v1250
    %v5447 = vunpack.c.l.b16 %v1251
    %v5448 = vunpack.c.l.b16 %v1252
    %v5449 = vunpack.c.h.b16 %v1252
    %v5450 = vunpack.c.l.b16 %v1253
    %v5451 = vunpack.c.h.b16 %v1253
    %v5452 = vunpack.c.l.b16 %v1254
    %v5453 = vunpack.c.l.b16 %v1255
    %v5454 = vunpack.c.h.b16 %v1255
    %v5455 = vunpack.c.l.b16 %v1256
    %v5456 = vunpack.c.h.b16 %v1256
    %v5457 = vunpack.c.l.b16 %v1257
    %v5458 = vunpack.c.l.b16 %v1258
    %v5459 = vunpack.c.h.b16 %v1258
    %v5460 = vunpack.c.l.b16 %v1259
    %v5461 = vunpack.c.h.b16 %v1259
    %v5462 = vunpack.c.l.b16 %v1260
    %v5463 = vunpack.c.l.b16 %v1261
    %v5464 = vunpack.c.h.b16 %v1261
    %v5465 = vunpack.c.l.b16 %v1262
    %v5466 = vunpack.c.h.b16 %v1262
    %v5467 = vunpack.c.l.b16 %v1263
    %v5468 = vunpack.c.l.b16 %v1264
    %v5469 = vunpack.c.h.b16 %v1264
    %v5470 = vunpack.c.l.b16 %v1265
    %v5471 = vunpack.c.h.b16 %v1265
    %v5472 = vunpack.c.l.b16 %v1266
    %v5473 = vunpack.c.l.b16 %v1267
    %v5474 = vunpack.c.h.b16 %v1267
    %v5475 = vunpack.c.l.b16 %v1268
    %v5476 = vunpack.c.h.b16 %v1268
    %v5477 = vunpack.c.l.b16 %v1269
    %v5478 = vunpack.c.l.b16 %v1270
    %v5479 = vunpack.c.h.b16 %v1270
    %v5480 = vunpack.c.l.b16 %v1271
    %v5481 = vunpack.c.h.b16 %v1271
    %v5482 = vunpack.c.l.b16 %v1272
    %v5483 = vunpack.c.l.b16 %v1273
    %v5484 = vunpack.c.h.b16 %v1273
    %v5485 = vunpack.c.l.b16 %v1274
    %v5486 = vunpack.c.h.b16 %v1274
    %v5487 = vunpack.c.l.b16 %v1275
    %v5488 = vunpack.c.l.b16 %v1276
    %v5489 = vunpack.c.h.b16 %v1276
    %v5490 = vunpack.c.l.b16 %v1277
    %v5491 = vunpack.c.h.b16 %v1277
    %v5492 = vunpack.c.l.b16 %v1278
    %v5493 = vunpack.c.l.b16 %v1279
    %v5494 = vunpack.c.h.b16 %v1279
    %v5495 = vunpack.c.l.b16 %v1280
    %v5496 = vunpack.c.h.b16 %v1280
    %v5497 = vunpack.c.l.b16 %v1281
    %v5498 = vunpack.c.l.b16 %v1282
    %v5499 = vunpack.c.h.b16 %v1282
    %v5500 = vunpack.c.l.b16 %v1283
    %v5501 = vunpack.c.h.b16 %v1283
    %v5502 = vunpack.c.l.b16 %v1284
    %v5503 = vunpack.c.l.b16 %v1285
    %v5504 = vunpack.c.h.b16 %v1285
    %v5505 = vunpack.c.l.b16 %v1286
    %v5506 = vunpack.c.h.b16 %v1286
    %v5507 = vunpack.c.l.b16 %v1287
    %v5508 = vunpack.c.l.b16 %v1288
    %v5509 = vunpack.c.h.b16 %v1288
    %v5510 = vunpack.c.l.b16 %v1289
    %v5511 = vunpack.c.h.b16 %v1289
    %v5512 = vunpack.c.l.b16 %v1290
    %v5513 = vunpack.c.l.b16 %v1291
    %v5514 = vunpack.c.h.b16 %v1291
    %v5515 = vunpack.c.l.b16 %v1292
    %v5516 = vunpack.c.h.b16 %v1292
    %v5517 = vunpack.c.l.b16 %v1293
    %v5518 = vunpack.c.l.b16 %v1294
    %v5519 = vunpack.c.h.b16 %v1294
    %v5520 = vunpack.c.l.b16 %v1295
    %v5521 = vunpack.c.h.b16 %v1295
    %v5522 = vunpack.c.l.b16 %v1296
    %v5523 = vunpack.c.l.b16 %v1297
    %v5524 = vunpack.c.h.b16 %v1297
    %v5525 = vunpack.c.l.b16 %v1298
    %v5526 = vunpack.c.h.b16 %v1298
    %v5527 = vunpack.c.l.b16 %v1299
    %v5528 = vunpack.c.l.b16 %v1300
    %v5529 = vunpack.c.h.b16 %v1300
    %v5530 = vunpack.c.l.b16 %v1301
    %v5531 = vunpack.c.h.b16 %v1301
    %v5532 = vunpack.c.l.b16 %v1302
    %v5533 = vunpack.c.l.b16 %v1303
    %v5534 = vunpack.c.h.b16 %v1303
    %v5535 = vunpack.c.l.b16 %v1304
    %v5536 = vunpack.c.h.b16 %v1304
    %v5537 = vunpack.c.l.b16 %v1305
    %v5538 = vunpack.c.l.b16 %v1306
    %v5539 = vunpack.c.h.b16 %v1306
    %v5540 = vunpack.c.l.b16 %v1307
    %v5541 = vunpack.c.h.b16 %v1307
    %v5542 = vunpack.c.l.b16 %v1308
    %v5543 = vunpack.c.l.b16 %v1309
    %v5544 = vunpack.c.h.b16 %v1309
    %v5545 = vunpack.c.l.b16 %v1310
    %v5546 = vunpack.c.h.b16 %v1310
    %v5547 = vunpack.c.l.b16 %v1311
    %v5548 = vunpack.c.l.b16 %v1312
    %v5549 = vunpack.c.h.b16 %v1312
    %v5550 = vunpack.c.l.b16 %v1313
    %v5551 = vunpack.c.h.b16 %v1313
    %v5552 = vunpack.c.l.b16 %v1314
    %v5553 = vunpack.c.l.b16 %v1315
    %v5554 = vunpack.c.h.b16 %v1315
    %v5555 = vunpack.c.l.b16 %v1316
    %v5556 = vunpack.c.h.b16 %v1316
    %v5557 = vunpack.c.l.b16 %v1317
    %v5558 = vunpack.c.l.b16 %v1318
    %v5559 = vunpack.c.h.b16 %v1318
    %v5560 = vunpack.c.l.b16 %v1319
    %v5561 = vunpack.c.h.b16 %v1319
    %v5562 = vunpack.c.l.b16 %v1320
    %v5563 = vunpack.c.l.b16 %v1321
    %v5564 = vunpack.c.h.b16 %v1321
    %v5565 = vunpack.c.l.b16 %v1322
    %v5566 = vunpack.c.h.b16 %v1322
    %v5567 = vunpack.c.l.b16 %v1323
    %v5568 = vunpack.c.l.b16 %v1324
    %v5569 = vunpack.c.h.b16 %v1324
    %v5570 = vunpack.c.l.b16 %v1325
    %v5571 = vunpack.c.h.b16 %v1325
    %v5572 = vunpack.c.l.b16 %v1326
    %v5573 = vunpack.c.l.b16 %v1327
    %v5574 = vunpack.c.h.b16 %v1327
    %v5575 = vunpack.c.l.b16 %v1328
    %v5576 = vunpack.c.h.b16 %v1328
    %v5577 = vunpack.c.l.b16 %v1329
    %v5578 = vunpack.c.l.b16 %v1330
    %v5579 = vunpack.c.h.b16 %v1330
    %v5580 = vunpack.c.l.b16 %v1331
    %v5581 = vunpack.c.h.b16 %v1331
    %v5582 = vunpack.c.l.b16 %v1332
    %v5583 = vunpack.c.l.b16 %v1333
    %v5584 = vunpack.c.h.b16 %v1333
    %v5585 = vunpack.c.l.b16 %v1334
    %v5586 = vunpack.c.h.b16 %v1334
    %v5587 = vunpack.c.l.b16 %v1335
    %v5588 = vunpack.c.l.b16 %v1336
    %v5589 = vunpack.c.h.b16 %v1336
    %v5590 = vunpack.c.l.b16 %v1337
    %v5591 = vunpack.c.h.b16 %v1337
    %v5592 = vunpack.c.l.b16 %v1338
    %v5593 = vunpack.c.l.b16 %v1339
    %v5594 = vunpack.c.h.b16 %v1339
    %v5595 = vunpack.c.l.b16 %v1340
    %v5596 = vunpack.c.h.b16 %v1340
    %v5597 = vunpack.c.l.b16 %v1341
    %v5598 = vunpack.c.l.b16 %v1342
    %v5599 = vunpack.c.h.b16 %v1342
    %v5600 = vunpack.c.l.b16 %v1343
    %v5601 = vunpack.c.h.b16 %v1343
    %v5602 = vunpack.c.l.b16 %v1344
    %v5603 = vunpack.c.l.b16 %v1345
    %v5604 = vunpack.c.h.b16 %v1345
    %v5605 = vunpack.c.l.b16 %v1346
    %v5606 = vunpack.c.h.b16 %v1346
    %v5607 = vunpack.c.l.b16 %v1347
    %v5608 = vunpack.c.l.b16 %v1348
    %v5609 = vunpack.c.h.b16 %v1348
    %v5610 = vunpack.c.l.b16 %v1349
    %v5611 = vunpack.c.h.b16 %v1349
    %v5612 = vunpack.c.l.b16 %v1350
    %v5613 = vunpack.c.l.b16 %v1351
    %v5614 = vunpack.c.h.b16 %v1351
    %v5615 = vunpack.c.l.b16 %v1352
    %v5616 = vunpack.c.h.b16 %v1352
    %v5617 = vunpack.c.l.b16 %v1353
    %v5618 = vunpack.c.l.b16 %v1354
    %v5619 = vunpack.c.h.b16 %v1354
    %v5620 = vunpack.c.l.b16 %v1355
    %v5621 = vunpack.c.h.b16 %v1355
    %v5622 = vunpack.c.l.b16 %v1356
    %v5623 = vunpack.c.l.b16 %v1357
    %v5624 = vunpack.c.h.b16 %v1357
    %v5625 = vunpack.c.l.b16 %v1358
    %v5626 = vunpack.c.h.b16 %v1358
    %v5627 = vunpack.c.l.b16 %v1359
    %v5628 = vunpack.c.l.b16 %v1360
    %v5629 = vunpack.c.h.b16 %v1360
    %v5630 = vunpack.c.l.b16 %v1361
    %v5631 = vunpack.c.h.b16 %v1361
    %v5632 = vunpack.c.l.b16 %v1362
    %v5633 = vunpack.c.l.b16 %v1363
    %v5634 = vunpack.c.h.b16 %v1363
    %v5635 = vunpack.c.l.b16 %v1364
    %v5636 = vunpack.c.h.b16 %v1364
    %v5637 = vunpack.c.l.b16 %v1365
    %v5638 = vunpack.c.l.b16 %v1366
    %v5639 = vunpack.c.h.b16 %v1366
    %v5640 = vunpack.c.l.b16 %v1367
    %v5641 = vunpack.c.h.b16 %v1367
    %v5642 = vunpack.c.l.b16 %v1368
    %v5643 = vunpack.c.l.b16 %v1369
    %v5644 = vunpack.c.h.b16 %v1369
    %v5645 = vunpack.c.l.b16 %v1370
    %v5646 = vunpack.c.h.b16 %v1370
    %v5647 = vunpack.c.l.b16 %v1371
    %v5648 = vunpack.c.l.b16 %v1372
    %v5649 = vunpack.c.h.b16 %v1372
    %v5650 = vunpack.c.l.b16 %v1373
    %v5651 = vunpack.c.h.b16 %v1373
    %v5652 = vunpack.c.l.b16 %v1374
    %v5653 = vunpack.c.l.b16 %v1375
    %v5654 = vunpack.c.h.b16 %v1375
    %v5655 = vunpack.c.l.b16 %v1376
    %v5656 = vunpack.c.h.b16 %v1376
    %v5657 = vunpack.c.l.b16 %v1377
    %v5658 = vunpack.c.l.b16 %v1378
    %v5659 = vunpack.c.h.b16 %v1378
    %v5660 = vunpack.c.l.b16 %v1379
    %v5661 = vunpack.c.h.b16 %v1379
    %v5662 = vunpack.c.l.b16 %v1380
    %v5663 = vunpack.c.l.b16 %v1381
    %v5664 = vunpack.c.h.b16 %v1381
    %v5665 = vunpack.c.l.b16 %v1382
    %v5666 = vunpack.c.h.b16 %v1382
    %v5667 = vunpack.c.l.b16 %v1383
    %v5668 = vunpack.c.l.b16 %v1384
    %v5669 = vunpack.c.h.b16 %v1384
    %v5670 = vunpack.c.l.b16 %v1385
    %v5671 = vunpack.c.h.b16 %v1385
    %v5672 = vunpack.c.l.b16 %v1386
    %v5673 = vunpack.c.l.b16 %v1387
    %v5674 = vunpack.c.h.b16 %v1387
    %v5675 = vunpack.c.l.b16 %v1388
    %v5676 = vunpack.c.h.b16 %v1388
    %v5677 = vunpack.c.l.b16 %v1389
    %v5678 = vunpack.c.l.b16 %v1390
    %v5679 = vunpack.c.h.b16 %v1390
    %v5680 = vunpack.c.l.b16 %v1391
    %v5681 = vunpack.c.h.b16 %v1391
    %v5682 = vunpack.c.l.b16 %v1392
    %v5683 = vunpack.c.l.b16 %v1393
    %v5684 = vunpack.c.h.b16 %v1393
    %v5685 = vunpack.c.l.b16 %v1394
    %v5686 = vunpack.c.h.b16 %v1394
    %v5687 = vunpack.c.l.b16 %v1395
    %v5688 = vunpack.c.l.b16 %v1396
    %v5689 = vunpack.c.h.b16 %v1396
    %v5690 = vunpack.c.l.b16 %v1397
    %v5691 = vunpack.c.h.b16 %v1397
    %v5692 = vunpack.c.l.b16 %v1398
    %v5693 = vunpack.c.l.b16 %v1399
    %v5694 = vunpack.c.h.b16 %v1399
    %v5695 = vunpack.c.l.b16 %v1400
    %v5696 = vunpack.c.h.b16 %v1400
    %v5697 = vunpack.c.l.b16 %v1401
    %v5698 = vunpack.c.l.b16 %v1402
    %v5699 = vunpack.c.h.b16 %v1402
    %v5700 = vunpack.c.l.b16 %v1403
    %v5701 = vunpack.c.h.b16 %v1403
    %v5702 = vunpack.c.l.b16 %v1404
    %v5703 = vunpack.c.l.b16 %v1405
    %v5704 = vunpack.c.h.b16 %v1405
    %v5705 = vunpack.c.l.b16 %v1406
    %v5706 = vunpack.c.h.b16 %v1406
    %v5707 = vunpack.c.l.b16 %v1407
    %v5708 = vunpack.c.l.b16 %v1408
    %v5709 = vunpack.c.h.b16 %v1408
    %v5710 = vunpack.c.l.b16 %v1409
    %v5711 = vunpack.c.h.b16 %v1409
    %v5712 = vunpack.c.l.b16 %v1410
    %v5713 = vunpack.c.l.b16 %v1411
    %v5714 = vunpack.c.h.b16 %v1411
    %v5715 = vunpack.c.l.b16 %v1412
    %v5716 = vunpack.c.h.b16 %v1412
    %v5717 = vunpack.c.l.b16 %v1413
    %v5718 = vunpack.c.l.b16 %v1414
    %v5719 = vunpack.c.h.b16 %v1414
    %v5720 = vunpack.c.l.b16 %v1415
    %v5721 = vunpack.c.h.b16 %v1415
    %v5722 = vunpack.c.l.b16 %v1416
    %v5723 = vunpack.c.l.b16 %v1417
    %v5724 = vunpack.c.h.b16 %v1417
    %v5725 = vunpack.c.l.b16 %v1418
    %v5726 = vunpack.c.h.b16 %v1418
    %v5727 = vunpack.c.l.b16 %v1419
    %v5728 = vunpack.c.l.b16 %v1420
    %v5729 = vunpack.c.h.b16 %v1420
    %v5730 = vunpack.c.l.b16 %v1421
    %v5731 = vunpack.c.h.b16 %v1421
    %v5732 = vunpack.c.l.b16 %v1422
    %v5733 = vunpack.c.l.b16 %v1423
    %v5734 = vunpack.c.h.b16 %v1423
    %v5735 = vunpack.c.l.b16 %v1424
    %v5736 = vunpack.c.h.b16 %v1424
    %v5737 = vunpack.c.l.b16 %v1425
    %v5738 = vunpack.c.l.b16 %v1426
    %v5739 = vunpack.c.h.b16 %v1426
    %v5740 = vunpack.c.l.b16 %v1427
    %v5741 = vunpack.c.h.b16 %v1427
    %v5742 = vunpack.c.l.b16 %v1428
    %v5743 = vunpack.c.l.b16 %v1429
    %v5744 = vunpack.c.h.b16 %v1429
    %v5745 = vunpack.c.l.b16 %v1430
    %v5746 = vunpack.c.h.b16 %v1430
    %v5747 = vunpack.c.l.b16 %v1431
    %v5748 = vunpack.c.l.b16 %v1432
    %v5749 = vunpack.c.h.b16 %v1432
    %v5750 = vunpack.c.l.b16 %v1433
    %v5751 = vunpack.c.h.b16 %v1433
    %v5752 = vunpack.c.l.b16 %v1434
    %v5753 = vunpack.c.l.b16 %v1435
    %v5754 = vunpack.c.h.b16 %v1435
    %v5755 = vunpack.c.l.b16 %v1436
    %v5756 = vunpack.c.h.b16 %v1436
    %v5757 = vunpack.c.l.b16 %v1437
    %v5758 = vunpack.c.l.b16 %v1438
    %v5759 = vunpack.c.h.b16 %v1438
    %v5760 = vunpack.c.l.b16 %v1439
    %v5761 = vunpack.c.h.b16 %v1439
    %v5762 = vunpack.c.l.b16 %v1440
    %v5763 = vunpack.c.l.b16 %v1441
    %v5764 = vunpack.c.h.b16 %v1441
    %v5765 = vunpack.c.l.b16 %v1442
    %v5766 = vunpack.c.h.b16 %v1442
    %v5767 = vunpack.c.l.b16 %v1443
    %v5768 = vunpack.c.l.b16 %v1444
    %v5769 = vunpack.c.h.b16 %v1444
    %v5770 = vunpack.c.l.b16 %v1445
    %v5771 = vunpack.c.h.b16 %v1445
    %v5772 = vunpack.c.l.b16 %v1446
    %v5773 = vunpack.c.l.b16 %v1447
    %v5774 = vunpack.c.h.b16 %v1447
    %v5775 = vunpack.c.l.b16 %v1448
    %v5776 = vunpack.c.h.b16 %v1448
    %v5777 = vunpack.c.l.b16 %v1449
    %v5778 = vunpack.c.l.b16 %v1450
    %v5779 = vunpack.c.h.b16 %v1450
    %v5780 = vunpack.c.l.b16 %v1451
    %v5781 = vunpack.c.h.b16 %v1451
    %v5782 = vunpack.c.l.b16 %v1452
    %v5783 = vunpack.c.l.b16 %v1453
    %v5784 = vunpack.c.h.b16 %v1453
    %v5785 = vunpack.c.l.b16 %v1454
    %v5786 = vunpack.c.h.b16 %v1454
    %v5787 = vunpack.c.l.b16 %v1455
    %v5788 = vunpack.c.l.b16 %v1456
    %v5789 = vunpack.c.h.b16 %v1456
    %v5790 = vunpack.c.l.b16 %v1457
    %v5791 = vunpack.c.h.b16 %v1457
    %v5792 = vunpack.c.l.b16 %v1458
    %v5793 = vunpack.c.l.b16 %v1459
    %v5794 = vunpack.c.h.b16 %v1459
    %v5795 = vunpack.c.l.b16 %v1460
    %v5796 = vunpack.c.h.b16 %v1460
    %v5797 = vunpack.c.l.b16 %v1461
    %v5798 = vunpack.c.l.b16 %v1462
    %v5799 = vunpack.c.h.b16 %v1462
    %v5800 = vunpack.c.l.b16 %v1463
    %v5801 = vunpack.c.h.b16 %v1463
    %v5802 = vunpack.c.l.b16 %v1464
    %v5803 = vunpack.c.l.b16 %v1465
    %v5804 = vunpack.c.h.b16 %v1465
    %v5805 = vunpack.c.l.b16 %v1466
    %v5806 = vunpack.c.h.b16 %v1466
    %v5807 = vunpack.c.l.b16 %v1467
    %v5808 = vunpack.c.l.b16 %v1468
    %v5809 = vunpack.c.h.b16 %v1468
    %v5810 = vunpack.c.l.b16 %v1469
    %v5811 = vunpack.c.h.b16 %v1469
    %v5812 = vunpack.c.l.b16 %v1470
    %v5813 = vunpack.c.l.b16 %v1471
    %v5814 = vunpack.c.h.b16 %v1471
    %v5815 = vunpack.c.l.b16 %v1472
    %v5816 = vunpack.c.h.b16 %v1472
    %v5817 = vunpack.c.l.b16 %v1473
    %v5818 = vunpack.c.l.b16 %v1474
    %v5819 = vunpack.c.h.b16 %v1474
    %v5820 = vunpack.c.l.b16 %v1475
    %v5821 = vunpack.c.h.b16 %v1475
    %v5822 = vunpack.c.l.b16 %v1476
    %v5823 = vunpack.c.l.b16 %v1477
    %v5824 = vunpack.c.h.b16 %v1477
    %v5825 = vunpack.c.l.b16 %v1478
    %v5826 = vunpack.c.h.b16 %v1478
    %v5827 = vunpack.c.l.b16 %v1479
    %v5828 = vunpack.c.l.b16 %v1480
    %v5829 = vunpack.c.h.b16 %v1480
    %v5830 = vunpack.c.l.b16 %v1481
    %v5831 = vunpack.c.h.b16 %v1481
    %v5832 = vunpack.c.l.b16 %v1482
    %v5833 = vunpack.c.l.b16 %v1483
    %v5834 = vunpack.c.h.b16 %v1483
    %v5835 = vunpack.c.l.b16 %v1484
    %v5836 = vunpack.c.h.b16 %v1484
    %v5837 = vunpack.c.l.b16 %v1485
    %v5838 = vunpack.c.l.b16 %v1486
    %v5839 = vunpack.c.h.b16 %v1486
    %v5840 = vunpack.c.l.b16 %v1487
    %v5841 = vunpack.c.h.b16 %v1487
    %v5842 = vunpack.c.l.b16 %v1488
    %v5843 = vunpack.c.l.b16 %v1489
    %v5844 = vunpack.c.h.b16 %v1489
    %v5845 = vunpack.c.l.b16 %v1490
    %v5846 = vunpack.c.h.b16 %v1490
    %v5847 = vunpack.c.l.b16 %v1491
    %v5848 = vunpack.c.l.b16 %v1492
    %v5849 = vunpack.c.h.b16 %v1492
    %v5850 = vunpack.c.l.b16 %v1493
    %v5851 = vunpack.c.h.b16 %v1493
    %v5852 = vunpack.c.l.b16 %v1494
    %v5853 = vunpack.c.l.b16 %v1495
    %v5854 = vunpack.c.h.b16 %v1495
    %v5855 = vunpack.c.l.b16 %v1496
    %v5856 = vunpack.c.h.b16 %v1496
    %v5857 = vunpack.c.l.b16 %v1497
    %v5858 = vunpack.c.l.b16 %v1498
    %v5859 = vunpack.c.h.b16 %v1498
    %v5860 = vunpack.c.l.b16 %v1499
    %v5861 = vunpack.c.h.b16 %v1499
    %v5862 = vunpack.c.l.b16 %v1500
    %v5863 = vunpack.c.l.b16 %v1501
    %v5864 = vunpack.c.h.b16 %v1501
    %v5865 = vunpack.c.l.b16 %v1502
    %v5866 = vunpack.c.h.b16 %v1502
    %v5867 = vunpack.c.l.b16 %v1503
    %v5868 = vunpack.c.l.b16 %v1504
    %v5869 = vunpack.c.h.b16 %v1504
    %v5870 = vunpack.c.l.b16 %v1505
    %v5871 = vunpack.c.h.b16 %v1505
    %v5872 = vunpack.c.l.b16 %v1506
    %v5873 = vunpack.c.l.b16 %v1507
    %v5874 = vunpack.c.h.b16 %v1507
    %v5875 = vunpack.c.l.b16 %v1508
    %v5876 = vunpack.c.h.b16 %v1508
    %v5877 = vunpack.c.l.b16 %v1509
    %v5878 = vunpack.c.l.b16 %v1510
    %v5879 = vunpack.c.h.b16 %v1510
    %v5880 = vunpack.c.l.b16 %v1511
    %v5881 = vunpack.c.h.b16 %v1511
    %v5882 = vunpack.c.l.b16 %v1512
    %v5883 = vunpack.c.l.b16 %v1513
    %v5884 = vunpack.c.h.b16 %v1513
    %v5885 = vunpack.c.l.b16 %v1514
    %v5886 = vunpack.c.h.b16 %v1514
    %v5887 = vunpack.c.l.b16 %v1515
    %v5888 = vunpack.c.l.b16 %v1516
    %v5889 = vunpack.c.h.b16 %v1516
    %v5890 = vunpack.c.l.b16 %v1517
    %v5891 = vunpack.c.h.b16 %v1517
    %v5892 = vunpack.c.l.b16 %v1518
    %v5893 = vunpack.c.l.b16 %v1519
    %v5894 = vunpack.c.h.b16 %v1519
    %v5895 = vunpack.c.l.b16 %v1520
    %v5896 = vunpack.c.h.b16 %v1520
    %v5897 = vunpack.c.l.b16 %v1521
    %v5898 = vunpack.c.l.b16 %v1522
    %v5899 = vunpack.c.h.b16 %v1522
    %v5900 = vunpack.c.l.b16 %v1523
    %v5901 = vunpack.c.h.b16 %v1523
    %v5902 = vunpack.c.l.b16 %v1524
    %v5903 = vunpack.c.l.b16 %v1525
    %v5904 = vunpack.c.h.b16 %v1525
    %v5905 = vunpack.c.l.b16 %v1526
    %v5906 = vunpack.c.h.b16 %v1526
    %v5907 = vunpack.c.l.b16 %v1527
    %v5908 = vunpack.c.l.b16 %v1528
    %v5909 = vunpack.c.h.b16 %v1528
    %v5910 = vunpack.c.l.b16 %v1529
    %v5911 = vunpack.c.h.b16 %v1529
    %v5912 = vunpack.c.l.b16 %v1530
    %v5913 = vunpack.c.l.b16 %v1531
    %v5914 = vunpack.c.h.b16 %v1531
    %v5915 = vunpack.c.l.b16 %v1532
    %v5916 = vunpack.c.h.b16 %v1532
    %v5917 = vunpack.c.l.b16 %v1533
    %v5918 = vunpack.c.l.b16 %v1534
    %v5919 = vunpack.c.h.b16 %v1534
    %v5920 = vunpack.c.l.b16 %v1535
    %v5921 = vunpack.c.h.b16 %v1535
    %v5922 = vunpack.c.l.b16 %v1536
    %v5923 = vunpack.c.l.b16 %v1537
    %v5924 = vunpack.c.h.b16 %v1537
    %v5925 = vunpack.c.l.b16 %v1538
    %v5926 = vunpack.c.h.b16 %v1538
    %v5927 = vunpack.c.l.b16 %v1539
    %v5928 = vunpack.c.l.b16 %v1540
    %v5929 = vunpack.c.h.b16 %v1540
    %v5930 = vunpack.c.l.b16 %v1541
    %v5931 = vunpack.c.h.b16 %v1541
    %v5932 = vunpack.c.l.b16 %v1542
    %v5933 = vunpack.c.l.b16 %v1543
    %v5934 = vunpack.c.h.b16 %v1543
    %v5935 = vunpack.c.l.b16 %v1544
    %v5936 = vunpack.c.h.b16 %v1544
    %v5937 = vunpack.c.l.b16 %v1545
    %v5938 = vunpack.c.l.b16 %v1546
    %v5939 = vunpack.c.h.b16 %v1546
    %v5940 = vunpack.c.l.b16 %v1547
    %v5941 = vunpack.c.h.b16 %v1547
    %v5942 = vunpack.c.l.b16 %v1548
    %v5943 = vunpack.c.l.b16 %v1549
    %v5944 = vunpack.c.h.b16 %v1549
    %v5945 = vunpack.c.l.b16 %v1550
    %v5946 = vunpack.c.h.b16 %v1550
    %v5947 = vunpack.c.l.b16 %v1551
    %v5948 = vunpack.c.l.b16 %v1552
    %v5949 = vunpack.c.h.b16 %v1552
    %v5950 = vunpack.c.l.b16 %v1553
    %v5951 = vunpack.c.h.b16 %v1553
    %v5952 = vunpack.c.l.b16 %v1554
    %v5953 = vunpack.c.l.b16 %v1555
    %v5954 = vunpack.c.h.b16 %v1555
    %v5955 = vunpack.c.l.b16 %v1556
    %v5956 = vunpack.c.h.b16 %v1556
    %v5957 = vunpack.c.l.b16 %v1557
    %v5958 = vunpack.c.l.b16 %v1558
    %v5959 = vunpack.c.h.b16 %v1558
    %v5960 = vunpack.c.l.b16 %v1559
    %v5961 = vunpack.c.h.b16 %v1559
    %v5962 = vunpack.c.l.b16 %v1560
    %v5963 = vunpack.c.l.b16 %v1561
    %v5964 = vunpack.c.h.b16 %v1561
    %v5965 = vunpack.c.l.b16 %v1562
    %v5966 = vunpack.c.h.b16 %v1562
    %v5967 = vunpack.c.l.b16 %v1563
    %v5968 = vunpack.c.l.b16 %v1564
    %v5969 = vunpack.c.h.b16 %v1564
    %v5970 = vunpack.c.l.b16 %v1565
    %v5971 = vunpack.c.h.b16 %v1565
    %v5972 = vunpack.c.l.b16 %v1566
    %v5973 = vunpack.c.l.b16 %v1567
    %v5974 = vunpack.c.h.b16 %v1567
    %v5975 = vunpack.c.l.b16 %v1568
    %v5976 = vunpack.c.h.b16 %v1568
    %v5977 = vunpack.c.l.b16 %v1569
    %v5978 = vunpack.c.l.b16 %v1570
    %v5979 = vunpack.c.h.b16 %v1570
    %v5980 = vunpack.c.l.b16 %v1571
    %v5981 = vunpack.c.h.b16 %v1571
    %v5982 = vunpack.c.l.b16 %v1572
    %v5983 = vunpack.c.l.b16 %v1573
    %v5984 = vunpack.c.h.b16 %v1573
    %v5985 = vunpack.c.l.b16 %v1574
    %v5986 = vunpack.c.h.b16 %v1574
    %v5987 = vunpack.c.l.b16 %v1575
    %v5988 = vunpack.c.l.b16 %v1576
    %v5989 = vunpack.c.h.b16 %v1576
    %v5990 = vunpack.c.l.b16 %v1577
    %v5991 = vunpack.c.h.b16 %v1577
    %v5992 = vunpack.c.l.b16 %v1578
    %v5993 = vunpack.c.l.b16 %v1579
    %v5994 = vunpack.c.h.b16 %v1579
    %v5995 = vunpack.c.l.b16 %v1580
    %v5996 = vunpack.c.h.b16 %v1580
    %v5997 = vunpack.c.l.b16 %v1581
    %v5998 = vunpack.c.l.b16 %v1582
    %v5999 = vunpack.c.h.b16 %v1582
    %v6000 = vunpack.c.l.b16 %v1583
    %v6001 = vunpack.c.h.b16 %v1583
    %v6002 = vunpack.c.l.b16 %v1584
    %v6003 = vunpack.c.l.b16 %v1585
    %v6004 = vunpack.c.h.b16 %v1585
    %v6005 = vunpack.c.l.b16 %v1586
    %v6006 = vunpack.c.h.b16 %v1586
    %v6007 = vunpack.c.l.b16 %v1587
    %v6008 = vunpack.c.l.b16 %v1588
    %v6009 = vunpack.c.h.b16 %v1588
    %v6010 = vunpack.c.l.b16 %v1589
    %v6011 = vunpack.c.h.b16 %v1589
    %v6012 = vunpack.c.l.b16 %v1590
    %v6013 = vunpack.c.l.b16 %v1591
    %v6014 = vunpack.c.h.b16 %v1591
    %v6015 = vunpack.c.l.b16 %v1592
    %v6016 = vunpack.c.h.b16 %v1592
    %v6017 = vunpack.c.l.b16 %v1593
    %v6018 = vunpack.c.l.b16 %v1594
    %v6019 = vunpack.c.h.b16 %v1594
    %v6020 = vunpack.c.l.b16 %v1595
    %v6021 = vunpack.c.h.b16 %v1595
    %v6022 = vunpack.c.l.b16 %v1596
    %v6023 = vunpack.c.l.b16 %v1597
    %v6024 = vunpack.c.h.b16 %v1597
    %v6025 = vunpack.c.l.b16 %v1598
    %v6026 = vunpack.c.h.b16 %v1598
    %v6027 = vunpack.c.l.b16 %v1599
    %v6028 = vunpack.c.l.b16 %v1600
    %v6029 = vunpack.c.h.b16 %v1600
    %v6030 = vunpack.c.l.b16 %v1601
    %v6031 = vunpack.c.h.b16 %v1601
    %v6032 = vunpack.c.l.b16 %v1602
    %v6033 = vunpack.c.l.b16 %v1603
    %v6034 = vunpack.c.h.b16 %v1603
    %v6035 = vunpack.c.l.b16 %v1604
    %v6036 = vunpack.c.h.b16 %v1604
    %v6037 = vunpack.c.l.b16 %v1605
    %v6038 = vunpack.c.l.b16 %v1606
    %v6039 = vunpack.c.h.b16 %v1606
    %v6040 = vunpack.c.l.b16 %v1607
    %v6041 = vunpack.c.h.b16 %v1607
    %v6042 = vunpack.c.l.b16 %v1608
    %v6043 = vunpack.c.l.b16 %v1609
    %v6044 = vunpack.c.h.b16 %v1609
    %v6045 = vunpack.c.l.b16 %v1610
    %v6046 = vunpack.c.h.b16 %v1610
    %v6047 = vunpack.c.l.b16 %v1611
    %v6048 = vunpack.c.l.b16 %v1612
    %v6049 = vunpack.c.h.b16 %v1612
    %v6050 = vunpack.c.l.b16 %v1613
    %v6051 = vunpack.c.h.b16 %v1613
    %v6052 = vunpack.c.l.b16 %v1614
    %v6053 = vunpack.c.l.b16 %v1615
    %v6054 = vunpack.c.h.b16 %v1615
    %v6055 = vunpack.c.l.b16 %v1616
    %v6056 = vunpack.c.h.b16 %v1616
    %v6057 = vunpack.c.l.b16 %v1617
    %v6058 = vunpack.c.l.b16 %v1618
    %v6059 = vunpack.c.h.b16 %v1618
    %v6060 = vunpack.c.l.b16 %v1619
    %v6061 = vunpack.c.h.b16 %v1619
    %v6062 = vunpack.c.l.b16 %v1620
    %v6063 = vunpack.c.l.b16 %v1621
    %v6064 = vunpack.c.h.b16 %v1621
    %v6065 = vunpack.c.l.b16 %v1622
    %v6066 = vunpack.c.h.b16 %v1622
    %v6067 = vunpack.c.l.b16 %v1623
    %v6068 = vunpack.c.l.b16 %v1624
    %v6069 = vunpack.c.h.b16 %v1624
    %v6070 = vunpack.c.l.b16 %v1625
    %v6071 = vunpack.c.h.b16 %v1625
    %v6072 = vunpack.c.l.b16 %v1626
    %v6073 = vunpack.c.l.b16 %v1627
    %v6074 = vunpack.c.h.b16 %v1627
    %v6075 = vunpack.c.l.b16 %v1628
    %v6076 = vunpack.c.h.b16 %v1628
    %v6077 = vunpack.c.l.b16 %v1629
    %v6078 = vunpack.c.l.b16 %v1630
    %v6079 = vunpack.c.h.b16 %v1630
    %v6080 = vunpack.c.l.b16 %v1631
    %v6081 = vunpack.c.h.b16 %v1631
    %v6082 = vunpack.c.l.b16 %v1632
    %v6083 = vunpack.c.l.b16 %v1633
    %v6084 = vunpack.c.h.b16 %v1633
    %v6085 = vunpack.c.l.b16 %v1634
    %v6086 = vunpack.c.h.b16 %v1634
    %v6087 = vunpack.c.l.b16 %v1635
    %v6088 = vunpack.c.l.b16 %v1636
    %v6089 = vunpack.c.h.b16 %v1636
    %v6090 = vunpack.c.l.b16 %v1637
    %v6091 = vunpack.c.h.b16 %v1637
    %v6092 = vunpack.c.l.b16 %v1638
    %v6093 = vunpack.c.l.b16 %v1639
    %v6094 = vunpack.c.h.b16 %v1639
    %v6095 = vunpack.c.l.b16 %v1640
    %v6096 = vunpack.c.h.b16 %v1640
    %v6097 = vunpack.c.l.b16 %v1641
    %v6098 = vunpack.c.l.b16 %v1642
    %v6099 = vunpack.c.h.b16 %v1642
    %v6100 = vunpack.c.l.b16 %v1643
    %v6101 = vunpack.c.h.b16 %v1643
    %v6102 = vunpack.c.l.b16 %v1644
    %v6103 = vunpack.c.l.b16 %v1645
    %v6104 = vunpack.c.h.b16 %v1645
    %v6105 = vunpack.c.l.b16 %v1646
    %v6106 = vunpack.c.h.b16 %v1646
    %v6107 = vunpack.c.l.b16 %v1647
    %v6108 = vunpack.c.l.b16 %v1648
    %v6109 = vunpack.c.h.b16 %v1648
    %v6110 = vunpack.c.l.b16 %v1649
    %v6111 = vunpack.c.h.b16 %v1649
    %v6112 = vunpack.c.l.b16 %v1650
    %v6113 = vunpack.c.l.b16 %v1651
    %v6114 = vunpack.c.h.b16 %v1651
    %v6115 = vunpack.c.l.b16 %v1652
    %v6116 = vunpack.c.h.b16 %v1652
    %v6117 = vunpack.c.l.b16 %v1653
    %v6118 = vunpack.c.l.b16 %v1654
    %v6119 = vunpack.c.h.b16 %v1654
    %v6120 = vunpack.c.l.b16 %v1655
    %v6121 = vunpack.c.h.b16 %v1655
    %v6122 = vunpack.c.l.b16 %v1656
    %v6123 = vunpack.c.l.b16 %v1657
    %v6124 = vunpack.c.h.b16 %v1657
    %v6125 = vunpack.c.l.b16 %v1658
    %v6126 = vunpack.c.h.b16 %v1658
    %v6127 = vunpack.c.l.b16 %v1659
    %v6128 = vunpack.c.l.b16 %v1660
    %v6129 = vunpack.c.h.b16 %v1660
    %v6130 = vunpack.c.l.b16 %v1661
    %v6131 = vunpack.c.h.b16 %v1661
    %v6132 = vunpack.c.l.b16 %v1662
    %v6133 = vunpack.c.l.b16 %v1663
    %v6134 = vunpack.c.h.b16 %v1663
    %v6135 = vunpack.c.l.b16 %v1664
    %v6136 = vunpack.c.h.b16 %v1664
    %v6137 = vunpack.c.l.b16 %v1665
    %v6138 = vunpack.c.l.b16 %v1666
    %v6139 = vunpack.c.h.b16 %v1666
    %v6140 = vunpack.c.l.b16 %v1667
    %v6141 = vunpack.c.h.b16 %v1667
    %v6142 = vunpack.c.l.b16 %v1668
    %v6143 = vunpack.c.l.b16 %v1669
    %v6144 = vunpack.c.h.b16 %v1669
    %v6145 = vunpack.c.l.b16 %v1670
    %v6146 = vunpack.c.h.b16 %v1670
    %v6147 = vunpack.c.l.b16 %v1671
    %v6148 = vunpack.c.l.b16 %v1672
    %v6149 = vunpack.c.h.b16 %v1672
    %v6150 = vunpack.c.l.b16 %v1673
    %v6151 = vunpack.c.h.b16 %v1673
    %v6152 = vunpack.c.l.b16 %v1674
    %v6153 = vunpack.c.l.b16 %v1675
    %v6154 = vunpack.c.h.b16 %v1675
    %v6155 = vunpack.c.l.b16 %v1676
    %v6156 = vunpack.c.h.b16 %v1676
    %v6157 = vunpack.c.l.b16 %v1677
    %v6158 = vunpack.c.l.b16 %v1678
    %v6159 = vunpack.c.h.b16 %v1678
    %v6160 = vunpack.c.l.b16 %v1679
    %v6161 = vunpack.c.h.b16 %v1679
    %v6162 = vunpack.c.l.b16 %v1680
    %v6163 = vunpack.c.l.b16 %v1681
    %v6164 = vunpack.c.h.b16 %v1681
    %v6165 = vunpack.c.l.b16 %v1682
    %v6166 = vunpack.c.h.b16 %v1682
    %v6167 = vunpack.c.l.b16 %v1683
    %v6168 = vunpack.c.l.b16 %v1684
    %v6169 = vunpack.c.h.b16 %v1684
    %v6170 = vunpack.c.l.b16 %v1685
    %v6171 = vunpack.c.h.b16 %v1685
    %v6172 = vunpack.c.l.b16 %v1686
    %v6173 = vunpack.c.l.b16 %v1687
    %v6174 = vunpack.c.h.b16 %v1687
    %v6175 = vunpack.c.l.b16 %v1688
    %v6176 = vunpack.c.h.b16 %v1688
    %v6177 = vunpack.c.l.b16 %v1689
    %v6178 = vunpack.c.l.b16 %v1690
    %v6179 = vunpack.c.h.b16 %v1690
    %v6180 = vunpack.c.l.b16 %v1691
    %v6181 = vunpack.c.h.b16 %v1691
    %v6182 = vunpack.c.l.b16 %v1692
    %v6183 = vunpack.c.l.b16 %v1693
    %v6184 = vunpack.c.h.b16 %v1693
    %v6185 = vunpack.c.l.b16 %v1694
    %v6186 = vunpack.c.h.b16 %v1694
    %v6187 = vunpack.c.l.b16 %v1695
    %v6188 = vunpack.c.l.b16 %v1696
    %v6189 = vunpack.c.h.b16 %v1696
    %v6190 = vunpack.c.l.b16 %v1697
    %v6191 = vunpack.c.h.b16 %v1697
    %v6192 = vunpack.c.l.b16 %v1698
    %v6193 = vunpack.c.l.b16 %v1699
    %v6194 = vunpack.c.h.b16 %v1699
    %v6195 = vunpack.c.l.b16 %v1700
    %v6196 = vunpack.c.h.b16 %v1700
    %v6197 = vunpack.c.l.b16 %v1701
    %v6198 = vunpack.c.l.b16 %v1702
    %v6199 = vunpack.c.h.b16 %v1702
    %v6200 = vunpack.c.l.b16 %v1703
    %v6201 = vunpack.c.h.b16 %v1703
    %v6202 = vunpack.c.l.b16 %v1704
    %v6203 = vunpack.c.l.b16 %v1705
    %v6204 = vunpack.c.h.b16 %v1705
    %v6205 = vunpack.c.l.b16 %v1706
    %v6206 = vunpack.c.h.b16 %v1706
    %v6207 = vunpack.c.l.b16 %v1707
    %v6208 = vunpack.c.l.b16 %v1708
    %v6209 = vunpack.c.h.b16 %v1708
    %v6210 = vunpack.c.l.b16 %v1709
    %v6211 = vunpack.c.h.b16 %v1709
    %v6212 = vunpack.c.l.b16 %v1710
    %v6213 = vunpack.c.l.b16 %v1711
    %v6214 = vunpack.c.h.b16 %v1711
    %v6215 = vunpack.c.l.b16 %v1712
    %v6216 = vunpack.c.h.b16 %v1712
    %v6217 = vunpack.c.l.b16 %v1713
    %v6218 = vunpack.c.l.b16 %v1714
    %v6219 = vunpack.c.h.b16 %v1714
    %v6220 = vunpack.c.l.b16 %v1715
    %v6221 = vunpack.c.h.b16 %v1715
    %v6222 = vunpack.c.l.b16 %v1716
    %v6223 = vunpack.c.l.b16 %v1717
    %v6224 = vunpack.c.h.b16 %v1717
    %v6225 = vunpack.c.l.b16 %v1718
    %v6226 = vunpack.c.h.b16 %v1718
    %v6227 = vunpack.c.l.b16 %v1719
    %v6228 = vunpack.c.l.b16 %v1720
    %v6229 = vunpack.c.h.b16 %v1720
    %v6230 = vunpack.c.l.b16 %v1721
    %v6231 = vunpack.c.h.b16 %v1721
    %v6232 = vunpack.c.l.b16 %v1722
    %v6233 = vunpack.c.l.b16 %v1723
    %v6234 = vunpack.c.h.b16 %v1723
    %v6235 = vunpack.c.l.b16 %v1724
    %v6236 = vunpack.c.h.b16 %v1724
    %v6237 = vunpack.c.l.b16 %v1725
    %v6238 = vunpack.c.l.b16 %v1726
    %v6239 = vunpack.c.h.b16 %v1726
    %v6240 = vunpack.c.l.b16 %v1727
    %v6241 = vunpack.c.h.b16 %v1727
    %v6242 = vunpack.c.l.b16 %v1728
    %v6243 = vunpack.c.l.b16 %v1729
    %v6244 = vunpack.c.h.b16 %v1729
    %v6245 = vunpack.c.l.b16 %v1730
    %v6246 = vunpack.c.h.b16 %v1730
    %v6247 = vunpack.c.l.b16 %v1731
    %v6248 = vunpack.c.l.b16 %v1732
    %v6249 = vunpack.c.h.b16 %v1732
    %v6250 = vunpack.c.l.b16 %v1733
    %v6251 = vunpack.c.h.b16 %v1733
    %v6252 = vunpack.c.l.b16 %v1734
    %v6253 = vunpack.c.l.b16 %v1735
    %v6254 = vunpack.c.h.b16 %v1735
    %v6255 = vunpack.c.l.b16 %v1736
    %v6256 = vunpack.c.h.b16 %v1736
    %v6257 = vunpack.c.l.b16 %v1737
    %v6258 = vunpack.c.l.b16 %v1738
    %v6259 = vunpack.c.h.b16 %v1738
    %v6260 = vunpack.c.l.b16 %v1739
    %v6261 = vunpack.c.h.b16 %v1739
    %v6262 = vunpack.c.l.b16 %v1740
    %v6263 = vunpack.c.l.b16 %v1741
    %v6264 = vunpack.c.h.b16 %v1741
    %v6265 = vunpack.c.l.b16 %v1742
    %v6266 = vunpack.c.h.b16 %v1742
    %v6267 = vunpack.c.l.b16 %v1743
    %v6268 = vunpack.c.l.b16 %v1744
    %v6269 = vunpack.c.h.b16 %v1744
    %v6270 = vunpack.c.l.b16 %v1745
    %v6271 = vunpack.c.h.b16 %v1745
    %v6272 = vunpack.c.l.b16 %v1746
    %v6273 = vunpack.c.l.b16 %v1747
    %v6274 = vunpack.c.h.b16 %v1747
    %v6275 = vunpack.c.l.b16 %v1748
    %v6276 = vunpack.c.h.b16 %v1748
    %v6277 = vunpack.c.l.b16 %v1749
    %v6278 = vunpack.c.l.b16 %v1750
    %v6279 = vunpack.c.h.b16 %v1750
    %v6280 = vunpack.c.l.b16 %v1751
    %v6281 = vunpack.c.h.b16 %v1751
    %v6282 = vunpack.c.l.b16 %v1752
    %v6283 = vunpack.c.l.b16 %v1753
    %v6284 = vunpack.c.h.b16 %v1753
    %v6285 = vunpack.c.l.b16 %v1754
    %v6286 = vunpack.c.h.b16 %v1754
    %v6287 = vunpack.c.l.b16 %v1755
    %v6288 = vunpack.c.l.b16 %v1756
    %v6289 = vunpack.c.h.b16 %v1756
    %v6290 = vunpack.c.l.b16 %v1757
    %v6291 = vunpack.c.h.b16 %v1757
    %v6292 = vunpack.c.l.b16 %v1758
    %v6293 = vunpack.c.l.b16 %v1759
    %v6294 = vunpack.c.h.b16 %v1759
    %v6295 = vunpack.c.l.b16 %v1760
    %v6296 = vunpack.c.h.b16 %v1760
    %v6297 = vunpack.c.l.b16 %v1761
    %v6298 = vunpack.c.l.b16 %v1762
    %v6299 = vunpack.c.h.b16 %v1762
    %v6300 = vunpack.c.l.b16 %v1763
    %v6301 = vunpack.c.h.b16 %v1763
    %v6302 = vunpack.c.l.b16 %v1764
    %v6303 = vunpack.c.l.b16 %v1765
    %v6304 = vunpack.c.h.b16 %v1765
    %v6305 = vunpack.c.l.b16 %v1766
    %v6306 = vunpack.c.h.b16 %v1766
    %v6307 = vunpack.c.l.b16 %v1767
    %v6308 = vunpack.c.l.b16 %v1768
    %v6309 = vunpack.c.h.b16 %v1768
    %v6310 = vunpack.c.l.b16 %v1769
    %v6311 = vunpack.c.h.b16 %v1769
    %v6312 = vunpack.c.l.b16 %v1770
    %v6313 = vunpack.c.l.b16 %v1771
    %v6314 = vunpack.c.h.b16 %v1771
    %v6315 = vunpack.c.l.b16 %v1772
    %v6316 = vunpack.c.h.b16 %v1772
    %v6317 = vunpack.c.l.b16 %v1773
    %v6318 = vunpack.c.l.b16 %v1774
    %v6319 = vunpack.c.h.b16 %v1774
    %v6320 = vunpack.c.l.b16 %v1775
    %v6321 = vunpack.c.h.b16 %v1775
    %v6322 = vunpack.c.l.b16 %v1776
    %v6323 = vunpack.c.l.b16 %v1777
    %v6324 = vunpack.c.h.b16 %v1777
    %v6325 = vunpack.c.l.b16 %v1778
    %v6326 = vunpack.c.h.b16 %v1778
    %v6327 = vunpack.c.l.b16 %v1779
    %v6328 = vunpack.c.l.b16 %v1780
    %v6329 = vunpack.c.h.b16 %v1780
    %v6330 = vunpack.c.l.b16 %v1781
    %v6331 = vunpack.c.h.b16 %v1781
    %v6332 = vunpack.c.l.b16 %v1782
    %v6333 = vunpack.c.l.b16 %v1783
    %v6334 = vunpack.c.h.b16 %v1783
    %v6335 = vunpack.c.l.b16 %v1784
    %v6336 = vunpack.c.h.b16 %v1784
    %v6337 = vunpack.c.l.b16 %v1785
    %v6338 = vunpack.c.l.b16 %v1786
    %v6339 = vunpack.c.h.b16 %v1786
    %v6340 = vunpack.c.l.b16 %v1787
    %v6341 = vunpack.c.h.b16 %v1787
    %v6342 = vunpack.c.l.b16 %v1788
    %v6343 = vunpack.c.l.b16 %v1789
    %v6344 = vunpack.c.h.b16 %v1789
    %v6345 = vunpack.c.l.b16 %v1790
    %v6346 = vunpack.c.h.b16 %v1790
    %v6347 = vunpack.c.l.b16 %v1791
    %v6348 = vunpack.c.l.b16 %v1792
    %v6349 = vunpack.c.h.b16 %v1792
    %v6350 = vunpack.c.l.b16 %v1793
    %v6351 = vunpack.c.h.b16 %v1793
    %v6352 = vunpack.c.l.b16 %v1794
    %v6353 = vunpack.c.l.b16 %v1795
    %v6354 = vunpack.c.h.b16 %v1795
    %v6355 = vunpack.c.l.b16 %v1796
    %v6356 = vunpack.c.h.b16 %v1796
    %v6357 = vunpack.c.l.b16 %v1797
    %v6358 = vunpack.c.l.b16 %v1798
    %v6359 = vunpack.c.h.b16 %v1798
    %v6360 = vunpack.c.l.b16 %v1799
    %v6361 = vunpack.c.h.b16 %v1799
    %v6362 = vunpack.c.l.b16 %v1800
    %v6363 = vunpack.c.l.b16 %v1801
    %v6364 = vunpack.c.h.b16 %v1801
    %v6365 = vunpack.c.l.b16 %v1802
    %v6366 = vunpack.c.h.b16 %v1802
    %v6367 = vunpack.c.l.b16 %v1803
    %v6368 = vunpack.c.l.b16 %v1804
    %v6369 = vunpack.c.h.b16 %v1804
    %v6370 = vunpack.c.l.b16 %v1805
    %v6371 = vunpack.c.h.b16 %v1805
    %v6372 = vunpack.c.l.b16 %v1806
    %v6373 = vunpack.c.l.b16 %v1807
    %v6374 = vunpack.c.h.b16 %v1807
    %v6375 = vunpack.c.l.b16 %v1808
    %v6376 = vunpack.c.h.b16 %v1808
    %v6377 = vunpack.c.l.b16 %v1809
    %v6378 = vunpack.c.l.b16 %v1810
    %v6379 = vunpack.c.h.b16 %v1810
    %v6380 = vunpack.c.l.b16 %v1811
    %v6381 = vunpack.c.h.b16 %v1811
    %v6382 = vunpack.c.l.b16 %v1812
    %v6383 = vunpack.c.l.b16 %v1813
    %v6384 = vunpack.c.h.b16 %v1813
    %v6385 = vunpack.c.l.b16 %v1814
    %v6386 = vunpack.c.h.b16 %v1814
    %v6387 = vunpack.c.l.b16 %v1815
    %v6388 = vunpack.c.l.b16 %v1816
    %v6389 = vunpack.c.h.b16 %v1816
    %v6390 = vunpack.c.l.b16 %v1817
    %v6391 = vunpack.c.h.b16 %v1817
    %v6392 = vunpack.c.l.b16 %v1818
    %v6393 = vunpack.c.l.b16 %v1819
    %v6394 = vunpack.c.h.b16 %v1819
    %v6395 = vunpack.c.l.b16 %v1820
    %v6396 = vunpack.c.h.b16 %v1820
    %v6397 = vunpack.c.l.b16 %v1821
    %v6398 = vunpack.c.l.b16 %v1822
    %v6399 = vunpack.c.h.b16 %v1822
    %v6400 = vunpack.c.l.b16 %v1823
    %v6401 = vunpack.c.h.b16 %v1823
    %v6402 = vunpack.c.l.b16 %v1824
    %v6403 = vunpack.c.l.b16 %v1825
    %v6404 = vunpack.c.h.b16 %v1825
    %v6405 = vunpack.c.l.b16 %v1826
    %v6406 = vunpack.c.h.b16 %v1826
    %v6407 = vunpack.c.l.b16 %v1827
    %v6408 = vunpack.c.l.b16 %v1828
    %v6409 = vunpack.c.h.b16 %v1828
    %v6410 = vunpack.c.l.b16 %v1829
    %v6411 = vunpack.c.h.b16 %v1829
    %v6412 = vunpack.c.l.b16 %v1830
    %v6413 = vunpack.c.l.b16 %v1831
    %v6414 = vunpack.c.h.b16 %v1831
    %v6415 = vunpack.c.l.b16 %v1832
    %v6416 = vunpack.c.h.b16 %v1832
    %v6417 = vunpack.c.l.b16 %v1833
    %v6418 = vunpack.c.l.b16 %v1834
    %v6419 = vunpack.c.h.b16 %v1834
    %v6420 = vunpack.c.l.b16 %v1835
    %v6421 = vunpack.c.h.b16 %v1835
    %v6422 = vunpack.c.l.b16 %v1836
    %v6423 = vunpack.c.l.b16 %v1837
    %v6424 = vunpack.c.h.b16 %v1837
    %v6425 = vunpack.c.l.b16 %v1838
    %v6426 = vunpack.c.h.b16 %v1838
    %v6427 = vunpack.c.l.b16 %v1839
    %v6428 = vunpack.c.l.b16 %v1840
    %v6429 = vunpack.c.h.b16 %v1840
    %v6430 = vunpack.c.l.b16 %v1841
    %v6431 = vunpack.c.h.b16 %v1841
    %v6432 = vunpack.c.l.b16 %v1842
    %v6433 = vunpack.c.l.b16 %v1843
    %v6434 = vunpack.c.h.b16 %v1843
    %v6435 = vunpack.c.l.b16 %v1844
    %v6436 = vunpack.c.h.b16 %v1844
    %v6437 = vunpack.c.l.b16 %v1845
    %v6438 = vunpack.c.l.b16 %v1846
    %v6439 = vunpack.c.h.b16 %v1846
    %v6440 = vunpack.c.l.b16 %v1847
    %v6441 = vunpack.c.h.b16 %v1847
    %v6442 = vunpack.c.l.b16 %v1848
    %v6443 = vunpack.c.l.b16 %v1849
    %v6444 = vunpack.c.h.b16 %v1849
    %v6445 = vunpack.c.l.b16 %v1850
    %v6446 = vunpack.c.h.b16 %v1850
    %v6447 = vunpack.c.l.b16 %v1851
    %v6448 = vunpack.c.l.b16 %v1852
    %v6449 = vunpack.c.h.b16 %v1852
    %v6450 = vunpack.c.l.b16 %v1853
    %v6451 = vunpack.c.h.b16 %v1853
    %v6452 = vunpack.c.l.b16 %v1854
    %v6453 = vunpack.c.l.b16 %v1855
    %v6454 = vunpack.c.h.b16 %v1855
    %v6455 = vunpack.c.l.b16 %v1856
    %v6456 = vunpack.c.h.b16 %v1856
    %v6457 = vunpack.c.l.b16 %v1857
    %v6458 = vunpack.c.l.b16 %v1858
    %v6459 = vunpack.c.h.b16 %v1858
    %v6460 = vunpack.c.l.b16 %v1859
    %v6461 = vunpack.c.h.b16 %v1859
    %v6462 = vunpack.c.l.b16 %v1860
    %v6463 = vunpack.c.l.b16 %v1861
    %v6464 = vunpack.c.h.b16 %v1861
    %v6465 = vunpack.c.l.b16 %v1862
    %v6466 = vunpack.c.h.b16 %v1862
    %v6467 = vunpack.c.l.b16 %v1863
    %v6468 = vunpack.c.l.b16 %v1864
    %v6469 = vunpack.c.h.b16 %v1864
    %v6470 = vunpack.c.l.b16 %v1865
    %v6471 = vunpack.c.h.b16 %v1865
    %v6472 = vunpack.c.l.b16 %v1866
    %v6473 = vunpack.c.l.b16 %v1867
    %v6474 = vunpack.c.h.b16 %v1867
    %v6475 = vunpack.c.l.b16 %v1868
    %v6476 = vunpack.c.h.b16 %v1868
    %v6477 = vunpack.c.l.b16 %v1869
    %v6478 = vunpack.c.l.b16 %v1870
    %v6479 = vunpack.c.h.b16 %v1870
    %v6480 = vunpack.c.l.b16 %v1871
    %v6481 = vunpack.c.h.b16 %v1871
    %v6482 = vunpack.c.l.b16 %v1872
    %v6483 = vunpack.c.l.b16 %v1873
    %v6484 = vunpack.c.h.b16 %v1873
    %v6485 = vunpack.c.l.b16 %v1874
    %v6486 = vunpack.c.h.b16 %v1874
    %v6487 = vunpack.c.l.b16 %v1875
    %v6488 = vunpack.c.l.b16 %v1876
    %v6489 = vunpack.c.h.b16 %v1876
    %v6490 = vunpack.c.l.b16 %v1877
    %v6491 = vunpack.c.h.b16 %v1877
    %v6492 = vunpack.c.l.b16 %v1878
    %v6493 = vunpack.c.l.b16 %v1879
    %v6494 = vunpack.c.h.b16 %v1879
    %v6495 = vunpack.c.l.b16 %v1880
    %v6496 = vunpack.c.h.b16 %v1880
    %v6497 = vunpack.c.l.b16 %v1881
    %v6498 = vunpack.c.l.b16 %v1882
    %v6499 = vunpack.c.h.b16 %v1882
    %v6500 = vunpack.c.l.b16 %v1883
    %v6501 = vunpack.c.h.b16 %v1883
    %v6502 = vunpack.c.l.b16 %v1884
    %v6503 = vunpack.c.l.b16 %v1885
    %v6504 = vunpack.c.h.b16 %v1885
    %v6505 = vunpack.c.l.b16 %v1886
    %v6506 = vunpack.c.h.b16 %v1886
    %v6507 = vunpack.c.l.b16 %v1887
    %v6508 = vpack.c.b16 %v3633, %v3628
    %v6509 = vpack.c.b16 %v3634, %v3629
    %v6510 = vpack.c.b16 %v3635, %v3630
    %v6511 = vpack.c.b16 %v3636, %v3631
    %v6512 = vpack.c.b16 %v3637, %v3632
    %v6513 = vpack.c.b16 %v3643, %v3638
    %v6514 = vpack.c.b16 %v3644, %v3639
    %v6515 = vpack.c.b16 %v3645, %v3640
    %v6516 = vpack.c.b16 %v3646, %v3641
    %v6517 = vpack.c.b16 %v3647, %v3642
    %v6518 = vpack.c.b16 %v3653, %v3648
    %v6519 = vpack.c.b16 %v3654, %v3649
    %v6520 = vpack.c.b16 %v3655, %v3650
    %v6521 = vpack.c.b16 %v3656, %v3651
    %v6522 = vpack.c.b16 %v3657, %v3652
    %v6523 = vpack.c.b16 %v3663, %v3658
    %v6524 = vpack.c.b16 %v3664, %v3659
    %v6525 = vpack.c.b16 %v3665, %v3660
    %v6526 = vpack.c.b16 %v3666, %v3661
    %v6527 = vpack.c.b16 %v3667, %v3662
    %v6528 = vpack.c.b16 %v3673, %v3668
    %v6529 = vpack.c.b16 %v3674, %v3669
    %v6530 = vpack.c.b16 %v3675, %v3670
    %v6531 = vpack.c.b16 %v3676, %v3671
    %v6532 = vpack.c.b16 %v3677, %v3672
    %v6533 = vpack.c.b16 %v3683, %v3678
    %v6534 = vpack.c.b16 %v3684, %v3679
    %v6535 = vpack.c.b16 %v3685, %v3680
    %v6536 = vpack.c.b16 %v3686, %v3681
    %v6537 = vpack.c.b16 %v3687, %v3682
    %v6538 = vpack.c.b16 %v3693, %v3688
    %v6539 = vpack.c.b16 %v3694, %v3689
    %v6540 = vpack.c.b16 %v3695, %v3690
    %v6541 = vpack.c.b16 %v3696, %v3691
    %v6542 = vpack.c.b16 %v3697, %v3692
    %v6543 = vpack.c.b16 %v3703, %v3698
    %v6544 = vpack.c.b16 %v3704, %v3699
    %v6545 = vpack.c.b16 %v3705, %v3700
    %v6546 = vpack.c.b16 %v3706, %v3701
    %v6547 = vpack.c.b16 %v3707, %v3702
    %v6548 = vpack.c.b16 %v3713, %v3708
    %v6549 = vpack.c.b16 %v3714, %v3709
    %v6550 = vpack.c.b16 %v3715, %v3710
    %v6551 = vpack.c.b16 %v3716, %v3711
    %v6552 = vpack.c.b16 %v3717, %v3712
    %v6553 = vpack.c.b16 %v3723, %v3718
    %v6554 = vpack.c.b16 %v3724, %v3719
    %v6555 = vpack.c.b16 %v3725, %v3720
    %v6556 = vpack.c.b16 %v3726, %v3721
    %v6557 = vpack.c.b16 %v3727, %v3722
    %v6558 = vpack.c.b16 %v3733, %v3728
    %v6559 = vpack.c.b16 %v3734, %v3729
    %v6560 = vpack.c.b16 %v3735, %v3730
    %v6561 = vpack.c.b16 %v3736, %v3731
    %v6562 = vpack.c.b16 %v3737, %v3732
    %v6563 = vpack.c.b16 %v3743, %v3738
    %v6564 = vpack.c.b16 %v3744, %v3739
    %v6565 = vpack.c.b16 %v3745, %v3740
    %v6566 = vpack.c.b16 %v3746, %v3741
    %v6567 = vpack.c.b16 %v3747, %v3742
    %v6568 = vpack.c.b16 %v3753, %v3748
    %v6569 = vpack.c.b16 %v3754, %v3749
    %v6570 = vpack.c.b16 %v3755, %v3750
    %v6571 = vpack.c.b16 %v3756, %v3751
    %v6572 = vpack.c.b16 %v3757, %v3752
    %v6573 = vpack.c.b16 %v3763, %v3758
    %v6574 = vpack.c.b16 %v3764, %v3759
    %v6575 = vpack.c.b16 %v3765, %v3760
    %v6576 = vpack.c.b16 %v3766, %v3761
    %v6577 = vpack.c.b16 %v3767, %v3762
    %v6578 = vpack.c.b16 %v3773, %v3768
    %v6579 = vpack.c.b16 %v3774, %v3769
    %v6580 = vpack.c.b16 %v3775, %v3770
    %v6581 = vpack.c.b16 %v3776, %v3771
    %v6582 = vpack.c.b16 %v3777, %v3772
    %v6583 = vpack.c.b16 %v3783, %v3778
    %v6584 = vpack.c.b16 %v3784, %v3779
    %v6585 = vpack.c.b16 %v3785, %v3780
    %v6586 = vpack.c.b16 %v3786, %v3781
    %v6587 = vpack.c.b16 %v3787, %v3782
    %v6588 = vpack.c.b16 %v3793, %v3788
    %v6589 = vpack.c.b16 %v3794, %v3789
    %v6590 = vpack.c.b16 %v3795, %v3790
    %v6591 = vpack.c.b16 %v3796, %v3791
    %v6592 = vpack.c.b16 %v3797, %v3792
    %v6593 = vpack.c.b16 %v3803, %v3798
    %v6594 = vpack.c.b16 %v3804, %v3799
    %v6595 = vpack.c.b16 %v3805, %v3800
    %v6596 = vpack.c.b16 %v3806, %v3801
    %v6597 = vpack.c.b16 %v3807, %v3802
    %v6598 = vpack.c.b16 %v3813, %v3808
    %v6599 = vpack.c.b16 %v3814, %v3809
    %v6600 = vpack.c.b16 %v3815, %v3810
    %v6601 = vpack.c.b16 %v3816, %v3811
    %v6602 = vpack.c.b16 %v3817, %v3812
    %v6603 = vpack.c.b16 %v3823, %v3818
    %v6604 = vpack.c.b16 %v3824, %v3819
    %v6605 = vpack.c.b16 %v3825, %v3820
    %v6606 = vpack.c.b16 %v3826, %v3821
    %v6607 = vpack.c.b16 %v3827, %v3822
    %v6608 = vpack.c.b16 %v3833, %v3828
    %v6609 = vpack.c.b16 %v3834, %v3829
    %v6610 = vpack.c.b16 %v3835, %v3830
    %v6611 = vpack.c.b16 %v3836, %v3831
    %v6612 = vpack.c.b16 %v3837, %v3832
    %v6613 = vpack.c.b16 %v3843, %v3838
    %v6614 = vpack.c.b16 %v3844, %v3839
    %v6615 = vpack.c.b16 %v3845, %v3840
    %v6616 = vpack.c.b16 %v3846, %v3841
    %v6617 = vpack.c.b16 %v3847, %v3842
    %v6618 = vpack.c.b16 %v3853, %v3848
    %v6619 = vpack.c.b16 %v3854, %v3849
    %v6620 = vpack.c.b16 %v3855, %v3850
    %v6621 = vpack.c.b16 %v3856, %v3851
    %v6622 = vpack.c.b16 %v3857, %v3852
    %v6623 = vpack.c.b16 %v3863, %v3858
    %v6624 = vpack.c.b16 %v3864, %v3859
    %v6625 = vpack.c.b16 %v3865, %v3860
    %v6626 = vpack.c.b16 %v3866, %v3861
    %v6627 = vpack.c.b16 %v3867, %v3862
    %v6628 = vpack.c.b16 %v3873, %v3868
    %v6629 = vpack.c.b16 %v3874, %v3869
    %v6630 = vpack.c.b16 %v3875, %v3870
    %v6631 = vpack.c.b16 %v3876, %v3871
    %v6632 = vpack.c.b16 %v3877, %v3872
    %v6633 = vpack.c.b16 %v3883, %v3878
    %v6634 = vpack.c.b16 %v3884, %v3879
    %v6635 = vpack.c.b16 %v3885, %v3880
    %v6636 = vpack.c.b16 %v3886, %v3881
    %v6637 = vpack.c.b16 %v3887, %v3882
    %v6638 = vpack.c.b16 %v3893, %v3888
    %v6639 = vpack.c.b16 %v3894, %v3889
    %v6640 = vpack.c.b16 %v3895, %v3890
    %v6641 = vpack.c.b16 %v3896, %v3891
    %v6642 = vpack.c.b16 %v3897, %v3892
    %v6643 = vpack.c.b16 %v3903, %v3898
    %v6644 = vpack.c.b16 %v3904, %v3899
    %v6645 = vpack.c.b16 %v3905, %v3900
    %v6646 = vpack.c.b16 %v3906, %v3901
    %v6647 = vpack.c.b16 %v3907, %v3902
    %v6648 = vpack.c.b16 %v3913, %v3908
    %v6649 = vpack.c.b16 %v3914, %v3909
    %v6650 = vpack.c.b16 %v3915, %v3910
    %v6651 = vpack.c.b16 %v3916, %v3911
    %v6652 = vpack.c.b16 %v3917, %v3912
    %v6653 = vpack.c.b16 %v3923, %v3918
    %v6654 = vpack.c.b16 %v3924, %v3919
    %v6655 = vpack.c.b16 %v3925, %v3920
    %v6656 = vpack.c.b16 %v3926, %v3921
    %v6657 = vpack.c.b16 %v3927, %v3922
    %v6658 = vpack.c.b16 %v3933, %v3928
    %v6659 = vpack.c.b16 %v3934, %v3929
    %v6660 = vpack.c.b16 %v3935, %v3930
    %v6661 = vpack.c.b16 %v3936, %v3931
    %v6662 = vpack.c.b16 %v3937, %v3932
    %v6663 = vpack.c.b16 %v3943, %v3938
    %v6664 = vpack.c.b16 %v3944, %v3939
    %v6665 = vpack.c.b16 %v3945, %v3940
    %v6666 = vpack.c.b16 %v3946, %v3941
    %v6667 = vpack.c.b16 %v3947, %v3942
    %v6668 = vpack.c.b16 %v3953, %v3948
    %v6669 = vpack.c.b16 %v3954, %v3949
    %v6670 = vpack.c.b16 %v3955, %v3950
    %v6671 = vpack.c.b16 %v3956, %v3951
    %v6672 = vpack.c.b16 %v3957, %v3952
    %v6673 = vpack.c.b16 %v3963, %v3958
    %v6674 = vpack.c.b16 %v3964, %v3959
    %v6675 = vpack.c.b16 %v3965, %v3960
    %v6676 = vpack.c.b16 %v3966, %v3961
    %v6677 = vpack.c.b16 %v3967, %v3962
    %v6678 = vpack.c.b16 %v3973, %v3968
    %v6679 = vpack.c.b16 %v3974, %v3969
    %v6680 = vpack.c.b16 %v3975, %v3970
    %v6681 = vpack.c.b16 %v3976, %v3971
    %v6682 = vpack.c.b16 %v3977, %v3972
    %v6683 = vpack.c.b16 %v3983, %v3978
    %v6684 = vpack.c.b16 %v3984, %v3979
    %v6685 = vpack.c.b16 %v3985, %v3980
    %v6686 = vpack.c.b16 %v3986, %v3981
    %v6687 = vpack.c.b16 %v3987, %v3982
    %v6688 = vpack.c.b16 %v3993, %v3988
    %v6689 = vpack.c.b16 %v3994, %v3989
    %v6690 = vpack.c.b16 %v3995, %v3990
    %v6691 = vpack.c.b16 %v3996, %v3991
    %v6692 = vpack.c.b16 %v3997, %v3992
    %v6693 = vpack.c.b16 %v4003, %v3998
    %v6694 = vpack.c.b16 %v4004, %v3999
    %v6695 = vpack.c.b16 %v4005, %v4000
    %v6696 = vpack.c.b16 %v4006, %v4001
    %v6697 = vpack.c.b16 %v4007, %v4002
    %v6698 = vpack.c.b16 %v4013, %v4008
    %v6699 = vpack.c.b16 %v4014, %v4009
    %v6700 = vpack.c.b16 %v4015, %v4010
    %v6701 = vpack.c.b16 %v4016, %v4011
    %v6702 = vpack.c.b16 %v4017, %v4012
    %v6703 = vpack.c.b16 %v4023, %v4018
    %v6704 = vpack.c.b16 %v4024, %v4019
    %v6705 = vpack.c.b16 %v4025, %v4020
    %v6706 = vpack.c.b16 %v4026, %v4021
    %v6707 = vpack.c.b16 %v4027, %v4022
    %v6708 = vpack.c.b16 %v4033, %v4028
    %v6709 = vpack.c.b16 %v4034, %v4029
    %v6710 = vpack.c.b16 %v4035, %v4030
    %v6711 = vpack.c.b16 %v4036, %v4031
    %v6712 = vpack.c.b16 %v4037, %v4032
    %v6713 = vpack.c.b16 %v4043, %v4038
    %v6714 = vpack.c.b16 %v4044, %v4039
    %v6715 = vpack.c.b16 %v4045, %v4040
    %v6716 = vpack.c.b16 %v4046, %v4041
    %v6717 = vpack.c.b16 %v4047, %v4042
    %v6718 = vpack.c.b16 %v4053, %v4048
    %v6719 = vpack.c.b16 %v4054, %v4049
    %v6720 = vpack.c.b16 %v4055, %v4050
    %v6721 = vpack.c.b16 %v4056, %v4051
    %v6722 = vpack.c.b16 %v4057, %v4052
    %v6723 = vpack.c.b16 %v4063, %v4058
    %v6724 = vpack.c.b16 %v4064, %v4059
    %v6725 = vpack.c.b16 %v4065, %v4060
    %v6726 = vpack.c.b16 %v4066, %v4061
    %v6727 = vpack.c.b16 %v4067, %v4062
    %v6728 = vpack.c.b16 %v4073, %v4068
    %v6729 = vpack.c.b16 %v4074, %v4069
    %v6730 = vpack.c.b16 %v4075, %v4070
    %v6731 = vpack.c.b16 %v4076, %v4071
    %v6732 = vpack.c.b16 %v4077, %v4072
    %v6733 = vpack.c.b16 %v4083, %v4078
    %v6734 = vpack.c.b16 %v4084, %v4079
    %v6735 = vpack.c.b16 %v4085, %v4080
    %v6736 = vpack.c.b16 %v4086, %v4081
    %v6737 = vpack.c.b16 %v4087, %v4082
    %v6738 = vpack.c.b16 %v4093, %v4088
    %v6739 = vpack.c.b16 %v4094, %v4089
    %v6740 = vpack.c.b16 %v4095, %v4090
    %v6741 = vpack.c.b16 %v4096, %v4091
    %v6742 = vpack.c.b16 %v4097, %v4092
    %v6743 = vpack.c.b16 %v4103, %v4098
    %v6744 = vpack.c.b16 %v4104, %v4099
    %v6745 = vpack.c.b16 %v4105, %v4100
    %v6746 = vpack.c.b16 %v4106, %v4101
    %v6747 = vpack.c.b16 %v4107, %v4102
    %v6748 = vpack.c.b16 %v4113, %v4108
    %v6749 = vpack.c.b16 %v4114, %v4109
    %v6750 = vpack.c.b16 %v4115, %v4110
    %v6751 = vpack.c.b16 %v4116, %v4111
    %v6752 = vpack.c.b16 %v4117, %v4112
    %v6753 = vpack.c.b16 %v4123, %v4118
    %v6754 = vpack.c.b16 %v4124, %v4119
    %v6755 = vpack.c.b16 %v4125, %v4120
    %v6756 = vpack.c.b16 %v4126, %v4121
    %v6757 = vpack.c.b16 %v4127, %v4122
    %v6758 = vpack.c.b16 %v4133, %v4128
    %v6759 = vpack.c.b16 %v4134, %v4129
    %v6760 = vpack.c.b16 %v4135, %v4130
    %v6761 = vpack.c.b16 %v4136, %v4131
    %v6762 = vpack.c.b16 %v4137, %v4132
    %v6763 = vpack.c.b16 %v4143, %v4138
    %v6764 = vpack.c.b16 %v4144, %v4139
    %v6765 = vpack.c.b16 %v4145, %v4140
    %v6766 = vpack.c.b16 %v4146, %v4141
    %v6767 = vpack.c.b16 %v4147, %v4142
    %v6768 = vpack.c.b16 %v4153, %v4148
    %v6769 = vpack.c.b16 %v4154, %v4149
    %v6770 = vpack.c.b16 %v4155, %v4150
    %v6771 = vpack.c.b16 %v4156, %v4151
    %v6772 = vpack.c.b16 %v4157, %v4152
    %v6773 = vpack.c.b16 %v4163, %v4158
    %v6774 = vpack.c.b16 %v4164, %v4159
    %v6775 = vpack.c.b16 %v4165, %v4160
    %v6776 = vpack.c.b16 %v4166, %v4161
    %v6777 = vpack.c.b16 %v4167, %v4162
    %v6778 = vpack.c.b16 %v4173, %v4168
    %v6779 = vpack.c.b16 %v4174, %v4169
    %v6780 = vpack.c.b16 %v4175, %v4170
    %v6781 = vpack.c.b16 %v4176, %v4171
    %v6782 = vpack.c.b16 %v4177, %v4172
    %v6783 = vpack.c.b16 %v4183, %v4178
    %v6784 = vpack.c.b16 %v4184, %v4179
    %v6785 = vpack.c.b16 %v4185, %v4180
    %v6786 = vpack.c.b16 %v4186, %v4181
    %v6787 = vpack.c.b16 %v4187, %v4182
    %v6788 = vpack.c.b16 %v4193, %v4188
    %v6789 = vpack.c.b16 %v4194, %v4189
    %v6790 = vpack.c.b16 %v4195, %v4190
    %v6791 = vpack.c.b16 %v4196, %v4191
    %v6792 = vpack.c.b16 %v4197, %v4192
    %v6793 = vpack.c.b16 %v4203, %v4198
    %v6794 = vpack.c.b16 %v4204, %v4199
    %v6795 = vpack.c.b16 %v4205, %v4200
    %v6796 = vpack.c.b16 %v4206, %v4201
    %v6797 = vpack.c.b16 %v4207, %v4202
    %v6798 = vpack.c.b16 %v4213, %v4208
    %v6799 = vpack.c.b16 %v4214, %v4209
    %v6800 = vpack.c.b16 %v4215, %v4210
    %v6801 = vpack.c.b16 %v4216, %v4211
    %v6802 = vpack.c.b16 %v4217, %v4212
    %v6803 = vpack.c.b16 %v4223, %v4218
    %v6804 = vpack.c.b16 %v4224, %v4219
    %v6805 = vpack.c.b16 %v4225, %v4220
    %v6806 = vpack.c.b16 %v4226, %v4221
    %v6807 = vpack.c.b16 %v4227, %v4222
    %v6808 = vpack.c.b16 %v4233, %v4228
    %v6809 = vpack.c.b16 %v4234, %v4229
    %v6810 = vpack.c.b16 %v4235, %v4230
    %v6811 = vpack.c.b16 %v4236, %v4231
    %v6812 = vpack.c.b16 %v4237, %v4232
    %v6813 = vpack.c.b16 %v4243, %v4238
    %v6814 = vpack.c.b16 %v4244, %v4239
    %v6815 = vpack.c.b16 %v4245, %v4240
    %v6816 = vpack.c.b16 %v4246, %v4241
    %v6817 = vpack.c.b16 %v4247, %v4242
    %v6818 = vpack.c.b16 %v4253, %v4248
    %v6819 = vpack.c.b16 %v4254, %v4249
    %v6820 = vpack.c.b16 %v4255, %v4250
    %v6821 = vpack.c.b16 %v4256, %v4251
    %v6822 = vpack.c.b16 %v4257, %v4252
    %v6823 = vpack.c.b16 %v4263, %v4258
    %v6824 = vpack.c.b16 %v4264, %v4259
    %v6825 = vpack.c.b16 %v4265, %v4260
    %v6826 = vpack.c.b16 %v4266, %v4261
    %v6827 = vpack.c.b16 %v4267, %v4262
    %v6828 = vpack.c.b16 %v4273, %v4268
    %v6829 = vpack.c.b16 %v4274, %v4269
    %v6830 = vpack.c.b16 %v4275, %v4270
    %v6831 = vpack.c.b16 %v4276, %v4271
    %v6832 = vpack.c.b16 %v4277, %v4272
    %v6833 = vpack.c.b16 %v4283, %v4278
    %v6834 = vpack.c.b16 %v4284, %v4279
    %v6835 = vpack.c.b16 %v4285, %v4280
    %v6836 = vpack.c.b16 %v4286, %v4281
    %v6837 = vpack.c.b16 %v4287, %v4282
    %v6838 = vpack.c.b16 %v4293, %v4288
    %v6839 = vpack.c.b16 %v4294, %v4289
    %v6840 = vpack.c.b16 %v4295, %v4290
    %v6841 = vpack.c.b16 %v4296, %v4291
    %v6842 = vpack.c.b16 %v4297, %v4292
    %v6843 = vpack.c.b16 %v4303, %v4298
    %v6844 = vpack.c.b16 %v4304, %v4299
    %v6845 = vpack.c.b16 %v4305, %v4300
    %v6846 = vpack.c.b16 %v4306, %v4301
    %v6847 = vpack.c.b16 %v4307, %v4302
    %v6848 = vpack.c.b16 %v4313, %v4308
    %v6849 = vpack.c.b16 %v4314, %v4309
    %v6850 = vpack.c.b16 %v4315, %v4310
    %v6851 = vpack.c.b16 %v4316, %v4311
    %v6852 = vpack.c.b16 %v4317, %v4312
    %v6853 = vpack.c.b16 %v4323, %v4318
    %v6854 = vpack.c.b16 %v4324, %v4319
    %v6855 = vpack.c.b16 %v4325, %v4320
    %v6856 = vpack.c.b16 %v4326, %v4321
    %v6857 = vpack.c.b16 %v4327, %v4322
    %v6858 = vpack.c.b16 %v4333, %v4328
    %v6859 = vpack.c.b16 %v4334, %v4329
    %v6860 = vpack.c.b16 %v4335, %v4330
    %v6861 = vpack.c.b16 %v4336, %v4331
    %v6862 = vpack.c.b16 %v4337, %v4332
    %v6863 = vpack.c.b16 %v4343, %v4338
    %v6864 = vpack.c.b16 %v4344, %v4339
    %v6865 = vpack.c.b16 %v4345, %v4340
    %v6866 = vpack.c.b16 %v4346, %v4341
    %v6867 = vpack.c.b16 %v4347, %v4342
    %v6868 = vpack.c.b16 %v4353, %v4348
    %v6869 = vpack.c.b16 %v4354, %v4349
    %v6870 = vpack.c.b16 %v4355, %v4350
    %v6871 = vpack.c.b16 %v4356, %v4351
    %v6872 = vpack.c.b16 %v4357, %v4352
    %v6873 = vpack.c.b16 %v4363, %v4358
    %v6874 = vpack.c.b16 %v4364, %v4359
    %v6875 = vpack.c.b16 %v4365, %v4360
    %v6876 = vpack.c.b16 %v4366, %v4361
    %v6877 = vpack.c.b16 %v4367, %v4362
    %v6878 = vpack.c.b16 %v4373, %v4368
    %v6879 = vpack.c.b16 %v4374, %v4369
    %v6880 = vpack.c.b16 %v4375, %v4370
    %v6881 = vpack.c.b16 %v4376, %v4371
    %v6882 = vpack.c.b16 %v4377, %v4372
    %v6883 = vpack.c.b16 %v4383, %v4378
    %v6884 = vpack.c.b16 %v4384, %v4379
    %v6885 = vpack.c.b16 %v4385, %v4380
    %v6886 = vpack.c.b16 %v4386, %v4381
    %v6887 = vpack.c.b16 %v4387, %v4382
    %v6888 = vpack.c.b16 %v4393, %v4388
    %v6889 = vpack.c.b16 %v4394, %v4389
    %v6890 = vpack.c.b16 %v4395, %v4390
    %v6891 = vpack.c.b16 %v4396, %v4391
    %v6892 = vpack.c.b16 %v4397, %v4392
    %v6893 = vpack.c.b16 %v4403, %v4398
    %v6894 = vpack.c.b16 %v4404, %v4399
    %v6895 = vpack.c.b16 %v4405, %v4400
    %v6896 = vpack.c.b16 %v4406, %v4401
    %v6897 = vpack.c.b16 %v4407, %v4402
    %v6898 = vpack.c.b16 %v4413, %v4408
    %v6899 = vpack.c.b16 %v4414, %v4409
    %v6900 = vpack.c.b16 %v4415, %v4410
    %v6901 = vpack.c.b16 %v4416, %v4411
    %v6902 = vpack.c.b16 %v4417, %v4412
    %v6903 = vpack.c.b16 %v4423, %v4418
    %v6904 = vpack.c.b16 %v4424, %v4419
    %v6905 = vpack.c.b16 %v4425, %v4420
    %v6906 = vpack.c.b16 %v4426, %v4421
    %v6907 = vpack.c.b16 %v4427, %v4422
    %v6908 = vpack.c.b16 %v4433, %v4428
    %v6909 = vpack.c.b16 %v4434, %v4429
    %v6910 = vpack.c.b16 %v4435, %v4430
    %v6911 = vpack.c.b16 %v4436, %v4431
    %v6912 = vpack.c.b16 %v4437, %v4432
    %v6913 = vpack.c.b16 %v4443, %v4438
    %v6914 = vpack.c.b16 %v4444, %v4439
    %v6915 = vpack.c.b16 %v4445, %v4440
    %v6916 = vpack.c.b16 %v4446, %v4441
    %v6917 = vpack.c.b16 %v4447, %v4442
    %v6918 = vpack.c.b16 %v4453, %v4448
    %v6919 = vpack.c.b16 %v4454, %v4449
    %v6920 = vpack.c.b16 %v4455, %v4450
    %v6921 = vpack.c.b16 %v4456, %v4451
    %v6922 = vpack.c.b16 %v4457, %v4452
    %v6923 = vpack.c.b16 %v4463, %v4458
    %v6924 = vpack.c.b16 %v4464, %v4459
    %v6925 = vpack.c.b16 %v4465, %v4460
    %v6926 = vpack.c.b16 %v4466, %v4461
    %v6927 = vpack.c.b16 %v4467, %v4462
    %v6928 = vpack.c.b16 %v4473, %v4468
    %v6929 = vpack.c.b16 %v4474, %v4469
    %v6930 = vpack.c.b16 %v4475, %v4470
    %v6931 = vpack.c.b16 %v4476, %v4471
    %v6932 = vpack.c.b16 %v4477, %v4472
    %v6933 = vpack.c.b16 %v4483, %v4478
    %v6934 = vpack.c.b16 %v4484, %v4479
    %v6935 = vpack.c.b16 %v4485, %v4480
    %v6936 = vpack.c.b16 %v4486, %v4481
    %v6937 = vpack.c.b16 %v4487, %v4482
    %v6938 = vpack.c.b16 %v4493, %v4488
    %v6939 = vpack.c.b16 %v4494, %v4489
    %v6940 = vpack.c.b16 %v4495, %v4490
    %v6941 = vpack.c.b16 %v4496, %v4491
    %v6942 = vpack.c.b16 %v4497, %v4492
    %v6943 = vpack.c.b16 %v4503, %v4498
    %v6944 = vpack.c.b16 %v4504, %v4499
    %v6945 = vpack.c.b16 %v4505, %v4500
    %v6946 = vpack.c.b16 %v4506, %v4501
    %v6947 = vpack.c.b16 %v4507, %v4502
    %v6948 = vpack.c.b16 %v4513, %v4508
    %v6949 = vpack.c.b16 %v4514, %v4509
    %v6950 = vpack.c.b16 %v4515, %v4510
    %v6951 = vpack.c.b16 %v4516, %v4511
    %v6952 = vpack.c.b16 %v4517, %v4512
    %v6953 = vpack.c.b16 %v4523, %v4518
    %v6954 = vpack.c.b16 %v4524, %v4519
    %v6955 = vpack.c.b16 %v4525, %v4520
    %v6956 = vpack.c.b16 %v4526, %v4521
    %v6957 = vpack.c.b16 %v4527, %v4522
    %v6958 = vpack.c.b16 %v4533, %v4528
    %v6959 = vpack.c.b16 %v4534, %v4529
    %v6960 = vpack.c.b16 %v4535, %v4530
    %v6961 = vpack.c.b16 %v4536, %v4531
    %v6962 = vpack.c.b16 %v4537, %v4532
    %v6963 = vpack.c.b16 %v4543, %v4538
    %v6964 = vpack.c.b16 %v4544, %v4539
    %v6965 = vpack.c.b16 %v4545, %v4540
    %v6966 = vpack.c.b16 %v4546, %v4541
    %v6967 = vpack.c.b16 %v4547, %v4542
    %v6968 = vpack.c.b16 %v4553, %v4548
    %v6969 = vpack.c.b16 %v4554, %v4549
    %v6970 = vpack.c.b16 %v4555, %v4550
    %v6971 = vpack.c.b16 %v4556, %v4551
    %v6972 = vpack.c.b16 %v4557, %v4552
    %v6973 = vpack.c.b16 %v4563, %v4558
    %v6974 = vpack.c.b16 %v4564, %v4559
    %v6975 = vpack.c.b16 %v4565, %v4560
    %v6976 = vpack.c.b16 %v4566, %v4561
    %v6977 = vpack.c.b16 %v4567, %v4562
    %v6978 = vpack.c.b16 %v4573, %v4568
    %v6979 = vpack.c.b16 %v4574, %v4569
    %v6980 = vpack.c.b16 %v4575, %v4570
    %v6981 = vpack.c.b16 %v4576, %v4571
    %v6982 = vpack.c.b16 %v4577, %v4572
    %v6983 = vpack.c.b16 %v4583, %v4578
    %v6984 = vpack.c.b16 %v4584, %v4579
    %v6985 = vpack.c.b16 %v4585, %v4580
    %v6986 = vpack.c.b16 %v4586, %v4581
    %v6987 = vpack.c.b16 %v4587, %v4582
    %v6988 = vpack.c.b16 %v4593, %v4588
    %v6989 = vpack.c.b16 %v4594, %v4589
    %v6990 = vpack.c.b16 %v4595, %v4590
    %v6991 = vpack.c.b16 %v4596, %v4591
    %v6992 = vpack.c.b16 %v4597, %v4592
    %v6993 = vpack.c.b16 %v4603, %v4598
    %v6994 = vpack.c.b16 %v4604, %v4599
    %v6995 = vpack.c.b16 %v4605, %v4600
    %v6996 = vpack.c.b16 %v4606, %v4601
    %v6997 = vpack.c.b16 %v4607, %v4602
    %v6998 = vpack.c.b16 %v4613, %v4608
    %v6999 = vpack.c.b16 %v4614, %v4609
    %v7000 = vpack.c.b16 %v4615, %v4610
    %v7001 = vpack.c.b16 %v4616, %v4611
    %v7002 = vpack.c.b16 %v4617, %v4612
    %v7003 = vpack.c.b16 %v4623, %v4618
    %v7004 = vpack.c.b16 %v4624, %v4619
    %v7005 = vpack.c.b16 %v4625, %v4620
    %v7006 = vpack.c.b16 %v4626, %v4621
    %v7007 = vpack.c.b16 %v4627, %v4622
    %v7008 = vpack.c.b16 %v4633, %v4628
    %v7009 = vpack.c.b16 %v4634, %v4629
    %v7010 = vpack.c.b16 %v4635, %v4630
    %v7011 = vpack.c.b16 %v4636, %v4631
    %v7012 = vpack.c.b16 %v4637, %v4632
    %v7013 = vpack.c.b16 %v4643, %v4638
    %v7014 = vpack.c.b16 %v4644, %v4639
    %v7015 = vpack.c.b16 %v4645, %v4640
    %v7016 = vpack.c.b16 %v4646, %v4641
    %v7017 = vpack.c.b16 %v4647, %v4642
    %v7018 = vpack.c.b16 %v4653, %v4648
    %v7019 = vpack.c.b16 %v4654, %v4649
    %v7020 = vpack.c.b16 %v4655, %v4650
    %v7021 = vpack.c.b16 %v4656, %v4651
    %v7022 = vpack.c.b16 %v4657, %v4652
    %v7023 = vpack.c.b16 %v4663, %v4658
    %v7024 = vpack.c.b16 %v4664, %v4659
    %v7025 = vpack.c.b16 %v4665, %v4660
    %v7026 = vpack.c.b16 %v4666, %v4661
    %v7027 = vpack.c.b16 %v4667, %v4662
    %v7028 = vpack.c.b16 %v4673, %v4668
    %v7029 = vpack.c.b16 %v4674, %v4669
    %v7030 = vpack.c.b16 %v4675, %v4670
    %v7031 = vpack.c.b16 %v4676, %v4671
    %v7032 = vpack.c.b16 %v4677, %v4672
    %v7033 = vpack.c.b16 %v4683, %v4678
    %v7034 = vpack.c.b16 %v4684, %v4679
    %v7035 = vpack.c.b16 %v4685, %v4680
    %v7036 = vpack.c.b16 %v4686, %v4681
    %v7037 = vpack.c.b16 %v4687, %v4682
    %v7038 = vpack.c.b16 %v4693, %v4688
    %v7039 = vpack.c.b16 %v4694, %v4689
    %v7040 = vpack.c.b16 %v4695, %v4690
    %v7041 = vpack.c.b16 %v4696, %v4691
    %v7042 = vpack.c.b16 %v4697, %v4692
    %v7043 = vpack.c.b16 %v4703, %v4698
    %v7044 = vpack.c.b16 %v4704, %v4699
    %v7045 = vpack.c.b16 %v4705, %v4700
    %v7046 = vpack.c.b16 %v4706, %v4701
    %v7047 = vpack.c.b16 %v4707, %v4702
    %v7048 = vpack.c.b16 %v4713, %v4708
    %v7049 = vpack.c.b16 %v4714, %v4709
    %v7050 = vpack.c.b16 %v4715, %v4710
    %v7051 = vpack.c.b16 %v4716, %v4711
    %v7052 = vpack.c.b16 %v4717, %v4712
    %v7053 = vpack.c.b16 %v4723, %v4718
    %v7054 = vpack.c.b16 %v4724, %v4719
    %v7055 = vpack.c.b16 %v4725, %v4720
    %v7056 = vpack.c.b16 %v4726, %v4721
    %v7057 = vpack.c.b16 %v4727, %v4722
    %v7058 = vpack.c.b16 %v4733, %v4728
    %v7059 = vpack.c.b16 %v4734, %v4729
    %v7060 = vpack.c.b16 %v4735, %v4730
    %v7061 = vpack.c.b16 %v4736, %v4731
    %v7062 = vpack.c.b16 %v4737, %v4732
    %v7063 = vpack.c.b16 %v4743, %v4738
    %v7064 = vpack.c.b16 %v4744, %v4739
    %v7065 = vpack.c.b16 %v4745, %v4740
    %v7066 = vpack.c.b16 %v4746, %v4741
    %v7067 = vpack.c.b16 %v4747, %v4742
    %v7068 = vpack.c.b16 %v4753, %v4748
    %v7069 = vpack.c.b16 %v4754, %v4749
    %v7070 = vpack.c.b16 %v4755, %v4750
    %v7071 = vpack.c.b16 %v4756, %v4751
    %v7072 = vpack.c.b16 %v4757, %v4752
    %v7073 = vpack.c.b16 %v4763, %v4758
    %v7074 = vpack.c.b16 %v4764, %v4759
    %v7075 = vpack.c.b16 %v4765, %v4760
    %v7076 = vpack.c.b16 %v4766, %v4761
    %v7077 = vpack.c.b16 %v4767, %v4762
    %v7078 = vpack.c.b16 %v4773, %v4768
    %v7079 = vpack.c.b16 %v4774, %v4769
    %v7080 = vpack.c.b16 %v4775, %v4770
    %v7081 = vpack.c.b16 %v4776, %v4771
    %v7082 = vpack.c.b16 %v4777, %v4772
    %v7083 = vpack.c.b16 %v4783, %v4778
    %v7084 = vpack.c.b16 %v4784, %v4779
    %v7085 = vpack.c.b16 %v4785, %v4780
    %v7086 = vpack.c.b16 %v4786, %v4781
    %v7087 = vpack.c.b16 %v4787, %v4782
    %v7088 = vpack.c.b16 %v4793, %v4788
    %v7089 = vpack.c.b16 %v4794, %v4789
    %v7090 = vpack.c.b16 %v4795, %v4790
    %v7091 = vpack.c.b16 %v4796, %v4791
    %v7092 = vpack.c.b16 %v4797, %v4792
    %v7093 = vpack.c.b16 %v4803, %v4798
    %v7094 = vpack.c.b16 %v4804, %v4799
    %v7095 = vpack.c.b16 %v4805, %v4800
    %v7096 = vpack.c.b16 %v4806, %v4801
    %v7097 = vpack.c.b16 %v4807, %v4802
    %v7098 = vpack.c.b16 %v4813, %v4808
    %v7099 = vpack.c.b16 %v4814, %v4809
    %v7100 = vpack.c.b16 %v4815, %v4810
    %v7101 = vpack.c.b16 %v4816, %v4811
    %v7102 = vpack.c.b16 %v4817, %v4812
    %v7103 = vpack.c.b16 %v4823, %v4818
    %v7104 = vpack.c.b16 %v4824, %v4819
    %v7105 = vpack.c.b16 %v4825, %v4820
    %v7106 = vpack.c.b16 %v4826, %v4821
    %v7107 = vpack.c.b16 %v4827, %v4822
    %v7108 = vpack.c.b16 %v4833, %v4828
    %v7109 = vpack.c.b16 %v4834, %v4829
    %v7110 = vpack.c.b16 %v4835, %v4830
    %v7111 = vpack.c.b16 %v4836, %v4831
    %v7112 = vpack.c.b16 %v4837, %v4832
    %v7113 = vpack.c.b16 %v4843, %v4838
    %v7114 = vpack.c.b16 %v4844, %v4839
    %v7115 = vpack.c.b16 %v4845, %v4840
    %v7116 = vpack.c.b16 %v4846, %v4841
    %v7117 = vpack.c.b16 %v4847, %v4842
    %v7118 = vpack.c.b16 %v4853, %v4848
    %v7119 = vpack.c.b16 %v4854, %v4849
    %v7120 = vpack.c.b16 %v4855, %v4850
    %v7121 = vpack.c.b16 %v4856, %v4851
    %v7122 = vpack.c.b16 %v4857, %v4852
    %v7123 = vpack.c.b16 %v4863, %v4858
    %v7124 = vpack.c.b16 %v4864, %v4859
    %v7125 = vpack.c.b16 %v4865, %v4860
    %v7126 = vpack.c.b16 %v4866, %v4861
    %v7127 = vpack.c.b16 %v4867, %v4862
    %v7128 = vpack.c.b16 %v4873, %v4868
    %v7129 = vpack.c.b16 %v4874, %v4869
    %v7130 = vpack.c.b16 %v4875, %v4870
    %v7131 = vpack.c.b16 %v4876, %v4871
    %v7132 = vpack.c.b16 %v4877, %v4872
    %v7133 = vpack.c.b16 %v4883, %v4878
    %v7134 = vpack.c.b16 %v4884, %v4879
    %v7135 = vpack.c.b16 %v4885, %v4880
    %v7136 = vpack.c.b16 %v4886, %v4881
    %v7137 = vpack.c.b16 %v4887, %v4882
    %v7138 = vpack.c.b16 %v4893, %v4888
    %v7139 = vpack.c.b16 %v4894, %v4889
    %v7140 = vpack.c.b16 %v4895, %v4890
    %v7141 = vpack.c.b16 %v4896, %v4891
    %v7142 = vpack.c.b16 %v4897, %v4892
    %v7143 = vpack.c.b16 %v4903, %v4898
    %v7144 = vpack.c.b16 %v4904, %v4899
    %v7145 = vpack.c.b16 %v4905, %v4900
    %v7146 = vpack.c.b16 %v4906, %v4901
    %v7147 = vpack.c.b16 %v4907, %v4902
    %v7148 = vpack.c.b16 %v4913, %v4908
    %v7149 = vpack.c.b16 %v4914, %v4909
    %v7150 = vpack.c.b16 %v4915, %v4910
    %v7151 = vpack.c.b16 %v4916, %v4911
    %v7152 = vpack.c.b16 %v4917, %v4912
    %v7153 = vpack.c.b16 %v4923, %v4918
    %v7154 = vpack.c.b16 %v4924, %v4919
    %v7155 = vpack.c.b16 %v4925, %v4920
    %v7156 = vpack.c.b16 %v4926, %v4921
    %v7157 = vpack.c.b16 %v4927, %v4922
    %v7158 = vpack.c.b16 %v4933, %v4928
    %v7159 = vpack.c.b16 %v4934, %v4929
    %v7160 = vpack.c.b16 %v4935, %v4930
    %v7161 = vpack.c.b16 %v4936, %v4931
    %v7162 = vpack.c.b16 %v4937, %v4932
    %v7163 = vpack.c.b16 %v4943, %v4938
    %v7164 = vpack.c.b16 %v4944, %v4939
    %v7165 = vpack.c.b16 %v4945, %v4940
    %v7166 = vpack.c.b16 %v4946, %v4941
    %v7167 = vpack.c.b16 %v4947, %v4942
    %v7168 = vpack.c.b16 %v4953, %v4948
    %v7169 = vpack.c.b16 %v4954, %v4949
    %v7170 = vpack.c.b16 %v4955, %v4950
    %v7171 = vpack.c.b16 %v4956, %v4951
    %v7172 = vpack.c.b16 %v4957, %v4952
    %v7173 = vpack.c.b16 %v4963, %v4958
    %v7174 = vpack.c.b16 %v4964, %v4959
    %v7175 = vpack.c.b16 %v4965, %v4960
    %v7176 = vpack.c.b16 %v4966, %v4961
    %v7177 = vpack.c.b16 %v4967, %v4962
    %v7178 = vpack.c.b16 %v4973, %v4968
    %v7179 = vpack.c.b16 %v4974, %v4969
    %v7180 = vpack.c.b16 %v4975, %v4970
    %v7181 = vpack.c.b16 %v4976, %v4971
    %v7182 = vpack.c.b16 %v4977, %v4972
    %v7183 = vpack.c.b16 %v4983, %v4978
    %v7184 = vpack.c.b16 %v4984, %v4979
    %v7185 = vpack.c.b16 %v4985, %v4980
    %v7186 = vpack.c.b16 %v4986, %v4981
    %v7187 = vpack.c.b16 %v4987, %v4982
    %v7188 = vpack.c.b16 %v4993, %v4988
    %v7189 = vpack.c.b16 %v4994, %v4989
    %v7190 = vpack.c.b16 %v4995, %v4990
    %v7191 = vpack.c.b16 %v4996, %v4991
    %v7192 = vpack.c.b16 %v4997, %v4992
    %v7193 = vpack.c.b16 %v5003, %v4998
    %v7194 = vpack.c.b16 %v5004, %v4999
    %v7195 = vpack.c.b16 %v5005, %v5000
    %v7196 = vpack.c.b16 %v5006, %v5001
    %v7197 = vpack.c.b16 %v5007, %v5002
    %v7198 = vpack.c.b16 %v5013, %v5008
    %v7199 = vpack.c.b16 %v5014, %v5009
    %v7200 = vpack.c.b16 %v5015, %v5010
    %v7201 = vpack.c.b16 %v5016, %v5011
    %v7202 = vpack.c.b16 %v5017, %v5012
    %v7203 = vpack.c.b16 %v5023, %v5018
    %v7204 = vpack.c.b16 %v5024, %v5019
    %v7205 = vpack.c.b16 %v5025, %v5020
    %v7206 = vpack.c.b16 %v5026, %v5021
    %v7207 = vpack.c.b16 %v5027, %v5022
    %v7208 = vpack.c.b16 %v5033, %v5028
    %v7209 = vpack.c.b16 %v5034, %v5029
    %v7210 = vpack.c.b16 %v5035, %v5030
    %v7211 = vpack.c.b16 %v5036, %v5031
    %v7212 = vpack.c.b16 %v5037, %v5032
    %v7213 = vpack.c.b16 %v5043, %v5038
    %v7214 = vpack.c.b16 %v5044, %v5039
    %v7215 = vpack.c.b16 %v5045, %v5040
    %v7216 = vpack.c.b16 %v5046, %v5041
    %v7217 = vpack.c.b16 %v5047, %v5042
    %v7218 = vpack.c.b16 %v5053, %v5048
    %v7219 = vpack.c.b16 %v5054, %v5049
    %v7220 = vpack.c.b16 %v5055, %v5050
    %v7221 = vpack.c.b16 %v5056, %v5051
    %v7222 = vpack.c.b16 %v5057, %v5052
    %v7223 = vpack.c.b16 %v5063, %v5058
    %v7224 = vpack.c.b16 %v5064, %v5059
    %v7225 = vpack.c.b16 %v5065, %v5060
    %v7226 = vpack.c.b16 %v5066, %v5061
    %v7227 = vpack.c.b16 %v5067, %v5062
    %v7228 = vpack.c.b16 %v5073, %v5068
    %v7229 = vpack.c.b16 %v5074, %v5069
    %v7230 = vpack.c.b16 %v5075, %v5070
    %v7231 = vpack.c.b16 %v5076, %v5071
    %v7232 = vpack.c.b16 %v5077, %v5072
    %v7233 = vpack.c.b16 %v5083, %v5078
    %v7234 = vpack.c.b16 %v5084, %v5079
    %v7235 = vpack.c.b16 %v5085, %v5080
    %v7236 = vpack.c.b16 %v5086, %v5081
    %v7237 = vpack.c.b16 %v5087, %v5082
    %v7238 = vpack.c.b16 %v5093, %v5088
    %v7239 = vpack.c.b16 %v5094, %v5089
    %v7240 = vpack.c.b16 %v5095, %v5090
    %v7241 = vpack.c.b16 %v5096, %v5091
    %v7242 = vpack.c.b16 %v5097, %v5092
    %v7243 = vpack.c.b16 %v5103, %v5098
    %v7244 = vpack.c.b16 %v5104, %v5099
    %v7245 = vpack.c.b16 %v5105, %v5100
    %v7246 = vpack.c.b16 %v5106, %v5101
    %v7247 = vpack.c.b16 %v5107, %v5102
    %v7248 = vpack.c.b16 %v5113, %v5108
    %v7249 = vpack.c.b16 %v5114, %v5109
    %v7250 = vpack.c.b16 %v5115, %v5110
    %v7251 = vpack.c.b16 %v5116, %v5111
    %v7252 = vpack.c.b16 %v5117, %v5112
    %v7253 = vpack.c.b16 %v5123, %v5118
    %v7254 = vpack.c.b16 %v5124, %v5119
    %v7255 = vpack.c.b16 %v5125, %v5120
    %v7256 = vpack.c.b16 %v5126, %v5121
    %v7257 = vpack.c.b16 %v5127, %v5122
    %v7258 = vpack.c.b16 %v5133, %v5128
    %v7259 = vpack.c.b16 %v5134, %v5129
    %v7260 = vpack.c.b16 %v5135, %v5130
    %v7261 = vpack.c.b16 %v5136, %v5131
    %v7262 = vpack.c.b16 %v5137, %v5132
    %v7263 = vpack.c.b16 %v5143, %v5138
    %v7264 = vpack.c.b16 %v5144, %v5139
    %v7265 = vpack.c.b16 %v5145, %v5140
    %v7266 = vpack.c.b16 %v5146, %v5141
    %v7267 = vpack.c.b16 %v5147, %v5142
    %v7268 = vpack.c.b16 %v5153, %v5148
    %v7269 = vpack.c.b16 %v5154, %v5149
    %v7270 = vpack.c.b16 %v5155, %v5150
    %v7271 = vpack.c.b16 %v5156, %v5151
    %v7272 = vpack.c.b16 %v5157, %v5152
    %v7273 = vpack.c.b16 %v5163, %v5158
    %v7274 = vpack.c.b16 %v5164, %v5159
    %v7275 = vpack.c.b16 %v5165, %v5160
    %v7276 = vpack.c.b16 %v5166, %v5161
    %v7277 = vpack.c.b16 %v5167, %v5162
    %v7278 = vpack.c.b16 %v5173, %v5168
    %v7279 = vpack.c.b16 %v5174, %v5169
    %v7280 = vpack.c.b16 %v5175, %v5170
    %v7281 = vpack.c.b16 %v5176, %v5171
    %v7282 = vpack.c.b16 %v5177, %v5172
    %v7283 = vpack.c.b16 %v5183, %v5178
    %v7284 = vpack.c.b16 %v5184, %v5179
    %v7285 = vpack.c.b16 %v5185, %v5180
    %v7286 = vpack.c.b16 %v5186, %v5181
    %v7287 = vpack.c.b16 %v5187, %v5182
    %v7288 = vpack.c.b16 %v5193, %v5188
    %v7289 = vpack.c.b16 %v5194, %v5189
    %v7290 = vpack.c.b16 %v5195, %v5190
    %v7291 = vpack.c.b16 %v5196, %v5191
    %v7292 = vpack.c.b16 %v5197, %v5192
    %v7293 = vpack.c.b16 %v5203, %v5198
    %v7294 = vpack.c.b16 %v5204, %v5199
    %v7295 = vpack.c.b16 %v5205, %v5200
    %v7296 = vpack.c.b16 %v5206, %v5201
    %v7297 = vpack.c.b16 %v5207, %v5202
    %v7298 = vpack.c.b16 %v5213, %v5208
    %v7299 = vpack.c.b16 %v5214, %v5209
    %v7300 = vpack.c.b16 %v5215, %v5210
    %v7301 = vpack.c.b16 %v5216, %v5211
    %v7302 = vpack.c.b16 %v5217, %v5212
    %v7303 = vpack.c.b16 %v5223, %v5218
    %v7304 = vpack.c.b16 %v5224, %v5219
    %v7305 = vpack.c.b16 %v5225, %v5220
    %v7306 = vpack.c.b16 %v5226, %v5221
    %v7307 = vpack.c.b16 %v5227, %v5222
    %v7308 = vpack.c.b16 %v5233, %v5228
    %v7309 = vpack.c.b16 %v5234, %v5229
    %v7310 = vpack.c.b16 %v5235, %v5230
    %v7311 = vpack.c.b16 %v5236, %v5231
    %v7312 = vpack.c.b16 %v5237, %v5232
    %v7313 = vpack.c.b16 %v5243, %v5238
    %v7314 = vpack.c.b16 %v5244, %v5239
    %v7315 = vpack.c.b16 %v5245, %v5240
    %v7316 = vpack.c.b16 %v5246, %v5241
    %v7317 = vpack.c.b16 %v5247, %v5242
    %v7318 = vpack.c.b16 %v5253, %v5248
    %v7319 = vpack.c.b16 %v5254, %v5249
    %v7320 = vpack.c.b16 %v5255, %v5250
    %v7321 = vpack.c.b16 %v5256, %v5251
    %v7322 = vpack.c.b16 %v5257, %v5252
    %v7323 = vpack.c.b16 %v5263, %v5258
    %v7324 = vpack.c.b16 %v5264, %v5259
    %v7325 = vpack.c.b16 %v5265, %v5260
    %v7326 = vpack.c.b16 %v5266, %v5261
    %v7327 = vpack.c.b16 %v5267, %v5262
    %v7328 = vpack.c.b16 %v5273, %v5268
    %v7329 = vpack.c.b16 %v5274, %v5269
    %v7330 = vpack.c.b16 %v5275, %v5270
    %v7331 = vpack.c.b16 %v5276, %v5271
    %v7332 = vpack.c.b16 %v5277, %v5272
    %v7333 = vpack.c.b16 %v5283, %v5278
    %v7334 = vpack.c.b16 %v5284, %v5279
    %v7335 = vpack.c.b16 %v5285, %v5280
    %v7336 = vpack.c.b16 %v5286, %v5281
    %v7337 = vpack.c.b16 %v5287, %v5282
    %v7338 = vpack.c.b16 %v5293, %v5288
    %v7339 = vpack.c.b16 %v5294, %v5289
    %v7340 = vpack.c.b16 %v5295, %v5290
    %v7341 = vpack.c.b16 %v5296, %v5291
    %v7342 = vpack.c.b16 %v5297, %v5292
    %v7343 = vpack.c.b16 %v5303, %v5298
    %v7344 = vpack.c.b16 %v5304, %v5299
    %v7345 = vpack.c.b16 %v5305, %v5300
    %v7346 = vpack.c.b16 %v5306, %v5301
    %v7347 = vpack.c.b16 %v5307, %v5302
    %v7348 = vpack.c.b16 %v5313, %v5308
    %v7349 = vpack.c.b16 %v5314, %v5309
    %v7350 = vpack.c.b16 %v5315, %v5310
    %v7351 = vpack.c.b16 %v5316, %v5311
    %v7352 = vpack.c.b16 %v5317, %v5312
    %v7353 = vpack.c.b16 %v5323, %v5318
    %v7354 = vpack.c.b16 %v5324, %v5319
    %v7355 = vpack.c.b16 %v5325, %v5320
    %v7356 = vpack.c.b16 %v5326, %v5321
    %v7357 = vpack.c.b16 %v5327, %v5322
    %v7358 = vpack.c.b16 %v5333, %v5328
    %v7359 = vpack.c.b16 %v5334, %v5329
    %v7360 = vpack.c.b16 %v5335, %v5330
    %v7361 = vpack.c.b16 %v5336, %v5331
    %v7362 = vpack.c.b16 %v5337, %v5332
    %v7363 = vpack.c.b16 %v5343, %v5338
    %v7364 = vpack.c.b16 %v5344, %v5339
    %v7365 = vpack.c.b16 %v5345, %v5340
    %v7366 = vpack.c.b16 %v5346, %v5341
    %v7367 = vpack.c.b16 %v5347, %v5342
    %v7368 = vpack.c.b16 %v5353, %v5348
    %v7369 = vpack.c.b16 %v5354, %v5349
    %v7370 = vpack.c.b16 %v5355, %v5350
    %v7371 = vpack.c.b16 %v5356, %v5351
    %v7372 = vpack.c.b16 %v5357, %v5352
    %v7373 = vpack.c.b16 %v5363, %v5358
    %v7374 = vpack.c.b16 %v5364, %v5359
    %v7375 = vpack.c.b16 %v5365, %v5360
    %v7376 = vpack.c.b16 %v5366, %v5361
    %v7377 = vpack.c.b16 %v5367, %v5362
    %v7378 = vpack.c.b16 %v5373, %v5368
    %v7379 = vpack.c.b16 %v5374, %v5369
    %v7380 = vpack.c.b16 %v5375, %v5370
    %v7381 = vpack.c.b16 %v5376, %v5371
    %v7382 = vpack.c.b16 %v5377, %v5372
    %v7383 = vpack.c.b16 %v5383, %v5378
    %v7384 = vpack.c.b16 %v5384, %v5379
    %v7385 = vpack.c.b16 %v5385, %v5380
    %v7386 = vpack.c.b16 %v5386, %v5381
    %v7387 = vpack.c.b16 %v5387, %v5382
    %v7388 = vpack.c.b16 %v5393, %v5388
    %v7389 = vpack.c.b16 %v5394, %v5389
    %v7390 = vpack.c.b16 %v5395, %v5390
    %v7391 = vpack.c.b16 %v5396, %v5391
    %v7392 = vpack.c.b16 %v5397, %v5392
    %v7393 = vpack.c.b16 %v5403, %v5398
    %v7394 = vpack.c.b16 %v5404, %v5399
    %v7395 = vpack.c.b16 %v5405, %v5400
    %v7396 = vpack.c.b16 %v5406, %v5401
    %v7397 = vpack.c.b16 %v5407, %v5402
    %v7398 = vpack.c.b16 %v5413, %v5408
    %v7399 = vpack.c.b16 %v5414, %v5409
    %v7400 = vpack.c.b16 %v5415, %v5410
    %v7401 = vpack.c.b16 %v5416, %v5411
    %v7402 = vpack.c.b16 %v5417, %v5412
    %v7403 = vpack.c.b16 %v5423, %v5418
    %v7404 = vpack.c.b16 %v5424, %v5419
    %v7405 = vpack.c.b16 %v5425, %v5420
    %v7406 = vpack.c.b16 %v5426, %v5421
    %v7407 = vpack.c.b16 %v5427, %v5422
    %v7408 = vpack.c.b16 %v5433, %v5428
    %v7409 = vpack.c.b16 %v5434, %v5429
    %v7410 = vpack.c.b16 %v5435, %v5430
    %v7411 = vpack.c.b16 %v5436, %v5431
    %v7412 = vpack.c.b16 %v5437, %v5432
    %v7413 = vpack.c.b16 %v5443, %v5438
    %v7414 = vpack.c.b16 %v5444, %v5439
    %v7415 = vpack.c.b16 %v5445, %v5440
    %v7416 = vpack.c.b16 %v5446, %v5441
    %v7417 = vpack.c.b16 %v5447, %v5442
    %v7418 = vpack.c.b16 %v5453, %v5448
    %v7419 = vpack.c.b16 %v5454, %v5449
    %v7420 = vpack.c.b16 %v5455, %v5450
    %v7421 = vpack.c.b16 %v5456, %v5451
    %v7422 = vpack.c.b16 %v5457, %v5452
    %v7423 = vpack.c.b16 %v5463, %v5458
    %v7424 = vpack.c.b16 %v5464, %v5459
    %v7425 = vpack.c.b16 %v5465, %v5460
    %v7426 = vpack.c.b16 %v5466, %v5461
    %v7427 = vpack.c.b16 %v5467, %v5462
    %v7428 = vpack.c.b16 %v5473, %v5468
    %v7429 = vpack.c.b16 %v5474, %v5469
    %v7430 = vpack.c.b16 %v5475, %v5470
    %v7431 = vpack.c.b16 %v5476, %v5471
    %v7432 = vpack.c.b16 %v5477, %v5472
    %v7433 = vpack.c.b16 %v5483, %v5478
    %v7434 = vpack.c.b16 %v5484, %v5479
    %v7435 = vpack.c.b16 %v5485, %v5480
    %v7436 = vpack.c.b16 %v5486, %v5481
    %v7437 = vpack.c.b16 %v5487, %v5482
    %v7438 = vpack.c.b16 %v5493, %v5488
    %v7439 = vpack.c.b16 %v5494, %v5489
    %v7440 = vpack.c.b16 %v5495, %v5490
    %v7441 = vpack.c.b16 %v5496, %v5491
    %v7442 = vpack.c.b16 %v5497, %v5492
    %v7443 = vpack.c.b16 %v5503, %v5498
    %v7444 = vpack.c.b16 %v5504, %v5499
    %v7445 = vpack.c.b16 %v5505, %v5500
    %v7446 = vpack.c.b16 %v5506, %v5501
    %v7447 = vpack.c.b16 %v5507, %v5502
    %v7448 = vpack.c.b16 %v5513, %v5508
    %v7449 = vpack.c.b16 %v5514, %v5509
    %v7450 = vpack.c.b16 %v5515, %v5510
    %v7451 = vpack.c.b16 %v5516, %v5511
    %v7452 = vpack.c.b16 %v5517, %v5512
    %v7453 = vpack.c.b16 %v5523, %v5518
    %v7454 = vpack.c.b16 %v5524, %v5519
    %v7455 = vpack.c.b16 %v5525, %v5520
    %v7456 = vpack.c.b16 %v5526, %v5521
    %v7457 = vpack.c.b16 %v5527, %v5522
    %v7458 = vpack.c.b16 %v5533, %v5528
    %v7459 = vpack.c.b16 %v5534, %v5529
    %v7460 = vpack.c.b16 %v5535, %v5530
    %v7461 = vpack.c.b16 %v5536, %v5531
    %v7462 = vpack.c.b16 %v5537, %v5532
    %v7463 = vpack.c.b16 %v5543, %v5538
    %v7464 = vpack.c.b16 %v5544, %v5539
    %v7465 = vpack.c.b16 %v5545, %v5540
    %v7466 = vpack.c.b16 %v5546, %v5541
    %v7467 = vpack.c.b16 %v5547, %v5542
    %v7468 = vpack.c.b16 %v5553, %v5548
    %v7469 = vpack.c.b16 %v5554, %v5549
    %v7470 = vpack.c.b16 %v5555, %v5550
    %v7471 = vpack.c.b16 %v5556, %v5551
    %v7472 = vpack.c.b16 %v5557, %v5552
    %v7473 = vpack.c.b16 %v5563, %v5558
    %v7474 = vpack.c.b16 %v5564, %v5559
    %v7475 = vpack.c.b16 %v5565, %v5560
    %v7476 = vpack.c.b16 %v5566, %v5561
    %v7477 = vpack.c.b16 %v5567, %v5562
    %v7478 = vpack.c.b16 %v5573, %v5568
    %v7479 = vpack.c.b16 %v5574, %v5569
    %v7480 = vpack.c.b16 %v5575, %v5570
    %v7481 = vpack.c.b16 %v5576, %v5571
    %v7482 = vpack.c.b16 %v5577, %v5572
    %v7483 = vpack.c.b16 %v5583, %v5578
    %v7484 = vpack.c.b16 %v5584, %v5579
    %v7485 = vpack.c.b16 %v5585, %v5580
    %v7486 = vpack.c.b16 %v5586, %v5581
    %v7487 = vpack.c.b16 %v5587, %v5582
    %v7488 = vpack.c.b16 %v5593, %v5588
    %v7489 = vpack.c.b16 %v5594, %v5589
    %v7490 = vpack.c.b16 %v5595, %v5590
    %v7491 = vpack.c.b16 %v5596, %v5591
    %v7492 = vpack.c.b16 %v5597, %v5592
    %v7493 = vpack.c.b16 %v5603, %v5598
    %v7494 = vpack.c.b16 %v5604, %v5599
    %v7495 = vpack.c.b16 %v5605, %v5600
    %v7496 = vpack.c.b16 %v5606, %v5601
    %v7497 = vpack.c.b16 %v5607, %v5602
    %v7498 = vpack.c.b16 %v5613, %v5608
    %v7499 = vpack.c.b16 %v5614, %v5609
    %v7500 = vpack.c.b16 %v5615, %v5610
    %v7501 = vpack.c.b16 %v5616, %v5611
    %v7502 = vpack.c.b16 %v5617, %v5612
    %v7503 = vpack.c.b16 %v5623, %v5618
    %v7504 = vpack.c.b16 %v5624, %v5619
    %v7505 = vpack.c.b16 %v5625, %v5620
    %v7506 = vpack.c.b16 %v5626, %v5621
    %v7507 = vpack.c.b16 %v5627, %v5622
    %v7508 = vpack.c.b16 %v5633, %v5628
    %v7509 = vpack.c.b16 %v5634, %v5629
    %v7510 = vpack.c.b16 %v5635, %v5630
    %v7511 = vpack.c.b16 %v5636, %v5631
    %v7512 = vpack.c.b16 %v5637, %v5632
    %v7513 = vpack.c.b16 %v5643, %v5638
    %v7514 = vpack.c.b16 %v5644, %v5639
    %v7515 = vpack.c.b16 %v5645, %v5640
    %v7516 = vpack.c.b16 %v5646, %v5641
    %v7517 = vpack.c.b16 %v5647, %v5642
    %v7518 = vpack.c.b16 %v5653, %v5648
    %v7519 = vpack.c.b16 %v5654, %v5649
    %v7520 = vpack.c.b16 %v5655, %v5650
    %v7521 = vpack.c.b16 %v5656, %v5651
    %v7522 = vpack.c.b16 %v5657, %v5652
    %v7523 = vpack.c.b16 %v5663, %v5658
    %v7524 = vpack.c.b16 %v5664, %v5659
    %v7525 = vpack.c.b16 %v5665, %v5660
    %v7526 = vpack.c.b16 %v5666, %v5661
    %v7527 = vpack.c.b16 %v5667, %v5662
    %v7528 = vpack.c.b16 %v5673, %v5668
    %v7529 = vpack.c.b16 %v5674, %v5669
    %v7530 = vpack.c.b16 %v5675, %v5670
    %v7531 = vpack.c.b16 %v5676, %v5671
    %v7532 = vpack.c.b16 %v5677, %v5672
    %v7533 = vpack.c.b16 %v5683, %v5678
    %v7534 = vpack.c.b16 %v5684, %v5679
    %v7535 = vpack.c.b16 %v5685, %v5680
    %v7536 = vpack.c.b16 %v5686, %v5681
    %v7537 = vpack.c.b16 %v5687, %v5682
    %v7538 = vpack.c.b16 %v5693, %v5688
    %v7539 = vpack.c.b16 %v5694, %v5689
    %v7540 = vpack.c.b16 %v5695, %v5690
    %v7541 = vpack.c.b16 %v5696, %v5691
    %v7542 = vpack.c.b16 %v5697, %v5692
    %v7543 = vpack.c.b16 %v5703, %v5698
    %v7544 = vpack.c.b16 %v5704, %v5699
    %v7545 = vpack.c.b16 %v5705, %v5700
    %v7546 = vpack.c.b16 %v5706, %v5701
    %v7547 = vpack.c.b16 %v5707, %v5702
    %v7548 = vpack.c.b16 %v5713, %v5708
    %v7549 = vpack.c.b16 %v5714, %v5709
    %v7550 = vpack.c.b16 %v5715, %v5710
    %v7551 = vpack.c.b16 %v5716, %v5711
    %v7552 = vpack.c.b16 %v5717, %v5712
    %v7553 = vpack.c.b16 %v5723, %v5718
    %v7554 = vpack.c.b16 %v5724, %v5719
    %v7555 = vpack.c.b16 %v5725, %v5720
    %v7556 = vpack.c.b16 %v5726, %v5721
    %v7557 = vpack.c.b16 %v5727, %v5722
    %v7558 = vpack.c.b16 %v5733, %v5728
    %v7559 = vpack.c.b16 %v5734, %v5729
    %v7560 = vpack.c.b16 %v5735, %v5730
    %v7561 = vpack.c.b16 %v5736, %v5731
    %v7562 = vpack.c.b16 %v5737, %v5732
    %v7563 = vpack.c.b16 %v5743, %v5738
    %v7564 = vpack.c.b16 %v5744, %v5739
    %v7565 = vpack.c.b16 %v5745, %v5740
    %v7566 = vpack.c.b16 %v5746, %v5741
    %v7567 = vpack.c.b16 %v5747, %v5742
    %v7568 = vpack.c.b16 %v5753, %v5748
    %v7569 = vpack.c.b16 %v5754, %v5749
    %v7570 = vpack.c.b16 %v5755, %v5750
    %v7571 = vpack.c.b16 %v5756, %v5751
    %v7572 = vpack.c.b16 %v5757, %v5752
    %v7573 = vpack.c.b16 %v5763, %v5758
    %v7574 = vpack.c.b16 %v5764, %v5759
    %v7575 = vpack.c.b16 %v5765, %v5760
    %v7576 = vpack.c.b16 %v5766, %v5761
    %v7577 = vpack.c.b16 %v5767, %v5762
    %v7578 = vpack.c.b16 %v5773, %v5768
    %v7579 = vpack.c.b16 %v5774, %v5769
    %v7580 = vpack.c.b16 %v5775, %v5770
    %v7581 = vpack.c.b16 %v5776, %v5771
    %v7582 = vpack.c.b16 %v5777, %v5772
    %v7583 = vpack.c.b16 %v5783, %v5778
    %v7584 = vpack.c.b16 %v5784, %v5779
    %v7585 = vpack.c.b16 %v5785, %v5780
    %v7586 = vpack.c.b16 %v5786, %v5781
    %v7587 = vpack.c.b16 %v5787, %v5782
    %v7588 = vpack.c.b16 %v5793, %v5788
    %v7589 = vpack.c.b16 %v5794, %v5789
    %v7590 = vpack.c.b16 %v5795, %v5790
    %v7591 = vpack.c.b16 %v5796, %v5791
    %v7592 = vpack.c.b16 %v5797, %v5792
    %v7593 = vpack.c.b16 %v5803, %v5798
    %v7594 = vpack.c.b16 %v5804, %v5799
    %v7595 = vpack.c.b16 %v5805, %v5800
    %v7596 = vpack.c.b16 %v5806, %v5801
    %v7597 = vpack.c.b16 %v5807, %v5802
    %v7598 = vpack.c.b16 %v5813, %v5808
    %v7599 = vpack.c.b16 %v5814, %v5809
    %v7600 = vpack.c.b16 %v5815, %v5810
    %v7601 = vpack.c.b16 %v5816, %v5811
    %v7602 = vpack.c.b16 %v5817, %v5812
    %v7603 = vpack.c.b16 %v5823, %v5818
    %v7604 = vpack.c.b16 %v5824, %v5819
    %v7605 = vpack.c.b16 %v5825, %v5820
    %v7606 = vpack.c.b16 %v5826, %v5821
    %v7607 = vpack.c.b16 %v5827, %v5822
    %v7608 = vpack.c.b16 %v5833, %v5828
    %v7609 = vpack.c.b16 %v5834, %v5829
    %v7610 = vpack.c.b16 %v5835, %v5830
    %v7611 = vpack.c.b16 %v5836, %v5831
    %v7612 = vpack.c.b16 %v5837, %v5832
    %v7613 = vpack.c.b16 %v5843, %v5838
    %v7614 = vpack.c.b16 %v5844, %v5839
    %v7615 = vpack.c.b16 %v5845, %v5840
    %v7616 = vpack.c.b16 %v5846, %v5841
    %v7617 = vpack.c.b16 %v5847, %v5842
    %v7618 = vpack.c.b16 %v5853, %v5848
    %v7619 = vpack.c.b16 %v5854, %v5849
    %v7620 = vpack.c.b16 %v5855, %v5850
    %v7621 = vpack.c.b16 %v5856, %v5851
    %v7622 = vpack.c.b16 %v5857, %v5852
    %v7623 = vpack.c.b16 %v5863, %v5858
    %v7624 = vpack.c.b16 %v5864, %v5859
    %v7625 = vpack.c.b16 %v5865, %v5860
    %v7626 = vpack.c.b16 %v5866, %v5861
    %v7627 = vpack.c.b16 %v5867, %v5862
    %v7628 = vpack.c.b16 %v5873, %v5868
    %v7629 = vpack.c.b16 %v5874, %v5869
    %v7630 = vpack.c.b16 %v5875, %v5870
    %v7631 = vpack.c.b16 %v5876, %v5871
    %v7632 = vpack.c.b16 %v5877, %v5872
    %v7633 = vpack.c.b16 %v5883, %v5878
    %v7634 = vpack.c.b16 %v5884, %v5879
    %v7635 = vpack.c.b16 %v5885, %v5880
    %v7636 = vpack.c.b16 %v5886, %v5881
    %v7637 = vpack.c.b16 %v5887, %v5882
    %v7638 = vpack.c.b16 %v5893, %v5888
    %v7639 = vpack.c.b16 %v5894, %v5889
    %v7640 = vpack.c.b16 %v5895, %v5890
    %v7641 = vpack.c.b16 %v5896, %v5891
    %v7642 = vpack.c.b16 %v5897, %v5892
    %v7643 = vpack.c.b16 %v5903, %v5898
    %v7644 = vpack.c.b16 %v5904, %v5899
    %v7645 = vpack.c.b16 %v5905, %v5900
    %v7646 = vpack.c.b16 %v5906, %v5901
    %v7647 = vpack.c.b16 %v5907, %v5902
    %v7648 = vpack.c.b16 %v5913, %v5908
    %v7649 = vpack.c.b16 %v5914, %v5909
    %v7650 = vpack.c.b16 %v5915, %v5910
    %v7651 = vpack.c.b16 %v5916, %v5911
    %v7652 = vpack.c.b16 %v5917, %v5912
    %v7653 = vpack.c.b16 %v5923, %v5918
    %v7654 = vpack.c.b16 %v5924, %v5919
    %v7655 = vpack.c.b16 %v5925, %v5920
    %v7656 = vpack.c.b16 %v5926, %v5921
    %v7657 = vpack.c.b16 %v5927, %v5922
    %v7658 = vpack.c.b16 %v5933, %v5928
    %v7659 = vpack.c.b16 %v5934, %v5929
    %v7660 = vpack.c.b16 %v5935, %v5930
    %v7661 = vpack.c.b16 %v5936, %v5931
    %v7662 = vpack.c.b16 %v5937, %v5932
    %v7663 = vpack.c.b16 %v5943, %v5938
    %v7664 = vpack.c.b16 %v5944, %v5939
    %v7665 = vpack.c.b16 %v5945, %v5940
    %v7666 = vpack.c.b16 %v5946, %v5941
    %v7667 = vpack.c.b16 %v5947, %v5942
    %v7668 = vpack.c.b16 %v5953, %v5948
    %v7669 = vpack.c.b16 %v5954, %v5949
    %v7670 = vpack.c.b16 %v5955, %v5950
    %v7671 = vpack.c.b16 %v5956, %v5951
    %v7672 = vpack.c.b16 %v5957, %v5952
    %v7673 = vpack.c.b16 %v5963, %v5958
    %v7674 = vpack.c.b16 %v5964, %v5959
    %v7675 = vpack.c.b16 %v5965, %v5960
    %v7676 = vpack.c.b16 %v5966, %v5961
    %v7677 = vpack.c.b16 %v5967, %v5962
    %v7678 = vpack.c.b16 %v5973, %v5968
    %v7679 = vpack.c.b16 %v5974, %v5969
    %v7680 = vpack.c.b16 %v5975, %v5970
    %v7681 = vpack.c.b16 %v5976, %v5971
    %v7682 = vpack.c.b16 %v5977, %v5972
    %v7683 = vpack.c.b16 %v5983, %v5978
    %v7684 = vpack.c.b16 %v5984, %v5979
    %v7685 = vpack.c.b16 %v5985, %v5980
    %v7686 = vpack.c.b16 %v5986, %v5981
    %v7687 = vpack.c.b16 %v5987, %v5982
    %v7688 = vpack.c.b16 %v5993, %v5988
    %v7689 = vpack.c.b16 %v5994, %v5989
    %v7690 = vpack.c.b16 %v5995, %v5990
    %v7691 = vpack.c.b16 %v5996, %v5991
    %v7692 = vpack.c.b16 %v5997, %v5992
    %v7693 = vpack.c.b16 %v6003, %v5998
    %v7694 = vpack.c.b16 %v6004, %v5999
    %v7695 = vpack.c.b16 %v6005, %v6000
    %v7696 = vpack.c.b16 %v6006, %v6001
    %v7697 = vpack.c.b16 %v6007, %v6002
    %v7698 = vpack.c.b16 %v6013, %v6008
    %v7699 = vpack.c.b16 %v6014, %v6009
    %v7700 = vpack.c.b16 %v6015, %v6010
    %v7701 = vpack.c.b16 %v6016, %v6011
    %v7702 = vpack.c.b16 %v6017, %v6012
    %v7703 = vpack.c.b16 %v6023, %v6018
    %v7704 = vpack.c.b16 %v6024, %v6019
    %v7705 = vpack.c.b16 %v6025, %v6020
    %v7706 = vpack.c.b16 %v6026, %v6021
    %v7707 = vpack.c.b16 %v6027, %v6022
    %v7708 = vpack.c.b16 %v6033, %v6028
    %v7709 = vpack.c.b16 %v6034, %v6029
    %v7710 = vpack.c.b16 %v6035, %v6030
    %v7711 = vpack.c.b16 %v6036, %v6031
    %v7712 = vpack.c.b16 %v6037, %v6032
    %v7713 = vpack.c.b16 %v6043, %v6038
    %v7714 = vpack.c.b16 %v6044, %v6039
    %v7715 = vpack.c.b16 %v6045, %v6040
    %v7716 = vpack.c.b16 %v6046, %v6041
    %v7717 = vpack.c.b16 %v6047, %v6042
    %v7718 = vpack.c.b16 %v6053, %v6048
    %v7719 = vpack.c.b16 %v6054, %v6049
    %v7720 = vpack.c.b16 %v6055, %v6050
    %v7721 = vpack.c.b16 %v6056, %v6051
    %v7722 = vpack.c.b16 %v6057, %v6052
    %v7723 = vpack.c.b16 %v6063, %v6058
    %v7724 = vpack.c.b16 %v6064, %v6059
    %v7725 = vpack.c.b16 %v6065, %v6060
    %v7726 = vpack.c.b16 %v6066, %v6061
    %v7727 = vpack.c.b16 %v6067, %v6062
    %v7728 = vpack.c.b16 %v6073, %v6068
    %v7729 = vpack.c.b16 %v6074, %v6069
    %v7730 = vpack.c.b16 %v6075, %v6070
    %v7731 = vpack.c.b16 %v6076, %v6071
    %v7732 = vpack.c.b16 %v6077, %v6072
    %v7733 = vpack.c.b16 %v6083, %v6078
    %v7734 = vpack.c.b16 %v6084, %v6079
    %v7735 = vpack.c.b16 %v6085, %v6080
    %v7736 = vpack.c.b16 %v6086, %v6081
    %v7737 = vpack.c.b16 %v6087, %v6082
    %v7738 = vpack.c.b16 %v6093, %v6088
    %v7739 = vpack.c.b16 %v6094, %v6089
    %v7740 = vpack.c.b16 %v6095, %v6090
    %v7741 = vpack.c.b16 %v6096, %v6091
    %v7742 = vpack.c.b16 %v6097, %v6092
    %v7743 = vpack.c.b16 %v6103, %v6098
    %v7744 = vpack.c.b16 %v6104, %v6099
    %v7745 = vpack.c.b16 %v6105, %v6100
    %v7746 = vpack.c.b16 %v6106, %v6101
    %v7747 = vpack.c.b16 %v6107, %v6102
    %v7748 = vpack.c.b16 %v6113, %v6108
    %v7749 = vpack.c.b16 %v6114, %v6109
    %v7750 = vpack.c.b16 %v6115, %v6110
    %v7751 = vpack.c.b16 %v6116, %v6111
    %v7752 = vpack.c.b16 %v6117, %v6112
    %v7753 = vpack.c.b16 %v6123, %v6118
    %v7754 = vpack.c.b16 %v6124, %v6119
    %v7755 = vpack.c.b16 %v6125, %v6120
    %v7756 = vpack.c.b16 %v6126, %v6121
    %v7757 = vpack.c.b16 %v6127, %v6122
    %v7758 = vpack.c.b16 %v6133, %v6128
    %v7759 = vpack.c.b16 %v6134, %v6129
    %v7760 = vpack.c.b16 %v6135, %v6130
    %v7761 = vpack.c.b16 %v6136, %v6131
    %v7762 = vpack.c.b16 %v6137, %v6132
    %v7763 = vpack.c.b16 %v6143, %v6138
    %v7764 = vpack.c.b16 %v6144, %v6139
    %v7765 = vpack.c.b16 %v6145, %v6140
    %v7766 = vpack.c.b16 %v6146, %v6141
    %v7767 = vpack.c.b16 %v6147, %v6142
    %v7768 = vpack.c.b16 %v6153, %v6148
    %v7769 = vpack.c.b16 %v6154, %v6149
    %v7770 = vpack.c.b16 %v6155, %v6150
    %v7771 = vpack.c.b16 %v6156, %v6151
    %v7772 = vpack.c.b16 %v6157, %v6152
    %v7773 = vpack.c.b16 %v6163, %v6158
    %v7774 = vpack.c.b16 %v6164, %v6159
    %v7775 = vpack.c.b16 %v6165, %v6160
    %v7776 = vpack.c.b16 %v6166, %v6161
    %v7777 = vpack.c.b16 %v6167, %v6162
    %v7778 = vpack.c.b16 %v6173, %v6168
    %v7779 = vpack.c.b16 %v6174, %v6169
    %v7780 = vpack.c.b16 %v6175, %v6170
    %v7781 = vpack.c.b16 %v6176, %v6171
    %v7782 = vpack.c.b16 %v6177, %v6172
    %v7783 = vpack.c.b16 %v6183, %v6178
    %v7784 = vpack.c.b16 %v6184, %v6179
    %v7785 = vpack.c.b16 %v6185, %v6180
    %v7786 = vpack.c.b16 %v6186, %v6181
    %v7787 = vpack.c.b16 %v6187, %v6182
    %v7788 = vpack.c.b16 %v6193, %v6188
    %v7789 = vpack.c.b16 %v6194, %v6189
    %v7790 = vpack.c.b16 %v6195, %v6190
    %v7791 = vpack.c.b16 %v6196, %v6191
    %v7792 = vpack.c.b16 %v6197, %v6192
    %v7793 = vpack.c.b16 %v6203, %v6198
    %v7794 = vpack.c.b16 %v6204, %v6199
    %v7795 = vpack.c.b16 %v6205, %v6200
    %v7796 = vpack.c.b16 %v6206, %v6201
    %v7797 = vpack.c.b16 %v6207, %v6202
    %v7798 = vpack.c.b16 %v6213, %v6208
    %v7799 = vpack.c.b16 %v6214, %v6209
    %v7800 = vpack.c.b16 %v6215, %v6210
    %v7801 = vpack.c.b16 %v6216, %v6211
    %v7802 = vpack.c.b16 %v6217, %v6212
    %v7803 = vpack.c.b16 %v6223, %v6218
    %v7804 = vpack.c.b16 %v6224, %v6219
    %v7805 = vpack.c.b16 %v6225, %v6220
    %v7806 = vpack.c.b16 %v6226, %v6221
    %v7807 = vpack.c.b16 %v6227, %v6222
    %v7808 = vpack.c.b16 %v6233, %v6228
    %v7809 = vpack.c.b16 %v6234, %v6229
    %v7810 = vpack.c.b16 %v6235, %v6230
    %v7811 = vpack.c.b16 %v6236, %v6231
    %v7812 = vpack.c.b16 %v6237, %v6232
    %v7813 = vpack.c.b16 %v6243, %v6238
    %v7814 = vpack.c.b16 %v6244, %v6239
    %v7815 = vpack.c.b16 %v6245, %v6240
    %v7816 = vpack.c.b16 %v6246, %v6241
    %v7817 = vpack.c.b16 %v6247, %v6242
    %v7818 = vpack.c.b16 %v6253, %v6248
    %v7819 = vpack.c.b16 %v6254, %v6249
    %v7820 = vpack.c.b16 %v6255, %v6250
    %v7821 = vpack.c.b16 %v6256, %v6251
    %v7822 = vpack.c.b16 %v6257, %v6252
    %v7823 = vpack.c.b16 %v6263, %v6258
    %v7824 = vpack.c.b16 %v6264, %v6259
    %v7825 = vpack.c.b16 %v6265, %v6260
    %v7826 = vpack.c.b16 %v6266, %v6261
    %v7827 = vpack.c.b16 %v6267, %v6262
    %v7828 = vpack.c.b16 %v6273, %v6268
    %v7829 = vpack.c.b16 %v6274, %v6269
    %v7830 = vpack.c.b16 %v6275, %v6270
    %v7831 = vpack.c.b16 %v6276, %v6271
    %v7832 = vpack.c.b16 %v6277, %v6272
    %v7833 = vpack.c.b16 %v6283, %v6278
    %v7834 = vpack.c.b16 %v6284, %v6279
    %v7835 = vpack.c.b16 %v6285, %v6280
    %v7836 = vpack.c.b16 %v6286, %v6281
    %v7837 = vpack.c.b16 %v6287, %v6282
    %v7838 = vpack.c.b16 %v6293, %v6288
    %v7839 = vpack.c.b16 %v6294, %v6289
    %v7840 = vpack.c.b16 %v6295, %v6290
    %v7841 = vpack.c.b16 %v6296, %v6291
    %v7842 = vpack.c.b16 %v6297, %v6292
    %v7843 = vpack.c.b16 %v6303, %v6298
    %v7844 = vpack.c.b16 %v6304, %v6299
    %v7845 = vpack.c.b16 %v6305, %v6300
    %v7846 = vpack.c.b16 %v6306, %v6301
    %v7847 = vpack.c.b16 %v6307, %v6302
    %v7848 = vpack.c.b16 %v6313, %v6308
    %v7849 = vpack.c.b16 %v6314, %v6309
    %v7850 = vpack.c.b16 %v6315, %v6310
    %v7851 = vpack.c.b16 %v6316, %v6311
    %v7852 = vpack.c.b16 %v6317, %v6312
    %v7853 = vpack.c.b16 %v6323, %v6318
    %v7854 = vpack.c.b16 %v6324, %v6319
    %v7855 = vpack.c.b16 %v6325, %v6320
    %v7856 = vpack.c.b16 %v6326, %v6321
    %v7857 = vpack.c.b16 %v6327, %v6322
    %v7858 = vpack.c.b16 %v6333, %v6328
    %v7859 = vpack.c.b16 %v6334, %v6329
    %v7860 = vpack.c.b16 %v6335, %v6330
    %v7861 = vpack.c.b16 %v6336, %v6331
    %v7862 = vpack.c.b16 %v6337, %v6332
    %v7863 = vpack.c.b16 %v6343, %v6338
    %v7864 = vpack.c.b16 %v6344, %v6339
    %v7865 = vpack.c.b16 %v6345, %v6340
    %v7866 = vpack.c.b16 %v6346, %v6341
    %v7867 = vpack.c.b16 %v6347, %v6342
    %v7868 = vpack.c.b16 %v6353, %v6348
    %v7869 = vpack.c.b16 %v6354, %v6349
    %v7870 = vpack.c.b16 %v6355, %v6350
    %v7871 = vpack.c.b16 %v6356, %v6351
    %v7872 = vpack.c.b16 %v6357, %v6352
    %v7873 = vpack.c.b16 %v6363, %v6358
    %v7874 = vpack.c.b16 %v6364, %v6359
    %v7875 = vpack.c.b16 %v6365, %v6360
    %v7876 = vpack.c.b16 %v6366, %v6361
    %v7877 = vpack.c.b16 %v6367, %v6362
    %v7878 = vpack.c.b16 %v6373, %v6368
    %v7879 = vpack.c.b16 %v6374, %v6369
    %v7880 = vpack.c.b16 %v6375, %v6370
    %v7881 = vpack.c.b16 %v6376, %v6371
    %v7882 = vpack.c.b16 %v6377, %v6372
    %v7883 = vpack.c.b16 %v6383, %v6378
    %v7884 = vpack.c.b16 %v6384, %v6379
    %v7885 = vpack.c.b16 %v6385, %v6380
    %v7886 = vpack.c.b16 %v6386, %v6381
    %v7887 = vpack.c.b16 %v6387, %v6382
    %v7888 = vpack.c.b16 %v6393, %v6388
    %v7889 = vpack.c.b16 %v6394, %v6389
    %v7890 = vpack.c.b16 %v6395, %v6390
    %v7891 = vpack.c.b16 %v6396, %v6391
    %v7892 = vpack.c.b16 %v6397, %v6392
    %v7893 = vpack.c.b16 %v6403, %v6398
    %v7894 = vpack.c.b16 %v6404, %v6399
    %v7895 = vpack.c.b16 %v6405, %v6400
    %v7896 = vpack.c.b16 %v6406, %v6401
    %v7897 = vpack.c.b16 %v6407, %v6402
    %v7898 = vpack.c.b16 %v6413, %v6408
    %v7899 = vpack.c.b16 %v6414, %v6409
    %v7900 = vpack.c.b16 %v6415, %v6410
    %v7901 = vpack.c.b16 %v6416, %v6411
    %v7902 = vpack.c.b16 %v6417, %v6412
    %v7903 = vpack.c.b16 %v6423, %v6418
    %v7904 = vpack.c.b16 %v6424, %v6419
    %v7905 = vpack.c.b16 %v6425, %v6420
    %v7906 = vpack.c.b16 %v6426, %v6421
    %v7907 = vpack.c.b16 %v6427, %v6422
    %v7908 = vpack.c.b16 %v6433, %v6428
    %v7909 = vpack.c.b16 %v6434, %v6429
    %v7910 = vpack.c.b16 %v6435, %v6430
    %v7911 = vpack.c.b16 %v6436, %v6431
    %v7912 = vpack.c.b16 %v6437, %v6432
    %v7913 = vpack.c.b16 %v6443, %v6438
    %v7914 = vpack.c.b16 %v6444, %v6439
    %v7915 = vpack.c.b16 %v6445, %v6440
    %v7916 = vpack.c.b16 %v6446, %v6441
    %v7917 = vpack.c.b16 %v6447, %v6442
    %v7918 = vpack.c.b16 %v6453, %v6448
    %v7919 = vpack.c.b16 %v6454, %v6449
    %v7920 = vpack.c.b16 %v6455, %v6450
    %v7921 = vpack.c.b16 %v6456, %v6451
    %v7922 = vpack.c.b16 %v6457, %v6452
    %v7923 = vpack.c.b16 %v6463, %v6458
    %v7924 = vpack.c.b16 %v6464, %v6459
    %v7925 = vpack.c.b16 %v6465, %v6460
    %v7926 = vpack.c.b16 %v6466, %v6461
    %v7927 = vpack.c.b16 %v6467, %v6462
    %v7928 = vpack.c.b16 %v6473, %v6468
    %v7929 = vpack.c.b16 %v6474, %v6469
    %v7930 = vpack.c.b16 %v6475, %v6470
    %v7931 = vpack.c.b16 %v6476, %v6471
    %v7932 = vpack.c.b16 %v6477, %v6472
    %v7933 = vpack.c.b16 %v6483, %v6478
    %v7934 = vpack.c.b16 %v6484, %v6479
    %v7935 = vpack.c.b16 %v6485, %v6480
    %v7936 = vpack.c.b16 %v6486, %v6481
    %v7937 = vpack.c.b16 %v6487, %v6482
    %v7938 = vpack.c.b16 %v6493, %v6488
    %v7939 = vpack.c.b16 %v6494, %v6489
    %v7940 = vpack.c.b16 %v6495, %v6490
    %v7941 = vpack.c.b16 %v6496, %v6491
    %v7942 = vpack.c.b16 %v6497, %v6492
    %v7943 = vpack.c.b16 %v6503, %v6498
    %v7944 = vpack.c.b16 %v6504, %v6499
    %v7945 = vpack.c.b16 %v6505, %v6500
    %v7946 = vpack.c.b16 %v6506, %v6501
    %v7947 = vpack.c.b16 %v6507, %v6502
    %9388 = vmatpush.bf16.msra.mxu0 %v6543
    %9389 = vmatpush.bf16.msra.mxu0 %v6538
    %9390 = vmatpush.bf16.msra.mxu0 %v6533
    %9391 = vmatpush.bf16.msra.mxu0 %v6528
    %9392 = vmatpush.bf16.msra.mxu0 %v6523
    %9393 = vmatpush.bf16.msra.mxu0 %v6518
    %9394 = vmatpush.bf16.msra.mxu0 %v6513
    %9395 = vmatpush.bf16.msra.mxu0 %v6508
    %9396 = vmatmul.bf16.gmra.mxu0 %v124
    %v9397 = vpop.f32.mrf.mxu0
    %v9398 = vadd.f32 %v1890, %v9397
    %v9399 = vpop.f32.mrf.mxu0
    %9400 = vdwg.mxu0
    %9401 = vmatpush.bf16.msra.mxu0 %v6583
    %9402 = vmatpush.bf16.msra.mxu0 %v6578
    %9403 = vmatpush.bf16.msra.mxu0 %v6573
    %9404 = vmatpush.bf16.msra.mxu0 %v6568
    %9405 = vmatpush.bf16.msra.mxu0 %v6563
    %9406 = vmatpush.bf16.msra.mxu0 %v6558
    %9407 = vmatpush.bf16.msra.mxu0 %v6553
    %9408 = vmatpush.bf16.msra.mxu0 %v6548
    %9409 = vmatmul.bf16.gmra.mxu0 %v125
    %v9410 = vpop.f32.mrf.mxu0
    %v9411 = vadd.f32 %v9398, %v9410
    %v9412 = vpop.f32.mrf.mxu0
    %9413 = vdwg.mxu0
    %9414 = vmatpush.bf16.msra.mxu0 %v6623
    %9415 = vmatpush.bf16.msra.mxu0 %v6618
    %9416 = vmatpush.bf16.msra.mxu0 %v6613
    %9417 = vmatpush.bf16.msra.mxu0 %v6608
    %9418 = vmatpush.bf16.msra.mxu0 %v6603
    %9419 = vmatpush.bf16.msra.mxu0 %v6598
    %9420 = vmatpush.bf16.msra.mxu0 %v6593
    %9421 = vmatpush.bf16.msra.mxu0 %v6588
    %9422 = vmatmul.bf16.gmra.mxu0 %v126
    %v9423 = vpop.f32.mrf.mxu0
    %v9424 = vadd.f32 %v9411, %v9423
    %v9425 = vpop.f32.mrf.mxu0
    %9426 = vdwg.mxu0
    %9427 = vmatpush.bf16.msra.mxu0 %v6663
    %9428 = vmatpush.bf16.msra.mxu0 %v6658
    %9429 = vmatpush.bf16.msra.mxu0 %v6653
    %9430 = vmatpush.bf16.msra.mxu0 %v6648
    %9431 = vmatpush.bf16.msra.mxu0 %v6643
    %9432 = vmatpush.bf16.msra.mxu0 %v6638
    %9433 = vmatpush.bf16.msra.mxu0 %v6633
    %9434 = vmatpush.bf16.msra.mxu0 %v6628
    %9435 = vmatmul.bf16.gmra.mxu0 %v127
    %v9436 = vpop.f32.mrf.mxu0
    %v9437 = vadd.f32 %v9424, %v9436
    %v9438 = vpop.f32.mrf.mxu0
    %9439 = vdwg.mxu0
    %9440 = vmatpush.bf16.msra.mxu0 %v6703
    %9441 = vmatpush.bf16.msra.mxu0 %v6698
    %9442 = vmatpush.bf16.msra.mxu0 %v6693
    %9443 = vmatpush.bf16.msra.mxu0 %v6688
    %9444 = vmatpush.bf16.msra.mxu0 %v6683
    %9445 = vmatpush.bf16.msra.mxu0 %v6678
    %9446 = vmatpush.bf16.msra.mxu0 %v6673
    %9447 = vmatpush.bf16.msra.mxu0 %v6668
    %9448 = vmatmul.bf16.gmra.mxu0 %v128
    %v9449 = vpop.f32.mrf.mxu0
    %v9450 = vadd.f32 %v9437, %v9449
    %v9451 = vpop.f32.mrf.mxu0
    %9452 = vdwg.mxu0
    %9453 = vmatpush.bf16.msra.mxu0 %v6743
    %9454 = vmatpush.bf16.msra.mxu0 %v6738
    %9455 = vmatpush.bf16.msra.mxu0 %v6733
    %9456 = vmatpush.bf16.msra.mxu0 %v6728
    %9457 = vmatpush.bf16.msra.mxu0 %v6723
    %9458 = vmatpush.bf16.msra.mxu0 %v6718
    %9459 = vmatpush.bf16.msra.mxu0 %v6713
    %9460 = vmatpush.bf16.msra.mxu0 %v6708
    %9461 = vmatmul.bf16.gmra.mxu0 %v129
    %v9462 = vpop.f32.mrf.mxu0
    %v9463 = vadd.f32 %v9450, %v9462
    %v9464 = vpop.f32.mrf.mxu0
    %9465 = vdwg.mxu0
    %9466 = vmatpush.bf16.msra.mxu0 %v6783
    %9467 = vmatpush.bf16.msra.mxu0 %v6778
    %9468 = vmatpush.bf16.msra.mxu0 %v6773
    %9469 = vmatpush.bf16.msra.mxu0 %v6768
    %9470 = vmatpush.bf16.msra.mxu0 %v6763
    %9471 = vmatpush.bf16.msra.mxu0 %v6758
    %9472 = vmatpush.bf16.msra.mxu0 %v6753
    %9473 = vmatpush.bf16.msra.mxu0 %v6748
    %9474 = vmatmul.bf16.gmra.mxu0 %v130
    %v9475 = vpop.f32.mrf.mxu0
    %v9476 = vadd.f32 %v9463, %v9475
    %v9477 = vpop.f32.mrf.mxu0
    %9478 = vdwg.mxu0
    %9479 = vmatpush.bf16.msra.mxu0 %v6823
    %9480 = vmatpush.bf16.msra.mxu0 %v6818
    %9481 = vmatpush.bf16.msra.mxu0 %v6813
    %9482 = vmatpush.bf16.msra.mxu0 %v6808
    %9483 = vmatpush.bf16.msra.mxu0 %v6803
    %9484 = vmatpush.bf16.msra.mxu0 %v6798
    %9485 = vmatpush.bf16.msra.mxu0 %v6793
    %9486 = vmatpush.bf16.msra.mxu0 %v6788
    %9487 = vmatmul.bf16.gmra.mxu0 %v131
    %v9488 = vpop.f32.mrf.mxu0
    %v9489 = vadd.f32 %v9476, %v9488
    %v9490 = vpop.f32.mrf.mxu0
    %9491 = vdwg.mxu0
    %9492 = vmatpush.bf16.msra.mxu0 %v6863
    %9493 = vmatpush.bf16.msra.mxu0 %v6858
    %9494 = vmatpush.bf16.msra.mxu0 %v6853
    %9495 = vmatpush.bf16.msra.mxu0 %v6848
    %9496 = vmatpush.bf16.msra.mxu0 %v6843
    %9497 = vmatpush.bf16.msra.mxu0 %v6838
    %9498 = vmatpush.bf16.msra.mxu0 %v6833
    %9499 = vmatpush.bf16.msra.mxu0 %v6828
    %9500 = vmatmul.bf16.gmra.mxu0 %v132
    %v9501 = vpop.f32.mrf.mxu0
    %v9502 = vadd.f32 %v9489, %v9501
    %v9503 = vpop.f32.mrf.mxu0
    %9504 = vdwg.mxu0
    %9505 = vmatpush.bf16.msra.mxu0 %v6903
    %9506 = vmatpush.bf16.msra.mxu0 %v6898
    %9507 = vmatpush.bf16.msra.mxu0 %v6893
    %9508 = vmatpush.bf16.msra.mxu0 %v6888
    %9509 = vmatpush.bf16.msra.mxu0 %v6883
    %9510 = vmatpush.bf16.msra.mxu0 %v6878
    %9511 = vmatpush.bf16.msra.mxu0 %v6873
    %9512 = vmatpush.bf16.msra.mxu0 %v6868
    %9513 = vmatmul.bf16.gmra.mxu0 %v133
    %v9514 = vpop.f32.mrf.mxu0
    %v9515 = vadd.f32 %v9502, %v9514
    %v9516 = vpop.f32.mrf.mxu0
    %9517 = vdwg.mxu0
    %9518 = vmatpush.bf16.msra.mxu0 %v6943
    %9519 = vmatpush.bf16.msra.mxu0 %v6938
    %9520 = vmatpush.bf16.msra.mxu0 %v6933
    %9521 = vmatpush.bf16.msra.mxu0 %v6928
    %9522 = vmatpush.bf16.msra.mxu0 %v6923
    %9523 = vmatpush.bf16.msra.mxu0 %v6918
    %9524 = vmatpush.bf16.msra.mxu0 %v6913
    %9525 = vmatpush.bf16.msra.mxu0 %v6908
    %9526 = vmatmul.bf16.gmra.mxu0 %v134
    %v9527 = vpop.f32.mrf.mxu0
    %v9528 = vadd.f32 %v9515, %v9527
    %v9529 = vpop.f32.mrf.mxu0
    %9530 = vdwg.mxu0
    %9531 = vmatpush.bf16.msra.mxu0 %v6983
    %9532 = vmatpush.bf16.msra.mxu0 %v6978
    %9533 = vmatpush.bf16.msra.mxu0 %v6973
    %9534 = vmatpush.bf16.msra.mxu0 %v6968
    %9535 = vmatpush.bf16.msra.mxu0 %v6963
    %9536 = vmatpush.bf16.msra.mxu0 %v6958
    %9537 = vmatpush.bf16.msra.mxu0 %v6953
    %9538 = vmatpush.bf16.msra.mxu0 %v6948
    %9539 = vmatmul.bf16.gmra.mxu0 %v135
    %v9540 = vpop.f32.mrf.mxu0
    %v9541 = vadd.f32 %v9528, %v9540
    %v9542 = vpop.f32.mrf.mxu0
    %9543 = vdwg.mxu0
    %9544 = vmatpush.bf16.msra.mxu0 %v7023
    %9545 = vmatpush.bf16.msra.mxu0 %v7018
    %9546 = vmatpush.bf16.msra.mxu0 %v7013
    %9547 = vmatpush.bf16.msra.mxu0 %v7008
    %9548 = vmatpush.bf16.msra.mxu0 %v7003
    %9549 = vmatpush.bf16.msra.mxu0 %v6998
    %9550 = vmatpush.bf16.msra.mxu0 %v6993
    %9551 = vmatpush.bf16.msra.mxu0 %v6988
    %9552 = vmatmul.bf16.gmra.mxu0 %v136
    %v9553 = vpop.f32.mrf.mxu0
    %v9554 = vadd.f32 %v9541, %v9553
    %v9555 = vpop.f32.mrf.mxu0
    %9556 = vdwg.mxu0
    %9557 = vmatpush.bf16.msra.mxu0 %v7063
    %9558 = vmatpush.bf16.msra.mxu0 %v7058
    %9559 = vmatpush.bf16.msra.mxu0 %v7053
    %9560 = vmatpush.bf16.msra.mxu0 %v7048
    %9561 = vmatpush.bf16.msra.mxu0 %v7043
    %9562 = vmatpush.bf16.msra.mxu0 %v7038
    %9563 = vmatpush.bf16.msra.mxu0 %v7033
    %9564 = vmatpush.bf16.msra.mxu0 %v7028
    %9565 = vmatmul.bf16.gmra.mxu0 %v137
    %v9566 = vpop.f32.mrf.mxu0
    %v9567 = vadd.f32 %v9554, %v9566
    %v9568 = vpop.f32.mrf.mxu0
    %9569 = vdwg.mxu0
    %9570 = vmatpush.bf16.msra.mxu0 %v7103
    %9571 = vmatpush.bf16.msra.mxu0 %v7098
    %9572 = vmatpush.bf16.msra.mxu0 %v7093
    %9573 = vmatpush.bf16.msra.mxu0 %v7088
    %9574 = vmatpush.bf16.msra.mxu0 %v7083
    %9575 = vmatpush.bf16.msra.mxu0 %v7078
    %9576 = vmatpush.bf16.msra.mxu0 %v7073
    %9577 = vmatpush.bf16.msra.mxu0 %v7068
    %9578 = vmatmul.bf16.gmra.mxu0 %v138
    %v9579 = vpop.f32.mrf.mxu0
    %v9580 = vadd.f32 %v9567, %v9579
    %v9581 = vpop.f32.mrf.mxu0
    %9582 = vdwg.mxu0
    %9583 = vmatpush.bf16.msra.mxu0 %v7143
    %9584 = vmatpush.bf16.msra.mxu0 %v7138
    %9585 = vmatpush.bf16.msra.mxu0 %v7133
    %9586 = vmatpush.bf16.msra.mxu0 %v7128
    %9587 = vmatpush.bf16.msra.mxu0 %v7123
    %9588 = vmatpush.bf16.msra.mxu0 %v7118
    %9589 = vmatpush.bf16.msra.mxu0 %v7113
    %9590 = vmatpush.bf16.msra.mxu0 %v7108
    %9591 = vmatmul.bf16.gmra.mxu0 %v139
    %v9592 = vpop.f32.mrf.mxu0
    %v9593 = vadd.f32 %v9580, %v9592
    %v9594 = vpop.f32.mrf.mxu0
    %9595 = vdwg.mxu0
    %9596 = vmatpush.bf16.msra.mxu0 %v7183
    %9597 = vmatpush.bf16.msra.mxu0 %v7178
    %9598 = vmatpush.bf16.msra.mxu0 %v7173
    %9599 = vmatpush.bf16.msra.mxu0 %v7168
    %9600 = vmatpush.bf16.msra.mxu0 %v7163
    %9601 = vmatpush.bf16.msra.mxu0 %v7158
    %9602 = vmatpush.bf16.msra.mxu0 %v7153
    %9603 = vmatpush.bf16.msra.mxu0 %v7148
    %9604 = vmatmul.bf16.gmra.mxu0 %v140
    %v9605 = vpop.f32.mrf.mxu0
    %v9606 = vadd.f32 %v9593, %v9605
    %v9607 = vpop.f32.mrf.mxu0
    %9608 = vdwg.mxu0
    %9609 = vmatpush.bf16.msra.mxu0 %v7223
    %9610 = vmatpush.bf16.msra.mxu0 %v7218
    %9611 = vmatpush.bf16.msra.mxu0 %v7213
    %9612 = vmatpush.bf16.msra.mxu0 %v7208
    %9613 = vmatpush.bf16.msra.mxu0 %v7203
    %9614 = vmatpush.bf16.msra.mxu0 %v7198
    %9615 = vmatpush.bf16.msra.mxu0 %v7193
    %9616 = vmatpush.bf16.msra.mxu0 %v7188
    %9617 = vmatmul.bf16.gmra.mxu0 %v141
    %v9618 = vpop.f32.mrf.mxu0
    %v9619 = vadd.f32 %v9606, %v9618
    %v9620 = vpop.f32.mrf.mxu0
    %9621 = vdwg.mxu0
    %9622 = vmatpush.bf16.msra.mxu0 %v7263
    %9623 = vmatpush.bf16.msra.mxu0 %v7258
    %9624 = vmatpush.bf16.msra.mxu0 %v7253
    %9625 = vmatpush.bf16.msra.mxu0 %v7248
    %9626 = vmatpush.bf16.msra.mxu0 %v7243
    %9627 = vmatpush.bf16.msra.mxu0 %v7238
    %9628 = vmatpush.bf16.msra.mxu0 %v7233
    %9629 = vmatpush.bf16.msra.mxu0 %v7228
    %9630 = vmatmul.bf16.gmra.mxu0 %v142
    %v9631 = vpop.f32.mrf.mxu0
    %v9632 = vadd.f32 %v9619, %v9631
    %v9633 = vpop.f32.mrf.mxu0
    %9634 = vdwg.mxu0
    %9635 = vmatpush.bf16.msra.mxu0 %v7303
    %9636 = vmatpush.bf16.msra.mxu0 %v7298
    %9637 = vmatpush.bf16.msra.mxu0 %v7293
    %9638 = vmatpush.bf16.msra.mxu0 %v7288
    %9639 = vmatpush.bf16.msra.mxu0 %v7283
    %9640 = vmatpush.bf16.msra.mxu0 %v7278
    %9641 = vmatpush.bf16.msra.mxu0 %v7273
    %9642 = vmatpush.bf16.msra.mxu0 %v7268
    %9643 = vmatmul.bf16.gmra.mxu0 %v143
    %v9644 = vpop.f32.mrf.mxu0
    %v9645 = vadd.f32 %v9632, %v9644
    %v9646 = vpop.f32.mrf.mxu0
    %9647 = vdwg.mxu0
    %9648 = vmatpush.bf16.msra.mxu0 %v7343
    %9649 = vmatpush.bf16.msra.mxu0 %v7338
    %9650 = vmatpush.bf16.msra.mxu0 %v7333
    %9651 = vmatpush.bf16.msra.mxu0 %v7328
    %9652 = vmatpush.bf16.msra.mxu0 %v7323
    %9653 = vmatpush.bf16.msra.mxu0 %v7318
    %9654 = vmatpush.bf16.msra.mxu0 %v7313
    %9655 = vmatpush.bf16.msra.mxu0 %v7308
    %9656 = vmatmul.bf16.gmra.mxu0 %v144
    %v9657 = vpop.f32.mrf.mxu0
    %v9658 = vadd.f32 %v9645, %v9657
    %v9659 = vpop.f32.mrf.mxu0
    %9660 = vdwg.mxu0
    %9661 = vmatpush.bf16.msra.mxu0 %v7383
    %9662 = vmatpush.bf16.msra.mxu0 %v7378
    %9663 = vmatpush.bf16.msra.mxu0 %v7373
    %9664 = vmatpush.bf16.msra.mxu0 %v7368
    %9665 = vmatpush.bf16.msra.mxu0 %v7363
    %9666 = vmatpush.bf16.msra.mxu0 %v7358
    %9667 = vmatpush.bf16.msra.mxu0 %v7353
    %9668 = vmatpush.bf16.msra.mxu0 %v7348
    %9669 = vmatmul.bf16.gmra.mxu0 %v145
    %v9670 = vpop.f32.mrf.mxu0
    %v9671 = vadd.f32 %v9658, %v9670
    %v9672 = vpop.f32.mrf.mxu0
    %9673 = vdwg.mxu0
    %9674 = vmatpush.bf16.msra.mxu0 %v7423
    %9675 = vmatpush.bf16.msra.mxu0 %v7418
    %9676 = vmatpush.bf16.msra.mxu0 %v7413
    %9677 = vmatpush.bf16.msra.mxu0 %v7408
    %9678 = vmatpush.bf16.msra.mxu0 %v7403
    %9679 = vmatpush.bf16.msra.mxu0 %v7398
    %9680 = vmatpush.bf16.msra.mxu0 %v7393
    %9681 = vmatpush.bf16.msra.mxu0 %v7388
    %9682 = vmatmul.bf16.gmra.mxu0 %v146
    %v9683 = vpop.f32.mrf.mxu0
    %v9684 = vadd.f32 %v9671, %v9683
    %v9685 = vpop.f32.mrf.mxu0
    %9686 = vdwg.mxu0
    %9687 = vmatpush.bf16.msra.mxu0 %v7463
    %9688 = vmatpush.bf16.msra.mxu0 %v7458
    %9689 = vmatpush.bf16.msra.mxu0 %v7453
    %9690 = vmatpush.bf16.msra.mxu0 %v7448
    %9691 = vmatpush.bf16.msra.mxu0 %v7443
    %9692 = vmatpush.bf16.msra.mxu0 %v7438
    %9693 = vmatpush.bf16.msra.mxu0 %v7433
    %9694 = vmatpush.bf16.msra.mxu0 %v7428
    %9695 = vmatmul.bf16.gmra.mxu0 %v147
    %v9696 = vpop.f32.mrf.mxu0
    %v9697 = vadd.f32 %v9684, %v9696
    %v9698 = vpop.f32.mrf.mxu0
    %9699 = vdwg.mxu0
    %9700 = vmatpush.bf16.msra.mxu0 %v7503
    %9701 = vmatpush.bf16.msra.mxu0 %v7498
    %9702 = vmatpush.bf16.msra.mxu0 %v7493
    %9703 = vmatpush.bf16.msra.mxu0 %v7488
    %9704 = vmatpush.bf16.msra.mxu0 %v7483
    %9705 = vmatpush.bf16.msra.mxu0 %v7478
    %9706 = vmatpush.bf16.msra.mxu0 %v7473
    %9707 = vmatpush.bf16.msra.mxu0 %v7468
    %9708 = vmatmul.bf16.gmra.mxu0 %v148
    %v9709 = vpop.f32.mrf.mxu0
    %v9710 = vadd.f32 %v9697, %v9709
    %v9711 = vpop.f32.mrf.mxu0
    %9712 = vdwg.mxu0
    %9713 = vmatpush.bf16.msra.mxu0 %v7543
    %9714 = vmatpush.bf16.msra.mxu0 %v7538
    %9715 = vmatpush.bf16.msra.mxu0 %v7533
    %9716 = vmatpush.bf16.msra.mxu0 %v7528
    %9717 = vmatpush.bf16.msra.mxu0 %v7523
    %9718 = vmatpush.bf16.msra.mxu0 %v7518
    %9719 = vmatpush.bf16.msra.mxu0 %v7513
    %9720 = vmatpush.bf16.msra.mxu0 %v7508
    %9721 = vmatmul.bf16.gmra.mxu0 %v149
    %v9722 = vpop.f32.mrf.mxu0
    %v9723 = vadd.f32 %v9710, %v9722
    %v9724 = vpop.f32.mrf.mxu0
    %9725 = vdwg.mxu0
    %9726 = vmatpush.bf16.msra.mxu0 %v7583
    %9727 = vmatpush.bf16.msra.mxu0 %v7578
    %9728 = vmatpush.bf16.msra.mxu0 %v7573
    %9729 = vmatpush.bf16.msra.mxu0 %v7568
    %9730 = vmatpush.bf16.msra.mxu0 %v7563
    %9731 = vmatpush.bf16.msra.mxu0 %v7558
    %9732 = vmatpush.bf16.msra.mxu0 %v7553
    %9733 = vmatpush.bf16.msra.mxu0 %v7548
    %9734 = vmatmul.bf16.gmra.mxu0 %v150
    %v9735 = vpop.f32.mrf.mxu0
    %v9736 = vadd.f32 %v9723, %v9735
    %v9737 = vpop.f32.mrf.mxu0
    %9738 = vdwg.mxu0
    %9739 = vmatpush.bf16.msra.mxu0 %v7623
    %9740 = vmatpush.bf16.msra.mxu0 %v7618
    %9741 = vmatpush.bf16.msra.mxu0 %v7613
    %9742 = vmatpush.bf16.msra.mxu0 %v7608
    %9743 = vmatpush.bf16.msra.mxu0 %v7603
    %9744 = vmatpush.bf16.msra.mxu0 %v7598
    %9745 = vmatpush.bf16.msra.mxu0 %v7593
    %9746 = vmatpush.bf16.msra.mxu0 %v7588
    %9747 = vmatmul.bf16.gmra.mxu0 %v151
    %v9748 = vpop.f32.mrf.mxu0
    %v9749 = vadd.f32 %v9736, %v9748
    %v9750 = vpop.f32.mrf.mxu0
    %9751 = vdwg.mxu0
    %9752 = vmatpush.bf16.msra.mxu0 %v7663
    %9753 = vmatpush.bf16.msra.mxu0 %v7658
    %9754 = vmatpush.bf16.msra.mxu0 %v7653
    %9755 = vmatpush.bf16.msra.mxu0 %v7648
    %9756 = vmatpush.bf16.msra.mxu0 %v7643
    %9757 = vmatpush.bf16.msra.mxu0 %v7638
    %9758 = vmatpush.bf16.msra.mxu0 %v7633
    %9759 = vmatpush.bf16.msra.mxu0 %v7628
    %9760 = vmatmul.bf16.gmra.mxu0 %v152
    %v9761 = vpop.f32.mrf.mxu0
    %v9762 = vadd.f32 %v9749, %v9761
    %v9763 = vpop.f32.mrf.mxu0
    %9764 = vdwg.mxu0
    %9765 = vmatpush.bf16.msra.mxu0 %v7703
    %9766 = vmatpush.bf16.msra.mxu0 %v7698
    %9767 = vmatpush.bf16.msra.mxu0 %v7693
    %9768 = vmatpush.bf16.msra.mxu0 %v7688
    %9769 = vmatpush.bf16.msra.mxu0 %v7683
    %9770 = vmatpush.bf16.msra.mxu0 %v7678
    %9771 = vmatpush.bf16.msra.mxu0 %v7673
    %9772 = vmatpush.bf16.msra.mxu0 %v7668
    %9773 = vmatmul.bf16.gmra.mxu0 %v153
    %v9774 = vpop.f32.mrf.mxu0
    %v9775 = vadd.f32 %v9762, %v9774
    %v9776 = vpop.f32.mrf.mxu0
    %9777 = vdwg.mxu0
    %9778 = vmatpush.bf16.msra.mxu0 %v7743
    %9779 = vmatpush.bf16.msra.mxu0 %v7738
    %9780 = vmatpush.bf16.msra.mxu0 %v7733
    %9781 = vmatpush.bf16.msra.mxu0 %v7728
    %9782 = vmatpush.bf16.msra.mxu0 %v7723
    %9783 = vmatpush.bf16.msra.mxu0 %v7718
    %9784 = vmatpush.bf16.msra.mxu0 %v7713
    %9785 = vmatpush.bf16.msra.mxu0 %v7708
    %9786 = vmatmul.bf16.gmra.mxu0 %v154
    %v9787 = vpop.f32.mrf.mxu0
    %v9788 = vadd.f32 %v9775, %v9787
    %v9789 = vpop.f32.mrf.mxu0
    %9790 = vdwg.mxu0
    %9791 = vmatpush.bf16.msra.mxu0 %v7783
    %9792 = vmatpush.bf16.msra.mxu0 %v7778
    %9793 = vmatpush.bf16.msra.mxu0 %v7773
    %9794 = vmatpush.bf16.msra.mxu0 %v7768
    %9795 = vmatpush.bf16.msra.mxu0 %v7763
    %9796 = vmatpush.bf16.msra.mxu0 %v7758
    %9797 = vmatpush.bf16.msra.mxu0 %v7753
    %9798 = vmatpush.bf16.msra.mxu0 %v7748
    %9799 = vmatmul.bf16.gmra.mxu0 %v155
    %v9800 = vpop.f32.mrf.mxu0
    %v9801 = vadd.f32 %v9788, %v9800
    %v9802 = vpop.f32.mrf.mxu0
    %9803 = vdwg.mxu0
    %9804 = vmatpush.bf16.msra.mxu0 %v7823
    %9805 = vmatpush.bf16.msra.mxu0 %v7818
    %9806 = vmatpush.bf16.msra.mxu0 %v7813
    %9807 = vmatpush.bf16.msra.mxu0 %v7808
    %9808 = vmatpush.bf16.msra.mxu0 %v7803
    %9809 = vmatpush.bf16.msra.mxu0 %v7798
    %9810 = vmatpush.bf16.msra.mxu0 %v7793
    %9811 = vmatpush.bf16.msra.mxu0 %v7788
    %9812 = vmatmul.bf16.gmra.mxu0 %v156
    %v9813 = vpop.f32.mrf.mxu0
    %v9814 = vadd.f32 %v9801, %v9813
    %v9815 = vpop.f32.mrf.mxu0
    %9816 = vdwg.mxu0
    %9817 = vmatpush.bf16.msra.mxu0 %v7863
    %9818 = vmatpush.bf16.msra.mxu0 %v7858
    %9819 = vmatpush.bf16.msra.mxu0 %v7853
    %9820 = vmatpush.bf16.msra.mxu0 %v7848
    %9821 = vmatpush.bf16.msra.mxu0 %v7843
    %9822 = vmatpush.bf16.msra.mxu0 %v7838
    %9823 = vmatpush.bf16.msra.mxu0 %v7833
    %9824 = vmatpush.bf16.msra.mxu0 %v7828
    %9825 = vmatmul.bf16.gmra.mxu0 %v157
    %v9826 = vpop.f32.mrf.mxu0
    %v9827 = vadd.f32 %v9814, %v9826
    %v9828 = vpop.f32.mrf.mxu0
    %9829 = vdwg.mxu0
    %9830 = vmatpush.bf16.msra.mxu0 %v7903
    %9831 = vmatpush.bf16.msra.mxu0 %v7898
    %9832 = vmatpush.bf16.msra.mxu0 %v7893
    %9833 = vmatpush.bf16.msra.mxu0 %v7888
    %9834 = vmatpush.bf16.msra.mxu0 %v7883
    %9835 = vmatpush.bf16.msra.mxu0 %v7878
    %9836 = vmatpush.bf16.msra.mxu0 %v7873
    %9837 = vmatpush.bf16.msra.mxu0 %v7868
    %9838 = vmatmul.bf16.gmra.mxu0 %v158
    %v9839 = vpop.f32.mrf.mxu0
    %v9840 = vadd.f32 %v9827, %v9839
    %v9841 = vpop.f32.mrf.mxu0
    %9842 = vdwg.mxu0
    %9843 = vmatpush.bf16.msra.mxu0 %v7943
    %9844 = vmatpush.bf16.msra.mxu0 %v7938
    %9845 = vmatpush.bf16.msra.mxu0 %v7933
    %9846 = vmatpush.bf16.msra.mxu0 %v7928
    %9847 = vmatpush.bf16.msra.mxu0 %v7923
    %9848 = vmatpush.bf16.msra.mxu0 %v7918
    %9849 = vmatpush.bf16.msra.mxu0 %v7913
    %9850 = vmatpush.bf16.msra.mxu0 %v7908
    %9851 = vmatmul.bf16.gmra.mxu0 %v159
    %v9852 = vpop.f32.mrf.mxu0
    %v9853 = vadd.f32 %v9840, %v9852
    %v9854 = vpop.f32.mrf.mxu0
    %9855 = vdwg.mxu0
    %9856 = vmatpush.bf16.msra.mxu0 %v6544
    %9857 = vmatpush.bf16.msra.mxu0 %v6539
    %9858 = vmatpush.bf16.msra.mxu0 %v6534
    %9859 = vmatpush.bf16.msra.mxu0 %v6529
    %9860 = vmatpush.bf16.msra.mxu0 %v6524
    %9861 = vmatpush.bf16.msra.mxu0 %v6519
    %9862 = vmatpush.bf16.msra.mxu0 %v6514
    %9863 = vmatpush.bf16.msra.mxu0 %v6509
    %9864 = vmatmul.bf16.gmra.mxu0 %v124
    %v9865 = vpop.f32.mrf.mxu0
    %v9866 = vadd.f32 %v1891, %v9865
    %v9867 = vpop.f32.mrf.mxu0
    %9868 = vdwg.mxu0
    %9869 = vmatpush.bf16.msra.mxu0 %v6584
    %9870 = vmatpush.bf16.msra.mxu0 %v6579
    %9871 = vmatpush.bf16.msra.mxu0 %v6574
    %9872 = vmatpush.bf16.msra.mxu0 %v6569
    %9873 = vmatpush.bf16.msra.mxu0 %v6564
    %9874 = vmatpush.bf16.msra.mxu0 %v6559
    %9875 = vmatpush.bf16.msra.mxu0 %v6554
    %9876 = vmatpush.bf16.msra.mxu0 %v6549
    %9877 = vmatmul.bf16.gmra.mxu0 %v125
    %v9878 = vpop.f32.mrf.mxu0
    %v9879 = vadd.f32 %v9866, %v9878
    %v9880 = vpop.f32.mrf.mxu0
    %9881 = vdwg.mxu0
    %9882 = vmatpush.bf16.msra.mxu0 %v6624
    %9883 = vmatpush.bf16.msra.mxu0 %v6619
    %9884 = vmatpush.bf16.msra.mxu0 %v6614
    %9885 = vmatpush.bf16.msra.mxu0 %v6609
    %9886 = vmatpush.bf16.msra.mxu0 %v6604
    %9887 = vmatpush.bf16.msra.mxu0 %v6599
    %9888 = vmatpush.bf16.msra.mxu0 %v6594
    %9889 = vmatpush.bf16.msra.mxu0 %v6589
    %9890 = vmatmul.bf16.gmra.mxu0 %v126
    %v9891 = vpop.f32.mrf.mxu0
    %v9892 = vadd.f32 %v9879, %v9891
    %v9893 = vpop.f32.mrf.mxu0
    %9894 = vdwg.mxu0
    %9895 = vmatpush.bf16.msra.mxu0 %v6664
    %9896 = vmatpush.bf16.msra.mxu0 %v6659
    %9897 = vmatpush.bf16.msra.mxu0 %v6654
    %9898 = vmatpush.bf16.msra.mxu0 %v6649
    %9899 = vmatpush.bf16.msra.mxu0 %v6644
    %9900 = vmatpush.bf16.msra.mxu0 %v6639
    %9901 = vmatpush.bf16.msra.mxu0 %v6634
    %9902 = vmatpush.bf16.msra.mxu0 %v6629
    %9903 = vmatmul.bf16.gmra.mxu0 %v127
    %v9904 = vpop.f32.mrf.mxu0
    %v9905 = vadd.f32 %v9892, %v9904
    %v9906 = vpop.f32.mrf.mxu0
    %9907 = vdwg.mxu0
    %9908 = vmatpush.bf16.msra.mxu0 %v6704
    %9909 = vmatpush.bf16.msra.mxu0 %v6699
    %9910 = vmatpush.bf16.msra.mxu0 %v6694
    %9911 = vmatpush.bf16.msra.mxu0 %v6689
    %9912 = vmatpush.bf16.msra.mxu0 %v6684
    %9913 = vmatpush.bf16.msra.mxu0 %v6679
    %9914 = vmatpush.bf16.msra.mxu0 %v6674
    %9915 = vmatpush.bf16.msra.mxu0 %v6669
    %9916 = vmatmul.bf16.gmra.mxu0 %v128
    %v9917 = vpop.f32.mrf.mxu0
    %v9918 = vadd.f32 %v9905, %v9917
    %v9919 = vpop.f32.mrf.mxu0
    %9920 = vdwg.mxu0
    %9921 = vmatpush.bf16.msra.mxu0 %v6744
    %9922 = vmatpush.bf16.msra.mxu0 %v6739
    %9923 = vmatpush.bf16.msra.mxu0 %v6734
    %9924 = vmatpush.bf16.msra.mxu0 %v6729
    %9925 = vmatpush.bf16.msra.mxu0 %v6724
    %9926 = vmatpush.bf16.msra.mxu0 %v6719
    %9927 = vmatpush.bf16.msra.mxu0 %v6714
    %9928 = vmatpush.bf16.msra.mxu0 %v6709
    %9929 = vmatmul.bf16.gmra.mxu0 %v129
    %v9930 = vpop.f32.mrf.mxu0
    %v9931 = vadd.f32 %v9918, %v9930
    %v9932 = vpop.f32.mrf.mxu0
    %9933 = vdwg.mxu0
    %9934 = vmatpush.bf16.msra.mxu0 %v6784
    %9935 = vmatpush.bf16.msra.mxu0 %v6779
    %9936 = vmatpush.bf16.msra.mxu0 %v6774
    %9937 = vmatpush.bf16.msra.mxu0 %v6769
    %9938 = vmatpush.bf16.msra.mxu0 %v6764
    %9939 = vmatpush.bf16.msra.mxu0 %v6759
    %9940 = vmatpush.bf16.msra.mxu0 %v6754
    %9941 = vmatpush.bf16.msra.mxu0 %v6749
    %9942 = vmatmul.bf16.gmra.mxu0 %v130
    %v9943 = vpop.f32.mrf.mxu0
    %v9944 = vadd.f32 %v9931, %v9943
    %v9945 = vpop.f32.mrf.mxu0
    %9946 = vdwg.mxu0
    %9947 = vmatpush.bf16.msra.mxu0 %v6824
    %9948 = vmatpush.bf16.msra.mxu0 %v6819
    %9949 = vmatpush.bf16.msra.mxu0 %v6814
    %9950 = vmatpush.bf16.msra.mxu0 %v6809
    %9951 = vmatpush.bf16.msra.mxu0 %v6804
    %9952 = vmatpush.bf16.msra.mxu0 %v6799
    %9953 = vmatpush.bf16.msra.mxu0 %v6794
    %9954 = vmatpush.bf16.msra.mxu0 %v6789
    %9955 = vmatmul.bf16.gmra.mxu0 %v131
    %v9956 = vpop.f32.mrf.mxu0
    %v9957 = vadd.f32 %v9944, %v9956
    %v9958 = vpop.f32.mrf.mxu0
    %9959 = vdwg.mxu0
    %9960 = vmatpush.bf16.msra.mxu0 %v6864
    %9961 = vmatpush.bf16.msra.mxu0 %v6859
    %9962 = vmatpush.bf16.msra.mxu0 %v6854
    %9963 = vmatpush.bf16.msra.mxu0 %v6849
    %9964 = vmatpush.bf16.msra.mxu0 %v6844
    %9965 = vmatpush.bf16.msra.mxu0 %v6839
    %9966 = vmatpush.bf16.msra.mxu0 %v6834
    %9967 = vmatpush.bf16.msra.mxu0 %v6829
    %9968 = vmatmul.bf16.gmra.mxu0 %v132
    %v9969 = vpop.f32.mrf.mxu0
    %v9970 = vadd.f32 %v9957, %v9969
    %v9971 = vpop.f32.mrf.mxu0
    %9972 = vdwg.mxu0
    %9973 = vmatpush.bf16.msra.mxu0 %v6904
    %9974 = vmatpush.bf16.msra.mxu0 %v6899
    %9975 = vmatpush.bf16.msra.mxu0 %v6894
    %9976 = vmatpush.bf16.msra.mxu0 %v6889
    %9977 = vmatpush.bf16.msra.mxu0 %v6884
    %9978 = vmatpush.bf16.msra.mxu0 %v6879
    %9979 = vmatpush.bf16.msra.mxu0 %v6874
    %9980 = vmatpush.bf16.msra.mxu0 %v6869
    %9981 = vmatmul.bf16.gmra.mxu0 %v133
    %v9982 = vpop.f32.mrf.mxu0
    %v9983 = vadd.f32 %v9970, %v9982
    %v9984 = vpop.f32.mrf.mxu0
    %9985 = vdwg.mxu0
    %9986 = vmatpush.bf16.msra.mxu0 %v6944
    %9987 = vmatpush.bf16.msra.mxu0 %v6939
    %9988 = vmatpush.bf16.msra.mxu0 %v6934
    %9989 = vmatpush.bf16.msra.mxu0 %v6929
    %9990 = vmatpush.bf16.msra.mxu0 %v6924
    %9991 = vmatpush.bf16.msra.mxu0 %v6919
    %9992 = vmatpush.bf16.msra.mxu0 %v6914
    %9993 = vmatpush.bf16.msra.mxu0 %v6909
    %9994 = vmatmul.bf16.gmra.mxu0 %v134
    %v9995 = vpop.f32.mrf.mxu0
    %v9996 = vadd.f32 %v9983, %v9995
    %v9997 = vpop.f32.mrf.mxu0
    %9998 = vdwg.mxu0
    %9999 = vmatpush.bf16.msra.mxu0 %v6984
    %10000 = vmatpush.bf16.msra.mxu0 %v6979
    %10001 = vmatpush.bf16.msra.mxu0 %v6974
    %10002 = vmatpush.bf16.msra.mxu0 %v6969
    %10003 = vmatpush.bf16.msra.mxu0 %v6964
    %10004 = vmatpush.bf16.msra.mxu0 %v6959
    %10005 = vmatpush.bf16.msra.mxu0 %v6954
    %10006 = vmatpush.bf16.msra.mxu0 %v6949
    %10007 = vmatmul.bf16.gmra.mxu0 %v135
    %v10008 = vpop.f32.mrf.mxu0
    %v10009 = vadd.f32 %v9996, %v10008
    %v10010 = vpop.f32.mrf.mxu0
    %10011 = vdwg.mxu0
    %10012 = vmatpush.bf16.msra.mxu0 %v7024
    %10013 = vmatpush.bf16.msra.mxu0 %v7019
    %10014 = vmatpush.bf16.msra.mxu0 %v7014
    %10015 = vmatpush.bf16.msra.mxu0 %v7009
    %10016 = vmatpush.bf16.msra.mxu0 %v7004
    %10017 = vmatpush.bf16.msra.mxu0 %v6999
    %10018 = vmatpush.bf16.msra.mxu0 %v6994
    %10019 = vmatpush.bf16.msra.mxu0 %v6989
    %10020 = vmatmul.bf16.gmra.mxu0 %v136
    %v10021 = vpop.f32.mrf.mxu0
    %v10022 = vadd.f32 %v10009, %v10021
    %v10023 = vpop.f32.mrf.mxu0
    %10024 = vdwg.mxu0
    %10025 = vmatpush.bf16.msra.mxu0 %v7064
    %10026 = vmatpush.bf16.msra.mxu0 %v7059
    %10027 = vmatpush.bf16.msra.mxu0 %v7054
    %10028 = vmatpush.bf16.msra.mxu0 %v7049
    %10029 = vmatpush.bf16.msra.mxu0 %v7044
    %10030 = vmatpush.bf16.msra.mxu0 %v7039
    %10031 = vmatpush.bf16.msra.mxu0 %v7034
    %10032 = vmatpush.bf16.msra.mxu0 %v7029
    %10033 = vmatmul.bf16.gmra.mxu0 %v137
    %v10034 = vpop.f32.mrf.mxu0
    %v10035 = vadd.f32 %v10022, %v10034
    %v10036 = vpop.f32.mrf.mxu0
    %10037 = vdwg.mxu0
    %10038 = vmatpush.bf16.msra.mxu0 %v7104
    %10039 = vmatpush.bf16.msra.mxu0 %v7099
    %10040 = vmatpush.bf16.msra.mxu0 %v7094
    %10041 = vmatpush.bf16.msra.mxu0 %v7089
    %10042 = vmatpush.bf16.msra.mxu0 %v7084
    %10043 = vmatpush.bf16.msra.mxu0 %v7079
    %10044 = vmatpush.bf16.msra.mxu0 %v7074
    %10045 = vmatpush.bf16.msra.mxu0 %v7069
    %10046 = vmatmul.bf16.gmra.mxu0 %v138
    %v10047 = vpop.f32.mrf.mxu0
    %v10048 = vadd.f32 %v10035, %v10047
    %v10049 = vpop.f32.mrf.mxu0
    %10050 = vdwg.mxu0
    %10051 = vmatpush.bf16.msra.mxu0 %v7144
    %10052 = vmatpush.bf16.msra.mxu0 %v7139
    %10053 = vmatpush.bf16.msra.mxu0 %v7134
    %10054 = vmatpush.bf16.msra.mxu0 %v7129
    %10055 = vmatpush.bf16.msra.mxu0 %v7124
    %10056 = vmatpush.bf16.msra.mxu0 %v7119
    %10057 = vmatpush.bf16.msra.mxu0 %v7114
    %10058 = vmatpush.bf16.msra.mxu0 %v7109
    %10059 = vmatmul.bf16.gmra.mxu0 %v139
    %v10060 = vpop.f32.mrf.mxu0
    %v10061 = vadd.f32 %v10048, %v10060
    %v10062 = vpop.f32.mrf.mxu0
    %10063 = vdwg.mxu0
    %10064 = vmatpush.bf16.msra.mxu0 %v7184
    %10065 = vmatpush.bf16.msra.mxu0 %v7179
    %10066 = vmatpush.bf16.msra.mxu0 %v7174
    %10067 = vmatpush.bf16.msra.mxu0 %v7169
    %10068 = vmatpush.bf16.msra.mxu0 %v7164
    %10069 = vmatpush.bf16.msra.mxu0 %v7159
    %10070 = vmatpush.bf16.msra.mxu0 %v7154
    %10071 = vmatpush.bf16.msra.mxu0 %v7149
    %10072 = vmatmul.bf16.gmra.mxu0 %v140
    %v10073 = vpop.f32.mrf.mxu0
    %v10074 = vadd.f32 %v10061, %v10073
    %v10075 = vpop.f32.mrf.mxu0
    %10076 = vdwg.mxu0
    %10077 = vmatpush.bf16.msra.mxu0 %v7224
    %10078 = vmatpush.bf16.msra.mxu0 %v7219
    %10079 = vmatpush.bf16.msra.mxu0 %v7214
    %10080 = vmatpush.bf16.msra.mxu0 %v7209
    %10081 = vmatpush.bf16.msra.mxu0 %v7204
    %10082 = vmatpush.bf16.msra.mxu0 %v7199
    %10083 = vmatpush.bf16.msra.mxu0 %v7194
    %10084 = vmatpush.bf16.msra.mxu0 %v7189
    %10085 = vmatmul.bf16.gmra.mxu0 %v141
    %v10086 = vpop.f32.mrf.mxu0
    %v10087 = vadd.f32 %v10074, %v10086
    %v10088 = vpop.f32.mrf.mxu0
    %10089 = vdwg.mxu0
    %10090 = vmatpush.bf16.msra.mxu0 %v7264
    %10091 = vmatpush.bf16.msra.mxu0 %v7259
    %10092 = vmatpush.bf16.msra.mxu0 %v7254
    %10093 = vmatpush.bf16.msra.mxu0 %v7249
    %10094 = vmatpush.bf16.msra.mxu0 %v7244
    %10095 = vmatpush.bf16.msra.mxu0 %v7239
    %10096 = vmatpush.bf16.msra.mxu0 %v7234
    %10097 = vmatpush.bf16.msra.mxu0 %v7229
    %10098 = vmatmul.bf16.gmra.mxu0 %v142
    %v10099 = vpop.f32.mrf.mxu0
    %v10100 = vadd.f32 %v10087, %v10099
    %v10101 = vpop.f32.mrf.mxu0
    %10102 = vdwg.mxu0
    %10103 = vmatpush.bf16.msra.mxu0 %v7304
    %10104 = vmatpush.bf16.msra.mxu0 %v7299
    %10105 = vmatpush.bf16.msra.mxu0 %v7294
    %10106 = vmatpush.bf16.msra.mxu0 %v7289
    %10107 = vmatpush.bf16.msra.mxu0 %v7284
    %10108 = vmatpush.bf16.msra.mxu0 %v7279
    %10109 = vmatpush.bf16.msra.mxu0 %v7274
    %10110 = vmatpush.bf16.msra.mxu0 %v7269
    %10111 = vmatmul.bf16.gmra.mxu0 %v143
    %v10112 = vpop.f32.mrf.mxu0
    %v10113 = vadd.f32 %v10100, %v10112
    %v10114 = vpop.f32.mrf.mxu0
    %10115 = vdwg.mxu0
    %10116 = vmatpush.bf16.msra.mxu0 %v7344
    %10117 = vmatpush.bf16.msra.mxu0 %v7339
    %10118 = vmatpush.bf16.msra.mxu0 %v7334
    %10119 = vmatpush.bf16.msra.mxu0 %v7329
    %10120 = vmatpush.bf16.msra.mxu0 %v7324
    %10121 = vmatpush.bf16.msra.mxu0 %v7319
    %10122 = vmatpush.bf16.msra.mxu0 %v7314
    %10123 = vmatpush.bf16.msra.mxu0 %v7309
    %10124 = vmatmul.bf16.gmra.mxu0 %v144
    %v10125 = vpop.f32.mrf.mxu0
    %v10126 = vadd.f32 %v10113, %v10125
    %v10127 = vpop.f32.mrf.mxu0
    %10128 = vdwg.mxu0
    %10129 = vmatpush.bf16.msra.mxu0 %v7384
    %10130 = vmatpush.bf16.msra.mxu0 %v7379
    %10131 = vmatpush.bf16.msra.mxu0 %v7374
    %10132 = vmatpush.bf16.msra.mxu0 %v7369
    %10133 = vmatpush.bf16.msra.mxu0 %v7364
    %10134 = vmatpush.bf16.msra.mxu0 %v7359
    %10135 = vmatpush.bf16.msra.mxu0 %v7354
    %10136 = vmatpush.bf16.msra.mxu0 %v7349
    %10137 = vmatmul.bf16.gmra.mxu0 %v145
    %v10138 = vpop.f32.mrf.mxu0
    %v10139 = vadd.f32 %v10126, %v10138
    %v10140 = vpop.f32.mrf.mxu0
    %10141 = vdwg.mxu0
    %10142 = vmatpush.bf16.msra.mxu0 %v7424
    %10143 = vmatpush.bf16.msra.mxu0 %v7419
    %10144 = vmatpush.bf16.msra.mxu0 %v7414
    %10145 = vmatpush.bf16.msra.mxu0 %v7409
    %10146 = vmatpush.bf16.msra.mxu0 %v7404
    %10147 = vmatpush.bf16.msra.mxu0 %v7399
    %10148 = vmatpush.bf16.msra.mxu0 %v7394
    %10149 = vmatpush.bf16.msra.mxu0 %v7389
    %10150 = vmatmul.bf16.gmra.mxu0 %v146
    %v10151 = vpop.f32.mrf.mxu0
    %v10152 = vadd.f32 %v10139, %v10151
    %v10153 = vpop.f32.mrf.mxu0
    %10154 = vdwg.mxu0
    %10155 = vmatpush.bf16.msra.mxu0 %v7464
    %10156 = vmatpush.bf16.msra.mxu0 %v7459
    %10157 = vmatpush.bf16.msra.mxu0 %v7454
    %10158 = vmatpush.bf16.msra.mxu0 %v7449
    %10159 = vmatpush.bf16.msra.mxu0 %v7444
    %10160 = vmatpush.bf16.msra.mxu0 %v7439
    %10161 = vmatpush.bf16.msra.mxu0 %v7434
    %10162 = vmatpush.bf16.msra.mxu0 %v7429
    %10163 = vmatmul.bf16.gmra.mxu0 %v147
    %v10164 = vpop.f32.mrf.mxu0
    %v10165 = vadd.f32 %v10152, %v10164
    %v10166 = vpop.f32.mrf.mxu0
    %10167 = vdwg.mxu0
    %10168 = vmatpush.bf16.msra.mxu0 %v7504
    %10169 = vmatpush.bf16.msra.mxu0 %v7499
    %10170 = vmatpush.bf16.msra.mxu0 %v7494
    %10171 = vmatpush.bf16.msra.mxu0 %v7489
    %10172 = vmatpush.bf16.msra.mxu0 %v7484
    %10173 = vmatpush.bf16.msra.mxu0 %v7479
    %10174 = vmatpush.bf16.msra.mxu0 %v7474
    %10175 = vmatpush.bf16.msra.mxu0 %v7469
    %10176 = vmatmul.bf16.gmra.mxu0 %v148
    %v10177 = vpop.f32.mrf.mxu0
    %v10178 = vadd.f32 %v10165, %v10177
    %v10179 = vpop.f32.mrf.mxu0
    %10180 = vdwg.mxu0
    %10181 = vmatpush.bf16.msra.mxu0 %v7544
    %10182 = vmatpush.bf16.msra.mxu0 %v7539
    %10183 = vmatpush.bf16.msra.mxu0 %v7534
    %10184 = vmatpush.bf16.msra.mxu0 %v7529
    %10185 = vmatpush.bf16.msra.mxu0 %v7524
    %10186 = vmatpush.bf16.msra.mxu0 %v7519
    %10187 = vmatpush.bf16.msra.mxu0 %v7514
    %10188 = vmatpush.bf16.msra.mxu0 %v7509
    %10189 = vmatmul.bf16.gmra.mxu0 %v149
    %v10190 = vpop.f32.mrf.mxu0
    %v10191 = vadd.f32 %v10178, %v10190
    %v10192 = vpop.f32.mrf.mxu0
    %10193 = vdwg.mxu0
    %10194 = vmatpush.bf16.msra.mxu0 %v7584
    %10195 = vmatpush.bf16.msra.mxu0 %v7579
    %10196 = vmatpush.bf16.msra.mxu0 %v7574
    %10197 = vmatpush.bf16.msra.mxu0 %v7569
    %10198 = vmatpush.bf16.msra.mxu0 %v7564
    %10199 = vmatpush.bf16.msra.mxu0 %v7559
    %10200 = vmatpush.bf16.msra.mxu0 %v7554
    %10201 = vmatpush.bf16.msra.mxu0 %v7549
    %10202 = vmatmul.bf16.gmra.mxu0 %v150
    %v10203 = vpop.f32.mrf.mxu0
    %v10204 = vadd.f32 %v10191, %v10203
    %v10205 = vpop.f32.mrf.mxu0
    %10206 = vdwg.mxu0
    %10207 = vmatpush.bf16.msra.mxu0 %v7624
    %10208 = vmatpush.bf16.msra.mxu0 %v7619
    %10209 = vmatpush.bf16.msra.mxu0 %v7614
    %10210 = vmatpush.bf16.msra.mxu0 %v7609
    %10211 = vmatpush.bf16.msra.mxu0 %v7604
    %10212 = vmatpush.bf16.msra.mxu0 %v7599
    %10213 = vmatpush.bf16.msra.mxu0 %v7594
    %10214 = vmatpush.bf16.msra.mxu0 %v7589
    %10215 = vmatmul.bf16.gmra.mxu0 %v151
    %v10216 = vpop.f32.mrf.mxu0
    %v10217 = vadd.f32 %v10204, %v10216
    %v10218 = vpop.f32.mrf.mxu0
    %10219 = vdwg.mxu0
    %10220 = vmatpush.bf16.msra.mxu0 %v7664
    %10221 = vmatpush.bf16.msra.mxu0 %v7659
    %10222 = vmatpush.bf16.msra.mxu0 %v7654
    %10223 = vmatpush.bf16.msra.mxu0 %v7649
    %10224 = vmatpush.bf16.msra.mxu0 %v7644
    %10225 = vmatpush.bf16.msra.mxu0 %v7639
    %10226 = vmatpush.bf16.msra.mxu0 %v7634
    %10227 = vmatpush.bf16.msra.mxu0 %v7629
    %10228 = vmatmul.bf16.gmra.mxu0 %v152
    %v10229 = vpop.f32.mrf.mxu0
    %v10230 = vadd.f32 %v10217, %v10229
    %v10231 = vpop.f32.mrf.mxu0
    %10232 = vdwg.mxu0
    %10233 = vmatpush.bf16.msra.mxu0 %v7704
    %10234 = vmatpush.bf16.msra.mxu0 %v7699
    %10235 = vmatpush.bf16.msra.mxu0 %v7694
    %10236 = vmatpush.bf16.msra.mxu0 %v7689
    %10237 = vmatpush.bf16.msra.mxu0 %v7684
    %10238 = vmatpush.bf16.msra.mxu0 %v7679
    %10239 = vmatpush.bf16.msra.mxu0 %v7674
    %10240 = vmatpush.bf16.msra.mxu0 %v7669
    %10241 = vmatmul.bf16.gmra.mxu0 %v153
    %v10242 = vpop.f32.mrf.mxu0
    %v10243 = vadd.f32 %v10230, %v10242
    %v10244 = vpop.f32.mrf.mxu0
    %10245 = vdwg.mxu0
    %10246 = vmatpush.bf16.msra.mxu0 %v7744
    %10247 = vmatpush.bf16.msra.mxu0 %v7739
    %10248 = vmatpush.bf16.msra.mxu0 %v7734
    %10249 = vmatpush.bf16.msra.mxu0 %v7729
    %10250 = vmatpush.bf16.msra.mxu0 %v7724
    %10251 = vmatpush.bf16.msra.mxu0 %v7719
    %10252 = vmatpush.bf16.msra.mxu0 %v7714
    %10253 = vmatpush.bf16.msra.mxu0 %v7709
    %10254 = vmatmul.bf16.gmra.mxu0 %v154
    %v10255 = vpop.f32.mrf.mxu0
    %v10256 = vadd.f32 %v10243, %v10255
    %v10257 = vpop.f32.mrf.mxu0
    %10258 = vdwg.mxu0
    %10259 = vmatpush.bf16.msra.mxu0 %v7784
    %10260 = vmatpush.bf16.msra.mxu0 %v7779
    %10261 = vmatpush.bf16.msra.mxu0 %v7774
    %10262 = vmatpush.bf16.msra.mxu0 %v7769
    %10263 = vmatpush.bf16.msra.mxu0 %v7764
    %10264 = vmatpush.bf16.msra.mxu0 %v7759
    %10265 = vmatpush.bf16.msra.mxu0 %v7754
    %10266 = vmatpush.bf16.msra.mxu0 %v7749
    %10267 = vmatmul.bf16.gmra.mxu0 %v155
    %v10268 = vpop.f32.mrf.mxu0
    %v10269 = vadd.f32 %v10256, %v10268
    %v10270 = vpop.f32.mrf.mxu0
    %10271 = vdwg.mxu0
    %10272 = vmatpush.bf16.msra.mxu0 %v7824
    %10273 = vmatpush.bf16.msra.mxu0 %v7819
    %10274 = vmatpush.bf16.msra.mxu0 %v7814
    %10275 = vmatpush.bf16.msra.mxu0 %v7809
    %10276 = vmatpush.bf16.msra.mxu0 %v7804
    %10277 = vmatpush.bf16.msra.mxu0 %v7799
    %10278 = vmatpush.bf16.msra.mxu0 %v7794
    %10279 = vmatpush.bf16.msra.mxu0 %v7789
    %10280 = vmatmul.bf16.gmra.mxu0 %v156
    %v10281 = vpop.f32.mrf.mxu0
    %v10282 = vadd.f32 %v10269, %v10281
    %v10283 = vpop.f32.mrf.mxu0
    %10284 = vdwg.mxu0
    %10285 = vmatpush.bf16.msra.mxu0 %v7864
    %10286 = vmatpush.bf16.msra.mxu0 %v7859
    %10287 = vmatpush.bf16.msra.mxu0 %v7854
    %10288 = vmatpush.bf16.msra.mxu0 %v7849
    %10289 = vmatpush.bf16.msra.mxu0 %v7844
    %10290 = vmatpush.bf16.msra.mxu0 %v7839
    %10291 = vmatpush.bf16.msra.mxu0 %v7834
    %10292 = vmatpush.bf16.msra.mxu0 %v7829
    %10293 = vmatmul.bf16.gmra.mxu0 %v157
    %v10294 = vpop.f32.mrf.mxu0
    %v10295 = vadd.f32 %v10282, %v10294
    %v10296 = vpop.f32.mrf.mxu0
    %10297 = vdwg.mxu0
    %10298 = vmatpush.bf16.msra.mxu0 %v7904
    %10299 = vmatpush.bf16.msra.mxu0 %v7899
    %10300 = vmatpush.bf16.msra.mxu0 %v7894
    %10301 = vmatpush.bf16.msra.mxu0 %v7889
    %10302 = vmatpush.bf16.msra.mxu0 %v7884
    %10303 = vmatpush.bf16.msra.mxu0 %v7879
    %10304 = vmatpush.bf16.msra.mxu0 %v7874
    %10305 = vmatpush.bf16.msra.mxu0 %v7869
    %10306 = vmatmul.bf16.gmra.mxu0 %v158
    %v10307 = vpop.f32.mrf.mxu0
    %v10308 = vadd.f32 %v10295, %v10307
    %v10309 = vpop.f32.mrf.mxu0
    %10310 = vdwg.mxu0
    %10311 = vmatpush.bf16.msra.mxu0 %v7944
    %10312 = vmatpush.bf16.msra.mxu0 %v7939
    %10313 = vmatpush.bf16.msra.mxu0 %v7934
    %10314 = vmatpush.bf16.msra.mxu0 %v7929
    %10315 = vmatpush.bf16.msra.mxu0 %v7924
    %10316 = vmatpush.bf16.msra.mxu0 %v7919
    %10317 = vmatpush.bf16.msra.mxu0 %v7914
    %10318 = vmatpush.bf16.msra.mxu0 %v7909
    %10319 = vmatmul.bf16.gmra.mxu0 %v159
    %v10320 = vpop.f32.mrf.mxu0
    %v10321 = vadd.f32 %v10308, %v10320
    %v10322 = vpop.f32.mrf.mxu0
    %10323 = vdwg.mxu0
    %10324 = vmatpush.bf16.msra.mxu0 %v6545
    %10325 = vmatpush.bf16.msra.mxu0 %v6540
    %10326 = vmatpush.bf16.msra.mxu0 %v6535
    %10327 = vmatpush.bf16.msra.mxu0 %v6530
    %10328 = vmatpush.bf16.msra.mxu0 %v6525
    %10329 = vmatpush.bf16.msra.mxu0 %v6520
    %10330 = vmatpush.bf16.msra.mxu0 %v6515
    %10331 = vmatpush.bf16.msra.mxu0 %v6510
    %10332 = vmatmul.bf16.gmra.mxu0 %v124
    %v10333 = vpop.f32.mrf.mxu0
    %v10334 = vadd.f32 %v1892, %v10333
    %v10335 = vpop.f32.mrf.mxu0
    %10336 = vdwg.mxu0
    %10337 = vmatpush.bf16.msra.mxu0 %v6585
    %10338 = vmatpush.bf16.msra.mxu0 %v6580
    %10339 = vmatpush.bf16.msra.mxu0 %v6575
    %10340 = vmatpush.bf16.msra.mxu0 %v6570
    %10341 = vmatpush.bf16.msra.mxu0 %v6565
    %10342 = vmatpush.bf16.msra.mxu0 %v6560
    %10343 = vmatpush.bf16.msra.mxu0 %v6555
    %10344 = vmatpush.bf16.msra.mxu0 %v6550
    %10345 = vmatmul.bf16.gmra.mxu0 %v125
    %v10346 = vpop.f32.mrf.mxu0
    %v10347 = vadd.f32 %v10334, %v10346
    %v10348 = vpop.f32.mrf.mxu0
    %10349 = vdwg.mxu0
    %10350 = vmatpush.bf16.msra.mxu0 %v6625
    %10351 = vmatpush.bf16.msra.mxu0 %v6620
    %10352 = vmatpush.bf16.msra.mxu0 %v6615
    %10353 = vmatpush.bf16.msra.mxu0 %v6610
    %10354 = vmatpush.bf16.msra.mxu0 %v6605
    %10355 = vmatpush.bf16.msra.mxu0 %v6600
    %10356 = vmatpush.bf16.msra.mxu0 %v6595
    %10357 = vmatpush.bf16.msra.mxu0 %v6590
    %10358 = vmatmul.bf16.gmra.mxu0 %v126
    %v10359 = vpop.f32.mrf.mxu0
    %v10360 = vadd.f32 %v10347, %v10359
    %v10361 = vpop.f32.mrf.mxu0
    %10362 = vdwg.mxu0
    %10363 = vmatpush.bf16.msra.mxu0 %v6665
    %10364 = vmatpush.bf16.msra.mxu0 %v6660
    %10365 = vmatpush.bf16.msra.mxu0 %v6655
    %10366 = vmatpush.bf16.msra.mxu0 %v6650
    %10367 = vmatpush.bf16.msra.mxu0 %v6645
    %10368 = vmatpush.bf16.msra.mxu0 %v6640
    %10369 = vmatpush.bf16.msra.mxu0 %v6635
    %10370 = vmatpush.bf16.msra.mxu0 %v6630
    %10371 = vmatmul.bf16.gmra.mxu0 %v127
    %v10372 = vpop.f32.mrf.mxu0
    %v10373 = vadd.f32 %v10360, %v10372
    %v10374 = vpop.f32.mrf.mxu0
    %10375 = vdwg.mxu0
    %10376 = vmatpush.bf16.msra.mxu0 %v6705
    %10377 = vmatpush.bf16.msra.mxu0 %v6700
    %10378 = vmatpush.bf16.msra.mxu0 %v6695
    %10379 = vmatpush.bf16.msra.mxu0 %v6690
    %10380 = vmatpush.bf16.msra.mxu0 %v6685
    %10381 = vmatpush.bf16.msra.mxu0 %v6680
    %10382 = vmatpush.bf16.msra.mxu0 %v6675
    %10383 = vmatpush.bf16.msra.mxu0 %v6670
    %10384 = vmatmul.bf16.gmra.mxu0 %v128
    %v10385 = vpop.f32.mrf.mxu0
    %v10386 = vadd.f32 %v10373, %v10385
    %v10387 = vpop.f32.mrf.mxu0
    %10388 = vdwg.mxu0
    %10389 = vmatpush.bf16.msra.mxu0 %v6745
    %10390 = vmatpush.bf16.msra.mxu0 %v6740
    %10391 = vmatpush.bf16.msra.mxu0 %v6735
    %10392 = vmatpush.bf16.msra.mxu0 %v6730
    %10393 = vmatpush.bf16.msra.mxu0 %v6725
    %10394 = vmatpush.bf16.msra.mxu0 %v6720
    %10395 = vmatpush.bf16.msra.mxu0 %v6715
    %10396 = vmatpush.bf16.msra.mxu0 %v6710
    %10397 = vmatmul.bf16.gmra.mxu0 %v129
    %v10398 = vpop.f32.mrf.mxu0
    %v10399 = vadd.f32 %v10386, %v10398
    %v10400 = vpop.f32.mrf.mxu0
    %10401 = vdwg.mxu0
    %10402 = vmatpush.bf16.msra.mxu0 %v6785
    %10403 = vmatpush.bf16.msra.mxu0 %v6780
    %10404 = vmatpush.bf16.msra.mxu0 %v6775
    %10405 = vmatpush.bf16.msra.mxu0 %v6770
    %10406 = vmatpush.bf16.msra.mxu0 %v6765
    %10407 = vmatpush.bf16.msra.mxu0 %v6760
    %10408 = vmatpush.bf16.msra.mxu0 %v6755
    %10409 = vmatpush.bf16.msra.mxu0 %v6750
    %10410 = vmatmul.bf16.gmra.mxu0 %v130
    %v10411 = vpop.f32.mrf.mxu0
    %v10412 = vadd.f32 %v10399, %v10411
    %v10413 = vpop.f32.mrf.mxu0
    %10414 = vdwg.mxu0
    %10415 = vmatpush.bf16.msra.mxu0 %v6825
    %10416 = vmatpush.bf16.msra.mxu0 %v6820
    %10417 = vmatpush.bf16.msra.mxu0 %v6815
    %10418 = vmatpush.bf16.msra.mxu0 %v6810
    %10419 = vmatpush.bf16.msra.mxu0 %v6805
    %10420 = vmatpush.bf16.msra.mxu0 %v6800
    %10421 = vmatpush.bf16.msra.mxu0 %v6795
    %10422 = vmatpush.bf16.msra.mxu0 %v6790
    %10423 = vmatmul.bf16.gmra.mxu0 %v131
    %v10424 = vpop.f32.mrf.mxu0
    %v10425 = vadd.f32 %v10412, %v10424
    %v10426 = vpop.f32.mrf.mxu0
    %10427 = vdwg.mxu0
    %10428 = vmatpush.bf16.msra.mxu0 %v6865
    %10429 = vmatpush.bf16.msra.mxu0 %v6860
    %10430 = vmatpush.bf16.msra.mxu0 %v6855
    %10431 = vmatpush.bf16.msra.mxu0 %v6850
    %10432 = vmatpush.bf16.msra.mxu0 %v6845
    %10433 = vmatpush.bf16.msra.mxu0 %v6840
    %10434 = vmatpush.bf16.msra.mxu0 %v6835
    %10435 = vmatpush.bf16.msra.mxu0 %v6830
    %10436 = vmatmul.bf16.gmra.mxu0 %v132
    %v10437 = vpop.f32.mrf.mxu0
    %v10438 = vadd.f32 %v10425, %v10437
    %v10439 = vpop.f32.mrf.mxu0
    %10440 = vdwg.mxu0
    %10441 = vmatpush.bf16.msra.mxu0 %v6905
    %10442 = vmatpush.bf16.msra.mxu0 %v6900
    %10443 = vmatpush.bf16.msra.mxu0 %v6895
    %10444 = vmatpush.bf16.msra.mxu0 %v6890
    %10445 = vmatpush.bf16.msra.mxu0 %v6885
    %10446 = vmatpush.bf16.msra.mxu0 %v6880
    %10447 = vmatpush.bf16.msra.mxu0 %v6875
    %10448 = vmatpush.bf16.msra.mxu0 %v6870
    %10449 = vmatmul.bf16.gmra.mxu0 %v133
    %v10450 = vpop.f32.mrf.mxu0
    %v10451 = vadd.f32 %v10438, %v10450
    %v10452 = vpop.f32.mrf.mxu0
    %10453 = vdwg.mxu0
    %10454 = vmatpush.bf16.msra.mxu0 %v6945
    %10455 = vmatpush.bf16.msra.mxu0 %v6940
    %10456 = vmatpush.bf16.msra.mxu0 %v6935
    %10457 = vmatpush.bf16.msra.mxu0 %v6930
    %10458 = vmatpush.bf16.msra.mxu0 %v6925
    %10459 = vmatpush.bf16.msra.mxu0 %v6920
    %10460 = vmatpush.bf16.msra.mxu0 %v6915
    %10461 = vmatpush.bf16.msra.mxu0 %v6910
    %10462 = vmatmul.bf16.gmra.mxu0 %v134
    %v10463 = vpop.f32.mrf.mxu0
    %v10464 = vadd.f32 %v10451, %v10463
    %v10465 = vpop.f32.mrf.mxu0
    %10466 = vdwg.mxu0
    %10467 = vmatpush.bf16.msra.mxu0 %v6985
    %10468 = vmatpush.bf16.msra.mxu0 %v6980
    %10469 = vmatpush.bf16.msra.mxu0 %v6975
    %10470 = vmatpush.bf16.msra.mxu0 %v6970
    %10471 = vmatpush.bf16.msra.mxu0 %v6965
    %10472 = vmatpush.bf16.msra.mxu0 %v6960
    %10473 = vmatpush.bf16.msra.mxu0 %v6955
    %10474 = vmatpush.bf16.msra.mxu0 %v6950
    %10475 = vmatmul.bf16.gmra.mxu0 %v135
    %v10476 = vpop.f32.mrf.mxu0
    %v10477 = vadd.f32 %v10464, %v10476
    %v10478 = vpop.f32.mrf.mxu0
    %10479 = vdwg.mxu0
    %10480 = vmatpush.bf16.msra.mxu0 %v7025
    %10481 = vmatpush.bf16.msra.mxu0 %v7020
    %10482 = vmatpush.bf16.msra.mxu0 %v7015
    %10483 = vmatpush.bf16.msra.mxu0 %v7010
    %10484 = vmatpush.bf16.msra.mxu0 %v7005
    %10485 = vmatpush.bf16.msra.mxu0 %v7000
    %10486 = vmatpush.bf16.msra.mxu0 %v6995
    %10487 = vmatpush.bf16.msra.mxu0 %v6990
    %10488 = vmatmul.bf16.gmra.mxu0 %v136
    %v10489 = vpop.f32.mrf.mxu0
    %v10490 = vadd.f32 %v10477, %v10489
    %v10491 = vpop.f32.mrf.mxu0
    %10492 = vdwg.mxu0
    %10493 = vmatpush.bf16.msra.mxu0 %v7065
    %10494 = vmatpush.bf16.msra.mxu0 %v7060
    %10495 = vmatpush.bf16.msra.mxu0 %v7055
    %10496 = vmatpush.bf16.msra.mxu0 %v7050
    %10497 = vmatpush.bf16.msra.mxu0 %v7045
    %10498 = vmatpush.bf16.msra.mxu0 %v7040
    %10499 = vmatpush.bf16.msra.mxu0 %v7035
    %10500 = vmatpush.bf16.msra.mxu0 %v7030
    %10501 = vmatmul.bf16.gmra.mxu0 %v137
    %v10502 = vpop.f32.mrf.mxu0
    %v10503 = vadd.f32 %v10490, %v10502
    %v10504 = vpop.f32.mrf.mxu0
    %10505 = vdwg.mxu0
    %10506 = vmatpush.bf16.msra.mxu0 %v7105
    %10507 = vmatpush.bf16.msra.mxu0 %v7100
    %10508 = vmatpush.bf16.msra.mxu0 %v7095
    %10509 = vmatpush.bf16.msra.mxu0 %v7090
    %10510 = vmatpush.bf16.msra.mxu0 %v7085
    %10511 = vmatpush.bf16.msra.mxu0 %v7080
    %10512 = vmatpush.bf16.msra.mxu0 %v7075
    %10513 = vmatpush.bf16.msra.mxu0 %v7070
    %10514 = vmatmul.bf16.gmra.mxu0 %v138
    %v10515 = vpop.f32.mrf.mxu0
    %v10516 = vadd.f32 %v10503, %v10515
    %v10517 = vpop.f32.mrf.mxu0
    %10518 = vdwg.mxu0
    %10519 = vmatpush.bf16.msra.mxu0 %v7145
    %10520 = vmatpush.bf16.msra.mxu0 %v7140
    %10521 = vmatpush.bf16.msra.mxu0 %v7135
    %10522 = vmatpush.bf16.msra.mxu0 %v7130
    %10523 = vmatpush.bf16.msra.mxu0 %v7125
    %10524 = vmatpush.bf16.msra.mxu0 %v7120
    %10525 = vmatpush.bf16.msra.mxu0 %v7115
    %10526 = vmatpush.bf16.msra.mxu0 %v7110
    %10527 = vmatmul.bf16.gmra.mxu0 %v139
    %v10528 = vpop.f32.mrf.mxu0
    %v10529 = vadd.f32 %v10516, %v10528
    %v10530 = vpop.f32.mrf.mxu0
    %10531 = vdwg.mxu0
    %10532 = vmatpush.bf16.msra.mxu0 %v7185
    %10533 = vmatpush.bf16.msra.mxu0 %v7180
    %10534 = vmatpush.bf16.msra.mxu0 %v7175
    %10535 = vmatpush.bf16.msra.mxu0 %v7170
    %10536 = vmatpush.bf16.msra.mxu0 %v7165
    %10537 = vmatpush.bf16.msra.mxu0 %v7160
    %10538 = vmatpush.bf16.msra.mxu0 %v7155
    %10539 = vmatpush.bf16.msra.mxu0 %v7150
    %10540 = vmatmul.bf16.gmra.mxu0 %v140
    %v10541 = vpop.f32.mrf.mxu0
    %v10542 = vadd.f32 %v10529, %v10541
    %v10543 = vpop.f32.mrf.mxu0
    %10544 = vdwg.mxu0
    %10545 = vmatpush.bf16.msra.mxu0 %v7225
    %10546 = vmatpush.bf16.msra.mxu0 %v7220
    %10547 = vmatpush.bf16.msra.mxu0 %v7215
    %10548 = vmatpush.bf16.msra.mxu0 %v7210
    %10549 = vmatpush.bf16.msra.mxu0 %v7205
    %10550 = vmatpush.bf16.msra.mxu0 %v7200
    %10551 = vmatpush.bf16.msra.mxu0 %v7195
    %10552 = vmatpush.bf16.msra.mxu0 %v7190
    %10553 = vmatmul.bf16.gmra.mxu0 %v141
    %v10554 = vpop.f32.mrf.mxu0
    %v10555 = vadd.f32 %v10542, %v10554
    %v10556 = vpop.f32.mrf.mxu0
    %10557 = vdwg.mxu0
    %10558 = vmatpush.bf16.msra.mxu0 %v7265
    %10559 = vmatpush.bf16.msra.mxu0 %v7260
    %10560 = vmatpush.bf16.msra.mxu0 %v7255
    %10561 = vmatpush.bf16.msra.mxu0 %v7250
    %10562 = vmatpush.bf16.msra.mxu0 %v7245
    %10563 = vmatpush.bf16.msra.mxu0 %v7240
    %10564 = vmatpush.bf16.msra.mxu0 %v7235
    %10565 = vmatpush.bf16.msra.mxu0 %v7230
    %10566 = vmatmul.bf16.gmra.mxu0 %v142
    %v10567 = vpop.f32.mrf.mxu0
    %v10568 = vadd.f32 %v10555, %v10567
    %v10569 = vpop.f32.mrf.mxu0
    %10570 = vdwg.mxu0
    %10571 = vmatpush.bf16.msra.mxu0 %v7305
    %10572 = vmatpush.bf16.msra.mxu0 %v7300
    %10573 = vmatpush.bf16.msra.mxu0 %v7295
    %10574 = vmatpush.bf16.msra.mxu0 %v7290
    %10575 = vmatpush.bf16.msra.mxu0 %v7285
    %10576 = vmatpush.bf16.msra.mxu0 %v7280
    %10577 = vmatpush.bf16.msra.mxu0 %v7275
    %10578 = vmatpush.bf16.msra.mxu0 %v7270
    %10579 = vmatmul.bf16.gmra.mxu0 %v143
    %v10580 = vpop.f32.mrf.mxu0
    %v10581 = vadd.f32 %v10568, %v10580
    %v10582 = vpop.f32.mrf.mxu0
    %10583 = vdwg.mxu0
    %10584 = vmatpush.bf16.msra.mxu0 %v7345
    %10585 = vmatpush.bf16.msra.mxu0 %v7340
    %10586 = vmatpush.bf16.msra.mxu0 %v7335
    %10587 = vmatpush.bf16.msra.mxu0 %v7330
    %10588 = vmatpush.bf16.msra.mxu0 %v7325
    %10589 = vmatpush.bf16.msra.mxu0 %v7320
    %10590 = vmatpush.bf16.msra.mxu0 %v7315
    %10591 = vmatpush.bf16.msra.mxu0 %v7310
    %10592 = vmatmul.bf16.gmra.mxu0 %v144
    %v10593 = vpop.f32.mrf.mxu0
    %v10594 = vadd.f32 %v10581, %v10593
    %v10595 = vpop.f32.mrf.mxu0
    %10596 = vdwg.mxu0
    %10597 = vmatpush.bf16.msra.mxu0 %v7385
    %10598 = vmatpush.bf16.msra.mxu0 %v7380
    %10599 = vmatpush.bf16.msra.mxu0 %v7375
    %10600 = vmatpush.bf16.msra.mxu0 %v7370
    %10601 = vmatpush.bf16.msra.mxu0 %v7365
    %10602 = vmatpush.bf16.msra.mxu0 %v7360
    %10603 = vmatpush.bf16.msra.mxu0 %v7355
    %10604 = vmatpush.bf16.msra.mxu0 %v7350
    %10605 = vmatmul.bf16.gmra.mxu0 %v145
    %v10606 = vpop.f32.mrf.mxu0
    %v10607 = vadd.f32 %v10594, %v10606
    %v10608 = vpop.f32.mrf.mxu0
    %10609 = vdwg.mxu0
    %10610 = vmatpush.bf16.msra.mxu0 %v7425
    %10611 = vmatpush.bf16.msra.mxu0 %v7420
    %10612 = vmatpush.bf16.msra.mxu0 %v7415
    %10613 = vmatpush.bf16.msra.mxu0 %v7410
    %10614 = vmatpush.bf16.msra.mxu0 %v7405
    %10615 = vmatpush.bf16.msra.mxu0 %v7400
    %10616 = vmatpush.bf16.msra.mxu0 %v7395
    %10617 = vmatpush.bf16.msra.mxu0 %v7390
    %10618 = vmatmul.bf16.gmra.mxu0 %v146
    %v10619 = vpop.f32.mrf.mxu0
    %v10620 = vadd.f32 %v10607, %v10619
    %v10621 = vpop.f32.mrf.mxu0
    %10622 = vdwg.mxu0
    %10623 = vmatpush.bf16.msra.mxu0 %v7465
    %10624 = vmatpush.bf16.msra.mxu0 %v7460
    %10625 = vmatpush.bf16.msra.mxu0 %v7455
    %10626 = vmatpush.bf16.msra.mxu0 %v7450
    %10627 = vmatpush.bf16.msra.mxu0 %v7445
    %10628 = vmatpush.bf16.msra.mxu0 %v7440
    %10629 = vmatpush.bf16.msra.mxu0 %v7435
    %10630 = vmatpush.bf16.msra.mxu0 %v7430
    %10631 = vmatmul.bf16.gmra.mxu0 %v147
    %v10632 = vpop.f32.mrf.mxu0
    %v10633 = vadd.f32 %v10620, %v10632
    %v10634 = vpop.f32.mrf.mxu0
    %10635 = vdwg.mxu0
    %10636 = vmatpush.bf16.msra.mxu0 %v7505
    %10637 = vmatpush.bf16.msra.mxu0 %v7500
    %10638 = vmatpush.bf16.msra.mxu0 %v7495
    %10639 = vmatpush.bf16.msra.mxu0 %v7490
    %10640 = vmatpush.bf16.msra.mxu0 %v7485
    %10641 = vmatpush.bf16.msra.mxu0 %v7480
    %10642 = vmatpush.bf16.msra.mxu0 %v7475
    %10643 = vmatpush.bf16.msra.mxu0 %v7470
    %10644 = vmatmul.bf16.gmra.mxu0 %v148
    %v10645 = vpop.f32.mrf.mxu0
    %v10646 = vadd.f32 %v10633, %v10645
    %v10647 = vpop.f32.mrf.mxu0
    %10648 = vdwg.mxu0
    %10649 = vmatpush.bf16.msra.mxu0 %v7545
    %10650 = vmatpush.bf16.msra.mxu0 %v7540
    %10651 = vmatpush.bf16.msra.mxu0 %v7535
    %10652 = vmatpush.bf16.msra.mxu0 %v7530
    %10653 = vmatpush.bf16.msra.mxu0 %v7525
    %10654 = vmatpush.bf16.msra.mxu0 %v7520
    %10655 = vmatpush.bf16.msra.mxu0 %v7515
    %10656 = vmatpush.bf16.msra.mxu0 %v7510
    %10657 = vmatmul.bf16.gmra.mxu0 %v149
    %v10658 = vpop.f32.mrf.mxu0
    %v10659 = vadd.f32 %v10646, %v10658
    %v10660 = vpop.f32.mrf.mxu0
    %10661 = vdwg.mxu0
    %10662 = vmatpush.bf16.msra.mxu0 %v7585
    %10663 = vmatpush.bf16.msra.mxu0 %v7580
    %10664 = vmatpush.bf16.msra.mxu0 %v7575
    %10665 = vmatpush.bf16.msra.mxu0 %v7570
    %10666 = vmatpush.bf16.msra.mxu0 %v7565
    %10667 = vmatpush.bf16.msra.mxu0 %v7560
    %10668 = vmatpush.bf16.msra.mxu0 %v7555
    %10669 = vmatpush.bf16.msra.mxu0 %v7550
    %10670 = vmatmul.bf16.gmra.mxu0 %v150
    %v10671 = vpop.f32.mrf.mxu0
    %v10672 = vadd.f32 %v10659, %v10671
    %v10673 = vpop.f32.mrf.mxu0
    %10674 = vdwg.mxu0
    %10675 = vmatpush.bf16.msra.mxu0 %v7625
    %10676 = vmatpush.bf16.msra.mxu0 %v7620
    %10677 = vmatpush.bf16.msra.mxu0 %v7615
    %10678 = vmatpush.bf16.msra.mxu0 %v7610
    %10679 = vmatpush.bf16.msra.mxu0 %v7605
    %10680 = vmatpush.bf16.msra.mxu0 %v7600
    %10681 = vmatpush.bf16.msra.mxu0 %v7595
    %10682 = vmatpush.bf16.msra.mxu0 %v7590
    %10683 = vmatmul.bf16.gmra.mxu0 %v151
    %v10684 = vpop.f32.mrf.mxu0
    %v10685 = vadd.f32 %v10672, %v10684
    %v10686 = vpop.f32.mrf.mxu0
    %10687 = vdwg.mxu0
    %10688 = vmatpush.bf16.msra.mxu0 %v7665
    %10689 = vmatpush.bf16.msra.mxu0 %v7660
    %10690 = vmatpush.bf16.msra.mxu0 %v7655
    %10691 = vmatpush.bf16.msra.mxu0 %v7650
    %10692 = vmatpush.bf16.msra.mxu0 %v7645
    %10693 = vmatpush.bf16.msra.mxu0 %v7640
    %10694 = vmatpush.bf16.msra.mxu0 %v7635
    %10695 = vmatpush.bf16.msra.mxu0 %v7630
    %10696 = vmatmul.bf16.gmra.mxu0 %v152
    %v10697 = vpop.f32.mrf.mxu0
    %v10698 = vadd.f32 %v10685, %v10697
    %v10699 = vpop.f32.mrf.mxu0
    %10700 = vdwg.mxu0
    %10701 = vmatpush.bf16.msra.mxu0 %v7705
    %10702 = vmatpush.bf16.msra.mxu0 %v7700
    %10703 = vmatpush.bf16.msra.mxu0 %v7695
    %10704 = vmatpush.bf16.msra.mxu0 %v7690
    %10705 = vmatpush.bf16.msra.mxu0 %v7685
    %10706 = vmatpush.bf16.msra.mxu0 %v7680
    %10707 = vmatpush.bf16.msra.mxu0 %v7675
    %10708 = vmatpush.bf16.msra.mxu0 %v7670
    %10709 = vmatmul.bf16.gmra.mxu0 %v153
    %v10710 = vpop.f32.mrf.mxu0
    %v10711 = vadd.f32 %v10698, %v10710
    %v10712 = vpop.f32.mrf.mxu0
    %10713 = vdwg.mxu0
    %10714 = vmatpush.bf16.msra.mxu0 %v7745
    %10715 = vmatpush.bf16.msra.mxu0 %v7740
    %10716 = vmatpush.bf16.msra.mxu0 %v7735
    %10717 = vmatpush.bf16.msra.mxu0 %v7730
    %10718 = vmatpush.bf16.msra.mxu0 %v7725
    %10719 = vmatpush.bf16.msra.mxu0 %v7720
    %10720 = vmatpush.bf16.msra.mxu0 %v7715
    %10721 = vmatpush.bf16.msra.mxu0 %v7710
    %10722 = vmatmul.bf16.gmra.mxu0 %v154
    %v10723 = vpop.f32.mrf.mxu0
    %v10724 = vadd.f32 %v10711, %v10723
    %v10725 = vpop.f32.mrf.mxu0
    %10726 = vdwg.mxu0
    %10727 = vmatpush.bf16.msra.mxu0 %v7785
    %10728 = vmatpush.bf16.msra.mxu0 %v7780
    %10729 = vmatpush.bf16.msra.mxu0 %v7775
    %10730 = vmatpush.bf16.msra.mxu0 %v7770
    %10731 = vmatpush.bf16.msra.mxu0 %v7765
    %10732 = vmatpush.bf16.msra.mxu0 %v7760
    %10733 = vmatpush.bf16.msra.mxu0 %v7755
    %10734 = vmatpush.bf16.msra.mxu0 %v7750
    %10735 = vmatmul.bf16.gmra.mxu0 %v155
    %v10736 = vpop.f32.mrf.mxu0
    %v10737 = vadd.f32 %v10724, %v10736
    %v10738 = vpop.f32.mrf.mxu0
    %10739 = vdwg.mxu0
    %10740 = vmatpush.bf16.msra.mxu0 %v7825
    %10741 = vmatpush.bf16.msra.mxu0 %v7820
    %10742 = vmatpush.bf16.msra.mxu0 %v7815
    %10743 = vmatpush.bf16.msra.mxu0 %v7810
    %10744 = vmatpush.bf16.msra.mxu0 %v7805
    %10745 = vmatpush.bf16.msra.mxu0 %v7800
    %10746 = vmatpush.bf16.msra.mxu0 %v7795
    %10747 = vmatpush.bf16.msra.mxu0 %v7790
    %10748 = vmatmul.bf16.gmra.mxu0 %v156
    %v10749 = vpop.f32.mrf.mxu0
    %v10750 = vadd.f32 %v10737, %v10749
    %v10751 = vpop.f32.mrf.mxu0
    %10752 = vdwg.mxu0
    %10753 = vmatpush.bf16.msra.mxu0 %v7865
    %10754 = vmatpush.bf16.msra.mxu0 %v7860
    %10755 = vmatpush.bf16.msra.mxu0 %v7855
    %10756 = vmatpush.bf16.msra.mxu0 %v7850
    %10757 = vmatpush.bf16.msra.mxu0 %v7845
    %10758 = vmatpush.bf16.msra.mxu0 %v7840
    %10759 = vmatpush.bf16.msra.mxu0 %v7835
    %10760 = vmatpush.bf16.msra.mxu0 %v7830
    %10761 = vmatmul.bf16.gmra.mxu0 %v157
    %v10762 = vpop.f32.mrf.mxu0
    %v10763 = vadd.f32 %v10750, %v10762
    %v10764 = vpop.f32.mrf.mxu0
    %10765 = vdwg.mxu0
    %10766 = vmatpush.bf16.msra.mxu0 %v7905
    %10767 = vmatpush.bf16.msra.mxu0 %v7900
    %10768 = vmatpush.bf16.msra.mxu0 %v7895
    %10769 = vmatpush.bf16.msra.mxu0 %v7890
    %10770 = vmatpush.bf16.msra.mxu0 %v7885
    %10771 = vmatpush.bf16.msra.mxu0 %v7880
    %10772 = vmatpush.bf16.msra.mxu0 %v7875
    %10773 = vmatpush.bf16.msra.mxu0 %v7870
    %10774 = vmatmul.bf16.gmra.mxu0 %v158
    %v10775 = vpop.f32.mrf.mxu0
    %v10776 = vadd.f32 %v10763, %v10775
    %v10777 = vpop.f32.mrf.mxu0
    %10778 = vdwg.mxu0
    %10779 = vmatpush.bf16.msra.mxu0 %v7945
    %10780 = vmatpush.bf16.msra.mxu0 %v7940
    %10781 = vmatpush.bf16.msra.mxu0 %v7935
    %10782 = vmatpush.bf16.msra.mxu0 %v7930
    %10783 = vmatpush.bf16.msra.mxu0 %v7925
    %10784 = vmatpush.bf16.msra.mxu0 %v7920
    %10785 = vmatpush.bf16.msra.mxu0 %v7915
    %10786 = vmatpush.bf16.msra.mxu0 %v7910
    %10787 = vmatmul.bf16.gmra.mxu0 %v159
    %v10788 = vpop.f32.mrf.mxu0
    %v10789 = vadd.f32 %v10776, %v10788
    %v10790 = vpop.f32.mrf.mxu0
    %10791 = vdwg.mxu0
    %10792 = vmatpush.bf16.msra.mxu0 %v6546
    %10793 = vmatpush.bf16.msra.mxu0 %v6541
    %10794 = vmatpush.bf16.msra.mxu0 %v6536
    %10795 = vmatpush.bf16.msra.mxu0 %v6531
    %10796 = vmatpush.bf16.msra.mxu0 %v6526
    %10797 = vmatpush.bf16.msra.mxu0 %v6521
    %10798 = vmatpush.bf16.msra.mxu0 %v6516
    %10799 = vmatpush.bf16.msra.mxu0 %v6511
    %10800 = vmatmul.bf16.gmra.mxu0 %v124
    %v10801 = vpop.f32.mrf.mxu0
    %v10802 = vadd.f32 %v1893, %v10801
    %v10803 = vpop.f32.mrf.mxu0
    %10804 = vdwg.mxu0
    %10805 = vmatpush.bf16.msra.mxu0 %v6586
    %10806 = vmatpush.bf16.msra.mxu0 %v6581
    %10807 = vmatpush.bf16.msra.mxu0 %v6576
    %10808 = vmatpush.bf16.msra.mxu0 %v6571
    %10809 = vmatpush.bf16.msra.mxu0 %v6566
    %10810 = vmatpush.bf16.msra.mxu0 %v6561
    %10811 = vmatpush.bf16.msra.mxu0 %v6556
    %10812 = vmatpush.bf16.msra.mxu0 %v6551
    %10813 = vmatmul.bf16.gmra.mxu0 %v125
    %v10814 = vpop.f32.mrf.mxu0
    %v10815 = vadd.f32 %v10802, %v10814
    %v10816 = vpop.f32.mrf.mxu0
    %10817 = vdwg.mxu0
    %10818 = vmatpush.bf16.msra.mxu0 %v6626
    %10819 = vmatpush.bf16.msra.mxu0 %v6621
    %10820 = vmatpush.bf16.msra.mxu0 %v6616
    %10821 = vmatpush.bf16.msra.mxu0 %v6611
    %10822 = vmatpush.bf16.msra.mxu0 %v6606
    %10823 = vmatpush.bf16.msra.mxu0 %v6601
    %10824 = vmatpush.bf16.msra.mxu0 %v6596
    %10825 = vmatpush.bf16.msra.mxu0 %v6591
    %10826 = vmatmul.bf16.gmra.mxu0 %v126
    %v10827 = vpop.f32.mrf.mxu0
    %v10828 = vadd.f32 %v10815, %v10827
    %v10829 = vpop.f32.mrf.mxu0
    %10830 = vdwg.mxu0
    %10831 = vmatpush.bf16.msra.mxu0 %v6666
    %10832 = vmatpush.bf16.msra.mxu0 %v6661
    %10833 = vmatpush.bf16.msra.mxu0 %v6656
    %10834 = vmatpush.bf16.msra.mxu0 %v6651
    %10835 = vmatpush.bf16.msra.mxu0 %v6646
    %10836 = vmatpush.bf16.msra.mxu0 %v6641
    %10837 = vmatpush.bf16.msra.mxu0 %v6636
    %10838 = vmatpush.bf16.msra.mxu0 %v6631
    %10839 = vmatmul.bf16.gmra.mxu0 %v127
    %v10840 = vpop.f32.mrf.mxu0
    %v10841 = vadd.f32 %v10828, %v10840
    %v10842 = vpop.f32.mrf.mxu0
    %10843 = vdwg.mxu0
    %10844 = vmatpush.bf16.msra.mxu0 %v6706
    %10845 = vmatpush.bf16.msra.mxu0 %v6701
    %10846 = vmatpush.bf16.msra.mxu0 %v6696
    %10847 = vmatpush.bf16.msra.mxu0 %v6691
    %10848 = vmatpush.bf16.msra.mxu0 %v6686
    %10849 = vmatpush.bf16.msra.mxu0 %v6681
    %10850 = vmatpush.bf16.msra.mxu0 %v6676
    %10851 = vmatpush.bf16.msra.mxu0 %v6671
    %10852 = vmatmul.bf16.gmra.mxu0 %v128
    %v10853 = vpop.f32.mrf.mxu0
    %v10854 = vadd.f32 %v10841, %v10853
    %v10855 = vpop.f32.mrf.mxu0
    %10856 = vdwg.mxu0
    %10857 = vmatpush.bf16.msra.mxu0 %v6746
    %10858 = vmatpush.bf16.msra.mxu0 %v6741
    %10859 = vmatpush.bf16.msra.mxu0 %v6736
    %10860 = vmatpush.bf16.msra.mxu0 %v6731
    %10861 = vmatpush.bf16.msra.mxu0 %v6726
    %10862 = vmatpush.bf16.msra.mxu0 %v6721
    %10863 = vmatpush.bf16.msra.mxu0 %v6716
    %10864 = vmatpush.bf16.msra.mxu0 %v6711
    %10865 = vmatmul.bf16.gmra.mxu0 %v129
    %v10866 = vpop.f32.mrf.mxu0
    %v10867 = vadd.f32 %v10854, %v10866
    %v10868 = vpop.f32.mrf.mxu0
    %10869 = vdwg.mxu0
    %10870 = vmatpush.bf16.msra.mxu0 %v6786
    %10871 = vmatpush.bf16.msra.mxu0 %v6781
    %10872 = vmatpush.bf16.msra.mxu0 %v6776
    %10873 = vmatpush.bf16.msra.mxu0 %v6771
    %10874 = vmatpush.bf16.msra.mxu0 %v6766
    %10875 = vmatpush.bf16.msra.mxu0 %v6761
    %10876 = vmatpush.bf16.msra.mxu0 %v6756
    %10877 = vmatpush.bf16.msra.mxu0 %v6751
    %10878 = vmatmul.bf16.gmra.mxu0 %v130
    %v10879 = vpop.f32.mrf.mxu0
    %v10880 = vadd.f32 %v10867, %v10879
    %v10881 = vpop.f32.mrf.mxu0
    %10882 = vdwg.mxu0
    %10883 = vmatpush.bf16.msra.mxu0 %v6826
    %10884 = vmatpush.bf16.msra.mxu0 %v6821
    %10885 = vmatpush.bf16.msra.mxu0 %v6816
    %10886 = vmatpush.bf16.msra.mxu0 %v6811
    %10887 = vmatpush.bf16.msra.mxu0 %v6806
    %10888 = vmatpush.bf16.msra.mxu0 %v6801
    %10889 = vmatpush.bf16.msra.mxu0 %v6796
    %10890 = vmatpush.bf16.msra.mxu0 %v6791
    %10891 = vmatmul.bf16.gmra.mxu0 %v131
    %v10892 = vpop.f32.mrf.mxu0
    %v10893 = vadd.f32 %v10880, %v10892
    %v10894 = vpop.f32.mrf.mxu0
    %10895 = vdwg.mxu0
    %10896 = vmatpush.bf16.msra.mxu0 %v6866
    %10897 = vmatpush.bf16.msra.mxu0 %v6861
    %10898 = vmatpush.bf16.msra.mxu0 %v6856
    %10899 = vmatpush.bf16.msra.mxu0 %v6851
    %10900 = vmatpush.bf16.msra.mxu0 %v6846
    %10901 = vmatpush.bf16.msra.mxu0 %v6841
    %10902 = vmatpush.bf16.msra.mxu0 %v6836
    %10903 = vmatpush.bf16.msra.mxu0 %v6831
    %10904 = vmatmul.bf16.gmra.mxu0 %v132
    %v10905 = vpop.f32.mrf.mxu0
    %v10906 = vadd.f32 %v10893, %v10905
    %v10907 = vpop.f32.mrf.mxu0
    %10908 = vdwg.mxu0
    %10909 = vmatpush.bf16.msra.mxu0 %v6906
    %10910 = vmatpush.bf16.msra.mxu0 %v6901
    %10911 = vmatpush.bf16.msra.mxu0 %v6896
    %10912 = vmatpush.bf16.msra.mxu0 %v6891
    %10913 = vmatpush.bf16.msra.mxu0 %v6886
    %10914 = vmatpush.bf16.msra.mxu0 %v6881
    %10915 = vmatpush.bf16.msra.mxu0 %v6876
    %10916 = vmatpush.bf16.msra.mxu0 %v6871
    %10917 = vmatmul.bf16.gmra.mxu0 %v133
    %v10918 = vpop.f32.mrf.mxu0
    %v10919 = vadd.f32 %v10906, %v10918
    %v10920 = vpop.f32.mrf.mxu0
    %10921 = vdwg.mxu0
    %10922 = vmatpush.bf16.msra.mxu0 %v6946
    %10923 = vmatpush.bf16.msra.mxu0 %v6941
    %10924 = vmatpush.bf16.msra.mxu0 %v6936
    %10925 = vmatpush.bf16.msra.mxu0 %v6931
    %10926 = vmatpush.bf16.msra.mxu0 %v6926
    %10927 = vmatpush.bf16.msra.mxu0 %v6921
    %10928 = vmatpush.bf16.msra.mxu0 %v6916
    %10929 = vmatpush.bf16.msra.mxu0 %v6911
    %10930 = vmatmul.bf16.gmra.mxu0 %v134
    %v10931 = vpop.f32.mrf.mxu0
    %v10932 = vadd.f32 %v10919, %v10931
    %v10933 = vpop.f32.mrf.mxu0
    %10934 = vdwg.mxu0
    %10935 = vmatpush.bf16.msra.mxu0 %v6986
    %10936 = vmatpush.bf16.msra.mxu0 %v6981
    %10937 = vmatpush.bf16.msra.mxu0 %v6976
    %10938 = vmatpush.bf16.msra.mxu0 %v6971
    %10939 = vmatpush.bf16.msra.mxu0 %v6966
    %10940 = vmatpush.bf16.msra.mxu0 %v6961
    %10941 = vmatpush.bf16.msra.mxu0 %v6956
    %10942 = vmatpush.bf16.msra.mxu0 %v6951
    %10943 = vmatmul.bf16.gmra.mxu0 %v135
    %v10944 = vpop.f32.mrf.mxu0
    %v10945 = vadd.f32 %v10932, %v10944
    %v10946 = vpop.f32.mrf.mxu0
    %10947 = vdwg.mxu0
    %10948 = vmatpush.bf16.msra.mxu0 %v7026
    %10949 = vmatpush.bf16.msra.mxu0 %v7021
    %10950 = vmatpush.bf16.msra.mxu0 %v7016
    %10951 = vmatpush.bf16.msra.mxu0 %v7011
    %10952 = vmatpush.bf16.msra.mxu0 %v7006
    %10953 = vmatpush.bf16.msra.mxu0 %v7001
    %10954 = vmatpush.bf16.msra.mxu0 %v6996
    %10955 = vmatpush.bf16.msra.mxu0 %v6991
    %10956 = vmatmul.bf16.gmra.mxu0 %v136
    %v10957 = vpop.f32.mrf.mxu0
    %v10958 = vadd.f32 %v10945, %v10957
    %v10959 = vpop.f32.mrf.mxu0
    %10960 = vdwg.mxu0
    %10961 = vmatpush.bf16.msra.mxu0 %v7066
    %10962 = vmatpush.bf16.msra.mxu0 %v7061
    %10963 = vmatpush.bf16.msra.mxu0 %v7056
    %10964 = vmatpush.bf16.msra.mxu0 %v7051
    %10965 = vmatpush.bf16.msra.mxu0 %v7046
    %10966 = vmatpush.bf16.msra.mxu0 %v7041
    %10967 = vmatpush.bf16.msra.mxu0 %v7036
    %10968 = vmatpush.bf16.msra.mxu0 %v7031
    %10969 = vmatmul.bf16.gmra.mxu0 %v137
    %v10970 = vpop.f32.mrf.mxu0
    %v10971 = vadd.f32 %v10958, %v10970
    %v10972 = vpop.f32.mrf.mxu0
    %10973 = vdwg.mxu0
    %10974 = vmatpush.bf16.msra.mxu0 %v7106
    %10975 = vmatpush.bf16.msra.mxu0 %v7101
    %10976 = vmatpush.bf16.msra.mxu0 %v7096
    %10977 = vmatpush.bf16.msra.mxu0 %v7091
    %10978 = vmatpush.bf16.msra.mxu0 %v7086
    %10979 = vmatpush.bf16.msra.mxu0 %v7081
    %10980 = vmatpush.bf16.msra.mxu0 %v7076
    %10981 = vmatpush.bf16.msra.mxu0 %v7071
    %10982 = vmatmul.bf16.gmra.mxu0 %v138
    %v10983 = vpop.f32.mrf.mxu0
    %v10984 = vadd.f32 %v10971, %v10983
    %v10985 = vpop.f32.mrf.mxu0
    %10986 = vdwg.mxu0
    %10987 = vmatpush.bf16.msra.mxu0 %v7146
    %10988 = vmatpush.bf16.msra.mxu0 %v7141
    %10989 = vmatpush.bf16.msra.mxu0 %v7136
    %10990 = vmatpush.bf16.msra.mxu0 %v7131
    %10991 = vmatpush.bf16.msra.mxu0 %v7126
    %10992 = vmatpush.bf16.msra.mxu0 %v7121
    %10993 = vmatpush.bf16.msra.mxu0 %v7116
    %10994 = vmatpush.bf16.msra.mxu0 %v7111
    %10995 = vmatmul.bf16.gmra.mxu0 %v139
    %v10996 = vpop.f32.mrf.mxu0
    %v10997 = vadd.f32 %v10984, %v10996
    %v10998 = vpop.f32.mrf.mxu0
    %10999 = vdwg.mxu0
    %11000 = vmatpush.bf16.msra.mxu0 %v7186
    %11001 = vmatpush.bf16.msra.mxu0 %v7181
    %11002 = vmatpush.bf16.msra.mxu0 %v7176
    %11003 = vmatpush.bf16.msra.mxu0 %v7171
    %11004 = vmatpush.bf16.msra.mxu0 %v7166
    %11005 = vmatpush.bf16.msra.mxu0 %v7161
    %11006 = vmatpush.bf16.msra.mxu0 %v7156
    %11007 = vmatpush.bf16.msra.mxu0 %v7151
    %11008 = vmatmul.bf16.gmra.mxu0 %v140
    %v11009 = vpop.f32.mrf.mxu0
    %v11010 = vadd.f32 %v10997, %v11009
    %v11011 = vpop.f32.mrf.mxu0
    %11012 = vdwg.mxu0
    %11013 = vmatpush.bf16.msra.mxu0 %v7226
    %11014 = vmatpush.bf16.msra.mxu0 %v7221
    %11015 = vmatpush.bf16.msra.mxu0 %v7216
    %11016 = vmatpush.bf16.msra.mxu0 %v7211
    %11017 = vmatpush.bf16.msra.mxu0 %v7206
    %11018 = vmatpush.bf16.msra.mxu0 %v7201
    %11019 = vmatpush.bf16.msra.mxu0 %v7196
    %11020 = vmatpush.bf16.msra.mxu0 %v7191
    %11021 = vmatmul.bf16.gmra.mxu0 %v141
    %v11022 = vpop.f32.mrf.mxu0
    %v11023 = vadd.f32 %v11010, %v11022
    %v11024 = vpop.f32.mrf.mxu0
    %11025 = vdwg.mxu0
    %11026 = vmatpush.bf16.msra.mxu0 %v7266
    %11027 = vmatpush.bf16.msra.mxu0 %v7261
    %11028 = vmatpush.bf16.msra.mxu0 %v7256
    %11029 = vmatpush.bf16.msra.mxu0 %v7251
    %11030 = vmatpush.bf16.msra.mxu0 %v7246
    %11031 = vmatpush.bf16.msra.mxu0 %v7241
    %11032 = vmatpush.bf16.msra.mxu0 %v7236
    %11033 = vmatpush.bf16.msra.mxu0 %v7231
    %11034 = vmatmul.bf16.gmra.mxu0 %v142
    %v11035 = vpop.f32.mrf.mxu0
    %v11036 = vadd.f32 %v11023, %v11035
    %v11037 = vpop.f32.mrf.mxu0
    %11038 = vdwg.mxu0
    %11039 = vmatpush.bf16.msra.mxu0 %v7306
    %11040 = vmatpush.bf16.msra.mxu0 %v7301
    %11041 = vmatpush.bf16.msra.mxu0 %v7296
    %11042 = vmatpush.bf16.msra.mxu0 %v7291
    %11043 = vmatpush.bf16.msra.mxu0 %v7286
    %11044 = vmatpush.bf16.msra.mxu0 %v7281
    %11045 = vmatpush.bf16.msra.mxu0 %v7276
    %11046 = vmatpush.bf16.msra.mxu0 %v7271
    %11047 = vmatmul.bf16.gmra.mxu0 %v143
    %v11048 = vpop.f32.mrf.mxu0
    %v11049 = vadd.f32 %v11036, %v11048
    %v11050 = vpop.f32.mrf.mxu0
    %11051 = vdwg.mxu0
    %11052 = vmatpush.bf16.msra.mxu0 %v7346
    %11053 = vmatpush.bf16.msra.mxu0 %v7341
    %11054 = vmatpush.bf16.msra.mxu0 %v7336
    %11055 = vmatpush.bf16.msra.mxu0 %v7331
    %11056 = vmatpush.bf16.msra.mxu0 %v7326
    %11057 = vmatpush.bf16.msra.mxu0 %v7321
    %11058 = vmatpush.bf16.msra.mxu0 %v7316
    %11059 = vmatpush.bf16.msra.mxu0 %v7311
    %11060 = vmatmul.bf16.gmra.mxu0 %v144
    %v11061 = vpop.f32.mrf.mxu0
    %v11062 = vadd.f32 %v11049, %v11061
    %v11063 = vpop.f32.mrf.mxu0
    %11064 = vdwg.mxu0
    %11065 = vmatpush.bf16.msra.mxu0 %v7386
    %11066 = vmatpush.bf16.msra.mxu0 %v7381
    %11067 = vmatpush.bf16.msra.mxu0 %v7376
    %11068 = vmatpush.bf16.msra.mxu0 %v7371
    %11069 = vmatpush.bf16.msra.mxu0 %v7366
    %11070 = vmatpush.bf16.msra.mxu0 %v7361
    %11071 = vmatpush.bf16.msra.mxu0 %v7356
    %11072 = vmatpush.bf16.msra.mxu0 %v7351
    %11073 = vmatmul.bf16.gmra.mxu0 %v145
    %v11074 = vpop.f32.mrf.mxu0
    %v11075 = vadd.f32 %v11062, %v11074
    %v11076 = vpop.f32.mrf.mxu0
    %11077 = vdwg.mxu0
    %11078 = vmatpush.bf16.msra.mxu0 %v7426
    %11079 = vmatpush.bf16.msra.mxu0 %v7421
    %11080 = vmatpush.bf16.msra.mxu0 %v7416
    %11081 = vmatpush.bf16.msra.mxu0 %v7411
    %11082 = vmatpush.bf16.msra.mxu0 %v7406
    %11083 = vmatpush.bf16.msra.mxu0 %v7401
    %11084 = vmatpush.bf16.msra.mxu0 %v7396
    %11085 = vmatpush.bf16.msra.mxu0 %v7391
    %11086 = vmatmul.bf16.gmra.mxu0 %v146
    %v11087 = vpop.f32.mrf.mxu0
    %v11088 = vadd.f32 %v11075, %v11087
    %v11089 = vpop.f32.mrf.mxu0
    %11090 = vdwg.mxu0
    %11091 = vmatpush.bf16.msra.mxu0 %v7466
    %11092 = vmatpush.bf16.msra.mxu0 %v7461
    %11093 = vmatpush.bf16.msra.mxu0 %v7456
    %11094 = vmatpush.bf16.msra.mxu0 %v7451
    %11095 = vmatpush.bf16.msra.mxu0 %v7446
    %11096 = vmatpush.bf16.msra.mxu0 %v7441
    %11097 = vmatpush.bf16.msra.mxu0 %v7436
    %11098 = vmatpush.bf16.msra.mxu0 %v7431
    %11099 = vmatmul.bf16.gmra.mxu0 %v147
    %v11100 = vpop.f32.mrf.mxu0
    %v11101 = vadd.f32 %v11088, %v11100
    %v11102 = vpop.f32.mrf.mxu0
    %11103 = vdwg.mxu0
    %11104 = vmatpush.bf16.msra.mxu0 %v7506
    %11105 = vmatpush.bf16.msra.mxu0 %v7501
    %11106 = vmatpush.bf16.msra.mxu0 %v7496
    %11107 = vmatpush.bf16.msra.mxu0 %v7491
    %11108 = vmatpush.bf16.msra.mxu0 %v7486
    %11109 = vmatpush.bf16.msra.mxu0 %v7481
    %11110 = vmatpush.bf16.msra.mxu0 %v7476
    %11111 = vmatpush.bf16.msra.mxu0 %v7471
    %11112 = vmatmul.bf16.gmra.mxu0 %v148
    %v11113 = vpop.f32.mrf.mxu0
    %v11114 = vadd.f32 %v11101, %v11113
    %v11115 = vpop.f32.mrf.mxu0
    %11116 = vdwg.mxu0
    %11117 = vmatpush.bf16.msra.mxu0 %v7546
    %11118 = vmatpush.bf16.msra.mxu0 %v7541
    %11119 = vmatpush.bf16.msra.mxu0 %v7536
    %11120 = vmatpush.bf16.msra.mxu0 %v7531
    %11121 = vmatpush.bf16.msra.mxu0 %v7526
    %11122 = vmatpush.bf16.msra.mxu0 %v7521
    %11123 = vmatpush.bf16.msra.mxu0 %v7516
    %11124 = vmatpush.bf16.msra.mxu0 %v7511
    %11125 = vmatmul.bf16.gmra.mxu0 %v149
    %v11126 = vpop.f32.mrf.mxu0
    %v11127 = vadd.f32 %v11114, %v11126
    %v11128 = vpop.f32.mrf.mxu0
    %11129 = vdwg.mxu0
    %11130 = vmatpush.bf16.msra.mxu0 %v7586
    %11131 = vmatpush.bf16.msra.mxu0 %v7581
    %11132 = vmatpush.bf16.msra.mxu0 %v7576
    %11133 = vmatpush.bf16.msra.mxu0 %v7571
    %11134 = vmatpush.bf16.msra.mxu0 %v7566
    %11135 = vmatpush.bf16.msra.mxu0 %v7561
    %11136 = vmatpush.bf16.msra.mxu0 %v7556
    %11137 = vmatpush.bf16.msra.mxu0 %v7551
    %11138 = vmatmul.bf16.gmra.mxu0 %v150
    %v11139 = vpop.f32.mrf.mxu0
    %v11140 = vadd.f32 %v11127, %v11139
    %v11141 = vpop.f32.mrf.mxu0
    %11142 = vdwg.mxu0
    %11143 = vmatpush.bf16.msra.mxu0 %v7626
    %11144 = vmatpush.bf16.msra.mxu0 %v7621
    %11145 = vmatpush.bf16.msra.mxu0 %v7616
    %11146 = vmatpush.bf16.msra.mxu0 %v7611
    %11147 = vmatpush.bf16.msra.mxu0 %v7606
    %11148 = vmatpush.bf16.msra.mxu0 %v7601
    %11149 = vmatpush.bf16.msra.mxu0 %v7596
    %11150 = vmatpush.bf16.msra.mxu0 %v7591
    %11151 = vmatmul.bf16.gmra.mxu0 %v151
    %v11152 = vpop.f32.mrf.mxu0
    %v11153 = vadd.f32 %v11140, %v11152
    %v11154 = vpop.f32.mrf.mxu0
    %11155 = vdwg.mxu0
    %11156 = vmatpush.bf16.msra.mxu0 %v7666
    %11157 = vmatpush.bf16.msra.mxu0 %v7661
    %11158 = vmatpush.bf16.msra.mxu0 %v7656
    %11159 = vmatpush.bf16.msra.mxu0 %v7651
    %11160 = vmatpush.bf16.msra.mxu0 %v7646
    %11161 = vmatpush.bf16.msra.mxu0 %v7641
    %11162 = vmatpush.bf16.msra.mxu0 %v7636
    %11163 = vmatpush.bf16.msra.mxu0 %v7631
    %11164 = vmatmul.bf16.gmra.mxu0 %v152
    %v11165 = vpop.f32.mrf.mxu0
    %v11166 = vadd.f32 %v11153, %v11165
    %v11167 = vpop.f32.mrf.mxu0
    %11168 = vdwg.mxu0
    %11169 = vmatpush.bf16.msra.mxu0 %v7706
    %11170 = vmatpush.bf16.msra.mxu0 %v7701
    %11171 = vmatpush.bf16.msra.mxu0 %v7696
    %11172 = vmatpush.bf16.msra.mxu0 %v7691
    %11173 = vmatpush.bf16.msra.mxu0 %v7686
    %11174 = vmatpush.bf16.msra.mxu0 %v7681
    %11175 = vmatpush.bf16.msra.mxu0 %v7676
    %11176 = vmatpush.bf16.msra.mxu0 %v7671
    %11177 = vmatmul.bf16.gmra.mxu0 %v153
    %v11178 = vpop.f32.mrf.mxu0
    %v11179 = vadd.f32 %v11166, %v11178
    %v11180 = vpop.f32.mrf.mxu0
    %11181 = vdwg.mxu0
    %11182 = vmatpush.bf16.msra.mxu0 %v7746
    %11183 = vmatpush.bf16.msra.mxu0 %v7741
    %11184 = vmatpush.bf16.msra.mxu0 %v7736
    %11185 = vmatpush.bf16.msra.mxu0 %v7731
    %11186 = vmatpush.bf16.msra.mxu0 %v7726
    %11187 = vmatpush.bf16.msra.mxu0 %v7721
    %11188 = vmatpush.bf16.msra.mxu0 %v7716
    %11189 = vmatpush.bf16.msra.mxu0 %v7711
    %11190 = vmatmul.bf16.gmra.mxu0 %v154
    %v11191 = vpop.f32.mrf.mxu0
    %v11192 = vadd.f32 %v11179, %v11191
    %v11193 = vpop.f32.mrf.mxu0
    %11194 = vdwg.mxu0
    %11195 = vmatpush.bf16.msra.mxu0 %v7786
    %11196 = vmatpush.bf16.msra.mxu0 %v7781
    %11197 = vmatpush.bf16.msra.mxu0 %v7776
    %11198 = vmatpush.bf16.msra.mxu0 %v7771
    %11199 = vmatpush.bf16.msra.mxu0 %v7766
    %11200 = vmatpush.bf16.msra.mxu0 %v7761
    %11201 = vmatpush.bf16.msra.mxu0 %v7756
    %11202 = vmatpush.bf16.msra.mxu0 %v7751
    %11203 = vmatmul.bf16.gmra.mxu0 %v155
    %v11204 = vpop.f32.mrf.mxu0
    %v11205 = vadd.f32 %v11192, %v11204
    %v11206 = vpop.f32.mrf.mxu0
    %11207 = vdwg.mxu0
    %11208 = vmatpush.bf16.msra.mxu0 %v7826
    %11209 = vmatpush.bf16.msra.mxu0 %v7821
    %11210 = vmatpush.bf16.msra.mxu0 %v7816
    %11211 = vmatpush.bf16.msra.mxu0 %v7811
    %11212 = vmatpush.bf16.msra.mxu0 %v7806
    %11213 = vmatpush.bf16.msra.mxu0 %v7801
    %11214 = vmatpush.bf16.msra.mxu0 %v7796
    %11215 = vmatpush.bf16.msra.mxu0 %v7791
    %11216 = vmatmul.bf16.gmra.mxu0 %v156
    %v11217 = vpop.f32.mrf.mxu0
    %v11218 = vadd.f32 %v11205, %v11217
    %v11219 = vpop.f32.mrf.mxu0
    %11220 = vdwg.mxu0
    %11221 = vmatpush.bf16.msra.mxu0 %v7866
    %11222 = vmatpush.bf16.msra.mxu0 %v7861
    %11223 = vmatpush.bf16.msra.mxu0 %v7856
    %11224 = vmatpush.bf16.msra.mxu0 %v7851
    %11225 = vmatpush.bf16.msra.mxu0 %v7846
    %11226 = vmatpush.bf16.msra.mxu0 %v7841
    %11227 = vmatpush.bf16.msra.mxu0 %v7836
    %11228 = vmatpush.bf16.msra.mxu0 %v7831
    %11229 = vmatmul.bf16.gmra.mxu0 %v157
    %v11230 = vpop.f32.mrf.mxu0
    %v11231 = vadd.f32 %v11218, %v11230
    %v11232 = vpop.f32.mrf.mxu0
    %11233 = vdwg.mxu0
    %11234 = vmatpush.bf16.msra.mxu0 %v7906
    %11235 = vmatpush.bf16.msra.mxu0 %v7901
    %11236 = vmatpush.bf16.msra.mxu0 %v7896
    %11237 = vmatpush.bf16.msra.mxu0 %v7891
    %11238 = vmatpush.bf16.msra.mxu0 %v7886
    %11239 = vmatpush.bf16.msra.mxu0 %v7881
    %11240 = vmatpush.bf16.msra.mxu0 %v7876
    %11241 = vmatpush.bf16.msra.mxu0 %v7871
    %11242 = vmatmul.bf16.gmra.mxu0 %v158
    %v11243 = vpop.f32.mrf.mxu0
    %v11244 = vadd.f32 %v11231, %v11243
    %v11245 = vpop.f32.mrf.mxu0
    %11246 = vdwg.mxu0
    %11247 = vmatpush.bf16.msra.mxu0 %v7946
    %11248 = vmatpush.bf16.msra.mxu0 %v7941
    %11249 = vmatpush.bf16.msra.mxu0 %v7936
    %11250 = vmatpush.bf16.msra.mxu0 %v7931
    %11251 = vmatpush.bf16.msra.mxu0 %v7926
    %11252 = vmatpush.bf16.msra.mxu0 %v7921
    %11253 = vmatpush.bf16.msra.mxu0 %v7916
    %11254 = vmatpush.bf16.msra.mxu0 %v7911
    %11255 = vmatmul.bf16.gmra.mxu0 %v159
    %v11256 = vpop.f32.mrf.mxu0
    %v11257 = vadd.f32 %v11244, %v11256
    %v11258 = vpop.f32.mrf.mxu0
    %11259 = vdwg.mxu0
    %11260 = vmatpush.bf16.msra.mxu0 %v6547
    %11261 = vmatpush.bf16.msra.mxu0 %v6542
    %11262 = vmatpush.bf16.msra.mxu0 %v6537
    %11263 = vmatpush.bf16.msra.mxu0 %v6532
    %11264 = vmatpush.bf16.msra.mxu0 %v6527
    %11265 = vmatpush.bf16.msra.mxu0 %v6522
    %11266 = vmatpush.bf16.msra.mxu0 %v6517
    %11267 = vmatpush.bf16.msra.mxu0 %v6512
    %11268 = vmatmul.bf16.gmra.mxu0 %v124
    %v11269 = vpop.f32.mrf.mxu0
    %v11270 = vadd.f32 %v1894, %v11269
    %v11271 = vpop.f32.mrf.mxu0
    %11272 = vdwg.mxu0
    %11273 = vmatpush.bf16.msra.mxu0 %v6587
    %11274 = vmatpush.bf16.msra.mxu0 %v6582
    %11275 = vmatpush.bf16.msra.mxu0 %v6577
    %11276 = vmatpush.bf16.msra.mxu0 %v6572
    %11277 = vmatpush.bf16.msra.mxu0 %v6567
    %11278 = vmatpush.bf16.msra.mxu0 %v6562
    %11279 = vmatpush.bf16.msra.mxu0 %v6557
    %11280 = vmatpush.bf16.msra.mxu0 %v6552
    %11281 = vmatmul.bf16.gmra.mxu0 %v125
    %v11282 = vpop.f32.mrf.mxu0
    %v11283 = vadd.f32 %v11270, %v11282
    %v11284 = vpop.f32.mrf.mxu0
    %11285 = vdwg.mxu0
    %11286 = vmatpush.bf16.msra.mxu0 %v6627
    %11287 = vmatpush.bf16.msra.mxu0 %v6622
    %11288 = vmatpush.bf16.msra.mxu0 %v6617
    %11289 = vmatpush.bf16.msra.mxu0 %v6612
    %11290 = vmatpush.bf16.msra.mxu0 %v6607
    %11291 = vmatpush.bf16.msra.mxu0 %v6602
    %11292 = vmatpush.bf16.msra.mxu0 %v6597
    %11293 = vmatpush.bf16.msra.mxu0 %v6592
    %11294 = vmatmul.bf16.gmra.mxu0 %v126
    %v11295 = vpop.f32.mrf.mxu0
    %v11296 = vadd.f32 %v11283, %v11295
    %v11297 = vpop.f32.mrf.mxu0
    %11298 = vdwg.mxu0
    %11299 = vmatpush.bf16.msra.mxu0 %v6667
    %11300 = vmatpush.bf16.msra.mxu0 %v6662
    %11301 = vmatpush.bf16.msra.mxu0 %v6657
    %11302 = vmatpush.bf16.msra.mxu0 %v6652
    %11303 = vmatpush.bf16.msra.mxu0 %v6647
    %11304 = vmatpush.bf16.msra.mxu0 %v6642
    %11305 = vmatpush.bf16.msra.mxu0 %v6637
    %11306 = vmatpush.bf16.msra.mxu0 %v6632
    %11307 = vmatmul.bf16.gmra.mxu0 %v127
    %v11308 = vpop.f32.mrf.mxu0
    %v11309 = vadd.f32 %v11296, %v11308
    %v11310 = vpop.f32.mrf.mxu0
    %11311 = vdwg.mxu0
    %11312 = vmatpush.bf16.msra.mxu0 %v6707
    %11313 = vmatpush.bf16.msra.mxu0 %v6702
    %11314 = vmatpush.bf16.msra.mxu0 %v6697
    %11315 = vmatpush.bf16.msra.mxu0 %v6692
    %11316 = vmatpush.bf16.msra.mxu0 %v6687
    %11317 = vmatpush.bf16.msra.mxu0 %v6682
    %11318 = vmatpush.bf16.msra.mxu0 %v6677
    %11319 = vmatpush.bf16.msra.mxu0 %v6672
    %11320 = vmatmul.bf16.gmra.mxu0 %v128
    %v11321 = vpop.f32.mrf.mxu0
    %v11322 = vadd.f32 %v11309, %v11321
    %v11323 = vpop.f32.mrf.mxu0
    %11324 = vdwg.mxu0
    %11325 = vmatpush.bf16.msra.mxu0 %v6747
    %11326 = vmatpush.bf16.msra.mxu0 %v6742
    %11327 = vmatpush.bf16.msra.mxu0 %v6737
    %11328 = vmatpush.bf16.msra.mxu0 %v6732
    %11329 = vmatpush.bf16.msra.mxu0 %v6727
    %11330 = vmatpush.bf16.msra.mxu0 %v6722
    %11331 = vmatpush.bf16.msra.mxu0 %v6717
    %11332 = vmatpush.bf16.msra.mxu0 %v6712
    %11333 = vmatmul.bf16.gmra.mxu0 %v129
    %v11334 = vpop.f32.mrf.mxu0
    %v11335 = vadd.f32 %v11322, %v11334
    %v11336 = vpop.f32.mrf.mxu0
    %11337 = vdwg.mxu0
    %11338 = vmatpush.bf16.msra.mxu0 %v6787
    %11339 = vmatpush.bf16.msra.mxu0 %v6782
    %11340 = vmatpush.bf16.msra.mxu0 %v6777
    %11341 = vmatpush.bf16.msra.mxu0 %v6772
    %11342 = vmatpush.bf16.msra.mxu0 %v6767
    %11343 = vmatpush.bf16.msra.mxu0 %v6762
    %11344 = vmatpush.bf16.msra.mxu0 %v6757
    %11345 = vmatpush.bf16.msra.mxu0 %v6752
    %11346 = vmatmul.bf16.gmra.mxu0 %v130
    %v11347 = vpop.f32.mrf.mxu0
    %v11348 = vadd.f32 %v11335, %v11347
    %v11349 = vpop.f32.mrf.mxu0
    %11350 = vdwg.mxu0
    %11351 = vmatpush.bf16.msra.mxu0 %v6827
    %11352 = vmatpush.bf16.msra.mxu0 %v6822
    %11353 = vmatpush.bf16.msra.mxu0 %v6817
    %11354 = vmatpush.bf16.msra.mxu0 %v6812
    %11355 = vmatpush.bf16.msra.mxu0 %v6807
    %11356 = vmatpush.bf16.msra.mxu0 %v6802
    %11357 = vmatpush.bf16.msra.mxu0 %v6797
    %11358 = vmatpush.bf16.msra.mxu0 %v6792
    %11359 = vmatmul.bf16.gmra.mxu0 %v131
    %v11360 = vpop.f32.mrf.mxu0
    %v11361 = vadd.f32 %v11348, %v11360
    %v11362 = vpop.f32.mrf.mxu0
    %11363 = vdwg.mxu0
    %11364 = vmatpush.bf16.msra.mxu0 %v6867
    %11365 = vmatpush.bf16.msra.mxu0 %v6862
    %11366 = vmatpush.bf16.msra.mxu0 %v6857
    %11367 = vmatpush.bf16.msra.mxu0 %v6852
    %11368 = vmatpush.bf16.msra.mxu0 %v6847
    %11369 = vmatpush.bf16.msra.mxu0 %v6842
    %11370 = vmatpush.bf16.msra.mxu0 %v6837
    %11371 = vmatpush.bf16.msra.mxu0 %v6832
    %11372 = vmatmul.bf16.gmra.mxu0 %v132
    %v11373 = vpop.f32.mrf.mxu0
    %v11374 = vadd.f32 %v11361, %v11373
    %v11375 = vpop.f32.mrf.mxu0
    %11376 = vdwg.mxu0
    %11377 = vmatpush.bf16.msra.mxu0 %v6907
    %11378 = vmatpush.bf16.msra.mxu0 %v6902
    %11379 = vmatpush.bf16.msra.mxu0 %v6897
    %11380 = vmatpush.bf16.msra.mxu0 %v6892
    %11381 = vmatpush.bf16.msra.mxu0 %v6887
    %11382 = vmatpush.bf16.msra.mxu0 %v6882
    %11383 = vmatpush.bf16.msra.mxu0 %v6877
    %11384 = vmatpush.bf16.msra.mxu0 %v6872
    %11385 = vmatmul.bf16.gmra.mxu0 %v133
    %v11386 = vpop.f32.mrf.mxu0
    %v11387 = vadd.f32 %v11374, %v11386
    %v11388 = vpop.f32.mrf.mxu0
    %11389 = vdwg.mxu0
    %11390 = vmatpush.bf16.msra.mxu0 %v6947
    %11391 = vmatpush.bf16.msra.mxu0 %v6942
    %11392 = vmatpush.bf16.msra.mxu0 %v6937
    %11393 = vmatpush.bf16.msra.mxu0 %v6932
    %11394 = vmatpush.bf16.msra.mxu0 %v6927
    %11395 = vmatpush.bf16.msra.mxu0 %v6922
    %11396 = vmatpush.bf16.msra.mxu0 %v6917
    %11397 = vmatpush.bf16.msra.mxu0 %v6912
    %11398 = vmatmul.bf16.gmra.mxu0 %v134
    %v11399 = vpop.f32.mrf.mxu0
    %v11400 = vadd.f32 %v11387, %v11399
    %v11401 = vpop.f32.mrf.mxu0
    %11402 = vdwg.mxu0
    %11403 = vmatpush.bf16.msra.mxu0 %v6987
    %11404 = vmatpush.bf16.msra.mxu0 %v6982
    %11405 = vmatpush.bf16.msra.mxu0 %v6977
    %11406 = vmatpush.bf16.msra.mxu0 %v6972
    %11407 = vmatpush.bf16.msra.mxu0 %v6967
    %11408 = vmatpush.bf16.msra.mxu0 %v6962
    %11409 = vmatpush.bf16.msra.mxu0 %v6957
    %11410 = vmatpush.bf16.msra.mxu0 %v6952
    %11411 = vmatmul.bf16.gmra.mxu0 %v135
    %v11412 = vpop.f32.mrf.mxu0
    %v11413 = vadd.f32 %v11400, %v11412
    %v11414 = vpop.f32.mrf.mxu0
    %11415 = vdwg.mxu0
    %11416 = vmatpush.bf16.msra.mxu0 %v7027
    %11417 = vmatpush.bf16.msra.mxu0 %v7022
    %11418 = vmatpush.bf16.msra.mxu0 %v7017
    %11419 = vmatpush.bf16.msra.mxu0 %v7012
    %11420 = vmatpush.bf16.msra.mxu0 %v7007
    %11421 = vmatpush.bf16.msra.mxu0 %v7002
    %11422 = vmatpush.bf16.msra.mxu0 %v6997
    %11423 = vmatpush.bf16.msra.mxu0 %v6992
    %11424 = vmatmul.bf16.gmra.mxu0 %v136
    %v11425 = vpop.f32.mrf.mxu0
    %v11426 = vadd.f32 %v11413, %v11425
    %v11427 = vpop.f32.mrf.mxu0
    %11428 = vdwg.mxu0
    %11429 = vmatpush.bf16.msra.mxu0 %v7067
    %11430 = vmatpush.bf16.msra.mxu0 %v7062
    %11431 = vmatpush.bf16.msra.mxu0 %v7057
    %11432 = vmatpush.bf16.msra.mxu0 %v7052
    %11433 = vmatpush.bf16.msra.mxu0 %v7047
    %11434 = vmatpush.bf16.msra.mxu0 %v7042
    %11435 = vmatpush.bf16.msra.mxu0 %v7037
    %11436 = vmatpush.bf16.msra.mxu0 %v7032
    %11437 = vmatmul.bf16.gmra.mxu0 %v137
    %v11438 = vpop.f32.mrf.mxu0
    %v11439 = vadd.f32 %v11426, %v11438
    %v11440 = vpop.f32.mrf.mxu0
    %11441 = vdwg.mxu0
    %11442 = vmatpush.bf16.msra.mxu0 %v7107
    %11443 = vmatpush.bf16.msra.mxu0 %v7102
    %11444 = vmatpush.bf16.msra.mxu0 %v7097
    %11445 = vmatpush.bf16.msra.mxu0 %v7092
    %11446 = vmatpush.bf16.msra.mxu0 %v7087
    %11447 = vmatpush.bf16.msra.mxu0 %v7082
    %11448 = vmatpush.bf16.msra.mxu0 %v7077
    %11449 = vmatpush.bf16.msra.mxu0 %v7072
    %11450 = vmatmul.bf16.gmra.mxu0 %v138
    %v11451 = vpop.f32.mrf.mxu0
    %v11452 = vadd.f32 %v11439, %v11451
    %v11453 = vpop.f32.mrf.mxu0
    %11454 = vdwg.mxu0
    %11455 = vmatpush.bf16.msra.mxu0 %v7147
    %11456 = vmatpush.bf16.msra.mxu0 %v7142
    %11457 = vmatpush.bf16.msra.mxu0 %v7137
    %11458 = vmatpush.bf16.msra.mxu0 %v7132
    %11459 = vmatpush.bf16.msra.mxu0 %v7127
    %11460 = vmatpush.bf16.msra.mxu0 %v7122
    %11461 = vmatpush.bf16.msra.mxu0 %v7117
    %11462 = vmatpush.bf16.msra.mxu0 %v7112
    %11463 = vmatmul.bf16.gmra.mxu0 %v139
    %v11464 = vpop.f32.mrf.mxu0
    %v11465 = vadd.f32 %v11452, %v11464
    %v11466 = vpop.f32.mrf.mxu0
    %11467 = vdwg.mxu0
    %11468 = vmatpush.bf16.msra.mxu0 %v7187
    %11469 = vmatpush.bf16.msra.mxu0 %v7182
    %11470 = vmatpush.bf16.msra.mxu0 %v7177
    %11471 = vmatpush.bf16.msra.mxu0 %v7172
    %11472 = vmatpush.bf16.msra.mxu0 %v7167
    %11473 = vmatpush.bf16.msra.mxu0 %v7162
    %11474 = vmatpush.bf16.msra.mxu0 %v7157
    %11475 = vmatpush.bf16.msra.mxu0 %v7152
    %11476 = vmatmul.bf16.gmra.mxu0 %v140
    %v11477 = vpop.f32.mrf.mxu0
    %v11478 = vadd.f32 %v11465, %v11477
    %v11479 = vpop.f32.mrf.mxu0
    %11480 = vdwg.mxu0
    %11481 = vmatpush.bf16.msra.mxu0 %v7227
    %11482 = vmatpush.bf16.msra.mxu0 %v7222
    %11483 = vmatpush.bf16.msra.mxu0 %v7217
    %11484 = vmatpush.bf16.msra.mxu0 %v7212
    %11485 = vmatpush.bf16.msra.mxu0 %v7207
    %11486 = vmatpush.bf16.msra.mxu0 %v7202
    %11487 = vmatpush.bf16.msra.mxu0 %v7197
    %11488 = vmatpush.bf16.msra.mxu0 %v7192
    %11489 = vmatmul.bf16.gmra.mxu0 %v141
    %v11490 = vpop.f32.mrf.mxu0
    %v11491 = vadd.f32 %v11478, %v11490
    %v11492 = vpop.f32.mrf.mxu0
    %11493 = vdwg.mxu0
    %11494 = vmatpush.bf16.msra.mxu0 %v7267
    %11495 = vmatpush.bf16.msra.mxu0 %v7262
    %11496 = vmatpush.bf16.msra.mxu0 %v7257
    %11497 = vmatpush.bf16.msra.mxu0 %v7252
    %11498 = vmatpush.bf16.msra.mxu0 %v7247
    %11499 = vmatpush.bf16.msra.mxu0 %v7242
    %11500 = vmatpush.bf16.msra.mxu0 %v7237
    %11501 = vmatpush.bf16.msra.mxu0 %v7232
    %11502 = vmatmul.bf16.gmra.mxu0 %v142
    %v11503 = vpop.f32.mrf.mxu0
    %v11504 = vadd.f32 %v11491, %v11503
    %v11505 = vpop.f32.mrf.mxu0
    %11506 = vdwg.mxu0
    %11507 = vmatpush.bf16.msra.mxu0 %v7307
    %11508 = vmatpush.bf16.msra.mxu0 %v7302
    %11509 = vmatpush.bf16.msra.mxu0 %v7297
    %11510 = vmatpush.bf16.msra.mxu0 %v7292
    %11511 = vmatpush.bf16.msra.mxu0 %v7287
    %11512 = vmatpush.bf16.msra.mxu0 %v7282
    %11513 = vmatpush.bf16.msra.mxu0 %v7277
    %11514 = vmatpush.bf16.msra.mxu0 %v7272
    %11515 = vmatmul.bf16.gmra.mxu0 %v143
    %v11516 = vpop.f32.mrf.mxu0
    %v11517 = vadd.f32 %v11504, %v11516
    %v11518 = vpop.f32.mrf.mxu0
    %11519 = vdwg.mxu0
    %11520 = vmatpush.bf16.msra.mxu0 %v7347
    %11521 = vmatpush.bf16.msra.mxu0 %v7342
    %11522 = vmatpush.bf16.msra.mxu0 %v7337
    %11523 = vmatpush.bf16.msra.mxu0 %v7332
    %11524 = vmatpush.bf16.msra.mxu0 %v7327
    %11525 = vmatpush.bf16.msra.mxu0 %v7322
    %11526 = vmatpush.bf16.msra.mxu0 %v7317
    %11527 = vmatpush.bf16.msra.mxu0 %v7312
    %11528 = vmatmul.bf16.gmra.mxu0 %v144
    %v11529 = vpop.f32.mrf.mxu0
    %v11530 = vadd.f32 %v11517, %v11529
    %v11531 = vpop.f32.mrf.mxu0
    %11532 = vdwg.mxu0
    %11533 = vmatpush.bf16.msra.mxu0 %v7387
    %11534 = vmatpush.bf16.msra.mxu0 %v7382
    %11535 = vmatpush.bf16.msra.mxu0 %v7377
    %11536 = vmatpush.bf16.msra.mxu0 %v7372
    %11537 = vmatpush.bf16.msra.mxu0 %v7367
    %11538 = vmatpush.bf16.msra.mxu0 %v7362
    %11539 = vmatpush.bf16.msra.mxu0 %v7357
    %11540 = vmatpush.bf16.msra.mxu0 %v7352
    %11541 = vmatmul.bf16.gmra.mxu0 %v145
    %v11542 = vpop.f32.mrf.mxu0
    %v11543 = vadd.f32 %v11530, %v11542
    %v11544 = vpop.f32.mrf.mxu0
    %11545 = vdwg.mxu0
    %11546 = vmatpush.bf16.msra.mxu0 %v7427
    %11547 = vmatpush.bf16.msra.mxu0 %v7422
    %11548 = vmatpush.bf16.msra.mxu0 %v7417
    %11549 = vmatpush.bf16.msra.mxu0 %v7412
    %11550 = vmatpush.bf16.msra.mxu0 %v7407
    %11551 = vmatpush.bf16.msra.mxu0 %v7402
    %11552 = vmatpush.bf16.msra.mxu0 %v7397
    %11553 = vmatpush.bf16.msra.mxu0 %v7392
    %11554 = vmatmul.bf16.gmra.mxu0 %v146
    %v11555 = vpop.f32.mrf.mxu0
    %v11556 = vadd.f32 %v11543, %v11555
    %v11557 = vpop.f32.mrf.mxu0
    %11558 = vdwg.mxu0
    %11559 = vmatpush.bf16.msra.mxu0 %v7467
    %11560 = vmatpush.bf16.msra.mxu0 %v7462
    %11561 = vmatpush.bf16.msra.mxu0 %v7457
    %11562 = vmatpush.bf16.msra.mxu0 %v7452
    %11563 = vmatpush.bf16.msra.mxu0 %v7447
    %11564 = vmatpush.bf16.msra.mxu0 %v7442
    %11565 = vmatpush.bf16.msra.mxu0 %v7437
    %11566 = vmatpush.bf16.msra.mxu0 %v7432
    %11567 = vmatmul.bf16.gmra.mxu0 %v147
    %v11568 = vpop.f32.mrf.mxu0
    %v11569 = vadd.f32 %v11556, %v11568
    %v11570 = vpop.f32.mrf.mxu0
    %11571 = vdwg.mxu0
    %11572 = vmatpush.bf16.msra.mxu0 %v7507
    %11573 = vmatpush.bf16.msra.mxu0 %v7502
    %11574 = vmatpush.bf16.msra.mxu0 %v7497
    %11575 = vmatpush.bf16.msra.mxu0 %v7492
    %11576 = vmatpush.bf16.msra.mxu0 %v7487
    %11577 = vmatpush.bf16.msra.mxu0 %v7482
    %11578 = vmatpush.bf16.msra.mxu0 %v7477
    %11579 = vmatpush.bf16.msra.mxu0 %v7472
    %11580 = vmatmul.bf16.gmra.mxu0 %v148
    %v11581 = vpop.f32.mrf.mxu0
    %v11582 = vadd.f32 %v11569, %v11581
    %v11583 = vpop.f32.mrf.mxu0
    %11584 = vdwg.mxu0
    %11585 = vmatpush.bf16.msra.mxu0 %v7547
    %11586 = vmatpush.bf16.msra.mxu0 %v7542
    %11587 = vmatpush.bf16.msra.mxu0 %v7537
    %11588 = vmatpush.bf16.msra.mxu0 %v7532
    %11589 = vmatpush.bf16.msra.mxu0 %v7527
    %11590 = vmatpush.bf16.msra.mxu0 %v7522
    %11591 = vmatpush.bf16.msra.mxu0 %v7517
    %11592 = vmatpush.bf16.msra.mxu0 %v7512
    %11593 = vmatmul.bf16.gmra.mxu0 %v149
    %v11594 = vpop.f32.mrf.mxu0
    %v11595 = vadd.f32 %v11582, %v11594
    %v11596 = vpop.f32.mrf.mxu0
    %11597 = vdwg.mxu0
    %11598 = vmatpush.bf16.msra.mxu0 %v7587
    %11599 = vmatpush.bf16.msra.mxu0 %v7582
    %11600 = vmatpush.bf16.msra.mxu0 %v7577
    %11601 = vmatpush.bf16.msra.mxu0 %v7572
    %11602 = vmatpush.bf16.msra.mxu0 %v7567
    %11603 = vmatpush.bf16.msra.mxu0 %v7562
    %11604 = vmatpush.bf16.msra.mxu0 %v7557
    %11605 = vmatpush.bf16.msra.mxu0 %v7552
    %11606 = vmatmul.bf16.gmra.mxu0 %v150
    %v11607 = vpop.f32.mrf.mxu0
    %v11608 = vadd.f32 %v11595, %v11607
    %v11609 = vpop.f32.mrf.mxu0
    %11610 = vdwg.mxu0
    %11611 = vmatpush.bf16.msra.mxu0 %v7627
    %11612 = vmatpush.bf16.msra.mxu0 %v7622
    %11613 = vmatpush.bf16.msra.mxu0 %v7617
    %11614 = vmatpush.bf16.msra.mxu0 %v7612
    %11615 = vmatpush.bf16.msra.mxu0 %v7607
    %11616 = vmatpush.bf16.msra.mxu0 %v7602
    %11617 = vmatpush.bf16.msra.mxu0 %v7597
    %11618 = vmatpush.bf16.msra.mxu0 %v7592
    %11619 = vmatmul.bf16.gmra.mxu0 %v151
    %v11620 = vpop.f32.mrf.mxu0
    %v11621 = vadd.f32 %v11608, %v11620
    %v11622 = vpop.f32.mrf.mxu0
    %11623 = vdwg.mxu0
    %11624 = vmatpush.bf16.msra.mxu0 %v7667
    %11625 = vmatpush.bf16.msra.mxu0 %v7662
    %11626 = vmatpush.bf16.msra.mxu0 %v7657
    %11627 = vmatpush.bf16.msra.mxu0 %v7652
    %11628 = vmatpush.bf16.msra.mxu0 %v7647
    %11629 = vmatpush.bf16.msra.mxu0 %v7642
    %11630 = vmatpush.bf16.msra.mxu0 %v7637
    %11631 = vmatpush.bf16.msra.mxu0 %v7632
    %11632 = vmatmul.bf16.gmra.mxu0 %v152
    %v11633 = vpop.f32.mrf.mxu0
    %v11634 = vadd.f32 %v11621, %v11633
    %v11635 = vpop.f32.mrf.mxu0
    %11636 = vdwg.mxu0
    %11637 = vmatpush.bf16.msra.mxu0 %v7707
    %11638 = vmatpush.bf16.msra.mxu0 %v7702
    %11639 = vmatpush.bf16.msra.mxu0 %v7697
    %11640 = vmatpush.bf16.msra.mxu0 %v7692
    %11641 = vmatpush.bf16.msra.mxu0 %v7687
    %11642 = vmatpush.bf16.msra.mxu0 %v7682
    %11643 = vmatpush.bf16.msra.mxu0 %v7677
    %11644 = vmatpush.bf16.msra.mxu0 %v7672
    %11645 = vmatmul.bf16.gmra.mxu0 %v153
    %v11646 = vpop.f32.mrf.mxu0
    %v11647 = vadd.f32 %v11634, %v11646
    %v11648 = vpop.f32.mrf.mxu0
    %11649 = vdwg.mxu0
    %11650 = vmatpush.bf16.msra.mxu0 %v7747
    %11651 = vmatpush.bf16.msra.mxu0 %v7742
    %11652 = vmatpush.bf16.msra.mxu0 %v7737
    %11653 = vmatpush.bf16.msra.mxu0 %v7732
    %11654 = vmatpush.bf16.msra.mxu0 %v7727
    %11655 = vmatpush.bf16.msra.mxu0 %v7722
    %11656 = vmatpush.bf16.msra.mxu0 %v7717
    %11657 = vmatpush.bf16.msra.mxu0 %v7712
    %11658 = vmatmul.bf16.gmra.mxu0 %v154
    %v11659 = vpop.f32.mrf.mxu0
    %v11660 = vadd.f32 %v11647, %v11659
    %v11661 = vpop.f32.mrf.mxu0
    %11662 = vdwg.mxu0
    %11663 = vmatpush.bf16.msra.mxu0 %v7787
    %11664 = vmatpush.bf16.msra.mxu0 %v7782
    %11665 = vmatpush.bf16.msra.mxu0 %v7777
    %11666 = vmatpush.bf16.msra.mxu0 %v7772
    %11667 = vmatpush.bf16.msra.mxu0 %v7767
    %11668 = vmatpush.bf16.msra.mxu0 %v7762
    %11669 = vmatpush.bf16.msra.mxu0 %v7757
    %11670 = vmatpush.bf16.msra.mxu0 %v7752
    %11671 = vmatmul.bf16.gmra.mxu0 %v155
    %v11672 = vpop.f32.mrf.mxu0
    %v11673 = vadd.f32 %v11660, %v11672
    %v11674 = vpop.f32.mrf.mxu0
    %11675 = vdwg.mxu0
    %11676 = vmatpush.bf16.msra.mxu0 %v7827
    %11677 = vmatpush.bf16.msra.mxu0 %v7822
    %11678 = vmatpush.bf16.msra.mxu0 %v7817
    %11679 = vmatpush.bf16.msra.mxu0 %v7812
    %11680 = vmatpush.bf16.msra.mxu0 %v7807
    %11681 = vmatpush.bf16.msra.mxu0 %v7802
    %11682 = vmatpush.bf16.msra.mxu0 %v7797
    %11683 = vmatpush.bf16.msra.mxu0 %v7792
    %11684 = vmatmul.bf16.gmra.mxu0 %v156
    %v11685 = vpop.f32.mrf.mxu0
    %v11686 = vadd.f32 %v11673, %v11685
    %v11687 = vpop.f32.mrf.mxu0
    %11688 = vdwg.mxu0
    %11689 = vmatpush.bf16.msra.mxu0 %v7867
    %11690 = vmatpush.bf16.msra.mxu0 %v7862
    %11691 = vmatpush.bf16.msra.mxu0 %v7857
    %11692 = vmatpush.bf16.msra.mxu0 %v7852
    %11693 = vmatpush.bf16.msra.mxu0 %v7847
    %11694 = vmatpush.bf16.msra.mxu0 %v7842
    %11695 = vmatpush.bf16.msra.mxu0 %v7837
    %11696 = vmatpush.bf16.msra.mxu0 %v7832
    %11697 = vmatmul.bf16.gmra.mxu0 %v157
    %v11698 = vpop.f32.mrf.mxu0
    %v11699 = vadd.f32 %v11686, %v11698
    %v11700 = vpop.f32.mrf.mxu0
    %11701 = vdwg.mxu0
    %11702 = vmatpush.bf16.msra.mxu0 %v7907
    %11703 = vmatpush.bf16.msra.mxu0 %v7902
    %11704 = vmatpush.bf16.msra.mxu0 %v7897
    %11705 = vmatpush.bf16.msra.mxu0 %v7892
    %11706 = vmatpush.bf16.msra.mxu0 %v7887
    %11707 = vmatpush.bf16.msra.mxu0 %v7882
    %11708 = vmatpush.bf16.msra.mxu0 %v7877
    %11709 = vmatpush.bf16.msra.mxu0 %v7872
    %11710 = vmatmul.bf16.gmra.mxu0 %v158
    %v11711 = vpop.f32.mrf.mxu0
    %v11712 = vadd.f32 %v11699, %v11711
    %v11713 = vpop.f32.mrf.mxu0
    %11714 = vdwg.mxu0
    %11715 = vmatpush.bf16.msra.mxu0 %v7947
    %11716 = vmatpush.bf16.msra.mxu0 %v7942
    %11717 = vmatpush.bf16.msra.mxu0 %v7937
    %11718 = vmatpush.bf16.msra.mxu0 %v7932
    %11719 = vmatpush.bf16.msra.mxu0 %v7927
    %11720 = vmatpush.bf16.msra.mxu0 %v7922
    %11721 = vmatpush.bf16.msra.mxu0 %v7917
    %11722 = vmatpush.bf16.msra.mxu0 %v7912
    %11723 = vmatmul.bf16.gmra.mxu0 %v159
    %v11724 = vpop.f32.mrf.mxu0
    %v11725 = vadd.f32 %v11712, %v11724
    %v11726 = vpop.f32.mrf.mxu0
    %11727 = vdwg.mxu0
    %v11728 = vmax.f32 %v9853, 0.0
    %v11729 = vmax.f32 %v10321, 0.0
    %v11730 = vmax.f32 %v10789, 0.0
    %v11731 = vmax.f32 %v11257, 0.0
    %v11732 = vmax.f32 %v11725, 0.0
    %v11733 = vld [vmem:[%s3] sm:$0x3]
    %v11734 = vld [vmem:[%s4] sm:$0x3f]
    %v11735 = vld [vmem:[%s4 + $0x8] sm:$0x3f]
    %v11736 = vld [vmem:[%s4 + $0x10] sm:$0x3f]
    %v11737 = vld [vmem:[%s4 + $0x18] sm:$0x3f]
    %v11738 = vld [vmem:[%s4 + $0x20] sm:$0x3f]
    %v11739 = vld [vmem:[%s5] sm:$0x1f]
    %v11741 = vperm.slane %v11739, 0
    %v11742 = vperm.slane %v11739, 1
    %v11743 = vperm.slane %v11739, 2
    %v11744 = vperm.slane %v11739, 3
    %v11745 = vperm.slane %v11739, 4
    %vm11751 = vcmask 48128
    %v11753 = vsel %vm11751, %v11733, 0
    %vm11755 = vcmask 1045504
    %v11757 = vsel %vm11755, %v11734, 0
    %v11760 = vsel %vm11755, %v11735, 0
    %v11763 = vsel %vm11755, %v11736, 0
    %v11766 = vsel %vm11755, %v11737, 0
    %v11769 = vsel %vm11755, %v11738, 0
    %11771 = vmatpush.msra.mxu0 0.0
    %11772 = vmatpush.msra.mxu0 0.0
    %11773 = vmatpush.msra.mxu0 0.0
    %11774 = vmatpush.msra.mxu0 0.0
    %11775 = vmatpush.msra.mxu0 0.0
    %11776 = vmatpush.msra.mxu0 0.0
    %11777 = vmatpush.msra.mxu0 0.0
    %11778 = vmatpush.msra.mxu0 0.0
    %11779 = vmatpush.msra.mxu0 0.0
    %11780 = vmatpush.msra.mxu0 0.0
    %11781 = vmatpush.msra.mxu0 0.0
    %11782 = vmatpush.msra.mxu0 0.0
    %11783 = vmatpush.msra.mxu0 0.0
    %11784 = vmatpush.msra.mxu0 0.0
    %11785 = vmatpush.msra.mxu0 0.0
    %11786 = vmatpush.msra.mxu0 %v11757
    %11787 = vmatmul.f32.gmra.mxu0 %v11753
    %v11788 = vpop.f32.mrf.mxu0
    %v11789 = vadd.f32 %v11741, %v11788
    %11790 = vdwg.mxu0
    %11791 = vmatpush.msra.mxu0 0.0
    %11792 = vmatpush.msra.mxu0 0.0
    %11793 = vmatpush.msra.mxu0 0.0
    %11794 = vmatpush.msra.mxu0 0.0
    %11795 = vmatpush.msra.mxu0 0.0
    %11796 = vmatpush.msra.mxu0 0.0
    %11797 = vmatpush.msra.mxu0 0.0
    %11798 = vmatpush.msra.mxu0 0.0
    %11799 = vmatpush.msra.mxu0 0.0
    %11800 = vmatpush.msra.mxu0 0.0
    %11801 = vmatpush.msra.mxu0 0.0
    %11802 = vmatpush.msra.mxu0 0.0
    %11803 = vmatpush.msra.mxu0 0.0
    %11804 = vmatpush.msra.mxu0 0.0
    %11805 = vmatpush.msra.mxu0 0.0
    %11806 = vmatpush.msra.mxu0 %v11760
    %11807 = vmatmul.f32.gmra.mxu0 %v11753
    %v11808 = vpop.f32.mrf.mxu0
    %v11809 = vadd.f32 %v11742, %v11808
    %11810 = vdwg.mxu0
    %11811 = vmatpush.msra.mxu0 0.0
    %11812 = vmatpush.msra.mxu0 0.0
    %11813 = vmatpush.msra.mxu0 0.0
    %11814 = vmatpush.msra.mxu0 0.0
    %11815 = vmatpush.msra.mxu0 0.0
    %11816 = vmatpush.msra.mxu0 0.0
    %11817 = vmatpush.msra.mxu0 0.0
    %11818 = vmatpush.msra.mxu0 0.0
    %11819 = vmatpush.msra.mxu0 0.0
    %11820 = vmatpush.msra.mxu0 0.0
    %11821 = vmatpush.msra.mxu0 0.0
    %11822 = vmatpush.msra.mxu0 0.0
    %11823 = vmatpush.msra.mxu0 0.0
    %11824 = vmatpush.msra.mxu0 0.0
    %11825 = vmatpush.msra.mxu0 0.0
    %11826 = vmatpush.msra.mxu0 %v11763
    %11827 = vmatmul.f32.gmra.mxu0 %v11753
    %v11828 = vpop.f32.mrf.mxu0
    %v11829 = vadd.f32 %v11743, %v11828
    %11830 = vdwg.mxu0
    %11831 = vmatpush.msra.mxu0 0.0
    %11832 = vmatpush.msra.mxu0 0.0
    %11833 = vmatpush.msra.mxu0 0.0
    %11834 = vmatpush.msra.mxu0 0.0
    %11835 = vmatpush.msra.mxu0 0.0
    %11836 = vmatpush.msra.mxu0 0.0
    %11837 = vmatpush.msra.mxu0 0.0
    %11838 = vmatpush.msra.mxu0 0.0
    %11839 = vmatpush.msra.mxu0 0.0
    %11840 = vmatpush.msra.mxu0 0.0
    %11841 = vmatpush.msra.mxu0 0.0
    %11842 = vmatpush.msra.mxu0 0.0
    %11843 = vmatpush.msra.mxu0 0.0
    %11844 = vmatpush.msra.mxu0 0.0
    %11845 = vmatpush.msra.mxu0 0.0
    %11846 = vmatpush.msra.mxu0 %v11766
    %11847 = vmatmul.f32.gmra.mxu0 %v11753
    %v11848 = vpop.f32.mrf.mxu0
    %v11849 = vadd.f32 %v11744, %v11848
    %11850 = vdwg.mxu0
    %11851 = vmatpush.msra.mxu0 0.0
    %11852 = vmatpush.msra.mxu0 0.0
    %11853 = vmatpush.msra.mxu0 0.0
    %11854 = vmatpush.msra.mxu0 0.0
    %11855 = vmatpush.msra.mxu0 0.0
    %11856 = vmatpush.msra.mxu0 0.0
    %11857 = vmatpush.msra.mxu0 0.0
    %11858 = vmatpush.msra.mxu0 0.0
    %11859 = vmatpush.msra.mxu0 0.0
    %11860 = vmatpush.msra.mxu0 0.0
    %11861 = vmatpush.msra.mxu0 0.0
    %11862 = vmatpush.msra.mxu0 0.0
    %11863 = vmatpush.msra.mxu0 0.0
    %11864 = vmatpush.msra.mxu0 0.0
    %11865 = vmatpush.msra.mxu0 0.0
    %11866 = vmatpush.msra.mxu0 %v11769
    %11867 = vmatmul.f32.gmra.mxu0 %v11753
    %v11868 = vpop.f32.mrf.mxu0
    %v11869 = vadd.f32 %v11745, %v11868
    %11870 = vdwg.mxu0
    %v11871 = vmax.f32 %v11789, 0.0
    %v11872 = vmax.f32 %v11809, 0.0
    %v11873 = vmax.f32 %v11829, 0.0
    %v11874 = vmax.f32 %v11849, 0.0
    %v11875 = vmax.f32 %v11869, 0.0
    %v11880 = vrot.slane %v11729, 6
    %v11881 = vrot.slane %v11730, 4
    %v11882 = vrot.slane %v11731, 2
    %vm11883 = vcmask 1041408
    %v11884 = vsel %vm11883, %v11728, %v11880
    %vm11885 = vcmask 1045508
    %v11886 = vsel %vm11885, %v11881, %v11882
    %vm11887 = vcmask 1043456
    %v11888 = vsel %vm11887, %v11884, %v11886
    %11890 = vst [vmem:[#allocation2] sm:$0xff] %v11888
    %vm11891 = vcmask 713728
    %11892 = vst.msk [vmem:[#allocation2 + $0x8] sm:$0x3] %vm11891, %v11732
    %v11898 = vrot.slane %v11872, 6
    %v11899 = vrot.slane %v11873, 4
    %v11900 = vrot.slane %v11874, 2
    %v11901 = vsel %vm11883, %v11871, %v11898
    %v11902 = vsel %vm11885, %v11899, %v11900
    %v11903 = vsel %vm11887, %v11901, %v11902
    %11904 = vrot.lane.b32.xlu0 %v11903, 88
    %v11905 = vpop.permute.xlu0 %11904
    %11906 = vrot.lane.b32.xlu0 %v11875, 88
    %v11907 = vpop.permute.xlu0 %11906
    %v11908 = vrot.slane %v11905, 6
    %v11909 = vrot.slane %v11907, 6
    %vm11910 = vcmask 719872
    %v11911 = vsel %vm11910, %v11908, %v11905
    %v11912 = vsel %vm11883, %v11908, %v11909
    %v11913 = vsel %vm11910, %v11912, %v11907
    %vm11916 = vcmask 1042112
    %vm11917 = vcmask 1043458
    %vm11918 = vmor %vm11917, %vm11916
    %vm11919 = vmor %vm11885, %vm11918
    %vm11920 = vcmask 1047558
    %vm11921 = vmor %vm11920, %vm11919
    %11922 = vst.msk [vmem:[#allocation2 + $0x8] sm:$0xff] %vm11921, %v11911
    %vm11923 = vcmask 388098
    %vm11924 = vmor %vm11923, %vm11883
    %11925 = vst.msk [vmem:[#allocation2 + $0x10] sm:$0xf] %vm11924, %v11913
    // Predicated region
    $region26: #{embedding_network_forward.5} parent=1 // pred_check
      _
    $region27: #{embedding_network_forward.5} parent=1 // pred_check_branch
      %11927 = sbr.rel (0) target = $region29
    $region28: #{embedding_network_forward.5} parent=1 // pred_region
      %11929 = vsyncadd [#allocation3], 0
      %s11931 = sshll.u32 [#allocation2], 4
      %s11932 = int_to_ptr.vmem [resolvable:$true] %s11931
      %s11933 = sshll.u32 %s6, 4
      %s11934 = int_to_ptr.hbm [resolvable:$true] %s11933
      %11936 = dma.vmem_to_hbm [thread:$0]  %s11932, 320, %s11934, [#allocation3]
    $region29: #{embedding_network_forward.5} parent=1 // pred_fallthru
      _
    // Predicated region
    $region30: #{embedding_network_forward.5} parent=1 // pred_check
      _
    $region31: #{embedding_network_forward.5} parent=1 // pred_check_branch
      %11938 = sbr.rel (0) target = $region33
    $region32: #{embedding_network_forward.5} parent=1 // pred_region
      %11940 = dma.done [#allocation3], 320
    $region33: #{embedding_network_forward.5} parent=1 // pred_fallthru
      _
    %11941 = vsyncpa [#allocation3], 1

</llo_original>
